<compile_context>
chip_gen: v5e
topology: v5e:2x2
jax: 0.10.0
libtpu: 0.0.40
codegen_flags: <defaults>
</compile_context>

<pallas_src>
import jax
import jax.numpy as jnp
from jax.experimental import pallas as pl
from jax.experimental.pallas import tpu as pltpu

EPS = 1e-5
LANE = 128      # channels padded to a multiple of the 128-lane quantum
SUBLANE = 8     # padded-width scratch rounded to a sublane multiple


def _round_up(x, m):
    return ((x + m - 1) // m) * m


def double_conv_kernel(x_ref, w1_ref, w2_ref, out_ref, xpad_ref, ypad_ref):
    # x_ref   : (N, H, W, Cin_p)        bf16  NHWC input, channels lane-padded
    # w1_ref  : (3*Cin_p, 3*Cout_p)     bf16  folded conv1 weights
    # w2_ref  : (3*Cout_p, 3*Cout_p)    bf16  folded conv2 weights
    # out_ref : (N, H, W, Cout_p)       f32   lane-dense output
    # xpad_ref: (N, H+2, Wp_al, Cin_p)  bf16  zero-halo padded input scratch
    # ypad_ref: (N, H+2, Wp_al, Cout_p) bf16  zero-halo padded intermediate
    # Weight layout: w[dy*C_in + ci, dx*C_out + co] = torch_w[co, ci, dy, dx].
    N, H, W, _ = x_ref.shape

    def fill_padded(pad_ref, interior):
        # Zero only the halo / alignment-margin strips, then write the interior.
        wp_al = pad_ref.shape[2]
        c = pad_ref.shape[3]
        zrow = jnp.zeros((N, 1, wp_al, c), pad_ref.dtype)
        pad_ref[:, 0:1, :, :] = zrow                                 # top row
        pad_ref[:, H + 1:H + 2, :, :] = zrow                         # bottom row
        pad_ref[:, 1:H + 1, 0:1, :] = jnp.zeros((N, H, 1, c), pad_ref.dtype)
        pad_ref[:, 1:H + 1, W + 1:wp_al, :] = jnp.zeros(             # right halo
            (N, H, wp_al - (W + 1), c), pad_ref.dtype)               # + margin
        pad_ref[:, 1:H + 1, 1:W + 1, :] = interior.astype(pad_ref.dtype)

    def conv3x3(pad_ref, w_ref):
        # One MXU matmul per 3x3 conv (dy folded into K, dx into output cols).
        wp_al = pad_ref.shape[2]
        c_in = pad_ref.shape[3]
        c_out = w_ref.shape[1] // 3
        patch = jnp.concatenate(
            [pad_ref[:, 0:H, :, :],
             pad_ref[:, 1:H + 1, :, :],
             pad_ref[:, 2:H + 2, :, :]], axis=-1)        # (N, H, wp_al, 3*c_in) bf16
        lhs = patch.reshape(N * H * wp_al, 3 * c_in)
        r = jnp.dot(lhs, w_ref[...],
                    preferred_element_type=jnp.float32)  # (N*H*wp_al, 3*c_out) f32
        r = r.reshape(N, H, wp_al, 3 * c_out)
        # Recombine the 3 dx taps with W-shifted adds; halo/margin cols dropped.
        return (r[:, :, 0:W,     0 * c_out:1 * c_out] +
                r[:, :, 1:W + 1, 1 * c_out:2 * c_out] +
                r[:, :, 2:W + 2, 2 * c_out:3 * c_out])   # (N, H, W, c_out) f32

    def bn_relu(a):
        # BatchNorm2d(affine=False), training-mode stats, one-pass sum/sumsq (f32).
        c = a.shape[-1]
        flat = a.reshape(N * H * W, c)
        inv_cnt = 1.0 / float(N * H * W)
        s = jnp.sum(flat, axis=0, keepdims=True)
        ss = jnp.sum(flat * flat, axis=0, keepdims=True)
        mean = s * inv_cnt
        var = jnp.maximum(ss * inv_cnt - mean * mean, 0.0)
        y = jnp.maximum((flat - mean) * jax.lax.rsqrt(var + EPS), 0.0)
        return y.reshape(N, H, W, c)

    # conv1 -> BN -> ReLU
    fill_padded(xpad_ref, x_ref[...])
    y1 = bn_relu(conv3x3(xpad_ref, w1_ref))              # f32

    # conv2 -> BN -> ReLU (intermediate re-padded in VMEM as bf16 MXU operand)
    fill_padded(ypad_ref, y1)
    y2 = bn_relu(conv3x3(ypad_ref, w2_ref))

    out_ref[...] = y2                                    # lane-dense f32 store


def _pack_conv_weights(w_oihw, cin_p, cout_p):
    """Torch (Cout, Cin, 3, 3) -> folded bf16 slab (3*cin_p, 3*cout_p)."""
    cout, cin = w_oihw.shape[0], w_oihw.shape[1]
    w = jnp.transpose(w_oihw, (2, 1, 3, 0))              # (dy, ci, dx, co)
    w = jnp.pad(w, ((0, 0), (0, cin_p - cin), (0, 0), (0, cout_p - cout)))
    return w.reshape(3 * cin_p, 3 * cout_p).astype(jnp.bfloat16)


def double_conv_block(x_nchw, w1_oihw, w2_oihw):
    """x: (N, Cin, H, W) f32 (PyTorch NCHW). Returns (N, Cout, H, W) f32."""
    N, Cin, H, W = x_nchw.shape
    Cout = w1_oihw.shape[0]
    cin_p = _round_up(Cin, LANE)
    cout_p = _round_up(Cout, LANE)
    wp_al = _round_up(W + 2, SUBLANE)

    # Interface glue only: NCHW -> NHWC, lane-pad channels, bf16 MXU operand.
    # Spatial zero-padding happens inside the kernel; chained UNet blocks would
    # stay in NHWC (lane-padded) form and skip these transposes entirely.
    x = jnp.transpose(x_nchw, (0, 2, 3, 1))
    x = jnp.pad(x, ((0, 0), (0, 0), (0, 0), (0, cin_p - Cin))).astype(jnp.bfloat16)
    w1 = _pack_conv_weights(w1_oihw, cin_p, cout_p)
    w2 = _pack_conv_weights(w2_oihw, cout_p, cout_p)

    out_nhwc = pl.pallas_call(
        double_conv_kernel,
        out_shape=jax.ShapeDtypeStruct((N, H, W, cout_p), jnp.float32),
        in_specs=[pl.BlockSpec(memory_space=pltpu.MemorySpace.VMEM)] * 3,
        out_specs=pl.BlockSpec(memory_space=pltpu.MemorySpace.VMEM),
        scratch_shapes=[
            pltpu.VMEM((N, H + 2, wp_al, cin_p), jnp.bfloat16),
            pltpu.VMEM((N, H + 2, wp_al, cout_p), jnp.bfloat16),
        ],
        compiler_params=pltpu.CompilerParams(vmem_limit_bytes=32 * 1024 * 1024),
    )(x, w1, w2)

    return jnp.transpose(out_nhwc[..., :Cout], (0, 3, 1, 2))


def reference_double_conv(x, w1, w2, matmul_dtype=jnp.float32):
    """Pure-JAX reference mirroring the PyTorch module (training-mode BN).
    matmul_dtype=bfloat16 mimics the kernel's bf16 MXU operands exactly."""
    def conv(a, w):
        return jax.lax.conv_general_dilated(
            a.astype(matmul_dtype), w.astype(matmul_dtype),
            window_strides=(1, 1), padding=((1, 1), (1, 1)),
            dimension_numbers=("NCHW", "OIHW", "NCHW"),
            preferred_element_type=jnp.float32)

    def bn_relu(a):
        mean = jnp.mean(a, axis=(0, 2, 3), keepdims=True)
        var = jnp.mean((a - mean) ** 2, axis=(0, 2, 3), keepdims=True)
        return jnp.maximum((a - mean) * jax.lax.rsqrt(var + EPS), 0.0)

    return bn_relu(conv(bn_relu(conv(x, w1)), w2))


if __name__ == "__main__":
    key = jax.random.PRNGKey(0)
    kx, k1, k2 = jax.random.split(key, 3)

    N, Cin, Cout, H, W = 2, 4, 8, 16, 16
    x = jax.random.normal(kx, (N, Cin, H, W), dtype=jnp.float32)
    # Deterministic synthetic conv weights (PyTorch shape: (Cout, Cin, 3, 3)).
    w1 = 0.1 * jax.random.normal(k1, (Cout, Cin, 3, 3), dtype=jnp.float32)
    w2 = 0.1 * jax.random.normal(k2, (Cout, Cout, 3, 3), dtype=jnp.float32)

    out = jax.block_until_ready(double_conv_block(x, w1, w2))
    assert out.shape == (N, Cout, H, W)

    # Tight check vs a reference using the same bf16 MXU-operand quantization.
    ref_bf16 = jax.block_until_ready(
        reference_double_conv(x, w1, w2, matmul_dtype=jnp.bfloat16))
    assert jnp.allclose(out, ref_bf16, rtol=5e-3, atol=5e-3), (
        float(jnp.max(jnp.abs(out - ref_bf16))))

    # Looser check vs exact f32 module semantics (difference = bf16 quantization).
    ref_f32 = jax.block_until_ready(reference_double_conv(x, w1, w2))
    assert jnp.allclose(out, ref_f32, rtol=5e-2, atol=2e-1), (
        float(jnp.max(jnp.abs(out - ref_f32))))

    print("KERNEL_OK")
</pallas_src>

<mosaic_0001>
module attributes {stable_mosaic.version = 11 : i64} {
  func.func @double_conv_kernel(%arg0: memref<2x16x16x128xbf16, #tpu.memory_space<vmem>>, %arg1: memref<384x384xbf16, #tpu.memory_space<vmem>>, %arg2: memref<384x384xbf16, #tpu.memory_space<vmem>>, %arg3: memref<2x16x16x128xf32, #tpu.memory_space<vmem>>, %arg4: memref<2x18x24x128xbf16, #tpu.memory_space<vmem>>, %arg5: memref<2x18x24x128xbf16, #tpu.memory_space<vmem>>) attributes {dimension_semantics = [], scalar_prefetch = 0 : i64, scratch_operands = 2 : i64, tpu.core_type = #tpu.core_type<tc>} {
    %c0 = arith.constant 0 : index
    %c0_0 = arith.constant 0 : index
    %c0_1 = arith.constant 0 : index
    %c0_2 = arith.constant 0 : index
    %0 = vector.load %arg0[%c0, %c0_0, %c0_1, %c0_2] : memref<2x16x16x128xbf16, #tpu.memory_space<vmem>>, vector<2x16x16x128xbf16>
    %cst = arith.constant 0.000000e+00 : bf16
    %1 = vector.broadcast %cst : bf16 to vector<2x1x24x128xbf16>
    %c0_3 = arith.constant 0 : index
    %c0_4 = arith.constant 0 : index
    %c0_5 = arith.constant 0 : index
    %c0_6 = arith.constant 0 : index
    %2 = vector.load %arg4[%c0_3, %c0_4, %c0_5, %c0_6] : memref<2x18x24x128xbf16, #tpu.memory_space<vmem>>, vector<2x1x24x128xbf16>
    tpu.vector_store %arg4[%c0_3, %c0_4, %c0_5, %c0_6], %1 {strides = array<i32>} : memref<2x18x24x128xbf16, #tpu.memory_space<vmem>>, vector<2x1x24x128xbf16>,
    %c0_7 = arith.constant 0 : index
    %c17 = arith.constant 17 : index
    %c0_8 = arith.constant 0 : index
    %c0_9 = arith.constant 0 : index
    %3 = vector.load %arg4[%c0_7, %c17, %c0_8, %c0_9] : memref<2x18x24x128xbf16, #tpu.memory_space<vmem>>, vector<2x1x24x128xbf16>
    tpu.vector_store %arg4[%c0_7, %c17, %c0_8, %c0_9], %1 {strides = array<i32>} : memref<2x18x24x128xbf16, #tpu.memory_space<vmem>>, vector<2x1x24x128xbf16>,
    %cst_10 = arith.constant 0.000000e+00 : bf16
    %4 = vector.broadcast %cst_10 : bf16 to vector<2x16x1x128xbf16>
    %c0_11 = arith.constant 0 : index
    %c1 = arith.constant 1 : index
    %c0_12 = arith.constant 0 : index
    %c0_13 = arith.constant 0 : index
    %5 = vector.load %arg4[%c0_11, %c1, %c0_12, %c0_13] : memref<2x18x24x128xbf16, #tpu.memory_space<vmem>>, vector<2x16x1x128xbf16>
    tpu.vector_store %arg4[%c0_11, %c1, %c0_12, %c0_13], %4 {strides = array<i32>} : memref<2x18x24x128xbf16, #tpu.memory_space<vmem>>, vector<2x16x1x128xbf16>,
    %cst_14 = arith.constant 0.000000e+00 : bf16
    %6 = vector.broadcast %cst_14 : bf16 to vector<2x16x7x128xbf16>
    %c0_15 = arith.constant 0 : index
    %c1_16 = arith.constant 1 : index
    %c17_17 = arith.constant 17 : index
    %c0_18 = arith.constant 0 : index
    %7 = vector.load %arg4[%c0_15, %c1_16, %c17_17, %c0_18] : memref<2x18x24x128xbf16, #tpu.memory_space<vmem>>, vector<2x16x7x128xbf16>
    tpu.vector_store %arg4[%c0_15, %c1_16, %c17_17, %c0_18], %6 {strides = array<i32>} : memref<2x18x24x128xbf16, #tpu.memory_space<vmem>>, vector<2x16x7x128xbf16>,
    %c0_19 = arith.constant 0 : index
    %c1_20 = arith.constant 1 : index
    %c1_21 = arith.constant 1 : index
    %c0_22 = arith.constant 0 : index
    %8 = vector.load %arg4[%c0_19, %c1_20, %c1_21, %c0_22] : memref<2x18x24x128xbf16, #tpu.memory_space<vmem>>, vector<2x16x16x128xbf16>
    tpu.vector_store %arg4[%c0_19, %c1_20, %c1_21, %c0_22], %0 {strides = array<i32>} : memref<2x18x24x128xbf16, #tpu.memory_space<vmem>>, vector<2x16x16x128xbf16>,
    %c0_23 = arith.constant 0 : index
    %c0_24 = arith.constant 0 : index
    %c0_25 = arith.constant 0 : index
    %c0_26 = arith.constant 0 : index
    %9 = vector.load %arg4[%c0_23, %c0_24, %c0_25, %c0_26] : memref<2x18x24x128xbf16, #tpu.memory_space<vmem>>, vector<2x16x24x128xbf16>
    %c0_27 = arith.constant 0 : index
    %c1_28 = arith.constant 1 : index
    %c0_29 = arith.constant 0 : index
    %c0_30 = arith.constant 0 : index
    %10 = vector.load %arg4[%c0_27, %c1_28, %c0_29, %c0_30] : memref<2x18x24x128xbf16, #tpu.memory_space<vmem>>, vector<2x16x24x128xbf16>
    %c0_31 = arith.constant 0 : index
    %c2 = arith.constant 2 : index
    %c0_32 = arith.constant 0 : index
    %c0_33 = arith.constant 0 : index
    %11 = vector.load %arg4[%c0_31, %c2, %c0_32, %c0_33] : memref<2x18x24x128xbf16, #tpu.memory_space<vmem>>, vector<2x16x24x128xbf16>
    %12 = tpu.concatenate %9, %10, %11 in 3 : vector<2x16x24x128xbf16>, vector<2x16x24x128xbf16>, vector<2x16x24x128xbf16> -> vector<2x16x24x384xbf16>
    %13 = vector.shape_cast %12 : vector<2x16x24x384xbf16> to vector<768x384xbf16>
    %c0_34 = arith.constant 0 : index
    %c0_35 = arith.constant 0 : index
    %14 = vector.load %arg1[%c0_34, %c0_35] : memref<384x384xbf16, #tpu.memory_space<vmem>>, vector<384x384xbf16>
    %cst_36 = arith.constant dense<0.000000e+00> : vector<768x384xf32>
    %15 = tpu.matmul %13, %14, %cst_36 {dimension_numbers = #tpu.dot_dimension_numbers<[1], [0], [0], [1], [0, 0, 1, 1], [], []>} : vector<768x384xbf16>, vector<384x384xbf16>, vector<768x384xf32> -> vector<768x384xf32>
    %16 = vector.shape_cast %15 : vector<768x384xf32> to vector<2x16x24x384xf32>
    %17 = vector.extract_strided_slice %16 {offsets = [0, 0, 0, 0], sizes = [2, 16, 16, 128], strides = [1, 1, 1, 1]} : vector<2x16x24x384xf32> to vector<2x16x16x128xf32>
    %18 = vector.extract_strided_slice %16 {offsets = [0, 0, 1, 128], sizes = [2, 16, 16, 128], strides = [1, 1, 1, 1]} : vector<2x16x24x384xf32> to vector<2x16x16x128xf32>
    %19 = arith.addf %17, %18 : vector<2x16x16x128xf32>
    %20 = vector.extract_strided_slice %16 {offsets = [0, 0, 2, 256], sizes = [2, 16, 16, 128], strides = [1, 1, 1, 1]} : vector<2x16x24x384xf32> to vector<2x16x16x128xf32>
    %21 = arith.addf %19, %20 : vector<2x16x16x128xf32>
    %22 = vector.shape_cast %21 : vector<2x16x16x128xf32> to vector<512x128xf32>
    %cst_37 = arith.constant dense<0.000000e+00> : vector<128xf32>
    %23 = vector.multi_reduction <add>, %22, %cst_37 [0] : vector<512x128xf32> to vector<128xf32>
    %24 = vector.shape_cast %23 : vector<128xf32> to vector<1x128xf32>
    %25 = arith.mulf %22, %22 : vector<512x128xf32>
    %cst_38 = arith.constant dense<0.000000e+00> : vector<128xf32>
    %26 = vector.multi_reduction <add>, %25, %cst_38 [0] : vector<512x128xf32> to vector<128xf32>
    %27 = vector.shape_cast %26 : vector<128xf32> to vector<1x128xf32>
    %cst_39 = arith.constant 0.001953125 : f32
    %28 = vector.broadcast %cst_39 : f32 to vector<1x128xf32>
    %29 = arith.mulf %24, %28 : vector<1x128xf32>
    %cst_40 = arith.constant 0.001953125 : f32
    %30 = vector.broadcast %cst_40 : f32 to vector<1x128xf32>
    %31 = arith.mulf %27, %30 : vector<1x128xf32>
    %32 = arith.mulf %29, %29 : vector<1x128xf32>
    %33 = arith.subf %31, %32 : vector<1x128xf32>
    %cst_41 = arith.constant 0.000000e+00 : f32
    %34 = vector.broadcast %cst_41 : f32 to vector<1x128xf32>
    %35 = arith.maximumf %33, %34 : vector<1x128xf32>
    %36 = vector.broadcast %29 : vector<1x128xf32> to vector<512x128xf32>
    %37 = arith.subf %22, %36 : vector<512x128xf32>
    %cst_42 = arith.constant 9.99999974E-6 : f32
    %38 = vector.broadcast %cst_42 : f32 to vector<1x128xf32>
    %39 = arith.addf %35, %38 : vector<1x128xf32>
    %40 = math.rsqrt %39 : vector<1x128xf32>
    %41 = vector.broadcast %40 : vector<1x128xf32> to vector<512x128xf32>
    %42 = arith.mulf %37, %41 : vector<512x128xf32>
    %cst_43 = arith.constant 0.000000e+00 : f32
    %43 = vector.broadcast %cst_43 : f32 to vector<512x128xf32>
    %44 = arith.maximumf %42, %43 : vector<512x128xf32>
    %45 = vector.shape_cast %44 : vector<512x128xf32> to vector<2x16x16x128xf32>
    %cst_44 = arith.constant 0.000000e+00 : bf16
    %46 = vector.broadcast %cst_44 : bf16 to vector<2x1x24x128xbf16>
    %c0_45 = arith.constant 0 : index
    %c0_46 = arith.constant 0 : index
    %c0_47 = arith.constant 0 : index
    %c0_48 = arith.constant 0 : index
    %47 = vector.load %arg5[%c0_45, %c0_46, %c0_47, %c0_48] : memref<2x18x24x128xbf16, #tpu.memory_space<vmem>>, vector<2x1x24x128xbf16>
    tpu.vector_store %arg5[%c0_45, %c0_46, %c0_47, %c0_48], %46 {strides = array<i32>} : memref<2x18x24x128xbf16, #tpu.memory_space<vmem>>, vector<2x1x24x128xbf16>,
    %c0_49 = arith.constant 0 : index
    %c17_50 = arith.constant 17 : index
    %c0_51 = arith.constant 0 : index
    %c0_52 = arith.constant 0 : index
    %48 = vector.load %arg5[%c0_49, %c17_50, %c0_51, %c0_52] : memref<2x18x24x128xbf16, #tpu.memory_space<vmem>>, vector<2x1x24x128xbf16>
    tpu.vector_store %arg5[%c0_49, %c17_50, %c0_51, %c0_52], %46 {strides = array<i32>} : memref<2x18x24x128xbf16, #tpu.memory_space<vmem>>, vector<2x1x24x128xbf16>,
    %cst_53 = arith.constant 0.000000e+00 : bf16
    %49 = vector.broadcast %cst_53 : bf16 to vector<2x16x1x128xbf16>
    %c0_54 = arith.constant 0 : index
    %c1_55 = arith.constant 1 : index
    %c0_56 = arith.constant 0 : index
    %c0_57 = arith.constant 0 : index
    %50 = vector.load %arg5[%c0_54, %c1_55, %c0_56, %c0_57] : memref<2x18x24x128xbf16, #tpu.memory_space<vmem>>, vector<2x16x1x128xbf16>
    tpu.vector_store %arg5[%c0_54, %c1_55, %c0_56, %c0_57], %49 {strides = array<i32>} : memref<2x18x24x128xbf16, #tpu.memory_space<vmem>>, vector<2x16x1x128xbf16>,
    %cst_58 = arith.constant 0.000000e+00 : bf16
    %51 = vector.broadcast %cst_58 : bf16 to vector<2x16x7x128xbf16>
    %c0_59 = arith.constant 0 : index
    %c1_60 = arith.constant 1 : index
    %c17_61 = arith.constant 17 : index
    %c0_62 = arith.constant 0 : index
    %52 = vector.load %arg5[%c0_59, %c1_60, %c17_61, %c0_62] : memref<2x18x24x128xbf16, #tpu.memory_space<vmem>>, vector<2x16x7x128xbf16>
    tpu.vector_store %arg5[%c0_59, %c1_60, %c17_61, %c0_62], %51 {strides = array<i32>} : memref<2x18x24x128xbf16, #tpu.memory_space<vmem>>, vector<2x16x7x128xbf16>,
    %53 = arith.truncf %45 : vector<2x16x16x128xf32> to vector<2x16x16x128xbf16>
    %c0_63 = arith.constant 0 : index
    %c1_64 = arith.constant 1 : index
    %c1_65 = arith.constant 1 : index
    %c0_66 = arith.constant 0 : index
    %54 = vector.load %arg5[%c0_63, %c1_64, %c1_65, %c0_66] : memref<2x18x24x128xbf16, #tpu.memory_space<vmem>>, vector<2x16x16x128xbf16>
    tpu.vector_store %arg5[%c0_63, %c1_64, %c1_65, %c0_66], %53 {strides = array<i32>} : memref<2x18x24x128xbf16, #tpu.memory_space<vmem>>, vector<2x16x16x128xbf16>,
    %c0_67 = arith.constant 0 : index
    %c0_68 = arith.constant 0 : index
    %c0_69 = arith.constant 0 : index
    %c0_70 = arith.constant 0 : index
    %55 = vector.load %arg5[%c0_67, %c0_68, %c0_69, %c0_70] : memref<2x18x24x128xbf16, #tpu.memory_space<vmem>>, vector<2x16x24x128xbf16>
    %c0_71 = arith.constant 0 : index
    %c1_72 = arith.constant 1 : index
    %c0_73 = arith.constant 0 : index
    %c0_74 = arith.constant 0 : index
    %56 = vector.load %arg5[%c0_71, %c1_72, %c0_73, %c0_74] : memref<2x18x24x128xbf16, #tpu.memory_space<vmem>>, vector<2x16x24x128xbf16>
    %c0_75 = arith.constant 0 : index
    %c2_76 = arith.constant 2 : index
    %c0_77 = arith.constant 0 : index
    %c0_78 = arith.constant 0 : index
    %57 = vector.load %arg5[%c0_75, %c2_76, %c0_77, %c0_78] : memref<2x18x24x128xbf16, #tpu.memory_space<vmem>>, vector<2x16x24x128xbf16>
    %58 = tpu.concatenate %55, %56, %57 in 3 : vector<2x16x24x128xbf16>, vector<2x16x24x128xbf16>, vector<2x16x24x128xbf16> -> vector<2x16x24x384xbf16>
    %59 = vector.shape_cast %58 : vector<2x16x24x384xbf16> to vector<768x384xbf16>
    %c0_79 = arith.constant 0 : index
    %c0_80 = arith.constant 0 : index
    %60 = vector.load %arg2[%c0_79, %c0_80] : memref<384x384xbf16, #tpu.memory_space<vmem>>, vector<384x384xbf16>
    %cst_81 = arith.constant dense<0.000000e+00> : vector<768x384xf32>
    %61 = tpu.matmul %59, %60, %cst_81 {dimension_numbers = #tpu.dot_dimension_numbers<[1], [0], [0], [1], [0, 0, 1, 1], [], []>} : vector<768x384xbf16>, vector<384x384xbf16>, vector<768x384xf32> -> vector<768x384xf32>
    %62 = vector.shape_cast %61 : vector<768x384xf32> to vector<2x16x24x384xf32>
    %63 = vector.extract_strided_slice %62 {offsets = [0, 0, 0, 0], sizes = [2, 16, 16, 128], strides = [1, 1, 1, 1]} : vector<2x16x24x384xf32> to vector<2x16x16x128xf32>
    %64 = vector.extract_strided_slice %62 {offsets = [0, 0, 1, 128], sizes = [2, 16, 16, 128], strides = [1, 1, 1, 1]} : vector<2x16x24x384xf32> to vector<2x16x16x128xf32>
    %65 = arith.addf %63, %64 : vector<2x16x16x128xf32>
    %66 = vector.extract_strided_slice %62 {offsets = [0, 0, 2, 256], sizes = [2, 16, 16, 128], strides = [1, 1, 1, 1]} : vector<2x16x24x384xf32> to vector<2x16x16x128xf32>
    %67 = arith.addf %65, %66 : vector<2x16x16x128xf32>
    %68 = vector.shape_cast %67 : vector<2x16x16x128xf32> to vector<512x128xf32>
    %cst_82 = arith.constant dense<0.000000e+00> : vector<128xf32>
    %69 = vector.multi_reduction <add>, %68, %cst_82 [0] : vector<512x128xf32> to vector<128xf32>
    %70 = vector.shape_cast %69 : vector<128xf32> to vector<1x128xf32>
    %71 = arith.mulf %68, %68 : vector<512x128xf32>
    %cst_83 = arith.constant dense<0.000000e+00> : vector<128xf32>
    %72 = vector.multi_reduction <add>, %71, %cst_83 [0] : vector<512x128xf32> to vector<128xf32>
    %73 = vector.shape_cast %72 : vector<128xf32> to vector<1x128xf32>
    %cst_84 = arith.constant 0.001953125 : f32
    %74 = vector.broadcast %cst_84 : f32 to vector<1x128xf32>
    %75 = arith.mulf %70, %74 : vector<1x128xf32>
    %cst_85 = arith.constant 0.001953125 : f32
    %76 = vector.broadcast %cst_85 : f32 to vector<1x128xf32>
    %77 = arith.mulf %73, %76 : vector<1x128xf32>
    %78 = arith.mulf %75, %75 : vector<1x128xf32>
    %79 = arith.subf %77, %78 : vector<1x128xf32>
    %cst_86 = arith.constant 0.000000e+00 : f32
    %80 = vector.broadcast %cst_86 : f32 to vector<1x128xf32>
    %81 = arith.maximumf %79, %80 : vector<1x128xf32>
    %82 = vector.broadcast %75 : vector<1x128xf32> to vector<512x128xf32>
    %83 = arith.subf %68, %82 : vector<512x128xf32>
    %cst_87 = arith.constant 9.99999974E-6 : f32
    %84 = vector.broadcast %cst_87 : f32 to vector<1x128xf32>
    %85 = arith.addf %81, %84 : vector<1x128xf32>
    %86 = math.rsqrt %85 : vector<1x128xf32>
    %87 = vector.broadcast %86 : vector<1x128xf32> to vector<512x128xf32>
    %88 = arith.mulf %83, %87 : vector<512x128xf32>
    %cst_88 = arith.constant 0.000000e+00 : f32
    %89 = vector.broadcast %cst_88 : f32 to vector<512x128xf32>
    %90 = arith.maximumf %88, %89 : vector<512x128xf32>
    %91 = vector.shape_cast %90 : vector<512x128xf32> to vector<2x16x16x128xf32>
    %c0_89 = arith.constant 0 : index
    %c0_90 = arith.constant 0 : index
    %c0_91 = arith.constant 0 : index
    %c0_92 = arith.constant 0 : index
    %92 = vector.load %arg3[%c0_89, %c0_90, %c0_91, %c0_92] : memref<2x16x16x128xf32, #tpu.memory_space<vmem>>, vector<2x16x16x128xf32>
    tpu.vector_store %arg3[%c0_89, %c0_90, %c0_91, %c0_92], %91 {strides = array<i32>} : memref<2x16x16x128xf32, #tpu.memory_space<vmem>>, vector<2x16x16x128xf32>,
    return
  }
}

</mosaic_0001>

<llo_original>
// kernel: tpu_custom_call.1
$region0: #{tpu_custom_call.1}
  #allocation0 [shape = 'u32[]', space=smem, size = 0x4, offset = 0x4, fixed_abs, tag = 'smem constant byte address 0x4 - core index']
  #allocation1 [shape = 'u32[72,128]{1,0:T(1,128)}', space=vmem, size = 0x9000, scoped, tag = 'internal scratch']
  #allocation2 [shape = 'bf16[2,18,24,128]{3,2,1,0:T(8,128)(2,1)}', space=vmem, size = 0x36000, scoped, tag = 'scratch operand']
  #allocation3 [shape = 'bf16[2,18,24,128]{3,2,1,0:T(8,128)(2,1)}', space=vmem, size = 0x36000, scoped, tag = 'scratch operand']
  %s0 = inlined_call_operand.hbm [shape: bf16[2,16,16,128], index: 0, kind: input, shape index: {}]
  %s1 = inlined_call_operand.hbm [shape: bf16[384,384], index: 1, kind: input, shape index: {}]
  %s2 = inlined_call_operand.hbm [shape: bf16[384,384], index: 2, kind: input, shape index: {}]
  %s3 = inlined_call_operand.hbm [shape: f32[2,16,16,128], index: 3, kind: output, shape index: {}]
  %s4 = sld [smem:[#allocation0]]
  $region34: #{tpu_custom_call.1} parent=0
    _
  %s6 = ssub.s32 1, %s4
  %s7 = scalar_select 0, %s6, %s4
  $region1: #{tpu_custom_call.1} parent=0
    #allocation4 [shape = 'u8[131072]{0}', space=vmem, size = 0x20000, scoped, tag = 'input window, operand 0, single buffered']
    #allocation5 [shape = 's32[1]{0}', space=sflag, size = 0x4, scoped, tag = 'scoped memory for tpu_custom_call.1']
    #allocation6 [shape = 's32[1]{0}', space=sflag, size = 0x4, scoped, tag = 'scoped memory for tpu_custom_call.1']
    #allocation7 [shape = 'u8[294912]{0}', space=vmem, size = 0x48000, scoped, tag = 'input window, operand 1, single buffered']
    #allocation8 [shape = 's32[1]{0}', space=sflag, size = 0x4, scoped, tag = 'scoped memory for tpu_custom_call.1']
    #allocation9 [shape = 'u8[294912]{0}', space=vmem, size = 0x48000, scoped, tag = 'input window, operand 2, single buffered']
    #allocation10 [shape = 'u8[262144]{0}', space=vmem, size = 0x40000, scoped, tag = 'output window, operand 0, single buffered']
    %8 = vsyncpa [#allocation5], 0
    %9 = vsyncpa [#allocation8], 0
    %10 = vsyncpa [#allocation6], 0
    // Predicated region
    $region2: #{tpu_custom_call.1} parent=1 // pred_check
      _
    $region3: #{tpu_custom_call.1} parent=1 // pred_check_branch
      %12 = sbr.rel (0) target = $region5
    $region4: #{tpu_custom_call.1} parent=1 // pred_region
      %14 = vsyncadd [#allocation5], 0
      %s15 = sshll.u32 %s0, 4
      %s16 = int_to_ptr.hbm [resolvable:$true] %s15
      %s17 = sshll.u32 [#allocation4], 4
      %s18 = int_to_ptr.vmem [resolvable:$true] %s17
      %23 = dma.hbm_to_vmem [thread:$0]  %s16, 4096, %s18, [#allocation5], 64, 64, 4
    $region5: #{tpu_custom_call.1} parent=1 // pred_fallthru
      _
    // Predicated region
    $region6: #{tpu_custom_call.1} parent=1 // pred_check
      _
    $region7: #{tpu_custom_call.1} parent=1 // pred_check_branch
      %25 = sbr.rel (0) target = $region9
    $region8: #{tpu_custom_call.1} parent=1 // pred_region
      %27 = vsyncadd [#allocation8], 0
      %s28 = sshll.u32 %s1, 4
      %s29 = int_to_ptr.hbm [resolvable:$true] %s28
      %s30 = sshll.u32 [#allocation7], 4
      %s31 = int_to_ptr.vmem [resolvable:$true] %s30
      %36 = dma.hbm_to_vmem [thread:$0]  %s29, 9216, %s31, [#allocation8], 192, 192, 12
    $region9: #{tpu_custom_call.1} parent=1 // pred_fallthru
      _
    // Predicated region
    $region10: #{tpu_custom_call.1} parent=1 // pred_check
      _
    $region11: #{tpu_custom_call.1} parent=1 // pred_check_branch
      %38 = sbr.rel (0) target = $region13
    $region12: #{tpu_custom_call.1} parent=1 // pred_region
      %40 = vsyncadd [#allocation8], 0
      %s41 = sshll.u32 %s2, 4
      %s42 = int_to_ptr.hbm [resolvable:$true] %s41
      %s43 = sshll.u32 [#allocation9], 4
      %s44 = int_to_ptr.vmem [resolvable:$true] %s43
      %49 = dma.hbm_to_vmem [thread:$0]  %s42, 9216, %s44, [#allocation8], 192, 192, 12
    $region13: #{tpu_custom_call.1} parent=1 // pred_fallthru
      _
    // Predicated region
    $region14: #{tpu_custom_call.1} parent=1 // pred_check
      _
    $region15: #{tpu_custom_call.1} parent=1 // pred_check_branch
      %51 = sbr.rel (0) target = $region17
    $region16: #{tpu_custom_call.1} parent=1 // pred_region
      %53 = dma.done [#allocation5], 4096
    $region17: #{tpu_custom_call.1} parent=1 // pred_fallthru
      _
    // Predicated region
    $region18: #{tpu_custom_call.1} parent=1 // pred_check
      _
    $region19: #{tpu_custom_call.1} parent=1 // pred_check_branch
      %55 = sbr.rel (0) target = $region21
    $region20: #{tpu_custom_call.1} parent=1 // pred_region
      %57 = dma.done [#allocation8], 9216
    $region21: #{tpu_custom_call.1} parent=1 // pred_fallthru
      _
    // Predicated region
    $region22: #{tpu_custom_call.1} parent=1 // pred_check
      _
    $region23: #{tpu_custom_call.1} parent=1 // pred_check_branch
      %59 = sbr.rel (0) target = $region25
    $region24: #{tpu_custom_call.1} parent=1 // pred_region
      %61 = dma.done [#allocation8], 9216
    $region25: #{tpu_custom_call.1} parent=1 // pred_fallthru
      _
    %v63 = vld [vmem:[#allocation4] sm:$0xf]
    %v64 = vld [vmem:[#allocation4 + $0x4] sm:$0xf]
    %v65 = vld [vmem:[#allocation4 + $0x8] sm:$0xf]
    %v66 = vld [vmem:[#allocation4 + $0xc] sm:$0xf]
    %v67 = vld [vmem:[#allocation4 + $0x10] sm:$0xf]
    %v68 = vld [vmem:[#allocation4 + $0x14] sm:$0xf]
    %v69 = vld [vmem:[#allocation4 + $0x18] sm:$0xf]
    %v70 = vld [vmem:[#allocation4 + $0x1c] sm:$0xf]
    %v71 = vld [vmem:[#allocation4 + $0x20] sm:$0xf]
    %v72 = vld [vmem:[#allocation4 + $0x24] sm:$0xf]
    %v73 = vld [vmem:[#allocation4 + $0x28] sm:$0xf]
    %v74 = vld [vmem:[#allocation4 + $0x2c] sm:$0xf]
    %v75 = vld [vmem:[#allocation4 + $0x30] sm:$0xf]
    %v76 = vld [vmem:[#allocation4 + $0x34] sm:$0xf]
    %v77 = vld [vmem:[#allocation4 + $0x38] sm:$0xf]
    %v78 = vld [vmem:[#allocation4 + $0x3c] sm:$0xf]
    %v79 = vld [vmem:[#allocation4 + $0x40] sm:$0xf]
    %v80 = vld [vmem:[#allocation4 + $0x44] sm:$0xf]
    %v81 = vld [vmem:[#allocation4 + $0x48] sm:$0xf]
    %v82 = vld [vmem:[#allocation4 + $0x4c] sm:$0xf]
    %v83 = vld [vmem:[#allocation4 + $0x50] sm:$0xf]
    %v84 = vld [vmem:[#allocation4 + $0x54] sm:$0xf]
    %v85 = vld [vmem:[#allocation4 + $0x58] sm:$0xf]
    %v86 = vld [vmem:[#allocation4 + $0x5c] sm:$0xf]
    %v87 = vld [vmem:[#allocation4 + $0x60] sm:$0xf]
    %v88 = vld [vmem:[#allocation4 + $0x64] sm:$0xf]
    %v89 = vld [vmem:[#allocation4 + $0x68] sm:$0xf]
    %v90 = vld [vmem:[#allocation4 + $0x6c] sm:$0xf]
    %v91 = vld [vmem:[#allocation4 + $0x70] sm:$0xf]
    %v92 = vld [vmem:[#allocation4 + $0x74] sm:$0xf]
    %v93 = vld [vmem:[#allocation4 + $0x78] sm:$0xf]
    %v94 = vld [vmem:[#allocation4 + $0x7c] sm:$0xf]
    %v95 = vld [vmem:[#allocation4 + $0x80] sm:$0xf]
    %v96 = vld [vmem:[#allocation4 + $0x84] sm:$0xf]
    %v97 = vld [vmem:[#allocation4 + $0x88] sm:$0xf]
    %v98 = vld [vmem:[#allocation4 + $0x8c] sm:$0xf]
    %v99 = vld [vmem:[#allocation4 + $0x90] sm:$0xf]
    %v100 = vld [vmem:[#allocation4 + $0x94] sm:$0xf]
    %v101 = vld [vmem:[#allocation4 + $0x98] sm:$0xf]
    %v102 = vld [vmem:[#allocation4 + $0x9c] sm:$0xf]
    %v103 = vld [vmem:[#allocation4 + $0xa0] sm:$0xf]
    %v104 = vld [vmem:[#allocation4 + $0xa4] sm:$0xf]
    %v105 = vld [vmem:[#allocation4 + $0xa8] sm:$0xf]
    %v106 = vld [vmem:[#allocation4 + $0xac] sm:$0xf]
    %v107 = vld [vmem:[#allocation4 + $0xb0] sm:$0xf]
    %v108 = vld [vmem:[#allocation4 + $0xb4] sm:$0xf]
    %v109 = vld [vmem:[#allocation4 + $0xb8] sm:$0xf]
    %v110 = vld [vmem:[#allocation4 + $0xbc] sm:$0xf]
    %v111 = vld [vmem:[#allocation4 + $0xc0] sm:$0xf]
    %v112 = vld [vmem:[#allocation4 + $0xc4] sm:$0xf]
    %v113 = vld [vmem:[#allocation4 + $0xc8] sm:$0xf]
    %v114 = vld [vmem:[#allocation4 + $0xcc] sm:$0xf]
    %v115 = vld [vmem:[#allocation4 + $0xd0] sm:$0xf]
    %v116 = vld [vmem:[#allocation4 + $0xd4] sm:$0xf]
    %v117 = vld [vmem:[#allocation4 + $0xd8] sm:$0xf]
    %v118 = vld [vmem:[#allocation4 + $0xdc] sm:$0xf]
    %v119 = vld [vmem:[#allocation4 + $0xe0] sm:$0xf]
    %v120 = vld [vmem:[#allocation4 + $0xe4] sm:$0xf]
    %v121 = vld [vmem:[#allocation4 + $0xe8] sm:$0xf]
    %v122 = vld [vmem:[#allocation4 + $0xec] sm:$0xf]
    %v123 = vld [vmem:[#allocation4 + $0xf0] sm:$0xf]
    %v124 = vld [vmem:[#allocation4 + $0xf4] sm:$0xf]
    %v125 = vld [vmem:[#allocation4 + $0xf8] sm:$0xf]
    %v126 = vld [vmem:[#allocation4 + $0xfc] sm:$0xf]
    %127 = vst [vmem:[#allocation2] sm:$0xf] 0
    %128 = vst [vmem:[#allocation2 + $0x4] sm:$0xf] 0
    %129 = vst [vmem:[#allocation2 + $0x8] sm:$0xf] 0
    %130 = vst [vmem:[#allocation2 + $0xd8] sm:$0xf] 0
    %131 = vst [vmem:[#allocation2 + $0xdc] sm:$0xf] 0
    %132 = vst [vmem:[#allocation2 + $0xe0] sm:$0xf] 0
    %s133 = scalar_lea.vmem [#allocation2], 204
    %134 = vst [vmem:[%s133] sm:$0xf] 0
    %135 = vst [vmem:[%s133 + $0x4] sm:$0xf] 0
    %136 = vst [vmem:[%s133 + $0x8] sm:$0xf] 0
    %137 = vst [vmem:[%s133 + $0xd8] sm:$0xf] 0
    %138 = vst [vmem:[%s133 + $0xdc] sm:$0xf] 0
    %139 = vst [vmem:[%s133 + $0xe0] sm:$0xf] 0
    %s140 = scalar_lea.vmem [#allocation2], 12
    %vm141 = vcmask 1040384
    %vm142 = vsmask.f32 256
    %vm143 = vmand %vm141, %vm142
    %v144 = vld [vmem:[%s140] sm:$0x1]
    %v145 = vsel %vm143, 0, %v144
    %146 = vst [vmem:[%s140] sm:$0x1] %v145
    %v147 = vld [vmem:[%s140 + $0xc] sm:$0x1]
    %v148 = vsel %vm143, 0, %v147
    %149 = vst [vmem:[%s140 + $0xc] sm:$0x1] %v148
    %v150 = vld [vmem:[%s140 + $0x18] sm:$0x1]
    %v151 = vsel %vm143, 0, %v150
    %152 = vst [vmem:[%s140 + $0x18] sm:$0x1] %v151
    %v153 = vld [vmem:[%s140 + $0x24] sm:$0x1]
    %v154 = vsel %vm143, 0, %v153
    %155 = vst [vmem:[%s140 + $0x24] sm:$0x1] %v154
    %v156 = vld [vmem:[%s140 + $0x30] sm:$0x1]
    %v157 = vsel %vm143, 0, %v156
    %158 = vst [vmem:[%s140 + $0x30] sm:$0x1] %v157
    %v159 = vld [vmem:[%s140 + $0x3c] sm:$0x1]
    %v160 = vsel %vm143, 0, %v159
    %161 = vst [vmem:[%s140 + $0x3c] sm:$0x1] %v160
    %v162 = vld [vmem:[%s140 + $0x48] sm:$0x1]
    %v163 = vsel %vm143, 0, %v162
    %164 = vst [vmem:[%s140 + $0x48] sm:$0x1] %v163
    %v165 = vld [vmem:[%s140 + $0x54] sm:$0x1]
    %v166 = vsel %vm143, 0, %v165
    %167 = vst [vmem:[%s140 + $0x54] sm:$0x1] %v166
    %v168 = vld [vmem:[%s140 + $0x60] sm:$0x1]
    %v169 = vsel %vm143, 0, %v168
    %170 = vst [vmem:[%s140 + $0x60] sm:$0x1] %v169
    %v171 = vld [vmem:[%s140 + $0x6c] sm:$0x1]
    %v172 = vsel %vm143, 0, %v171
    %173 = vst [vmem:[%s140 + $0x6c] sm:$0x1] %v172
    %v174 = vld [vmem:[%s140 + $0x78] sm:$0x1]
    %v175 = vsel %vm143, 0, %v174
    %176 = vst [vmem:[%s140 + $0x78] sm:$0x1] %v175
    %v177 = vld [vmem:[%s140 + $0x84] sm:$0x1]
    %v178 = vsel %vm143, 0, %v177
    %179 = vst [vmem:[%s140 + $0x84] sm:$0x1] %v178
    %v180 = vld [vmem:[%s140 + $0x90] sm:$0x1]
    %v181 = vsel %vm143, 0, %v180
    %182 = vst [vmem:[%s140 + $0x90] sm:$0x1] %v181
    %v183 = vld [vmem:[%s140 + $0x9c] sm:$0x1]
    %v184 = vsel %vm143, 0, %v183
    %185 = vst [vmem:[%s140 + $0x9c] sm:$0x1] %v184
    %v186 = vld [vmem:[%s140 + $0xa8] sm:$0x1]
    %v187 = vsel %vm143, 0, %v186
    %188 = vst [vmem:[%s140 + $0xa8] sm:$0x1] %v187
    %v189 = vld [vmem:[%s140 + $0xb4] sm:$0x1]
    %v190 = vsel %vm143, 0, %v189
    %191 = vst [vmem:[%s140 + $0xb4] sm:$0x1] %v190
    %v192 = vld [vmem:[%s140 + $0xd8] sm:$0x1]
    %v193 = vsel %vm143, 0, %v192
    %194 = vst [vmem:[%s140 + $0xd8] sm:$0x1] %v193
    %v195 = vld [vmem:[%s140 + $0xe4] sm:$0x1]
    %v196 = vsel %vm143, 0, %v195
    %197 = vst [vmem:[%s140 + $0xe4] sm:$0x1] %v196
    %v198 = vld [vmem:[%s140 + $0xf0] sm:$0x1]
    %v199 = vsel %vm143, 0, %v198
    %200 = vst [vmem:[%s140 + $0xf0] sm:$0x1] %v199
    %v201 = vld [vmem:[%s140 + $0xfc] sm:$0x1]
    %v202 = vsel %vm143, 0, %v201
    %203 = vst [vmem:[%s140 + $0xfc] sm:$0x1] %v202
    %v204 = vld [vmem:[%s140 + $0x108] sm:$0x1]
    %v205 = vsel %vm143, 0, %v204
    %206 = vst [vmem:[%s140 + $0x108] sm:$0x1] %v205
    %v207 = vld [vmem:[%s140 + $0x114] sm:$0x1]
    %v208 = vsel %vm143, 0, %v207
    %209 = vst [vmem:[%s140 + $0x114] sm:$0x1] %v208
    %v210 = vld [vmem:[%s140 + $0x120] sm:$0x1]
    %v211 = vsel %vm143, 0, %v210
    %212 = vst [vmem:[%s140 + $0x120] sm:$0x1] %v211
    %v213 = vld [vmem:[%s140 + $0x12c] sm:$0x1]
    %v214 = vsel %vm143, 0, %v213
    %215 = vst [vmem:[%s140 + $0x12c] sm:$0x1] %v214
    %v216 = vld [vmem:[%s140 + $0x138] sm:$0x1]
    %v217 = vsel %vm143, 0, %v216
    %218 = vst [vmem:[%s140 + $0x138] sm:$0x1] %v217
    %v219 = vld [vmem:[%s140 + $0x144] sm:$0x1]
    %v220 = vsel %vm143, 0, %v219
    %221 = vst [vmem:[%s140 + $0x144] sm:$0x1] %v220
    %v222 = vld [vmem:[%s140 + $0x150] sm:$0x1]
    %v223 = vsel %vm143, 0, %v222
    %224 = vst [vmem:[%s140 + $0x150] sm:$0x1] %v223
    %v225 = vld [vmem:[%s140 + $0x15c] sm:$0x1]
    %v226 = vsel %vm143, 0, %v225
    %227 = vst [vmem:[%s140 + $0x15c] sm:$0x1] %v226
    %v228 = vld [vmem:[%s140 + $0x168] sm:$0x1]
    %v229 = vsel %vm143, 0, %v228
    %230 = vst [vmem:[%s140 + $0x168] sm:$0x1] %v229
    %v231 = vld [vmem:[%s140 + $0x174] sm:$0x1]
    %v232 = vsel %vm143, 0, %v231
    %233 = vst [vmem:[%s140 + $0x174] sm:$0x1] %v232
    %v234 = vld [vmem:[%s140 + $0x180] sm:$0x1]
    %v235 = vsel %vm143, 0, %v234
    %236 = vst [vmem:[%s140 + $0x180] sm:$0x1] %v235
    %v237 = vld [vmem:[%s140 + $0x18c] sm:$0x1]
    %v238 = vsel %vm143, 0, %v237
    %239 = vst [vmem:[%s140 + $0x18c] sm:$0x1] %v238
    %vm240 = vcmask 1043456
    %vm241 = vsmask.f32 7938
    %vm242 = vmand %vm240, %vm241
    %v243 = vld [vmem:[%s140 + $0x8] sm:$0xf]
    %v244 = vsel %vm242, 0, %v243
    %245 = vst [vmem:[%s140 + $0x8] sm:$0xf] %v244
    %v246 = vld [vmem:[%s140 + $0x14] sm:$0xf]
    %v247 = vsel %vm242, 0, %v246
    %248 = vst [vmem:[%s140 + $0x14] sm:$0xf] %v247
    %v249 = vld [vmem:[%s140 + $0x20] sm:$0xf]
    %v250 = vsel %vm242, 0, %v249
    %251 = vst [vmem:[%s140 + $0x20] sm:$0xf] %v250
    %v252 = vld [vmem:[%s140 + $0x2c] sm:$0xf]
    %v253 = vsel %vm242, 0, %v252
    %254 = vst [vmem:[%s140 + $0x2c] sm:$0xf] %v253
    %v255 = vld [vmem:[%s140 + $0x38] sm:$0xf]
    %v256 = vsel %vm242, 0, %v255
    %257 = vst [vmem:[%s140 + $0x38] sm:$0xf] %v256
    %v258 = vld [vmem:[%s140 + $0x44] sm:$0xf]
    %v259 = vsel %vm242, 0, %v258
    %260 = vst [vmem:[%s140 + $0x44] sm:$0xf] %v259
    %v261 = vld [vmem:[%s140 + $0x50] sm:$0xf]
    %v262 = vsel %vm242, 0, %v261
    %263 = vst [vmem:[%s140 + $0x50] sm:$0xf] %v262
    %v264 = vld [vmem:[%s140 + $0x5c] sm:$0xf]
    %v265 = vsel %vm242, 0, %v264
    %266 = vst [vmem:[%s140 + $0x5c] sm:$0xf] %v265
    %v267 = vld [vmem:[%s140 + $0x68] sm:$0xf]
    %v268 = vsel %vm242, 0, %v267
    %269 = vst [vmem:[%s140 + $0x68] sm:$0xf] %v268
    %v270 = vld [vmem:[%s140 + $0x74] sm:$0xf]
    %v271 = vsel %vm242, 0, %v270
    %272 = vst [vmem:[%s140 + $0x74] sm:$0xf] %v271
    %v273 = vld [vmem:[%s140 + $0x80] sm:$0xf]
    %v274 = vsel %vm242, 0, %v273
    %275 = vst [vmem:[%s140 + $0x80] sm:$0xf] %v274
    %v276 = vld [vmem:[%s140 + $0x8c] sm:$0xf]
    %v277 = vsel %vm242, 0, %v276
    %278 = vst [vmem:[%s140 + $0x8c] sm:$0xf] %v277
    %v279 = vld [vmem:[%s140 + $0x98] sm:$0xf]
    %v280 = vsel %vm242, 0, %v279
    %281 = vst [vmem:[%s140 + $0x98] sm:$0xf] %v280
    %v282 = vld [vmem:[%s140 + $0xa4] sm:$0xf]
    %v283 = vsel %vm242, 0, %v282
    %284 = vst [vmem:[%s140 + $0xa4] sm:$0xf] %v283
    %v285 = vld [vmem:[%s140 + $0xb0] sm:$0xf]
    %v286 = vsel %vm242, 0, %v285
    %287 = vst [vmem:[%s140 + $0xb0] sm:$0xf] %v286
    %v288 = vld [vmem:[%s140 + $0xbc] sm:$0xf]
    %v289 = vsel %vm242, 0, %v288
    %290 = vst [vmem:[%s140 + $0xbc] sm:$0xf] %v289
    %v291 = vld [vmem:[%s140 + $0xe0] sm:$0xf]
    %v292 = vsel %vm242, 0, %v291
    %293 = vst [vmem:[%s140 + $0xe0] sm:$0xf] %v292
    %v294 = vld [vmem:[%s140 + $0xec] sm:$0xf]
    %v295 = vsel %vm242, 0, %v294
    %296 = vst [vmem:[%s140 + $0xec] sm:$0xf] %v295
    %v297 = vld [vmem:[%s140 + $0xf8] sm:$0xf]
    %v298 = vsel %vm242, 0, %v297
    %299 = vst [vmem:[%s140 + $0xf8] sm:$0xf] %v298
    %v300 = vld [vmem:[%s140 + $0x104] sm:$0xf]
    %v301 = vsel %vm242, 0, %v300
    %302 = vst [vmem:[%s140 + $0x104] sm:$0xf] %v301
    %v303 = vld [vmem:[%s140 + $0x110] sm:$0xf]
    %v304 = vsel %vm242, 0, %v303
    %305 = vst [vmem:[%s140 + $0x110] sm:$0xf] %v304
    %v306 = vld [vmem:[%s140 + $0x11c] sm:$0xf]
    %v307 = vsel %vm242, 0, %v306
    %308 = vst [vmem:[%s140 + $0x11c] sm:$0xf] %v307
    %v309 = vld [vmem:[%s140 + $0x128] sm:$0xf]
    %v310 = vsel %vm242, 0, %v309
    %311 = vst [vmem:[%s140 + $0x128] sm:$0xf] %v310
    %v312 = vld [vmem:[%s140 + $0x134] sm:$0xf]
    %v313 = vsel %vm242, 0, %v312
    %314 = vst [vmem:[%s140 + $0x134] sm:$0xf] %v313
    %v315 = vld [vmem:[%s140 + $0x140] sm:$0xf]
    %v316 = vsel %vm242, 0, %v315
    %317 = vst [vmem:[%s140 + $0x140] sm:$0xf] %v316
    %v318 = vld [vmem:[%s140 + $0x14c] sm:$0xf]
    %v319 = vsel %vm242, 0, %v318
    %320 = vst [vmem:[%s140 + $0x14c] sm:$0xf] %v319
    %v321 = vld [vmem:[%s140 + $0x158] sm:$0xf]
    %v322 = vsel %vm242, 0, %v321
    %323 = vst [vmem:[%s140 + $0x158] sm:$0xf] %v322
    %v324 = vld [vmem:[%s140 + $0x164] sm:$0xf]
    %v325 = vsel %vm242, 0, %v324
    %326 = vst [vmem:[%s140 + $0x164] sm:$0xf] %v325
    %v327 = vld [vmem:[%s140 + $0x170] sm:$0xf]
    %v328 = vsel %vm242, 0, %v327
    %329 = vst [vmem:[%s140 + $0x170] sm:$0xf] %v328
    %v330 = vld [vmem:[%s140 + $0x17c] sm:$0xf]
    %v331 = vsel %vm242, 0, %v330
    %332 = vst [vmem:[%s140 + $0x17c] sm:$0xf] %v331
    %v333 = vld [vmem:[%s140 + $0x188] sm:$0xf]
    %v334 = vsel %vm242, 0, %v333
    %335 = vst [vmem:[%s140 + $0x188] sm:$0xf] %v334
    %v336 = vld [vmem:[%s140 + $0x194] sm:$0xf]
    %v337 = vsel %vm242, 0, %v336
    %338 = vst [vmem:[%s140 + $0x194] sm:$0xf] %v337
    %vm339 = vsmask.f32 4368
    %vm340 = vmor %vm142, %vm339
    %v342 = vshrl.u32 %v63, 16
    %v344 = vrot.slane %v342, 7
    %v345 = vshll.u32 %v63, 16
    %v347 = vor.u32 %v344, %v345
    %v348 = vrot.slane %v344, 4
    %v350 = vshrl.u32 %v64, 16
    %v352 = vrot.slane %v350, 7
    %v353 = vshll.u32 %v64, 16
    %v355 = vor.u32 %v352, %v353
    %v356 = vsel %vm340, %v348, %v355
    %v357 = vrot.slane %v352, 4
    %v359 = vshrl.u32 %v65, 16
    %v361 = vrot.slane %v359, 7
    %v362 = vshll.u32 %v65, 16
    %v364 = vor.u32 %v361, %v362
    %v365 = vrot.slane %v361, 4
    %v367 = vshrl.u32 %v66, 16
    %v369 = vrot.slane %v367, 7
    %v370 = vshll.u32 %v66, 16
    %v372 = vor.u32 %v369, %v370
    %v373 = vsel %vm340, %v365, %v372
    %v374 = vrot.slane %v369, 4
    %v376 = vshrl.u32 %v67, 16
    %v378 = vrot.slane %v376, 7
    %v379 = vshll.u32 %v67, 16
    %v381 = vor.u32 %v378, %v379
    %v382 = vrot.slane %v378, 4
    %v384 = vshrl.u32 %v68, 16
    %v386 = vrot.slane %v384, 7
    %v387 = vshll.u32 %v68, 16
    %v389 = vor.u32 %v386, %v387
    %v390 = vsel %vm340, %v382, %v389
    %v391 = vrot.slane %v386, 4
    %v393 = vshrl.u32 %v69, 16
    %v395 = vrot.slane %v393, 7
    %v396 = vshll.u32 %v69, 16
    %v398 = vor.u32 %v395, %v396
    %v399 = vrot.slane %v395, 4
    %v401 = vshrl.u32 %v70, 16
    %v403 = vrot.slane %v401, 7
    %v404 = vshll.u32 %v70, 16
    %v406 = vor.u32 %v403, %v404
    %v407 = vsel %vm340, %v399, %v406
    %v408 = vrot.slane %v403, 4
    %v410 = vshrl.u32 %v71, 16
    %v412 = vrot.slane %v410, 7
    %v413 = vshll.u32 %v71, 16
    %v415 = vor.u32 %v412, %v413
    %v416 = vrot.slane %v412, 4
    %v418 = vshrl.u32 %v72, 16
    %v420 = vrot.slane %v418, 7
    %v421 = vshll.u32 %v72, 16
    %v423 = vor.u32 %v420, %v421
    %v424 = vsel %vm340, %v416, %v423
    %v425 = vrot.slane %v420, 4
    %v427 = vshrl.u32 %v73, 16
    %v429 = vrot.slane %v427, 7
    %v430 = vshll.u32 %v73, 16
    %v432 = vor.u32 %v429, %v430
    %v433 = vrot.slane %v429, 4
    %v435 = vshrl.u32 %v74, 16
    %v437 = vrot.slane %v435, 7
    %v438 = vshll.u32 %v74, 16
    %v440 = vor.u32 %v437, %v438
    %v441 = vsel %vm340, %v433, %v440
    %v442 = vrot.slane %v437, 4
    %v444 = vshrl.u32 %v75, 16
    %v446 = vrot.slane %v444, 7
    %v447 = vshll.u32 %v75, 16
    %v449 = vor.u32 %v446, %v447
    %v450 = vrot.slane %v446, 4
    %v452 = vshrl.u32 %v76, 16
    %v454 = vrot.slane %v452, 7
    %v455 = vshll.u32 %v76, 16
    %v457 = vor.u32 %v454, %v455
    %v458 = vsel %vm340, %v450, %v457
    %v459 = vrot.slane %v454, 4
    %v461 = vshrl.u32 %v77, 16
    %v463 = vrot.slane %v461, 7
    %v464 = vshll.u32 %v77, 16
    %v466 = vor.u32 %v463, %v464
    %v467 = vrot.slane %v463, 4
    %v469 = vshrl.u32 %v78, 16
    %v471 = vrot.slane %v469, 7
    %v472 = vshll.u32 %v78, 16
    %v474 = vor.u32 %v471, %v472
    %v475 = vsel %vm340, %v467, %v474
    %v476 = vrot.slane %v471, 4
    %v478 = vshrl.u32 %v79, 16
    %v480 = vrot.slane %v478, 7
    %v481 = vshll.u32 %v79, 16
    %v483 = vor.u32 %v480, %v481
    %v484 = vrot.slane %v480, 4
    %v486 = vshrl.u32 %v80, 16
    %v488 = vrot.slane %v486, 7
    %v489 = vshll.u32 %v80, 16
    %v491 = vor.u32 %v488, %v489
    %v492 = vsel %vm340, %v484, %v491
    %v493 = vrot.slane %v488, 4
    %v495 = vshrl.u32 %v81, 16
    %v497 = vrot.slane %v495, 7
    %v498 = vshll.u32 %v81, 16
    %v500 = vor.u32 %v497, %v498
    %v501 = vrot.slane %v497, 4
    %v503 = vshrl.u32 %v82, 16
    %v505 = vrot.slane %v503, 7
    %v506 = vshll.u32 %v82, 16
    %v508 = vor.u32 %v505, %v506
    %v509 = vsel %vm340, %v501, %v508
    %v510 = vrot.slane %v505, 4
    %v512 = vshrl.u32 %v83, 16
    %v514 = vrot.slane %v512, 7
    %v515 = vshll.u32 %v83, 16
    %v517 = vor.u32 %v514, %v515
    %v518 = vrot.slane %v514, 4
    %v520 = vshrl.u32 %v84, 16
    %v522 = vrot.slane %v520, 7
    %v523 = vshll.u32 %v84, 16
    %v525 = vor.u32 %v522, %v523
    %v526 = vsel %vm340, %v518, %v525
    %v527 = vrot.slane %v522, 4
    %v529 = vshrl.u32 %v85, 16
    %v531 = vrot.slane %v529, 7
    %v532 = vshll.u32 %v85, 16
    %v534 = vor.u32 %v531, %v532
    %v535 = vrot.slane %v531, 4
    %v537 = vshrl.u32 %v86, 16
    %v539 = vrot.slane %v537, 7
    %v540 = vshll.u32 %v86, 16
    %v542 = vor.u32 %v539, %v540
    %v543 = vsel %vm340, %v535, %v542
    %v544 = vrot.slane %v539, 4
    %v546 = vshrl.u32 %v87, 16
    %v548 = vrot.slane %v546, 7
    %v549 = vshll.u32 %v87, 16
    %v551 = vor.u32 %v548, %v549
    %v552 = vrot.slane %v548, 4
    %v554 = vshrl.u32 %v88, 16
    %v556 = vrot.slane %v554, 7
    %v557 = vshll.u32 %v88, 16
    %v559 = vor.u32 %v556, %v557
    %v560 = vsel %vm340, %v552, %v559
    %v561 = vrot.slane %v556, 4
    %v563 = vshrl.u32 %v89, 16
    %v565 = vrot.slane %v563, 7
    %v566 = vshll.u32 %v89, 16
    %v568 = vor.u32 %v565, %v566
    %v569 = vrot.slane %v565, 4
    %v571 = vshrl.u32 %v90, 16
    %v573 = vrot.slane %v571, 7
    %v574 = vshll.u32 %v90, 16
    %v576 = vor.u32 %v573, %v574
    %v577 = vsel %vm340, %v569, %v576
    %v578 = vrot.slane %v573, 4
    %v580 = vshrl.u32 %v91, 16
    %v582 = vrot.slane %v580, 7
    %v583 = vshll.u32 %v91, 16
    %v585 = vor.u32 %v582, %v583
    %v586 = vrot.slane %v582, 4
    %v588 = vshrl.u32 %v92, 16
    %v590 = vrot.slane %v588, 7
    %v591 = vshll.u32 %v92, 16
    %v593 = vor.u32 %v590, %v591
    %v594 = vsel %vm340, %v586, %v593
    %v595 = vrot.slane %v590, 4
    %v597 = vshrl.u32 %v93, 16
    %v599 = vrot.slane %v597, 7
    %v600 = vshll.u32 %v93, 16
    %v602 = vor.u32 %v599, %v600
    %v603 = vrot.slane %v599, 4
    %v605 = vshrl.u32 %v94, 16
    %v607 = vrot.slane %v605, 7
    %v608 = vshll.u32 %v94, 16
    %v610 = vor.u32 %v607, %v608
    %v611 = vsel %vm340, %v603, %v610
    %v612 = vrot.slane %v607, 4
    %v614 = vshrl.u32 %v95, 16
    %v616 = vrot.slane %v614, 7
    %v617 = vshll.u32 %v95, 16
    %v619 = vor.u32 %v616, %v617
    %v620 = vrot.slane %v616, 4
    %v622 = vshrl.u32 %v96, 16
    %v624 = vrot.slane %v622, 7
    %v625 = vshll.u32 %v96, 16
    %v627 = vor.u32 %v624, %v625
    %v628 = vsel %vm340, %v620, %v627
    %v629 = vrot.slane %v624, 4
    %v631 = vshrl.u32 %v97, 16
    %v633 = vrot.slane %v631, 7
    %v634 = vshll.u32 %v97, 16
    %v636 = vor.u32 %v633, %v634
    %v637 = vrot.slane %v633, 4
    %v639 = vshrl.u32 %v98, 16
    %v641 = vrot.slane %v639, 7
    %v642 = vshll.u32 %v98, 16
    %v644 = vor.u32 %v641, %v642
    %v645 = vsel %vm340, %v637, %v644
    %v646 = vrot.slane %v641, 4
    %v648 = vshrl.u32 %v99, 16
    %v650 = vrot.slane %v648, 7
    %v651 = vshll.u32 %v99, 16
    %v653 = vor.u32 %v650, %v651
    %v654 = vrot.slane %v650, 4
    %v656 = vshrl.u32 %v100, 16
    %v658 = vrot.slane %v656, 7
    %v659 = vshll.u32 %v100, 16
    %v661 = vor.u32 %v658, %v659
    %v662 = vsel %vm340, %v654, %v661
    %v663 = vrot.slane %v658, 4
    %v665 = vshrl.u32 %v101, 16
    %v667 = vrot.slane %v665, 7
    %v668 = vshll.u32 %v101, 16
    %v670 = vor.u32 %v667, %v668
    %v671 = vrot.slane %v667, 4
    %v673 = vshrl.u32 %v102, 16
    %v675 = vrot.slane %v673, 7
    %v676 = vshll.u32 %v102, 16
    %v678 = vor.u32 %v675, %v676
    %v679 = vsel %vm340, %v671, %v678
    %v680 = vrot.slane %v675, 4
    %v682 = vshrl.u32 %v103, 16
    %v684 = vrot.slane %v682, 7
    %v685 = vshll.u32 %v103, 16
    %v687 = vor.u32 %v684, %v685
    %v688 = vrot.slane %v684, 4
    %v690 = vshrl.u32 %v104, 16
    %v692 = vrot.slane %v690, 7
    %v693 = vshll.u32 %v104, 16
    %v695 = vor.u32 %v692, %v693
    %v696 = vsel %vm340, %v688, %v695
    %v697 = vrot.slane %v692, 4
    %v699 = vshrl.u32 %v105, 16
    %v701 = vrot.slane %v699, 7
    %v702 = vshll.u32 %v105, 16
    %v704 = vor.u32 %v701, %v702
    %v705 = vrot.slane %v701, 4
    %v707 = vshrl.u32 %v106, 16
    %v709 = vrot.slane %v707, 7
    %v710 = vshll.u32 %v106, 16
    %v712 = vor.u32 %v709, %v710
    %v713 = vsel %vm340, %v705, %v712
    %v714 = vrot.slane %v709, 4
    %v716 = vshrl.u32 %v107, 16
    %v718 = vrot.slane %v716, 7
    %v719 = vshll.u32 %v107, 16
    %v721 = vor.u32 %v718, %v719
    %v722 = vrot.slane %v718, 4
    %v724 = vshrl.u32 %v108, 16
    %v726 = vrot.slane %v724, 7
    %v727 = vshll.u32 %v108, 16
    %v729 = vor.u32 %v726, %v727
    %v730 = vsel %vm340, %v722, %v729
    %v731 = vrot.slane %v726, 4
    %v733 = vshrl.u32 %v109, 16
    %v735 = vrot.slane %v733, 7
    %v736 = vshll.u32 %v109, 16
    %v738 = vor.u32 %v735, %v736
    %v739 = vrot.slane %v735, 4
    %v741 = vshrl.u32 %v110, 16
    %v743 = vrot.slane %v741, 7
    %v744 = vshll.u32 %v110, 16
    %v746 = vor.u32 %v743, %v744
    %v747 = vsel %vm340, %v739, %v746
    %v748 = vrot.slane %v743, 4
    %v750 = vshrl.u32 %v111, 16
    %v752 = vrot.slane %v750, 7
    %v753 = vshll.u32 %v111, 16
    %v755 = vor.u32 %v752, %v753
    %v756 = vrot.slane %v752, 4
    %v758 = vshrl.u32 %v112, 16
    %v760 = vrot.slane %v758, 7
    %v761 = vshll.u32 %v112, 16
    %v763 = vor.u32 %v760, %v761
    %v764 = vsel %vm340, %v756, %v763
    %v765 = vrot.slane %v760, 4
    %v767 = vshrl.u32 %v113, 16
    %v769 = vrot.slane %v767, 7
    %v770 = vshll.u32 %v113, 16
    %v772 = vor.u32 %v769, %v770
    %v773 = vrot.slane %v769, 4
    %v775 = vshrl.u32 %v114, 16
    %v777 = vrot.slane %v775, 7
    %v778 = vshll.u32 %v114, 16
    %v780 = vor.u32 %v777, %v778
    %v781 = vsel %vm340, %v773, %v780
    %v782 = vrot.slane %v777, 4
    %v784 = vshrl.u32 %v115, 16
    %v786 = vrot.slane %v784, 7
    %v787 = vshll.u32 %v115, 16
    %v789 = vor.u32 %v786, %v787
    %v790 = vrot.slane %v786, 4
    %v792 = vshrl.u32 %v116, 16
    %v794 = vrot.slane %v792, 7
    %v795 = vshll.u32 %v116, 16
    %v797 = vor.u32 %v794, %v795
    %v798 = vsel %vm340, %v790, %v797
    %v799 = vrot.slane %v794, 4
    %v801 = vshrl.u32 %v117, 16
    %v803 = vrot.slane %v801, 7
    %v804 = vshll.u32 %v117, 16
    %v806 = vor.u32 %v803, %v804
    %v807 = vrot.slane %v803, 4
    %v809 = vshrl.u32 %v118, 16
    %v811 = vrot.slane %v809, 7
    %v812 = vshll.u32 %v118, 16
    %v814 = vor.u32 %v811, %v812
    %v815 = vsel %vm340, %v807, %v814
    %v816 = vrot.slane %v811, 4
    %v818 = vshrl.u32 %v119, 16
    %v820 = vrot.slane %v818, 7
    %v821 = vshll.u32 %v119, 16
    %v823 = vor.u32 %v820, %v821
    %v824 = vrot.slane %v820, 4
    %v826 = vshrl.u32 %v120, 16
    %v828 = vrot.slane %v826, 7
    %v829 = vshll.u32 %v120, 16
    %v831 = vor.u32 %v828, %v829
    %v832 = vsel %vm340, %v824, %v831
    %v833 = vrot.slane %v828, 4
    %v835 = vshrl.u32 %v121, 16
    %v837 = vrot.slane %v835, 7
    %v838 = vshll.u32 %v121, 16
    %v840 = vor.u32 %v837, %v838
    %v841 = vrot.slane %v837, 4
    %v843 = vshrl.u32 %v122, 16
    %v845 = vrot.slane %v843, 7
    %v846 = vshll.u32 %v122, 16
    %v848 = vor.u32 %v845, %v846
    %v849 = vsel %vm340, %v841, %v848
    %v850 = vrot.slane %v845, 4
    %v852 = vshrl.u32 %v123, 16
    %v854 = vrot.slane %v852, 7
    %v855 = vshll.u32 %v123, 16
    %v857 = vor.u32 %v854, %v855
    %v858 = vrot.slane %v854, 4
    %v860 = vshrl.u32 %v124, 16
    %v862 = vrot.slane %v860, 7
    %v863 = vshll.u32 %v124, 16
    %v865 = vor.u32 %v862, %v863
    %v866 = vsel %vm340, %v858, %v865
    %v867 = vrot.slane %v862, 4
    %v869 = vshrl.u32 %v125, 16
    %v871 = vrot.slane %v869, 7
    %v872 = vshll.u32 %v125, 16
    %v874 = vor.u32 %v871, %v872
    %v875 = vrot.slane %v871, 4
    %v877 = vshrl.u32 %v126, 16
    %v879 = vrot.slane %v877, 7
    %v880 = vshll.u32 %v126, 16
    %v882 = vor.u32 %v879, %v880
    %v883 = vsel %vm340, %v875, %v882
    %v884 = vrot.slane %v879, 4
    %v981 = vld [vmem:[%s140] sm:$0xf]
    %v982 = vsel %vm242, %v347, %v981
    %983 = vst [vmem:[%s140] sm:$0xf] %v982
    %984 = vst [vmem:[%s140 + $0x4] sm:$0xf] %v356
    %v985 = vld [vmem:[%s140 + $0x8] sm:$0x1]
    %v986 = vsel %vm143, %v357, %v985
    %987 = vst [vmem:[%s140 + $0x8] sm:$0x1] %v986
    %v988 = vld [vmem:[%s140 + $0xc] sm:$0xf]
    %v989 = vsel %vm242, %v364, %v988
    %990 = vst [vmem:[%s140 + $0xc] sm:$0xf] %v989
    %991 = vst [vmem:[%s140 + $0x10] sm:$0xf] %v373
    %v992 = vld [vmem:[%s140 + $0x14] sm:$0x1]
    %v993 = vsel %vm143, %v374, %v992
    %994 = vst [vmem:[%s140 + $0x14] sm:$0x1] %v993
    %v995 = vld [vmem:[%s140 + $0x18] sm:$0xf]
    %v996 = vsel %vm242, %v381, %v995
    %997 = vst [vmem:[%s140 + $0x18] sm:$0xf] %v996
    %998 = vst [vmem:[%s140 + $0x1c] sm:$0xf] %v390
    %v999 = vld [vmem:[%s140 + $0x20] sm:$0x1]
    %v1000 = vsel %vm143, %v391, %v999
    %1001 = vst [vmem:[%s140 + $0x20] sm:$0x1] %v1000
    %v1002 = vld [vmem:[%s140 + $0x24] sm:$0xf]
    %v1003 = vsel %vm242, %v398, %v1002
    %1004 = vst [vmem:[%s140 + $0x24] sm:$0xf] %v1003
    %1005 = vst [vmem:[%s140 + $0x28] sm:$0xf] %v407
    %v1006 = vld [vmem:[%s140 + $0x2c] sm:$0x1]
    %v1007 = vsel %vm143, %v408, %v1006
    %1008 = vst [vmem:[%s140 + $0x2c] sm:$0x1] %v1007
    %v1009 = vld [vmem:[%s140 + $0x30] sm:$0xf]
    %v1010 = vsel %vm242, %v415, %v1009
    %1011 = vst [vmem:[%s140 + $0x30] sm:$0xf] %v1010
    %1012 = vst [vmem:[%s140 + $0x34] sm:$0xf] %v424
    %v1013 = vld [vmem:[%s140 + $0x38] sm:$0x1]
    %v1014 = vsel %vm143, %v425, %v1013
    %1015 = vst [vmem:[%s140 + $0x38] sm:$0x1] %v1014
    %v1016 = vld [vmem:[%s140 + $0x3c] sm:$0xf]
    %v1017 = vsel %vm242, %v432, %v1016
    %1018 = vst [vmem:[%s140 + $0x3c] sm:$0xf] %v1017
    %1019 = vst [vmem:[%s140 + $0x40] sm:$0xf] %v441
    %v1020 = vld [vmem:[%s140 + $0x44] sm:$0x1]
    %v1021 = vsel %vm143, %v442, %v1020
    %1022 = vst [vmem:[%s140 + $0x44] sm:$0x1] %v1021
    %v1023 = vld [vmem:[%s140 + $0x48] sm:$0xf]
    %v1024 = vsel %vm242, %v449, %v1023
    %1025 = vst [vmem:[%s140 + $0x48] sm:$0xf] %v1024
    %1026 = vst [vmem:[%s140 + $0x4c] sm:$0xf] %v458
    %v1027 = vld [vmem:[%s140 + $0x50] sm:$0x1]
    %v1028 = vsel %vm143, %v459, %v1027
    %1029 = vst [vmem:[%s140 + $0x50] sm:$0x1] %v1028
    %v1030 = vld [vmem:[%s140 + $0x54] sm:$0xf]
    %v1031 = vsel %vm242, %v466, %v1030
    %1032 = vst [vmem:[%s140 + $0x54] sm:$0xf] %v1031
    %1033 = vst [vmem:[%s140 + $0x58] sm:$0xf] %v475
    %v1034 = vld [vmem:[%s140 + $0x5c] sm:$0x1]
    %v1035 = vsel %vm143, %v476, %v1034
    %1036 = vst [vmem:[%s140 + $0x5c] sm:$0x1] %v1035
    %v1037 = vld [vmem:[%s140 + $0x60] sm:$0xf]
    %v1038 = vsel %vm242, %v483, %v1037
    %1039 = vst [vmem:[%s140 + $0x60] sm:$0xf] %v1038
    %1040 = vst [vmem:[%s140 + $0x64] sm:$0xf] %v492
    %v1041 = vld [vmem:[%s140 + $0x68] sm:$0x1]
    %v1042 = vsel %vm143, %v493, %v1041
    %1043 = vst [vmem:[%s140 + $0x68] sm:$0x1] %v1042
    %v1044 = vld [vmem:[%s140 + $0x6c] sm:$0xf]
    %v1045 = vsel %vm242, %v500, %v1044
    %1046 = vst [vmem:[%s140 + $0x6c] sm:$0xf] %v1045
    %1047 = vst [vmem:[%s140 + $0x70] sm:$0xf] %v509
    %v1048 = vld [vmem:[%s140 + $0x74] sm:$0x1]
    %v1049 = vsel %vm143, %v510, %v1048
    %1050 = vst [vmem:[%s140 + $0x74] sm:$0x1] %v1049
    %v1051 = vld [vmem:[%s140 + $0x78] sm:$0xf]
    %v1052 = vsel %vm242, %v517, %v1051
    %1053 = vst [vmem:[%s140 + $0x78] sm:$0xf] %v1052
    %1054 = vst [vmem:[%s140 + $0x7c] sm:$0xf] %v526
    %v1055 = vld [vmem:[%s140 + $0x80] sm:$0x1]
    %v1056 = vsel %vm143, %v527, %v1055
    %1057 = vst [vmem:[%s140 + $0x80] sm:$0x1] %v1056
    %v1058 = vld [vmem:[%s140 + $0x84] sm:$0xf]
    %v1059 = vsel %vm242, %v534, %v1058
    %1060 = vst [vmem:[%s140 + $0x84] sm:$0xf] %v1059
    %1061 = vst [vmem:[%s140 + $0x88] sm:$0xf] %v543
    %v1062 = vld [vmem:[%s140 + $0x8c] sm:$0x1]
    %v1063 = vsel %vm143, %v544, %v1062
    %1064 = vst [vmem:[%s140 + $0x8c] sm:$0x1] %v1063
    %v1065 = vld [vmem:[%s140 + $0x90] sm:$0xf]
    %v1066 = vsel %vm242, %v551, %v1065
    %1067 = vst [vmem:[%s140 + $0x90] sm:$0xf] %v1066
    %1068 = vst [vmem:[%s140 + $0x94] sm:$0xf] %v560
    %v1069 = vld [vmem:[%s140 + $0x98] sm:$0x1]
    %v1070 = vsel %vm143, %v561, %v1069
    %1071 = vst [vmem:[%s140 + $0x98] sm:$0x1] %v1070
    %v1072 = vld [vmem:[%s140 + $0x9c] sm:$0xf]
    %v1073 = vsel %vm242, %v568, %v1072
    %1074 = vst [vmem:[%s140 + $0x9c] sm:$0xf] %v1073
    %1075 = vst [vmem:[%s140 + $0xa0] sm:$0xf] %v577
    %v1076 = vld [vmem:[%s140 + $0xa4] sm:$0x1]
    %v1077 = vsel %vm143, %v578, %v1076
    %1078 = vst [vmem:[%s140 + $0xa4] sm:$0x1] %v1077
    %v1079 = vld [vmem:[%s140 + $0xa8] sm:$0xf]
    %v1080 = vsel %vm242, %v585, %v1079
    %1081 = vst [vmem:[%s140 + $0xa8] sm:$0xf] %v1080
    %1082 = vst [vmem:[%s140 + $0xac] sm:$0xf] %v594
    %v1083 = vld [vmem:[%s140 + $0xb0] sm:$0x1]
    %v1084 = vsel %vm143, %v595, %v1083
    %1085 = vst [vmem:[%s140 + $0xb0] sm:$0x1] %v1084
    %v1086 = vld [vmem:[%s140 + $0xb4] sm:$0xf]
    %v1087 = vsel %vm242, %v602, %v1086
    %1088 = vst [vmem:[%s140 + $0xb4] sm:$0xf] %v1087
    %1089 = vst [vmem:[%s140 + $0xb8] sm:$0xf] %v611
    %v1090 = vld [vmem:[%s140 + $0xbc] sm:$0x1]
    %v1091 = vsel %vm143, %v612, %v1090
    %1092 = vst [vmem:[%s140 + $0xbc] sm:$0x1] %v1091
    %v1093 = vld [vmem:[%s140 + $0xd8] sm:$0xf]
    %v1094 = vsel %vm242, %v619, %v1093
    %1095 = vst [vmem:[%s140 + $0xd8] sm:$0xf] %v1094
    %1096 = vst [vmem:[%s140 + $0xdc] sm:$0xf] %v628
    %v1097 = vld [vmem:[%s140 + $0xe0] sm:$0x1]
    %v1098 = vsel %vm143, %v629, %v1097
    %1099 = vst [vmem:[%s140 + $0xe0] sm:$0x1] %v1098
    %v1100 = vld [vmem:[%s140 + $0xe4] sm:$0xf]
    %v1101 = vsel %vm242, %v636, %v1100
    %1102 = vst [vmem:[%s140 + $0xe4] sm:$0xf] %v1101
    %1103 = vst [vmem:[%s140 + $0xe8] sm:$0xf] %v645
    %v1104 = vld [vmem:[%s140 + $0xec] sm:$0x1]
    %v1105 = vsel %vm143, %v646, %v1104
    %1106 = vst [vmem:[%s140 + $0xec] sm:$0x1] %v1105
    %v1107 = vld [vmem:[%s140 + $0xf0] sm:$0xf]
    %v1108 = vsel %vm242, %v653, %v1107
    %1109 = vst [vmem:[%s140 + $0xf0] sm:$0xf] %v1108
    %1110 = vst [vmem:[%s140 + $0xf4] sm:$0xf] %v662
    %v1111 = vld [vmem:[%s140 + $0xf8] sm:$0x1]
    %v1112 = vsel %vm143, %v663, %v1111
    %1113 = vst [vmem:[%s140 + $0xf8] sm:$0x1] %v1112
    %v1114 = vld [vmem:[%s140 + $0xfc] sm:$0xf]
    %v1115 = vsel %vm242, %v670, %v1114
    %1116 = vst [vmem:[%s140 + $0xfc] sm:$0xf] %v1115
    %1117 = vst [vmem:[%s140 + $0x100] sm:$0xf] %v679
    %v1118 = vld [vmem:[%s140 + $0x104] sm:$0x1]
    %v1119 = vsel %vm143, %v680, %v1118
    %1120 = vst [vmem:[%s140 + $0x104] sm:$0x1] %v1119
    %v1121 = vld [vmem:[%s140 + $0x108] sm:$0xf]
    %v1122 = vsel %vm242, %v687, %v1121
    %1123 = vst [vmem:[%s140 + $0x108] sm:$0xf] %v1122
    %1124 = vst [vmem:[%s140 + $0x10c] sm:$0xf] %v696
    %v1125 = vld [vmem:[%s140 + $0x110] sm:$0x1]
    %v1126 = vsel %vm143, %v697, %v1125
    %1127 = vst [vmem:[%s140 + $0x110] sm:$0x1] %v1126
    %v1128 = vld [vmem:[%s140 + $0x114] sm:$0xf]
    %v1129 = vsel %vm242, %v704, %v1128
    %1130 = vst [vmem:[%s140 + $0x114] sm:$0xf] %v1129
    %1131 = vst [vmem:[%s140 + $0x118] sm:$0xf] %v713
    %v1132 = vld [vmem:[%s140 + $0x11c] sm:$0x1]
    %v1133 = vsel %vm143, %v714, %v1132
    %1134 = vst [vmem:[%s140 + $0x11c] sm:$0x1] %v1133
    %v1135 = vld [vmem:[%s140 + $0x120] sm:$0xf]
    %v1136 = vsel %vm242, %v721, %v1135
    %1137 = vst [vmem:[%s140 + $0x120] sm:$0xf] %v1136
    %1138 = vst [vmem:[%s140 + $0x124] sm:$0xf] %v730
    %v1139 = vld [vmem:[%s140 + $0x128] sm:$0x1]
    %v1140 = vsel %vm143, %v731, %v1139
    %1141 = vst [vmem:[%s140 + $0x128] sm:$0x1] %v1140
    %v1142 = vld [vmem:[%s140 + $0x12c] sm:$0xf]
    %v1143 = vsel %vm242, %v738, %v1142
    %1144 = vst [vmem:[%s140 + $0x12c] sm:$0xf] %v1143
    %1145 = vst [vmem:[%s140 + $0x130] sm:$0xf] %v747
    %v1146 = vld [vmem:[%s140 + $0x134] sm:$0x1]
    %v1147 = vsel %vm143, %v748, %v1146
    %1148 = vst [vmem:[%s140 + $0x134] sm:$0x1] %v1147
    %v1149 = vld [vmem:[%s140 + $0x138] sm:$0xf]
    %v1150 = vsel %vm242, %v755, %v1149
    %1151 = vst [vmem:[%s140 + $0x138] sm:$0xf] %v1150
    %1152 = vst [vmem:[%s140 + $0x13c] sm:$0xf] %v764
    %v1153 = vld [vmem:[%s140 + $0x140] sm:$0x1]
    %v1154 = vsel %vm143, %v765, %v1153
    %1155 = vst [vmem:[%s140 + $0x140] sm:$0x1] %v1154
    %v1156 = vld [vmem:[%s140 + $0x144] sm:$0xf]
    %v1157 = vsel %vm242, %v772, %v1156
    %1158 = vst [vmem:[%s140 + $0x144] sm:$0xf] %v1157
    %1159 = vst [vmem:[%s140 + $0x148] sm:$0xf] %v781
    %v1160 = vld [vmem:[%s140 + $0x14c] sm:$0x1]
    %v1161 = vsel %vm143, %v782, %v1160
    %1162 = vst [vmem:[%s140 + $0x14c] sm:$0x1] %v1161
    %v1163 = vld [vmem:[%s140 + $0x150] sm:$0xf]
    %v1164 = vsel %vm242, %v789, %v1163
    %1165 = vst [vmem:[%s140 + $0x150] sm:$0xf] %v1164
    %1166 = vst [vmem:[%s140 + $0x154] sm:$0xf] %v798
    %v1167 = vld [vmem:[%s140 + $0x158] sm:$0x1]
    %v1168 = vsel %vm143, %v799, %v1167
    %1169 = vst [vmem:[%s140 + $0x158] sm:$0x1] %v1168
    %v1170 = vld [vmem:[%s140 + $0x15c] sm:$0xf]
    %v1171 = vsel %vm242, %v806, %v1170
    %1172 = vst [vmem:[%s140 + $0x15c] sm:$0xf] %v1171
    %1173 = vst [vmem:[%s140 + $0x160] sm:$0xf] %v815
    %v1174 = vld [vmem:[%s140 + $0x164] sm:$0x1]
    %v1175 = vsel %vm143, %v816, %v1174
    %1176 = vst [vmem:[%s140 + $0x164] sm:$0x1] %v1175
    %v1177 = vld [vmem:[%s140 + $0x168] sm:$0xf]
    %v1178 = vsel %vm242, %v823, %v1177
    %1179 = vst [vmem:[%s140 + $0x168] sm:$0xf] %v1178
    %1180 = vst [vmem:[%s140 + $0x16c] sm:$0xf] %v832
    %v1181 = vld [vmem:[%s140 + $0x170] sm:$0x1]
    %v1182 = vsel %vm143, %v833, %v1181
    %1183 = vst [vmem:[%s140 + $0x170] sm:$0x1] %v1182
    %v1184 = vld [vmem:[%s140 + $0x174] sm:$0xf]
    %v1185 = vsel %vm242, %v840, %v1184
    %1186 = vst [vmem:[%s140 + $0x174] sm:$0xf] %v1185
    %1187 = vst [vmem:[%s140 + $0x178] sm:$0xf] %v849
    %v1188 = vld [vmem:[%s140 + $0x17c] sm:$0x1]
    %v1189 = vsel %vm143, %v850, %v1188
    %1190 = vst [vmem:[%s140 + $0x17c] sm:$0x1] %v1189
    %v1191 = vld [vmem:[%s140 + $0x180] sm:$0xf]
    %v1192 = vsel %vm242, %v857, %v1191
    %1193 = vst [vmem:[%s140 + $0x180] sm:$0xf] %v1192
    %1194 = vst [vmem:[%s140 + $0x184] sm:$0xf] %v866
    %v1195 = vld [vmem:[%s140 + $0x188] sm:$0x1]
    %v1196 = vsel %vm143, %v867, %v1195
    %1197 = vst [vmem:[%s140 + $0x188] sm:$0x1] %v1196
    %v1198 = vld [vmem:[%s140 + $0x18c] sm:$0xf]
    %v1199 = vsel %vm242, %v874, %v1198
    %1200 = vst [vmem:[%s140 + $0x18c] sm:$0xf] %v1199
    %1201 = vst [vmem:[%s140 + $0x190] sm:$0xf] %v883
    %v1202 = vld [vmem:[%s140 + $0x194] sm:$0x1]
    %v1203 = vsel %vm143, %v884, %v1202
    %1204 = vst [vmem:[%s140 + $0x194] sm:$0x1] %v1203
    %v1205 = vld [vmem:[#allocation2] sm:$0xf]
    %v1206 = vld [vmem:[#allocation2 + $0x4] sm:$0xf]
    %v1207 = vld [vmem:[#allocation2 + $0x8] sm:$0xf]
    %v1208 = vld [vmem:[#allocation2 + $0xc] sm:$0xf]
    %v1209 = vld [vmem:[#allocation2 + $0x10] sm:$0xf]
    %v1210 = vld [vmem:[#allocation2 + $0x14] sm:$0xf]
    %v1211 = vld [vmem:[#allocation2 + $0x18] sm:$0xf]
    %v1212 = vld [vmem:[#allocation2 + $0x1c] sm:$0xf]
    %v1213 = vld [vmem:[#allocation2 + $0x20] sm:$0xf]
    %v1214 = vld [vmem:[#allocation2 + $0x24] sm:$0xf]
    %v1215 = vld [vmem:[#allocation2 + $0x28] sm:$0xf]
    %v1216 = vld [vmem:[#allocation2 + $0x2c] sm:$0xf]
    %v1217 = vld [vmem:[#allocation2 + $0x30] sm:$0xf]
    %v1218 = vld [vmem:[#allocation2 + $0x34] sm:$0xf]
    %v1219 = vld [vmem:[#allocation2 + $0x38] sm:$0xf]
    %v1220 = vld [vmem:[#allocation2 + $0x3c] sm:$0xf]
    %v1221 = vld [vmem:[#allocation2 + $0x40] sm:$0xf]
    %v1222 = vld [vmem:[#allocation2 + $0x44] sm:$0xf]
    %v1223 = vld [vmem:[#allocation2 + $0x48] sm:$0xf]
    %v1224 = vld [vmem:[#allocation2 + $0x4c] sm:$0xf]
    %v1225 = vld [vmem:[#allocation2 + $0x50] sm:$0xf]
    %v1226 = vld [vmem:[#allocation2 + $0x54] sm:$0xf]
    %v1227 = vld [vmem:[#allocation2 + $0x58] sm:$0xf]
    %v1228 = vld [vmem:[#allocation2 + $0x5c] sm:$0xf]
    %v1229 = vld [vmem:[#allocation2 + $0x60] sm:$0xf]
    %v1230 = vld [vmem:[#allocation2 + $0x64] sm:$0xf]
    %v1231 = vld [vmem:[#allocation2 + $0x68] sm:$0xf]
    %v1232 = vld [vmem:[#allocation2 + $0x6c] sm:$0xf]
    %v1233 = vld [vmem:[#allocation2 + $0x70] sm:$0xf]
    %v1234 = vld [vmem:[#allocation2 + $0x74] sm:$0xf]
    %v1235 = vld [vmem:[#allocation2 + $0x78] sm:$0xf]
    %v1236 = vld [vmem:[#allocation2 + $0x7c] sm:$0xf]
    %v1237 = vld [vmem:[#allocation2 + $0x80] sm:$0xf]
    %v1238 = vld [vmem:[#allocation2 + $0x84] sm:$0xf]
    %v1239 = vld [vmem:[#allocation2 + $0x88] sm:$0xf]
    %v1240 = vld [vmem:[#allocation2 + $0x8c] sm:$0xf]
    %v1241 = vld [vmem:[#allocation2 + $0x90] sm:$0xf]
    %v1242 = vld [vmem:[#allocation2 + $0x94] sm:$0xf]
    %v1243 = vld [vmem:[#allocation2 + $0x98] sm:$0xf]
    %v1244 = vld [vmem:[#allocation2 + $0x9c] sm:$0xf]
    %v1245 = vld [vmem:[#allocation2 + $0xa0] sm:$0xf]
    %v1246 = vld [vmem:[#allocation2 + $0xa4] sm:$0xf]
    %v1247 = vld [vmem:[#allocation2 + $0xa8] sm:$0xf]
    %v1248 = vld [vmem:[#allocation2 + $0xac] sm:$0xf]
    %v1249 = vld [vmem:[#allocation2 + $0xb0] sm:$0xf]
    %v1250 = vld [vmem:[#allocation2 + $0xb4] sm:$0xf]
    %v1251 = vld [vmem:[#allocation2 + $0xb8] sm:$0xf]
    %v1252 = vld [vmem:[#allocation2 + $0xbc] sm:$0xf]
    %v1253 = vld [vmem:[#allocation2 + $0xd8] sm:$0xf]
    %v1254 = vld [vmem:[#allocation2 + $0xdc] sm:$0xf]
    %v1255 = vld [vmem:[#allocation2 + $0xe0] sm:$0xf]
    %v1256 = vld [vmem:[#allocation2 + $0xe4] sm:$0xf]
    %v1257 = vld [vmem:[#allocation2 + $0xe8] sm:$0xf]
    %v1258 = vld [vmem:[#allocation2 + $0xec] sm:$0xf]
    %v1259 = vld [vmem:[#allocation2 + $0xf0] sm:$0xf]
    %v1260 = vld [vmem:[#allocation2 + $0xf4] sm:$0xf]
    %v1261 = vld [vmem:[#allocation2 + $0xf8] sm:$0xf]
    %v1262 = vld [vmem:[#allocation2 + $0xfc] sm:$0xf]
    %v1263 = vld [vmem:[#allocation2 + $0x100] sm:$0xf]
    %v1264 = vld [vmem:[#allocation2 + $0x104] sm:$0xf]
    %v1265 = vld [vmem:[#allocation2 + $0x108] sm:$0xf]
    %v1266 = vld [vmem:[#allocation2 + $0x10c] sm:$0xf]
    %v1267 = vld [vmem:[#allocation2 + $0x110] sm:$0xf]
    %v1268 = vld [vmem:[#allocation2 + $0x114] sm:$0xf]
    %v1269 = vld [vmem:[#allocation2 + $0x118] sm:$0xf]
    %v1270 = vld [vmem:[#allocation2 + $0x11c] sm:$0xf]
    %v1271 = vld [vmem:[#allocation2 + $0x120] sm:$0xf]
    %v1272 = vld [vmem:[#allocation2 + $0x124] sm:$0xf]
    %v1273 = vld [vmem:[#allocation2 + $0x128] sm:$0xf]
    %v1274 = vld [vmem:[#allocation2 + $0x12c] sm:$0xf]
    %v1275 = vld [vmem:[#allocation2 + $0x130] sm:$0xf]
    %v1276 = vld [vmem:[#allocation2 + $0x134] sm:$0xf]
    %v1277 = vld [vmem:[#allocation2 + $0x138] sm:$0xf]
    %v1278 = vld [vmem:[#allocation2 + $0x13c] sm:$0xf]
    %v1279 = vld [vmem:[#allocation2 + $0x140] sm:$0xf]
    %v1280 = vld [vmem:[#allocation2 + $0x144] sm:$0xf]
    %v1281 = vld [vmem:[#allocation2 + $0x148] sm:$0xf]
    %v1282 = vld [vmem:[#allocation2 + $0x14c] sm:$0xf]
    %v1283 = vld [vmem:[#allocation2 + $0x150] sm:$0xf]
    %v1284 = vld [vmem:[#allocation2 + $0x154] sm:$0xf]
    %v1285 = vld [vmem:[#allocation2 + $0x158] sm:$0xf]
    %v1286 = vld [vmem:[#allocation2 + $0x15c] sm:$0xf]
    %v1287 = vld [vmem:[#allocation2 + $0x160] sm:$0xf]
    %v1288 = vld [vmem:[#allocation2 + $0x164] sm:$0xf]
    %v1289 = vld [vmem:[#allocation2 + $0x168] sm:$0xf]
    %v1290 = vld [vmem:[#allocation2 + $0x16c] sm:$0xf]
    %v1291 = vld [vmem:[#allocation2 + $0x170] sm:$0xf]
    %v1292 = vld [vmem:[#allocation2 + $0x174] sm:$0xf]
    %v1293 = vld [vmem:[#allocation2 + $0x178] sm:$0xf]
    %v1294 = vld [vmem:[#allocation2 + $0x17c] sm:$0xf]
    %v1295 = vld [vmem:[#allocation2 + $0x180] sm:$0xf]
    %v1296 = vld [vmem:[#allocation2 + $0x184] sm:$0xf]
    %v1297 = vld [vmem:[#allocation2 + $0x188] sm:$0xf]
    %v1298 = vld [vmem:[#allocation2 + $0x18c] sm:$0xf]
    %v1299 = vld [vmem:[#allocation2 + $0x190] sm:$0xf]
    %v1300 = vld [vmem:[#allocation2 + $0x194] sm:$0xf]
    %v1301 = vld [vmem:[%s140] sm:$0xf]
    %v1302 = vld [vmem:[%s140 + $0x4] sm:$0xf]
    %v1303 = vld [vmem:[%s140 + $0x8] sm:$0xf]
    %v1304 = vld [vmem:[%s140 + $0xc] sm:$0xf]
    %v1305 = vld [vmem:[%s140 + $0x10] sm:$0xf]
    %v1306 = vld [vmem:[%s140 + $0x14] sm:$0xf]
    %v1307 = vld [vmem:[%s140 + $0x18] sm:$0xf]
    %v1308 = vld [vmem:[%s140 + $0x1c] sm:$0xf]
    %v1309 = vld [vmem:[%s140 + $0x20] sm:$0xf]
    %v1310 = vld [vmem:[%s140 + $0x24] sm:$0xf]
    %v1311 = vld [vmem:[%s140 + $0x28] sm:$0xf]
    %v1312 = vld [vmem:[%s140 + $0x2c] sm:$0xf]
    %v1313 = vld [vmem:[%s140 + $0x30] sm:$0xf]
    %v1314 = vld [vmem:[%s140 + $0x34] sm:$0xf]
    %v1315 = vld [vmem:[%s140 + $0x38] sm:$0xf]
    %v1316 = vld [vmem:[%s140 + $0x3c] sm:$0xf]
    %v1317 = vld [vmem:[%s140 + $0x40] sm:$0xf]
    %v1318 = vld [vmem:[%s140 + $0x44] sm:$0xf]
    %v1319 = vld [vmem:[%s140 + $0x48] sm:$0xf]
    %v1320 = vld [vmem:[%s140 + $0x4c] sm:$0xf]
    %v1321 = vld [vmem:[%s140 + $0x50] sm:$0xf]
    %v1322 = vld [vmem:[%s140 + $0x54] sm:$0xf]
    %v1323 = vld [vmem:[%s140 + $0x58] sm:$0xf]
    %v1324 = vld [vmem:[%s140 + $0x5c] sm:$0xf]
    %v1325 = vld [vmem:[%s140 + $0x60] sm:$0xf]
    %v1326 = vld [vmem:[%s140 + $0x64] sm:$0xf]
    %v1327 = vld [vmem:[%s140 + $0x68] sm:$0xf]
    %v1328 = vld [vmem:[%s140 + $0x6c] sm:$0xf]
    %v1329 = vld [vmem:[%s140 + $0x70] sm:$0xf]
    %v1330 = vld [vmem:[%s140 + $0x74] sm:$0xf]
    %v1331 = vld [vmem:[%s140 + $0x78] sm:$0xf]
    %v1332 = vld [vmem:[%s140 + $0x7c] sm:$0xf]
    %v1333 = vld [vmem:[%s140 + $0x80] sm:$0xf]
    %v1334 = vld [vmem:[%s140 + $0x84] sm:$0xf]
    %v1335 = vld [vmem:[%s140 + $0x88] sm:$0xf]
    %v1336 = vld [vmem:[%s140 + $0x8c] sm:$0xf]
    %v1337 = vld [vmem:[%s140 + $0x90] sm:$0xf]
    %v1338 = vld [vmem:[%s140 + $0x94] sm:$0xf]
    %v1339 = vld [vmem:[%s140 + $0x98] sm:$0xf]
    %v1340 = vld [vmem:[%s140 + $0x9c] sm:$0xf]
    %v1341 = vld [vmem:[%s140 + $0xa0] sm:$0xf]
    %v1342 = vld [vmem:[%s140 + $0xa4] sm:$0xf]
    %v1343 = vld [vmem:[%s140 + $0xa8] sm:$0xf]
    %v1344 = vld [vmem:[%s140 + $0xac] sm:$0xf]
    %v1345 = vld [vmem:[%s140 + $0xb0] sm:$0xf]
    %v1346 = vld [vmem:[%s140 + $0xb4] sm:$0xf]
    %v1347 = vld [vmem:[%s140 + $0xb8] sm:$0xf]
    %v1348 = vld [vmem:[%s140 + $0xbc] sm:$0xf]
    %v1349 = vld [vmem:[%s140 + $0xd8] sm:$0xf]
    %v1350 = vld [vmem:[%s140 + $0xdc] sm:$0xf]
    %v1351 = vld [vmem:[%s140 + $0xe0] sm:$0xf]
    %v1352 = vld [vmem:[%s140 + $0xe4] sm:$0xf]
    %v1353 = vld [vmem:[%s140 + $0xe8] sm:$0xf]
    %v1354 = vld [vmem:[%s140 + $0xec] sm:$0xf]
    %v1355 = vld [vmem:[%s140 + $0xf0] sm:$0xf]
    %v1356 = vld [vmem:[%s140 + $0xf4] sm:$0xf]
    %v1357 = vld [vmem:[%s140 + $0xf8] sm:$0xf]
    %v1358 = vld [vmem:[%s140 + $0xfc] sm:$0xf]
    %v1359 = vld [vmem:[%s140 + $0x100] sm:$0xf]
    %v1360 = vld [vmem:[%s140 + $0x104] sm:$0xf]
    %v1361 = vld [vmem:[%s140 + $0x108] sm:$0xf]
    %v1362 = vld [vmem:[%s140 + $0x10c] sm:$0xf]
    %v1363 = vld [vmem:[%s140 + $0x110] sm:$0xf]
    %v1364 = vld [vmem:[%s140 + $0x114] sm:$0xf]
    %v1365 = vld [vmem:[%s140 + $0x118] sm:$0xf]
    %v1366 = vld [vmem:[%s140 + $0x11c] sm:$0xf]
    %v1367 = vld [vmem:[%s140 + $0x120] sm:$0xf]
    %v1368 = vld [vmem:[%s140 + $0x124] sm:$0xf]
    %v1369 = vld [vmem:[%s140 + $0x128] sm:$0xf]
    %v1370 = vld [vmem:[%s140 + $0x12c] sm:$0xf]
    %v1371 = vld [vmem:[%s140 + $0x130] sm:$0xf]
    %v1372 = vld [vmem:[%s140 + $0x134] sm:$0xf]
    %v1373 = vld [vmem:[%s140 + $0x138] sm:$0xf]
    %v1374 = vld [vmem:[%s140 + $0x13c] sm:$0xf]
    %v1375 = vld [vmem:[%s140 + $0x140] sm:$0xf]
    %v1376 = vld [vmem:[%s140 + $0x144] sm:$0xf]
    %v1377 = vld [vmem:[%s140 + $0x148] sm:$0xf]
    %v1378 = vld [vmem:[%s140 + $0x14c] sm:$0xf]
    %v1379 = vld [vmem:[%s140 + $0x150] sm:$0xf]
    %v1380 = vld [vmem:[%s140 + $0x154] sm:$0xf]
    %v1381 = vld [vmem:[%s140 + $0x158] sm:$0xf]
    %v1382 = vld [vmem:[%s140 + $0x15c] sm:$0xf]
    %v1383 = vld [vmem:[%s140 + $0x160] sm:$0xf]
    %v1384 = vld [vmem:[%s140 + $0x164] sm:$0xf]
    %v1385 = vld [vmem:[%s140 + $0x168] sm:$0xf]
    %v1386 = vld [vmem:[%s140 + $0x16c] sm:$0xf]
    %v1387 = vld [vmem:[%s140 + $0x170] sm:$0xf]
    %v1388 = vld [vmem:[%s140 + $0x174] sm:$0xf]
    %v1389 = vld [vmem:[%s140 + $0x178] sm:$0xf]
    %v1390 = vld [vmem:[%s140 + $0x17c] sm:$0xf]
    %v1391 = vld [vmem:[%s140 + $0x180] sm:$0xf]
    %v1392 = vld [vmem:[%s140 + $0x184] sm:$0xf]
    %v1393 = vld [vmem:[%s140 + $0x188] sm:$0xf]
    %v1394 = vld [vmem:[%s140 + $0x18c] sm:$0xf]
    %v1395 = vld [vmem:[%s140 + $0x190] sm:$0xf]
    %v1396 = vld [vmem:[%s140 + $0x194] sm:$0xf]
    %s1397 = scalar_lea.vmem [#allocation2], 24
    %v1398 = vld [vmem:[%s1397] sm:$0xf]
    %v1399 = vld [vmem:[%s1397 + $0x4] sm:$0xf]
    %v1400 = vld [vmem:[%s1397 + $0x8] sm:$0xf]
    %v1401 = vld [vmem:[%s1397 + $0xc] sm:$0xf]
    %v1402 = vld [vmem:[%s1397 + $0x10] sm:$0xf]
    %v1403 = vld [vmem:[%s1397 + $0x14] sm:$0xf]
    %v1404 = vld [vmem:[%s1397 + $0x18] sm:$0xf]
    %v1405 = vld [vmem:[%s1397 + $0x1c] sm:$0xf]
    %v1406 = vld [vmem:[%s1397 + $0x20] sm:$0xf]
    %v1407 = vld [vmem:[%s1397 + $0x24] sm:$0xf]
    %v1408 = vld [vmem:[%s1397 + $0x28] sm:$0xf]
    %v1409 = vld [vmem:[%s1397 + $0x2c] sm:$0xf]
    %v1410 = vld [vmem:[%s1397 + $0x30] sm:$0xf]
    %v1411 = vld [vmem:[%s1397 + $0x34] sm:$0xf]
    %v1412 = vld [vmem:[%s1397 + $0x38] sm:$0xf]
    %v1413 = vld [vmem:[%s1397 + $0x3c] sm:$0xf]
    %v1414 = vld [vmem:[%s1397 + $0x40] sm:$0xf]
    %v1415 = vld [vmem:[%s1397 + $0x44] sm:$0xf]
    %v1416 = vld [vmem:[%s1397 + $0x48] sm:$0xf]
    %v1417 = vld [vmem:[%s1397 + $0x4c] sm:$0xf]
    %v1418 = vld [vmem:[%s1397 + $0x50] sm:$0xf]
    %v1419 = vld [vmem:[%s1397 + $0x54] sm:$0xf]
    %v1420 = vld [vmem:[%s1397 + $0x58] sm:$0xf]
    %v1421 = vld [vmem:[%s1397 + $0x5c] sm:$0xf]
    %v1422 = vld [vmem:[%s1397 + $0x60] sm:$0xf]
    %v1423 = vld [vmem:[%s1397 + $0x64] sm:$0xf]
    %v1424 = vld [vmem:[%s1397 + $0x68] sm:$0xf]
    %v1425 = vld [vmem:[%s1397 + $0x6c] sm:$0xf]
    %v1426 = vld [vmem:[%s1397 + $0x70] sm:$0xf]
    %v1427 = vld [vmem:[%s1397 + $0x74] sm:$0xf]
    %v1428 = vld [vmem:[%s1397 + $0x78] sm:$0xf]
    %v1429 = vld [vmem:[%s1397 + $0x7c] sm:$0xf]
    %v1430 = vld [vmem:[%s1397 + $0x80] sm:$0xf]
    %v1431 = vld [vmem:[%s1397 + $0x84] sm:$0xf]
    %v1432 = vld [vmem:[%s1397 + $0x88] sm:$0xf]
    %v1433 = vld [vmem:[%s1397 + $0x8c] sm:$0xf]
    %v1434 = vld [vmem:[%s1397 + $0x90] sm:$0xf]
    %v1435 = vld [vmem:[%s1397 + $0x94] sm:$0xf]
    %v1436 = vld [vmem:[%s1397 + $0x98] sm:$0xf]
    %v1437 = vld [vmem:[%s1397 + $0x9c] sm:$0xf]
    %v1438 = vld [vmem:[%s1397 + $0xa0] sm:$0xf]
    %v1439 = vld [vmem:[%s1397 + $0xa4] sm:$0xf]
    %v1440 = vld [vmem:[%s1397 + $0xa8] sm:$0xf]
    %v1441 = vld [vmem:[%s1397 + $0xac] sm:$0xf]
    %v1442 = vld [vmem:[%s1397 + $0xb0] sm:$0xf]
    %v1443 = vld [vmem:[%s1397 + $0xb4] sm:$0xf]
    %v1444 = vld [vmem:[%s1397 + $0xb8] sm:$0xf]
    %v1445 = vld [vmem:[%s1397 + $0xbc] sm:$0xf]
    %v1446 = vld [vmem:[%s1397 + $0xd8] sm:$0xf]
    %v1447 = vld [vmem:[%s1397 + $0xdc] sm:$0xf]
    %v1448 = vld [vmem:[%s1397 + $0xe0] sm:$0xf]
    %v1449 = vld [vmem:[%s1397 + $0xe4] sm:$0xf]
    %v1450 = vld [vmem:[%s1397 + $0xe8] sm:$0xf]
    %v1451 = vld [vmem:[%s1397 + $0xec] sm:$0xf]
    %v1452 = vld [vmem:[%s1397 + $0xf0] sm:$0xf]
    %v1453 = vld [vmem:[%s1397 + $0xf4] sm:$0xf]
    %v1454 = vld [vmem:[%s1397 + $0xf8] sm:$0xf]
    %v1455 = vld [vmem:[%s1397 + $0xfc] sm:$0xf]
    %v1456 = vld [vmem:[%s1397 + $0x100] sm:$0xf]
    %v1457 = vld [vmem:[%s1397 + $0x104] sm:$0xf]
    %v1458 = vld [vmem:[%s1397 + $0x108] sm:$0xf]
    %v1459 = vld [vmem:[%s1397 + $0x10c] sm:$0xf]
    %v1460 = vld [vmem:[%s1397 + $0x110] sm:$0xf]
    %v1461 = vld [vmem:[%s1397 + $0x114] sm:$0xf]
    %v1462 = vld [vmem:[%s1397 + $0x118] sm:$0xf]
    %v1463 = vld [vmem:[%s1397 + $0x11c] sm:$0xf]
    %v1464 = vld [vmem:[%s1397 + $0x120] sm:$0xf]
    %v1465 = vld [vmem:[%s1397 + $0x124] sm:$0xf]
    %v1466 = vld [vmem:[%s1397 + $0x128] sm:$0xf]
    %v1467 = vld [vmem:[%s1397 + $0x12c] sm:$0xf]
    %v1468 = vld [vmem:[%s1397 + $0x130] sm:$0xf]
    %v1469 = vld [vmem:[%s1397 + $0x134] sm:$0xf]
    %v1470 = vld [vmem:[%s1397 + $0x138] sm:$0xf]
    %v1471 = vld [vmem:[%s1397 + $0x13c] sm:$0xf]
    %v1472 = vld [vmem:[%s1397 + $0x140] sm:$0xf]
    %v1473 = vld [vmem:[%s1397 + $0x144] sm:$0xf]
    %v1474 = vld [vmem:[%s1397 + $0x148] sm:$0xf]
    %v1475 = vld [vmem:[%s1397 + $0x14c] sm:$0xf]
    %v1476 = vld [vmem:[%s1397 + $0x150] sm:$0xf]
    %v1477 = vld [vmem:[%s1397 + $0x154] sm:$0xf]
    %v1478 = vld [vmem:[%s1397 + $0x158] sm:$0xf]
    %v1479 = vld [vmem:[%s1397 + $0x15c] sm:$0xf]
    %v1480 = vld [vmem:[%s1397 + $0x160] sm:$0xf]
    %v1481 = vld [vmem:[%s1397 + $0x164] sm:$0xf]
    %v1482 = vld [vmem:[%s1397 + $0x168] sm:$0xf]
    %v1483 = vld [vmem:[%s1397 + $0x16c] sm:$0xf]
    %v1484 = vld [vmem:[%s1397 + $0x170] sm:$0xf]
    %v1485 = vld [vmem:[%s1397 + $0x174] sm:$0xf]
    %v1486 = vld [vmem:[%s1397 + $0x178] sm:$0xf]
    %v1487 = vld [vmem:[%s1397 + $0x17c] sm:$0xf]
    %v1488 = vld [vmem:[%s1397 + $0x180] sm:$0xf]
    %v1489 = vld [vmem:[%s1397 + $0x184] sm:$0xf]
    %v1490 = vld [vmem:[%s1397 + $0x188] sm:$0xf]
    %v1491 = vld [vmem:[%s1397 + $0x18c] sm:$0xf]
    %v1492 = vld [vmem:[%s1397 + $0x190] sm:$0xf]
    %v1493 = vld [vmem:[%s1397 + $0x194] sm:$0xf]
    %v1590 = vunpack.c.l.b16 %v1205
    %v1591 = vunpack.c.l.b16 %v1206
    %v1592 = vunpack.c.l.b16 %v1207
    %v1593 = vunpack.c.l.b16 %v1208
    %v1594 = vunpack.c.l.b16 %v1209
    %v1595 = vunpack.c.l.b16 %v1210
    %v1596 = vunpack.c.l.b16 %v1211
    %v1597 = vunpack.c.l.b16 %v1212
    %v1598 = vunpack.c.l.b16 %v1213
    %v1599 = vunpack.c.l.b16 %v1214
    %v1600 = vunpack.c.l.b16 %v1215
    %v1601 = vunpack.c.l.b16 %v1216
    %v1602 = vunpack.c.l.b16 %v1217
    %v1603 = vunpack.c.l.b16 %v1218
    %v1604 = vunpack.c.l.b16 %v1219
    %v1605 = vunpack.c.l.b16 %v1220
    %v1606 = vunpack.c.l.b16 %v1221
    %v1607 = vunpack.c.l.b16 %v1222
    %v1608 = vunpack.c.l.b16 %v1223
    %v1609 = vunpack.c.l.b16 %v1224
    %v1610 = vunpack.c.l.b16 %v1225
    %v1611 = vunpack.c.l.b16 %v1226
    %v1612 = vunpack.c.l.b16 %v1227
    %v1613 = vunpack.c.l.b16 %v1228
    %v1614 = vunpack.c.l.b16 %v1229
    %v1615 = vunpack.c.l.b16 %v1230
    %v1616 = vunpack.c.l.b16 %v1231
    %v1617 = vunpack.c.l.b16 %v1232
    %v1618 = vunpack.c.l.b16 %v1233
    %v1619 = vunpack.c.l.b16 %v1234
    %v1620 = vunpack.c.l.b16 %v1235
    %v1621 = vunpack.c.l.b16 %v1236
    %v1622 = vunpack.c.l.b16 %v1237
    %v1623 = vunpack.c.l.b16 %v1238
    %v1624 = vunpack.c.l.b16 %v1239
    %v1625 = vunpack.c.l.b16 %v1240
    %v1626 = vunpack.c.l.b16 %v1241
    %v1627 = vunpack.c.l.b16 %v1242
    %v1628 = vunpack.c.l.b16 %v1243
    %v1629 = vunpack.c.l.b16 %v1244
    %v1630 = vunpack.c.l.b16 %v1245
    %v1631 = vunpack.c.l.b16 %v1246
    %v1632 = vunpack.c.l.b16 %v1247
    %v1633 = vunpack.c.l.b16 %v1248
    %v1634 = vunpack.c.l.b16 %v1249
    %v1635 = vunpack.c.l.b16 %v1250
    %v1636 = vunpack.c.l.b16 %v1251
    %v1637 = vunpack.c.l.b16 %v1252
    %v1638 = vunpack.c.l.b16 %v1253
    %v1639 = vunpack.c.l.b16 %v1254
    %v1640 = vunpack.c.l.b16 %v1255
    %v1641 = vunpack.c.l.b16 %v1256
    %v1642 = vunpack.c.l.b16 %v1257
    %v1643 = vunpack.c.l.b16 %v1258
    %v1644 = vunpack.c.l.b16 %v1259
    %v1645 = vunpack.c.l.b16 %v1260
    %v1646 = vunpack.c.l.b16 %v1261
    %v1647 = vunpack.c.l.b16 %v1262
    %v1648 = vunpack.c.l.b16 %v1263
    %v1649 = vunpack.c.l.b16 %v1264
    %v1650 = vunpack.c.l.b16 %v1265
    %v1651 = vunpack.c.l.b16 %v1266
    %v1652 = vunpack.c.l.b16 %v1267
    %v1653 = vunpack.c.l.b16 %v1268
    %v1654 = vunpack.c.l.b16 %v1269
    %v1655 = vunpack.c.l.b16 %v1270
    %v1656 = vunpack.c.l.b16 %v1271
    %v1657 = vunpack.c.l.b16 %v1272
    %v1658 = vunpack.c.l.b16 %v1273
    %v1659 = vunpack.c.l.b16 %v1274
    %v1660 = vunpack.c.l.b16 %v1275
    %v1661 = vunpack.c.l.b16 %v1276
    %v1662 = vunpack.c.l.b16 %v1277
    %v1663 = vunpack.c.l.b16 %v1278
    %v1664 = vunpack.c.l.b16 %v1279
    %v1665 = vunpack.c.l.b16 %v1280
    %v1666 = vunpack.c.l.b16 %v1281
    %v1667 = vunpack.c.l.b16 %v1282
    %v1668 = vunpack.c.l.b16 %v1283
    %v1669 = vunpack.c.l.b16 %v1284
    %v1670 = vunpack.c.l.b16 %v1285
    %v1671 = vunpack.c.l.b16 %v1286
    %v1672 = vunpack.c.l.b16 %v1287
    %v1673 = vunpack.c.l.b16 %v1288
    %v1674 = vunpack.c.l.b16 %v1289
    %v1675 = vunpack.c.l.b16 %v1290
    %v1676 = vunpack.c.l.b16 %v1291
    %v1677 = vunpack.c.l.b16 %v1292
    %v1678 = vunpack.c.l.b16 %v1293
    %v1679 = vunpack.c.l.b16 %v1294
    %v1680 = vunpack.c.l.b16 %v1295
    %v1681 = vunpack.c.l.b16 %v1296
    %v1682 = vunpack.c.l.b16 %v1297
    %v1683 = vunpack.c.l.b16 %v1298
    %v1684 = vunpack.c.l.b16 %v1299
    %v1685 = vunpack.c.l.b16 %v1300
    %v1782 = vunpack.c.l.b16 %v1301
    %v1783 = vunpack.c.l.b16 %v1302
    %v1784 = vunpack.c.l.b16 %v1303
    %v1785 = vunpack.c.l.b16 %v1304
    %v1786 = vunpack.c.l.b16 %v1305
    %v1787 = vunpack.c.l.b16 %v1306
    %v1788 = vunpack.c.l.b16 %v1307
    %v1789 = vunpack.c.l.b16 %v1308
    %v1790 = vunpack.c.l.b16 %v1309
    %v1791 = vunpack.c.l.b16 %v1310
    %v1792 = vunpack.c.l.b16 %v1311
    %v1793 = vunpack.c.l.b16 %v1312
    %v1794 = vunpack.c.l.b16 %v1313
    %v1795 = vunpack.c.l.b16 %v1314
    %v1796 = vunpack.c.l.b16 %v1315
    %v1797 = vunpack.c.l.b16 %v1316
    %v1798 = vunpack.c.l.b16 %v1317
    %v1799 = vunpack.c.l.b16 %v1318
    %v1800 = vunpack.c.l.b16 %v1319
    %v1801 = vunpack.c.l.b16 %v1320
    %v1802 = vunpack.c.l.b16 %v1321
    %v1803 = vunpack.c.l.b16 %v1322
    %v1804 = vunpack.c.l.b16 %v1323
    %v1805 = vunpack.c.l.b16 %v1324
    %v1806 = vunpack.c.l.b16 %v1325
    %v1807 = vunpack.c.l.b16 %v1326
    %v1808 = vunpack.c.l.b16 %v1327
    %v1809 = vunpack.c.l.b16 %v1328
    %v1810 = vunpack.c.l.b16 %v1329
    %v1811 = vunpack.c.l.b16 %v1330
    %v1812 = vunpack.c.l.b16 %v1331
    %v1813 = vunpack.c.l.b16 %v1332
    %v1814 = vunpack.c.l.b16 %v1333
    %v1815 = vunpack.c.l.b16 %v1334
    %v1816 = vunpack.c.l.b16 %v1335
    %v1817 = vunpack.c.l.b16 %v1336
    %v1818 = vunpack.c.l.b16 %v1337
    %v1819 = vunpack.c.l.b16 %v1338
    %v1820 = vunpack.c.l.b16 %v1339
    %v1821 = vunpack.c.l.b16 %v1340
    %v1822 = vunpack.c.l.b16 %v1341
    %v1823 = vunpack.c.l.b16 %v1342
    %v1824 = vunpack.c.l.b16 %v1343
    %v1825 = vunpack.c.l.b16 %v1344
    %v1826 = vunpack.c.l.b16 %v1345
    %v1827 = vunpack.c.l.b16 %v1346
    %v1828 = vunpack.c.l.b16 %v1347
    %v1829 = vunpack.c.l.b16 %v1348
    %v1830 = vunpack.c.l.b16 %v1349
    %v1831 = vunpack.c.l.b16 %v1350
    %v1832 = vunpack.c.l.b16 %v1351
    %v1833 = vunpack.c.l.b16 %v1352
    %v1834 = vunpack.c.l.b16 %v1353
    %v1835 = vunpack.c.l.b16 %v1354
    %v1836 = vunpack.c.l.b16 %v1355
    %v1837 = vunpack.c.l.b16 %v1356
    %v1838 = vunpack.c.l.b16 %v1357
    %v1839 = vunpack.c.l.b16 %v1358
    %v1840 = vunpack.c.l.b16 %v1359
    %v1841 = vunpack.c.l.b16 %v1360
    %v1842 = vunpack.c.l.b16 %v1361
    %v1843 = vunpack.c.l.b16 %v1362
    %v1844 = vunpack.c.l.b16 %v1363
    %v1845 = vunpack.c.l.b16 %v1364
    %v1846 = vunpack.c.l.b16 %v1365
    %v1847 = vunpack.c.l.b16 %v1366
    %v1848 = vunpack.c.l.b16 %v1367
    %v1849 = vunpack.c.l.b16 %v1368
    %v1850 = vunpack.c.l.b16 %v1369
    %v1851 = vunpack.c.l.b16 %v1370
    %v1852 = vunpack.c.l.b16 %v1371
    %v1853 = vunpack.c.l.b16 %v1372
    %v1854 = vunpack.c.l.b16 %v1373
    %v1855 = vunpack.c.l.b16 %v1374
    %v1856 = vunpack.c.l.b16 %v1375
    %v1857 = vunpack.c.l.b16 %v1376
    %v1858 = vunpack.c.l.b16 %v1377
    %v1859 = vunpack.c.l.b16 %v1378
    %v1860 = vunpack.c.l.b16 %v1379
    %v1861 = vunpack.c.l.b16 %v1380
    %v1862 = vunpack.c.l.b16 %v1381
    %v1863 = vunpack.c.l.b16 %v1382
    %v1864 = vunpack.c.l.b16 %v1383
    %v1865 = vunpack.c.l.b16 %v1384
    %v1866 = vunpack.c.l.b16 %v1385
    %v1867 = vunpack.c.l.b16 %v1386
    %v1868 = vunpack.c.l.b16 %v1387
    %v1869 = vunpack.c.l.b16 %v1388
    %v1870 = vunpack.c.l.b16 %v1389
    %v1871 = vunpack.c.l.b16 %v1390
    %v1872 = vunpack.c.l.b16 %v1391
    %v1873 = vunpack.c.l.b16 %v1392
    %v1874 = vunpack.c.l.b16 %v1393
    %v1875 = vunpack.c.l.b16 %v1394
    %v1876 = vunpack.c.l.b16 %v1395
    %v1877 = vunpack.c.l.b16 %v1396
    %v1974 = vunpack.c.l.b16 %v1398
    %v1975 = vunpack.c.l.b16 %v1399
    %v1976 = vunpack.c.l.b16 %v1400
    %v1977 = vunpack.c.l.b16 %v1401
    %v1978 = vunpack.c.l.b16 %v1402
    %v1979 = vunpack.c.l.b16 %v1403
    %v1980 = vunpack.c.l.b16 %v1404
    %v1981 = vunpack.c.l.b16 %v1405
    %v1982 = vunpack.c.l.b16 %v1406
    %v1983 = vunpack.c.l.b16 %v1407
    %v1984 = vunpack.c.l.b16 %v1408
    %v1985 = vunpack.c.l.b16 %v1409
    %v1986 = vunpack.c.l.b16 %v1410
    %v1987 = vunpack.c.l.b16 %v1411
    %v1988 = vunpack.c.l.b16 %v1412
    %v1989 = vunpack.c.l.b16 %v1413
    %v1990 = vunpack.c.l.b16 %v1414
    %v1991 = vunpack.c.l.b16 %v1415
    %v1992 = vunpack.c.l.b16 %v1416
    %v1993 = vunpack.c.l.b16 %v1417
    %v1994 = vunpack.c.l.b16 %v1418
    %v1995 = vunpack.c.l.b16 %v1419
    %v1996 = vunpack.c.l.b16 %v1420
    %v1997 = vunpack.c.l.b16 %v1421
    %v1998 = vunpack.c.l.b16 %v1422
    %v1999 = vunpack.c.l.b16 %v1423
    %v2000 = vunpack.c.l.b16 %v1424
    %v2001 = vunpack.c.l.b16 %v1425
    %v2002 = vunpack.c.l.b16 %v1426
    %v2003 = vunpack.c.l.b16 %v1427
    %v2004 = vunpack.c.l.b16 %v1428
    %v2005 = vunpack.c.l.b16 %v1429
    %v2006 = vunpack.c.l.b16 %v1430
    %v2007 = vunpack.c.l.b16 %v1431
    %v2008 = vunpack.c.l.b16 %v1432
    %v2009 = vunpack.c.l.b16 %v1433
    %v2010 = vunpack.c.l.b16 %v1434
    %v2011 = vunpack.c.l.b16 %v1435
    %v2012 = vunpack.c.l.b16 %v1436
    %v2013 = vunpack.c.l.b16 %v1437
    %v2014 = vunpack.c.l.b16 %v1438
    %v2015 = vunpack.c.l.b16 %v1439
    %v2016 = vunpack.c.l.b16 %v1440
    %v2017 = vunpack.c.l.b16 %v1441
    %v2018 = vunpack.c.l.b16 %v1442
    %v2019 = vunpack.c.l.b16 %v1443
    %v2020 = vunpack.c.l.b16 %v1444
    %v2021 = vunpack.c.l.b16 %v1445
    %v2022 = vunpack.c.l.b16 %v1446
    %v2023 = vunpack.c.l.b16 %v1447
    %v2024 = vunpack.c.l.b16 %v1448
    %v2025 = vunpack.c.l.b16 %v1449
    %v2026 = vunpack.c.l.b16 %v1450
    %v2027 = vunpack.c.l.b16 %v1451
    %v2028 = vunpack.c.l.b16 %v1452
    %v2029 = vunpack.c.l.b16 %v1453
    %v2030 = vunpack.c.l.b16 %v1454
    %v2031 = vunpack.c.l.b16 %v1455
    %v2032 = vunpack.c.l.b16 %v1456
    %v2033 = vunpack.c.l.b16 %v1457
    %v2034 = vunpack.c.l.b16 %v1458
    %v2035 = vunpack.c.l.b16 %v1459
    %v2036 = vunpack.c.l.b16 %v1460
    %v2037 = vunpack.c.l.b16 %v1461
    %v2038 = vunpack.c.l.b16 %v1462
    %v2039 = vunpack.c.l.b16 %v1463
    %v2040 = vunpack.c.l.b16 %v1464
    %v2041 = vunpack.c.l.b16 %v1465
    %v2042 = vunpack.c.l.b16 %v1466
    %v2043 = vunpack.c.l.b16 %v1467
    %v2044 = vunpack.c.l.b16 %v1468
    %v2045 = vunpack.c.l.b16 %v1469
    %v2046 = vunpack.c.l.b16 %v1470
    %v2047 = vunpack.c.l.b16 %v1471
    %v2048 = vunpack.c.l.b16 %v1472
    %v2049 = vunpack.c.l.b16 %v1473
    %v2050 = vunpack.c.l.b16 %v1474
    %v2051 = vunpack.c.l.b16 %v1475
    %v2052 = vunpack.c.l.b16 %v1476
    %v2053 = vunpack.c.l.b16 %v1477
    %v2054 = vunpack.c.l.b16 %v1478
    %v2055 = vunpack.c.l.b16 %v1479
    %v2056 = vunpack.c.l.b16 %v1480
    %v2057 = vunpack.c.l.b16 %v1481
    %v2058 = vunpack.c.l.b16 %v1482
    %v2059 = vunpack.c.l.b16 %v1483
    %v2060 = vunpack.c.l.b16 %v1484
    %v2061 = vunpack.c.l.b16 %v1485
    %v2062 = vunpack.c.l.b16 %v1486
    %v2063 = vunpack.c.l.b16 %v1487
    %v2064 = vunpack.c.l.b16 %v1488
    %v2065 = vunpack.c.l.b16 %v1489
    %v2066 = vunpack.c.l.b16 %v1490
    %v2067 = vunpack.c.l.b16 %v1491
    %v2068 = vunpack.c.l.b16 %v1492
    %v2069 = vunpack.c.l.b16 %v1493
    %v2070 = vld [vmem:[#allocation7] sm:$0xff]
    %v2071 = vld [vmem:[#allocation7 + $0x8] sm:$0xf]
    %v2072 = vld [vmem:[#allocation7 + $0xc] sm:$0xff]
    %v2073 = vld [vmem:[#allocation7 + $0x14] sm:$0xf]
    %v2074 = vld [vmem:[#allocation7 + $0x18] sm:$0xff]
    %v2075 = vld [vmem:[#allocation7 + $0x20] sm:$0xf]
    %v2076 = vld [vmem:[#allocation7 + $0x24] sm:$0xff]
    %v2077 = vld [vmem:[#allocation7 + $0x2c] sm:$0xf]
    %v2078 = vld [vmem:[#allocation7 + $0x30] sm:$0xff]
    %v2079 = vld [vmem:[#allocation7 + $0x38] sm:$0xf]
    %v2080 = vld [vmem:[#allocation7 + $0x3c] sm:$0xff]
    %v2081 = vld [vmem:[#allocation7 + $0x44] sm:$0xf]
    %v2082 = vld [vmem:[#allocation7 + $0x48] sm:$0xff]
    %v2083 = vld [vmem:[#allocation7 + $0x50] sm:$0xf]
    %v2084 = vld [vmem:[#allocation7 + $0x54] sm:$0xff]
    %v2085 = vld [vmem:[#allocation7 + $0x5c] sm:$0xf]
    %v2086 = vld [vmem:[#allocation7 + $0x60] sm:$0xff]
    %v2087 = vld [vmem:[#allocation7 + $0x68] sm:$0xf]
    %v2088 = vld [vmem:[#allocation7 + $0x6c] sm:$0xff]
    %v2089 = vld [vmem:[#allocation7 + $0x74] sm:$0xf]
    %v2090 = vld [vmem:[#allocation7 + $0x78] sm:$0xff]
    %v2091 = vld [vmem:[#allocation7 + $0x80] sm:$0xf]
    %v2092 = vld [vmem:[#allocation7 + $0x84] sm:$0xff]
    %v2093 = vld [vmem:[#allocation7 + $0x8c] sm:$0xf]
    %v2094 = vld [vmem:[#allocation7 + $0x90] sm:$0xff]
    %v2095 = vld [vmem:[#allocation7 + $0x98] sm:$0xf]
    %v2096 = vld [vmem:[#allocation7 + $0x9c] sm:$0xff]
    %v2097 = vld [vmem:[#allocation7 + $0xa4] sm:$0xf]
    %v2098 = vld [vmem:[#allocation7 + $0xa8] sm:$0xff]
    %v2099 = vld [vmem:[#allocation7 + $0xb0] sm:$0xf]
    %v2100 = vld [vmem:[#allocation7 + $0xb4] sm:$0xff]
    %v2101 = vld [vmem:[#allocation7 + $0xbc] sm:$0xf]
    %v2102 = vld [vmem:[#allocation7 + $0xc0] sm:$0xff]
    %v2103 = vld [vmem:[#allocation7 + $0xc8] sm:$0xf]
    %v2104 = vld [vmem:[#allocation7 + $0xcc] sm:$0xff]
    %v2105 = vld [vmem:[#allocation7 + $0xd4] sm:$0xf]
    %v2106 = vld [vmem:[#allocation7 + $0xd8] sm:$0xff]
    %v2107 = vld [vmem:[#allocation7 + $0xe0] sm:$0xf]
    %v2108 = vld [vmem:[#allocation7 + $0xe4] sm:$0xff]
    %v2109 = vld [vmem:[#allocation7 + $0xec] sm:$0xf]
    %v2110 = vld [vmem:[#allocation7 + $0xf0] sm:$0xff]
    %v2111 = vld [vmem:[#allocation7 + $0xf8] sm:$0xf]
    %v2112 = vld [vmem:[#allocation7 + $0xfc] sm:$0xff]
    %v2113 = vld [vmem:[#allocation7 + $0x104] sm:$0xf]
    %v2114 = vld [vmem:[#allocation7 + $0x108] sm:$0xff]
    %v2115 = vld [vmem:[#allocation7 + $0x110] sm:$0xf]
    %v2116 = vld [vmem:[#allocation7 + $0x114] sm:$0xff]
    %v2117 = vld [vmem:[#allocation7 + $0x11c] sm:$0xf]
    %v2118 = vld [vmem:[#allocation7 + $0x120] sm:$0xff]
    %v2119 = vld [vmem:[#allocation7 + $0x128] sm:$0xf]
    %v2120 = vld [vmem:[#allocation7 + $0x12c] sm:$0xff]
    %v2121 = vld [vmem:[#allocation7 + $0x134] sm:$0xf]
    %v2122 = vld [vmem:[#allocation7 + $0x138] sm:$0xff]
    %v2123 = vld [vmem:[#allocation7 + $0x140] sm:$0xf]
    %v2124 = vld [vmem:[#allocation7 + $0x144] sm:$0xff]
    %v2125 = vld [vmem:[#allocation7 + $0x14c] sm:$0xf]
    %v2126 = vld [vmem:[#allocation7 + $0x150] sm:$0xff]
    %v2127 = vld [vmem:[#allocation7 + $0x158] sm:$0xf]
    %v2128 = vld [vmem:[#allocation7 + $0x15c] sm:$0xff]
    %v2129 = vld [vmem:[#allocation7 + $0x164] sm:$0xf]
    %v2130 = vld [vmem:[#allocation7 + $0x168] sm:$0xff]
    %v2131 = vld [vmem:[#allocation7 + $0x170] sm:$0xf]
    %v2132 = vld [vmem:[#allocation7 + $0x174] sm:$0xff]
    %v2133 = vld [vmem:[#allocation7 + $0x17c] sm:$0xf]
    %v2134 = vld [vmem:[#allocation7 + $0x180] sm:$0xff]
    %v2135 = vld [vmem:[#allocation7 + $0x188] sm:$0xf]
    %v2136 = vld [vmem:[#allocation7 + $0x18c] sm:$0xff]
    %v2137 = vld [vmem:[#allocation7 + $0x194] sm:$0xf]
    %v2138 = vld [vmem:[#allocation7 + $0x198] sm:$0xff]
    %v2139 = vld [vmem:[#allocation7 + $0x1a0] sm:$0xf]
    %v2140 = vld [vmem:[#allocation7 + $0x1a4] sm:$0xff]
    %v2141 = vld [vmem:[#allocation7 + $0x1ac] sm:$0xf]
    %v2142 = vld [vmem:[#allocation7 + $0x1b0] sm:$0xff]
    %v2143 = vld [vmem:[#allocation7 + $0x1b8] sm:$0xf]
    %v2144 = vld [vmem:[#allocation7 + $0x1bc] sm:$0xff]
    %v2145 = vld [vmem:[#allocation7 + $0x1c4] sm:$0xf]
    %v2146 = vld [vmem:[#allocation7 + $0x1c8] sm:$0xff]
    %v2147 = vld [vmem:[#allocation7 + $0x1d0] sm:$0xf]
    %v2148 = vld [vmem:[#allocation7 + $0x1d4] sm:$0xff]
    %v2149 = vld [vmem:[#allocation7 + $0x1dc] sm:$0xf]
    %v2150 = vld [vmem:[#allocation7 + $0x1e0] sm:$0xff]
    %v2151 = vld [vmem:[#allocation7 + $0x1e8] sm:$0xf]
    %v2152 = vld [vmem:[#allocation7 + $0x1ec] sm:$0xff]
    %v2153 = vld [vmem:[#allocation7 + $0x1f4] sm:$0xf]
    %v2154 = vld [vmem:[#allocation7 + $0x1f8] sm:$0xff]
    %v2155 = vld [vmem:[#allocation7 + $0x200] sm:$0xf]
    %v2156 = vld [vmem:[#allocation7 + $0x204] sm:$0xff]
    %v2157 = vld [vmem:[#allocation7 + $0x20c] sm:$0xf]
    %v2158 = vld [vmem:[#allocation7 + $0x210] sm:$0xff]
    %v2159 = vld [vmem:[#allocation7 + $0x218] sm:$0xf]
    %v2160 = vld [vmem:[#allocation7 + $0x21c] sm:$0xff]
    %v2161 = vld [vmem:[#allocation7 + $0x224] sm:$0xf]
    %v2162 = vld [vmem:[#allocation7 + $0x228] sm:$0xff]
    %v2163 = vld [vmem:[#allocation7 + $0x230] sm:$0xf]
    %v2164 = vld [vmem:[#allocation7 + $0x234] sm:$0xff]
    %v2165 = vld [vmem:[#allocation7 + $0x23c] sm:$0xf]
    %v2166 = vpack.c.b16 %v1591, %v1590
    %v2167 = vpack.c.b16 %v1783, %v1782
    %v2168 = vpack.c.b16 %v1975, %v1974
    %v2169 = vpack.c.b16 %v1593, %v1592
    %v2170 = vpack.c.b16 %v1785, %v1784
    %v2171 = vpack.c.b16 %v1977, %v1976
    %v2172 = vpack.c.b16 %v1595, %v1594
    %v2173 = vpack.c.b16 %v1787, %v1786
    %v2174 = vpack.c.b16 %v1979, %v1978
    %v2175 = vpack.c.b16 %v1597, %v1596
    %v2176 = vpack.c.b16 %v1789, %v1788
    %v2177 = vpack.c.b16 %v1981, %v1980
    %v2178 = vpack.c.b16 %v1599, %v1598
    %v2179 = vpack.c.b16 %v1791, %v1790
    %v2180 = vpack.c.b16 %v1983, %v1982
    %v2181 = vpack.c.b16 %v1601, %v1600
    %v2182 = vpack.c.b16 %v1793, %v1792
    %v2183 = vpack.c.b16 %v1985, %v1984
    %v2184 = vpack.c.b16 %v1603, %v1602
    %v2185 = vpack.c.b16 %v1795, %v1794
    %v2186 = vpack.c.b16 %v1987, %v1986
    %v2187 = vpack.c.b16 %v1605, %v1604
    %v2188 = vpack.c.b16 %v1797, %v1796
    %v2189 = vpack.c.b16 %v1989, %v1988
    %v2190 = vpack.c.b16 %v1607, %v1606
    %v2191 = vpack.c.b16 %v1799, %v1798
    %v2192 = vpack.c.b16 %v1991, %v1990
    %v2193 = vpack.c.b16 %v1609, %v1608
    %v2194 = vpack.c.b16 %v1801, %v1800
    %v2195 = vpack.c.b16 %v1993, %v1992
    %v2196 = vpack.c.b16 %v1611, %v1610
    %v2197 = vpack.c.b16 %v1803, %v1802
    %v2198 = vpack.c.b16 %v1995, %v1994
    %v2199 = vpack.c.b16 %v1613, %v1612
    %v2200 = vpack.c.b16 %v1805, %v1804
    %v2201 = vpack.c.b16 %v1997, %v1996
    %v2202 = vpack.c.b16 %v1615, %v1614
    %v2203 = vpack.c.b16 %v1807, %v1806
    %v2204 = vpack.c.b16 %v1999, %v1998
    %v2205 = vpack.c.b16 %v1617, %v1616
    %v2206 = vpack.c.b16 %v1809, %v1808
    %v2207 = vpack.c.b16 %v2001, %v2000
    %v2208 = vpack.c.b16 %v1619, %v1618
    %v2209 = vpack.c.b16 %v1811, %v1810
    %v2210 = vpack.c.b16 %v2003, %v2002
    %v2211 = vpack.c.b16 %v1621, %v1620
    %v2212 = vpack.c.b16 %v1813, %v1812
    %v2213 = vpack.c.b16 %v2005, %v2004
    %v2214 = vpack.c.b16 %v1623, %v1622
    %v2215 = vpack.c.b16 %v1815, %v1814
    %v2216 = vpack.c.b16 %v2007, %v2006
    %v2217 = vpack.c.b16 %v1625, %v1624
    %v2218 = vpack.c.b16 %v1817, %v1816
    %v2219 = vpack.c.b16 %v2009, %v2008
    %v2220 = vpack.c.b16 %v1627, %v1626
    %v2221 = vpack.c.b16 %v1819, %v1818
    %v2222 = vpack.c.b16 %v2011, %v2010
    %v2223 = vpack.c.b16 %v1629, %v1628
    %v2224 = vpack.c.b16 %v1821, %v1820
    %v2225 = vpack.c.b16 %v2013, %v2012
    %v2226 = vpack.c.b16 %v1631, %v1630
    %v2227 = vpack.c.b16 %v1823, %v1822
    %v2228 = vpack.c.b16 %v2015, %v2014
    %v2229 = vpack.c.b16 %v1633, %v1632
    %v2230 = vpack.c.b16 %v1825, %v1824
    %v2231 = vpack.c.b16 %v2017, %v2016
    %v2232 = vpack.c.b16 %v1635, %v1634
    %v2233 = vpack.c.b16 %v1827, %v1826
    %v2234 = vpack.c.b16 %v2019, %v2018
    %v2235 = vpack.c.b16 %v1637, %v1636
    %v2236 = vpack.c.b16 %v1829, %v1828
    %v2237 = vpack.c.b16 %v2021, %v2020
    %v2238 = vpack.c.b16 %v1639, %v1638
    %v2239 = vpack.c.b16 %v1831, %v1830
    %v2240 = vpack.c.b16 %v2023, %v2022
    %v2241 = vpack.c.b16 %v1641, %v1640
    %v2242 = vpack.c.b16 %v1833, %v1832
    %v2243 = vpack.c.b16 %v2025, %v2024
    %v2244 = vpack.c.b16 %v1643, %v1642
    %v2245 = vpack.c.b16 %v1835, %v1834
    %v2246 = vpack.c.b16 %v2027, %v2026
    %v2247 = vpack.c.b16 %v1645, %v1644
    %v2248 = vpack.c.b16 %v1837, %v1836
    %v2249 = vpack.c.b16 %v2029, %v2028
    %v2250 = vpack.c.b16 %v1647, %v1646
    %v2251 = vpack.c.b16 %v1839, %v1838
    %v2252 = vpack.c.b16 %v2031, %v2030
    %v2253 = vpack.c.b16 %v1649, %v1648
    %v2254 = vpack.c.b16 %v1841, %v1840
    %v2255 = vpack.c.b16 %v2033, %v2032
    %v2256 = vpack.c.b16 %v1651, %v1650
    %v2257 = vpack.c.b16 %v1843, %v1842
    %v2258 = vpack.c.b16 %v2035, %v2034
    %v2259 = vpack.c.b16 %v1653, %v1652
    %v2260 = vpack.c.b16 %v1845, %v1844
    %v2261 = vpack.c.b16 %v2037, %v2036
    %v2262 = vpack.c.b16 %v1655, %v1654
    %v2263 = vpack.c.b16 %v1847, %v1846
    %v2264 = vpack.c.b16 %v2039, %v2038
    %v2265 = vpack.c.b16 %v1657, %v1656
    %v2266 = vpack.c.b16 %v1849, %v1848
    %v2267 = vpack.c.b16 %v2041, %v2040
    %v2268 = vpack.c.b16 %v1659, %v1658
    %v2269 = vpack.c.b16 %v1851, %v1850
    %v2270 = vpack.c.b16 %v2043, %v2042
    %v2271 = vpack.c.b16 %v1661, %v1660
    %v2272 = vpack.c.b16 %v1853, %v1852
    %v2273 = vpack.c.b16 %v2045, %v2044
    %v2274 = vpack.c.b16 %v1663, %v1662
    %v2275 = vpack.c.b16 %v1855, %v1854
    %v2276 = vpack.c.b16 %v2047, %v2046
    %v2277 = vpack.c.b16 %v1665, %v1664
    %v2278 = vpack.c.b16 %v1857, %v1856
    %v2279 = vpack.c.b16 %v2049, %v2048
    %v2280 = vpack.c.b16 %v1667, %v1666
    %v2281 = vpack.c.b16 %v1859, %v1858
    %v2282 = vpack.c.b16 %v2051, %v2050
    %v2283 = vpack.c.b16 %v1669, %v1668
    %v2284 = vpack.c.b16 %v1861, %v1860
    %v2285 = vpack.c.b16 %v2053, %v2052
    %v2286 = vpack.c.b16 %v1671, %v1670
    %v2287 = vpack.c.b16 %v1863, %v1862
    %v2288 = vpack.c.b16 %v2055, %v2054
    %v2289 = vpack.c.b16 %v1673, %v1672
    %v2290 = vpack.c.b16 %v1865, %v1864
    %v2291 = vpack.c.b16 %v2057, %v2056
    %v2292 = vpack.c.b16 %v1675, %v1674
    %v2293 = vpack.c.b16 %v1867, %v1866
    %v2294 = vpack.c.b16 %v2059, %v2058
    %v2295 = vpack.c.b16 %v1677, %v1676
    %v2296 = vpack.c.b16 %v1869, %v1868
    %v2297 = vpack.c.b16 %v2061, %v2060
    %v2298 = vpack.c.b16 %v1679, %v1678
    %v2299 = vpack.c.b16 %v1871, %v1870
    %v2300 = vpack.c.b16 %v2063, %v2062
    %v2301 = vpack.c.b16 %v1681, %v1680
    %v2302 = vpack.c.b16 %v1873, %v1872
    %v2303 = vpack.c.b16 %v2065, %v2064
    %v2304 = vpack.c.b16 %v1683, %v1682
    %v2305 = vpack.c.b16 %v1875, %v1874
    %v2306 = vpack.c.b16 %v2067, %v2066
    %v2307 = vpack.c.b16 %v1685, %v1684
    %v2308 = vpack.c.b16 %v1877, %v1876
    %v2309 = vpack.c.b16 %v2069, %v2068
    %v2550 = vunpack.c.l.b16 %v2070
    %v2551 = vunpack.c.h.b16 %v2070
    %v2552 = vunpack.c.l.b16 %v2071
    %v2553 = vunpack.c.l.b16 %v2072
    %v2554 = vunpack.c.h.b16 %v2072
    %v2555 = vunpack.c.l.b16 %v2073
    %v2556 = vunpack.c.l.b16 %v2074
    %v2557 = vunpack.c.h.b16 %v2074
    %v2558 = vunpack.c.l.b16 %v2075
    %v2559 = vunpack.c.l.b16 %v2076
    %v2560 = vunpack.c.h.b16 %v2076
    %v2561 = vunpack.c.l.b16 %v2077
    %v2562 = vunpack.c.l.b16 %v2078
    %v2563 = vunpack.c.h.b16 %v2078
    %v2564 = vunpack.c.l.b16 %v2079
    %v2565 = vunpack.c.l.b16 %v2080
    %v2566 = vunpack.c.h.b16 %v2080
    %v2567 = vunpack.c.l.b16 %v2081
    %v2568 = vunpack.c.l.b16 %v2082
    %v2569 = vunpack.c.h.b16 %v2082
    %v2570 = vunpack.c.l.b16 %v2083
    %v2571 = vunpack.c.l.b16 %v2084
    %v2572 = vunpack.c.h.b16 %v2084
    %v2573 = vunpack.c.l.b16 %v2085
    %v2574 = vunpack.c.l.b16 %v2086
    %v2575 = vunpack.c.h.b16 %v2086
    %v2576 = vunpack.c.l.b16 %v2087
    %v2577 = vunpack.c.l.b16 %v2088
    %v2578 = vunpack.c.h.b16 %v2088
    %v2579 = vunpack.c.l.b16 %v2089
    %v2580 = vunpack.c.l.b16 %v2090
    %v2581 = vunpack.c.h.b16 %v2090
    %v2582 = vunpack.c.l.b16 %v2091
    %v2583 = vunpack.c.l.b16 %v2092
    %v2584 = vunpack.c.h.b16 %v2092
    %v2585 = vunpack.c.l.b16 %v2093
    %v2586 = vunpack.c.l.b16 %v2094
    %v2587 = vunpack.c.h.b16 %v2094
    %v2588 = vunpack.c.l.b16 %v2095
    %v2589 = vunpack.c.l.b16 %v2096
    %v2590 = vunpack.c.h.b16 %v2096
    %v2591 = vunpack.c.l.b16 %v2097
    %v2592 = vunpack.c.l.b16 %v2098
    %v2593 = vunpack.c.h.b16 %v2098
    %v2594 = vunpack.c.l.b16 %v2099
    %v2595 = vunpack.c.l.b16 %v2100
    %v2596 = vunpack.c.h.b16 %v2100
    %v2597 = vunpack.c.l.b16 %v2101
    %v2598 = vunpack.c.l.b16 %v2102
    %v2599 = vunpack.c.h.b16 %v2102
    %v2600 = vunpack.c.l.b16 %v2103
    %v2601 = vunpack.c.l.b16 %v2104
    %v2602 = vunpack.c.h.b16 %v2104
    %v2603 = vunpack.c.l.b16 %v2105
    %v2604 = vunpack.c.l.b16 %v2106
    %v2605 = vunpack.c.h.b16 %v2106
    %v2606 = vunpack.c.l.b16 %v2107
    %v2607 = vunpack.c.l.b16 %v2108
    %v2608 = vunpack.c.h.b16 %v2108
    %v2609 = vunpack.c.l.b16 %v2109
    %v2610 = vunpack.c.l.b16 %v2110
    %v2611 = vunpack.c.h.b16 %v2110
    %v2612 = vunpack.c.l.b16 %v2111
    %v2613 = vunpack.c.l.b16 %v2112
    %v2614 = vunpack.c.h.b16 %v2112
    %v2615 = vunpack.c.l.b16 %v2113
    %v2616 = vunpack.c.l.b16 %v2114
    %v2617 = vunpack.c.h.b16 %v2114
    %v2618 = vunpack.c.l.b16 %v2115
    %v2619 = vunpack.c.l.b16 %v2116
    %v2620 = vunpack.c.h.b16 %v2116
    %v2621 = vunpack.c.l.b16 %v2117
    %v2622 = vunpack.c.l.b16 %v2118
    %v2623 = vunpack.c.h.b16 %v2118
    %v2624 = vunpack.c.l.b16 %v2119
    %v2625 = vunpack.c.l.b16 %v2120
    %v2626 = vunpack.c.h.b16 %v2120
    %v2627 = vunpack.c.l.b16 %v2121
    %v2628 = vunpack.c.l.b16 %v2122
    %v2629 = vunpack.c.h.b16 %v2122
    %v2630 = vunpack.c.l.b16 %v2123
    %v2631 = vunpack.c.l.b16 %v2124
    %v2632 = vunpack.c.h.b16 %v2124
    %v2633 = vunpack.c.l.b16 %v2125
    %v2634 = vunpack.c.l.b16 %v2126
    %v2635 = vunpack.c.h.b16 %v2126
    %v2636 = vunpack.c.l.b16 %v2127
    %v2637 = vunpack.c.l.b16 %v2128
    %v2638 = vunpack.c.h.b16 %v2128
    %v2639 = vunpack.c.l.b16 %v2129
    %v2640 = vunpack.c.l.b16 %v2130
    %v2641 = vunpack.c.h.b16 %v2130
    %v2642 = vunpack.c.l.b16 %v2131
    %v2643 = vunpack.c.l.b16 %v2132
    %v2644 = vunpack.c.h.b16 %v2132
    %v2645 = vunpack.c.l.b16 %v2133
    %v2646 = vunpack.c.l.b16 %v2134
    %v2647 = vunpack.c.h.b16 %v2134
    %v2648 = vunpack.c.l.b16 %v2135
    %v2649 = vunpack.c.l.b16 %v2136
    %v2650 = vunpack.c.h.b16 %v2136
    %v2651 = vunpack.c.l.b16 %v2137
    %v2652 = vunpack.c.l.b16 %v2138
    %v2653 = vunpack.c.h.b16 %v2138
    %v2654 = vunpack.c.l.b16 %v2139
    %v2655 = vunpack.c.l.b16 %v2140
    %v2656 = vunpack.c.h.b16 %v2140
    %v2657 = vunpack.c.l.b16 %v2141
    %v2658 = vunpack.c.l.b16 %v2142
    %v2659 = vunpack.c.h.b16 %v2142
    %v2660 = vunpack.c.l.b16 %v2143
    %v2661 = vunpack.c.l.b16 %v2144
    %v2662 = vunpack.c.h.b16 %v2144
    %v2663 = vunpack.c.l.b16 %v2145
    %v2664 = vunpack.c.l.b16 %v2146
    %v2665 = vunpack.c.h.b16 %v2146
    %v2666 = vunpack.c.l.b16 %v2147
    %v2667 = vunpack.c.l.b16 %v2148
    %v2668 = vunpack.c.h.b16 %v2148
    %v2669 = vunpack.c.l.b16 %v2149
    %v2670 = vunpack.c.l.b16 %v2150
    %v2671 = vunpack.c.h.b16 %v2150
    %v2672 = vunpack.c.l.b16 %v2151
    %v2673 = vunpack.c.l.b16 %v2152
    %v2674 = vunpack.c.h.b16 %v2152
    %v2675 = vunpack.c.l.b16 %v2153
    %v2676 = vunpack.c.l.b16 %v2154
    %v2677 = vunpack.c.h.b16 %v2154
    %v2678 = vunpack.c.l.b16 %v2155
    %v2679 = vunpack.c.l.b16 %v2156
    %v2680 = vunpack.c.h.b16 %v2156
    %v2681 = vunpack.c.l.b16 %v2157
    %v2682 = vunpack.c.l.b16 %v2158
    %v2683 = vunpack.c.h.b16 %v2158
    %v2684 = vunpack.c.l.b16 %v2159
    %v2685 = vunpack.c.l.b16 %v2160
    %v2686 = vunpack.c.h.b16 %v2160
    %v2687 = vunpack.c.l.b16 %v2161
    %v2688 = vunpack.c.l.b16 %v2162
    %v2689 = vunpack.c.h.b16 %v2162
    %v2690 = vunpack.c.l.b16 %v2163
    %v2691 = vunpack.c.l.b16 %v2164
    %v2692 = vunpack.c.h.b16 %v2164
    %v2693 = vunpack.c.l.b16 %v2165
    %v2694 = vpack.c.b16 %v2553, %v2550
    %v2695 = vpack.c.b16 %v2554, %v2551
    %v2696 = vpack.c.b16 %v2555, %v2552
    %v2697 = vpack.c.b16 %v2559, %v2556
    %v2698 = vpack.c.b16 %v2560, %v2557
    %v2699 = vpack.c.b16 %v2561, %v2558
    %v2700 = vpack.c.b16 %v2565, %v2562
    %v2701 = vpack.c.b16 %v2566, %v2563
    %v2702 = vpack.c.b16 %v2567, %v2564
    %v2703 = vpack.c.b16 %v2571, %v2568
    %v2704 = vpack.c.b16 %v2572, %v2569
    %v2705 = vpack.c.b16 %v2573, %v2570
    %v2706 = vpack.c.b16 %v2577, %v2574
    %v2707 = vpack.c.b16 %v2578, %v2575
    %v2708 = vpack.c.b16 %v2579, %v2576
    %v2709 = vpack.c.b16 %v2583, %v2580
    %v2710 = vpack.c.b16 %v2584, %v2581
    %v2711 = vpack.c.b16 %v2585, %v2582
    %v2712 = vpack.c.b16 %v2589, %v2586
    %v2713 = vpack.c.b16 %v2590, %v2587
    %v2714 = vpack.c.b16 %v2591, %v2588
    %v2715 = vpack.c.b16 %v2595, %v2592
    %v2716 = vpack.c.b16 %v2596, %v2593
    %v2717 = vpack.c.b16 %v2597, %v2594
    %v2718 = vpack.c.b16 %v2601, %v2598
    %v2719 = vpack.c.b16 %v2602, %v2599
    %v2720 = vpack.c.b16 %v2603, %v2600
    %v2721 = vpack.c.b16 %v2607, %v2604
    %v2722 = vpack.c.b16 %v2608, %v2605
    %v2723 = vpack.c.b16 %v2609, %v2606
    %v2724 = vpack.c.b16 %v2613, %v2610
    %v2725 = vpack.c.b16 %v2614, %v2611
    %v2726 = vpack.c.b16 %v2615, %v2612
    %v2727 = vpack.c.b16 %v2619, %v2616
    %v2728 = vpack.c.b16 %v2620, %v2617
    %v2729 = vpack.c.b16 %v2621, %v2618
    %v2730 = vpack.c.b16 %v2625, %v2622
    %v2731 = vpack.c.b16 %v2626, %v2623
    %v2732 = vpack.c.b16 %v2627, %v2624
    %v2733 = vpack.c.b16 %v2631, %v2628
    %v2734 = vpack.c.b16 %v2632, %v2629
    %v2735 = vpack.c.b16 %v2633, %v2630
    %v2736 = vpack.c.b16 %v2637, %v2634
    %v2737 = vpack.c.b16 %v2638, %v2635
    %v2738 = vpack.c.b16 %v2639, %v2636
    %v2739 = vpack.c.b16 %v2643, %v2640
    %v2740 = vpack.c.b16 %v2644, %v2641
    %v2741 = vpack.c.b16 %v2645, %v2642
    %v2742 = vpack.c.b16 %v2649, %v2646
    %v2743 = vpack.c.b16 %v2650, %v2647
    %v2744 = vpack.c.b16 %v2651, %v2648
    %v2745 = vpack.c.b16 %v2655, %v2652
    %v2746 = vpack.c.b16 %v2656, %v2653
    %v2747 = vpack.c.b16 %v2657, %v2654
    %v2748 = vpack.c.b16 %v2661, %v2658
    %v2749 = vpack.c.b16 %v2662, %v2659
    %v2750 = vpack.c.b16 %v2663, %v2660
    %v2751 = vpack.c.b16 %v2667, %v2664
    %v2752 = vpack.c.b16 %v2668, %v2665
    %v2753 = vpack.c.b16 %v2669, %v2666
    %v2754 = vpack.c.b16 %v2673, %v2670
    %v2755 = vpack.c.b16 %v2674, %v2671
    %v2756 = vpack.c.b16 %v2675, %v2672
    %v2757 = vpack.c.b16 %v2679, %v2676
    %v2758 = vpack.c.b16 %v2680, %v2677
    %v2759 = vpack.c.b16 %v2681, %v2678
    %v2760 = vpack.c.b16 %v2685, %v2682
    %v2761 = vpack.c.b16 %v2686, %v2683
    %v2762 = vpack.c.b16 %v2687, %v2684
    %v2763 = vpack.c.b16 %v2691, %v2688
    %v2764 = vpack.c.b16 %v2692, %v2689
    %v2765 = vpack.c.b16 %v2693, %v2690
    %2838 = vmatpush.bf16.msra.mxu0 %v2715
    %2839 = vmatpush.bf16.msra.mxu0 %v2712
    %2840 = vmatpush.bf16.msra.mxu0 %v2709
    %2841 = vmatpush.bf16.msra.mxu0 %v2706
    %2842 = vmatpush.bf16.msra.mxu0 %v2703
    %2843 = vmatpush.bf16.msra.mxu0 %v2700
    %2844 = vmatpush.bf16.msra.mxu0 %v2697
    %2845 = vmatpush.bf16.msra.mxu0 %v2694
    %2846 = vmatmul.bf16.gmra.mxu0 %v2166
    %v2847 = vpop.f32.mrf.mxu0
    %v2848 = vadd.f32 0.0, %v2847
    %v2849 = vpop.f32.mrf.mxu0
    %v2850 = vadd.f32 0.0, %v2849
    %2851 = vmatmul.bf16.gmra.mxu0 %v2169
    %v2852 = vpop.f32.mrf.mxu0
    %v2853 = vpop.f32.mrf.mxu0
    %v2854 = vadd.f32 0.0, %v2853
    %2855 = vmatmul.bf16.gmra.mxu0 %v2172
    %v2856 = vpop.f32.mrf.mxu0
    %v2857 = vadd.f32 0.0, %v2856
    %v2858 = vpop.f32.mrf.mxu0
    %2859 = vmatmul.bf16.gmra.mxu0 %v2175
    %v2860 = vpop.f32.mrf.mxu0
    %v2861 = vadd.f32 0.0, %v2860
    %v2862 = vpop.f32.mrf.mxu0
    %v2863 = vadd.f32 0.0, %v2862
    %2864 = vmatmul.bf16.gmra.mxu0 %v2178
    %v2865 = vpop.f32.mrf.mxu0
    %v2866 = vpop.f32.mrf.mxu0
    %v2867 = vadd.f32 0.0, %v2866
    %2868 = vmatmul.bf16.gmra.mxu0 %v2181
    %v2869 = vpop.f32.mrf.mxu0
    %v2870 = vadd.f32 0.0, %v2869
    %v2871 = vpop.f32.mrf.mxu0
    %2872 = vmatmul.bf16.gmra.mxu0 %v2184
    %v2873 = vpop.f32.mrf.mxu0
    %v2874 = vadd.f32 0.0, %v2873
    %v2875 = vpop.f32.mrf.mxu0
    %v2876 = vadd.f32 0.0, %v2875
    %2877 = vmatmul.bf16.gmra.mxu0 %v2187
    %v2878 = vpop.f32.mrf.mxu0
    %v2879 = vpop.f32.mrf.mxu0
    %v2880 = vadd.f32 0.0, %v2879
    %2881 = vmatmul.bf16.gmra.mxu0 %v2190
    %v2882 = vpop.f32.mrf.mxu0
    %v2883 = vadd.f32 0.0, %v2882
    %v2884 = vpop.f32.mrf.mxu0
    %2885 = vmatmul.bf16.gmra.mxu0 %v2193
    %v2886 = vpop.f32.mrf.mxu0
    %v2887 = vadd.f32 0.0, %v2886
    %v2888 = vpop.f32.mrf.mxu0
    %v2889 = vadd.f32 0.0, %v2888
    %2890 = vmatmul.bf16.gmra.mxu0 %v2196
    %v2891 = vpop.f32.mrf.mxu0
    %v2892 = vpop.f32.mrf.mxu0
    %v2893 = vadd.f32 0.0, %v2892
    %2894 = vmatmul.bf16.gmra.mxu0 %v2199
    %v2895 = vpop.f32.mrf.mxu0
    %v2896 = vadd.f32 0.0, %v2895
    %v2897 = vpop.f32.mrf.mxu0
    %2898 = vmatmul.bf16.gmra.mxu0 %v2202
    %v2899 = vpop.f32.mrf.mxu0
    %v2900 = vadd.f32 0.0, %v2899
    %v2901 = vpop.f32.mrf.mxu0
    %v2902 = vadd.f32 0.0, %v2901
    %2903 = vmatmul.bf16.gmra.mxu0 %v2205
    %v2904 = vpop.f32.mrf.mxu0
    %v2905 = vpop.f32.mrf.mxu0
    %v2906 = vadd.f32 0.0, %v2905
    %2907 = vmatmul.bf16.gmra.mxu0 %v2208
    %v2908 = vpop.f32.mrf.mxu0
    %v2909 = vadd.f32 0.0, %v2908
    %v2910 = vpop.f32.mrf.mxu0
    %2911 = vmatmul.bf16.gmra.mxu0 %v2211
    %v2912 = vpop.f32.mrf.mxu0
    %v2913 = vadd.f32 0.0, %v2912
    %v2914 = vpop.f32.mrf.mxu0
    %v2915 = vadd.f32 0.0, %v2914
    %2916 = vmatmul.bf16.gmra.mxu0 %v2214
    %v2917 = vpop.f32.mrf.mxu0
    %v2918 = vpop.f32.mrf.mxu0
    %v2919 = vadd.f32 0.0, %v2918
    %2920 = vmatmul.bf16.gmra.mxu0 %v2217
    %v2921 = vpop.f32.mrf.mxu0
    %v2922 = vadd.f32 0.0, %v2921
    %v2923 = vpop.f32.mrf.mxu0
    %2924 = vmatmul.bf16.gmra.mxu0 %v2220
    %v2925 = vpop.f32.mrf.mxu0
    %v2926 = vadd.f32 0.0, %v2925
    %v2927 = vpop.f32.mrf.mxu0
    %v2928 = vadd.f32 0.0, %v2927
    %2929 = vmatmul.bf16.gmra.mxu0 %v2223
    %v2930 = vpop.f32.mrf.mxu0
    %v2931 = vpop.f32.mrf.mxu0
    %v2932 = vadd.f32 0.0, %v2931
    %2933 = vmatmul.bf16.gmra.mxu0 %v2226
    %v2934 = vpop.f32.mrf.mxu0
    %v2935 = vadd.f32 0.0, %v2934
    %v2936 = vpop.f32.mrf.mxu0
    %2937 = vmatmul.bf16.gmra.mxu0 %v2229
    %v2938 = vpop.f32.mrf.mxu0
    %v2939 = vadd.f32 0.0, %v2938
    %v2940 = vpop.f32.mrf.mxu0
    %v2941 = vadd.f32 0.0, %v2940
    %2942 = vmatmul.bf16.gmra.mxu0 %v2232
    %v2943 = vpop.f32.mrf.mxu0
    %v2944 = vpop.f32.mrf.mxu0
    %v2945 = vadd.f32 0.0, %v2944
    %2946 = vmatmul.bf16.gmra.mxu0 %v2235
    %v2947 = vpop.f32.mrf.mxu0
    %v2948 = vadd.f32 0.0, %v2947
    %v2949 = vpop.f32.mrf.mxu0
    %2950 = vmatmul.bf16.gmra.mxu0 %v2238
    %v2951 = vpop.f32.mrf.mxu0
    %v2952 = vadd.f32 0.0, %v2951
    %v2953 = vpop.f32.mrf.mxu0
    %v2954 = vadd.f32 0.0, %v2953
    %2955 = vmatmul.bf16.gmra.mxu0 %v2241
    %v2956 = vpop.f32.mrf.mxu0
    %v2957 = vpop.f32.mrf.mxu0
    %v2958 = vadd.f32 0.0, %v2957
    %2959 = vmatmul.bf16.gmra.mxu0 %v2244
    %v2960 = vpop.f32.mrf.mxu0
    %v2961 = vadd.f32 0.0, %v2960
    %v2962 = vpop.f32.mrf.mxu0
    %2963 = vmatmul.bf16.gmra.mxu0 %v2247
    %v2964 = vpop.f32.mrf.mxu0
    %v2965 = vadd.f32 0.0, %v2964
    %v2966 = vpop.f32.mrf.mxu0
    %v2967 = vadd.f32 0.0, %v2966
    %2968 = vmatmul.bf16.gmra.mxu0 %v2250
    %v2969 = vpop.f32.mrf.mxu0
    %v2970 = vpop.f32.mrf.mxu0
    %v2971 = vadd.f32 0.0, %v2970
    %2972 = vmatmul.bf16.gmra.mxu0 %v2253
    %v2973 = vpop.f32.mrf.mxu0
    %v2974 = vadd.f32 0.0, %v2973
    %v2975 = vpop.f32.mrf.mxu0
    %2976 = vmatmul.bf16.gmra.mxu0 %v2256
    %v2977 = vpop.f32.mrf.mxu0
    %v2978 = vadd.f32 0.0, %v2977
    %v2979 = vpop.f32.mrf.mxu0
    %v2980 = vadd.f32 0.0, %v2979
    %2981 = vmatmul.bf16.gmra.mxu0 %v2259
    %v2982 = vpop.f32.mrf.mxu0
    %v2983 = vpop.f32.mrf.mxu0
    %v2984 = vadd.f32 0.0, %v2983
    %2985 = vmatmul.bf16.gmra.mxu0 %v2262
    %v2986 = vpop.f32.mrf.mxu0
    %v2987 = vadd.f32 0.0, %v2986
    %v2988 = vpop.f32.mrf.mxu0
    %2989 = vmatmul.bf16.gmra.mxu0 %v2265
    %v2990 = vpop.f32.mrf.mxu0
    %v2991 = vadd.f32 0.0, %v2990
    %v2992 = vpop.f32.mrf.mxu0
    %v2993 = vadd.f32 0.0, %v2992
    %2994 = vmatmul.bf16.gmra.mxu0 %v2268
    %v2995 = vpop.f32.mrf.mxu0
    %v2996 = vpop.f32.mrf.mxu0
    %v2997 = vadd.f32 0.0, %v2996
    %2998 = vmatmul.bf16.gmra.mxu0 %v2271
    %v2999 = vpop.f32.mrf.mxu0
    %v3000 = vadd.f32 0.0, %v2999
    %v3001 = vpop.f32.mrf.mxu0
    %3002 = vmatmul.bf16.gmra.mxu0 %v2274
    %v3003 = vpop.f32.mrf.mxu0
    %v3004 = vadd.f32 0.0, %v3003
    %v3005 = vpop.f32.mrf.mxu0
    %v3006 = vadd.f32 0.0, %v3005
    %3007 = vmatmul.bf16.gmra.mxu0 %v2277
    %v3008 = vpop.f32.mrf.mxu0
    %v3009 = vpop.f32.mrf.mxu0
    %v3010 = vadd.f32 0.0, %v3009
    %3011 = vmatmul.bf16.gmra.mxu0 %v2280
    %v3012 = vpop.f32.mrf.mxu0
    %v3013 = vadd.f32 0.0, %v3012
    %v3014 = vpop.f32.mrf.mxu0
    %3015 = vmatmul.bf16.gmra.mxu0 %v2283
    %v3016 = vpop.f32.mrf.mxu0
    %v3017 = vadd.f32 0.0, %v3016
    %v3018 = vpop.f32.mrf.mxu0
    %v3019 = vadd.f32 0.0, %v3018
    %3020 = vmatmul.bf16.gmra.mxu0 %v2286
    %v3021 = vpop.f32.mrf.mxu0
    %v3022 = vpop.f32.mrf.mxu0
    %v3023 = vadd.f32 0.0, %v3022
    %3024 = vmatmul.bf16.gmra.mxu0 %v2289
    %v3025 = vpop.f32.mrf.mxu0
    %v3026 = vadd.f32 0.0, %v3025
    %v3027 = vpop.f32.mrf.mxu0
    %3028 = vmatmul.bf16.gmra.mxu0 %v2292
    %v3029 = vpop.f32.mrf.mxu0
    %v3030 = vadd.f32 0.0, %v3029
    %v3031 = vpop.f32.mrf.mxu0
    %v3032 = vadd.f32 0.0, %v3031
    %3033 = vmatmul.bf16.gmra.mxu0 %v2295
    %v3034 = vpop.f32.mrf.mxu0
    %v3035 = vpop.f32.mrf.mxu0
    %v3036 = vadd.f32 0.0, %v3035
    %3037 = vmatmul.bf16.gmra.mxu0 %v2298
    %v3038 = vpop.f32.mrf.mxu0
    %v3039 = vadd.f32 0.0, %v3038
    %v3040 = vpop.f32.mrf.mxu0
    %3041 = vmatmul.bf16.gmra.mxu0 %v2301
    %v3042 = vpop.f32.mrf.mxu0
    %v3043 = vadd.f32 0.0, %v3042
    %v3044 = vpop.f32.mrf.mxu0
    %v3045 = vadd.f32 0.0, %v3044
    %3046 = vmatmul.bf16.gmra.mxu0 %v2304
    %v3047 = vpop.f32.mrf.mxu0
    %v3048 = vpop.f32.mrf.mxu0
    %v3049 = vadd.f32 0.0, %v3048
    %3050 = vmatmul.bf16.gmra.mxu0 %v2307
    %v3051 = vpop.f32.mrf.mxu0
    %v3052 = vadd.f32 0.0, %v3051
    %v3053 = vpop.f32.mrf.mxu0
    %3054 = vdwg.mxu0
    %3055 = vmatpush.bf16.msra.mxu0 %v2739
    %3056 = vmatpush.bf16.msra.mxu0 %v2736
    %3057 = vmatpush.bf16.msra.mxu0 %v2733
    %3058 = vmatpush.bf16.msra.mxu0 %v2730
    %3059 = vmatpush.bf16.msra.mxu0 %v2727
    %3060 = vmatpush.bf16.msra.mxu0 %v2724
    %3061 = vmatpush.bf16.msra.mxu0 %v2721
    %3062 = vmatpush.bf16.msra.mxu0 %v2718
    %3063 = vmatmul.bf16.gmra.mxu0 %v2167
    %v3064 = vpop.f32.mrf.mxu0
    %v3065 = vadd.f32 %v2848, %v3064
    %v3066 = vpop.f32.mrf.mxu0
    %v3067 = vadd.f32 %v2850, %v3066
    %3068 = vmatmul.bf16.gmra.mxu0 %v2170
    %v3069 = vpop.f32.mrf.mxu0
    %v3070 = vpop.f32.mrf.mxu0
    %v3071 = vadd.f32 %v2854, %v3070
    %3072 = vmatmul.bf16.gmra.mxu0 %v2173
    %v3073 = vpop.f32.mrf.mxu0
    %v3074 = vadd.f32 %v2857, %v3073
    %v3075 = vpop.f32.mrf.mxu0
    %3076 = vmatmul.bf16.gmra.mxu0 %v2176
    %v3077 = vpop.f32.mrf.mxu0
    %v3078 = vadd.f32 %v2861, %v3077
    %v3079 = vpop.f32.mrf.mxu0
    %v3080 = vadd.f32 %v2863, %v3079
    %3081 = vmatmul.bf16.gmra.mxu0 %v2179
    %v3082 = vpop.f32.mrf.mxu0
    %v3083 = vpop.f32.mrf.mxu0
    %v3084 = vadd.f32 %v2867, %v3083
    %3085 = vmatmul.bf16.gmra.mxu0 %v2182
    %v3086 = vpop.f32.mrf.mxu0
    %v3087 = vadd.f32 %v2870, %v3086
    %v3088 = vpop.f32.mrf.mxu0
    %3089 = vmatmul.bf16.gmra.mxu0 %v2185
    %v3090 = vpop.f32.mrf.mxu0
    %v3091 = vadd.f32 %v2874, %v3090
    %v3092 = vpop.f32.mrf.mxu0
    %v3093 = vadd.f32 %v2876, %v3092
    %3094 = vmatmul.bf16.gmra.mxu0 %v2188
    %v3095 = vpop.f32.mrf.mxu0
    %v3096 = vpop.f32.mrf.mxu0
    %v3097 = vadd.f32 %v2880, %v3096
    %3098 = vmatmul.bf16.gmra.mxu0 %v2191
    %v3099 = vpop.f32.mrf.mxu0
    %v3100 = vadd.f32 %v2883, %v3099
    %v3101 = vpop.f32.mrf.mxu0
    %3102 = vmatmul.bf16.gmra.mxu0 %v2194
    %v3103 = vpop.f32.mrf.mxu0
    %v3104 = vadd.f32 %v2887, %v3103
    %v3105 = vpop.f32.mrf.mxu0
    %v3106 = vadd.f32 %v2889, %v3105
    %3107 = vmatmul.bf16.gmra.mxu0 %v2197
    %v3108 = vpop.f32.mrf.mxu0
    %v3109 = vpop.f32.mrf.mxu0
    %v3110 = vadd.f32 %v2893, %v3109
    %3111 = vmatmul.bf16.gmra.mxu0 %v2200
    %v3112 = vpop.f32.mrf.mxu0
    %v3113 = vadd.f32 %v2896, %v3112
    %v3114 = vpop.f32.mrf.mxu0
    %3115 = vmatmul.bf16.gmra.mxu0 %v2203
    %v3116 = vpop.f32.mrf.mxu0
    %v3117 = vadd.f32 %v2900, %v3116
    %v3118 = vpop.f32.mrf.mxu0
    %v3119 = vadd.f32 %v2902, %v3118
    %3120 = vmatmul.bf16.gmra.mxu0 %v2206
    %v3121 = vpop.f32.mrf.mxu0
    %v3122 = vpop.f32.mrf.mxu0
    %v3123 = vadd.f32 %v2906, %v3122
    %3124 = vmatmul.bf16.gmra.mxu0 %v2209
    %v3125 = vpop.f32.mrf.mxu0
    %v3126 = vadd.f32 %v2909, %v3125
    %v3127 = vpop.f32.mrf.mxu0
    %3128 = vmatmul.bf16.gmra.mxu0 %v2212
    %v3129 = vpop.f32.mrf.mxu0
    %v3130 = vadd.f32 %v2913, %v3129
    %v3131 = vpop.f32.mrf.mxu0
    %v3132 = vadd.f32 %v2915, %v3131
    %3133 = vmatmul.bf16.gmra.mxu0 %v2215
    %v3134 = vpop.f32.mrf.mxu0
    %v3135 = vpop.f32.mrf.mxu0
    %v3136 = vadd.f32 %v2919, %v3135
    %3137 = vmatmul.bf16.gmra.mxu0 %v2218
    %v3138 = vpop.f32.mrf.mxu0
    %v3139 = vadd.f32 %v2922, %v3138
    %v3140 = vpop.f32.mrf.mxu0
    %3141 = vmatmul.bf16.gmra.mxu0 %v2221
    %v3142 = vpop.f32.mrf.mxu0
    %v3143 = vadd.f32 %v2926, %v3142
    %v3144 = vpop.f32.mrf.mxu0
    %v3145 = vadd.f32 %v2928, %v3144
    %3146 = vmatmul.bf16.gmra.mxu0 %v2224
    %v3147 = vpop.f32.mrf.mxu0
    %v3148 = vpop.f32.mrf.mxu0
    %v3149 = vadd.f32 %v2932, %v3148
    %3150 = vmatmul.bf16.gmra.mxu0 %v2227
    %v3151 = vpop.f32.mrf.mxu0
    %v3152 = vadd.f32 %v2935, %v3151
    %v3153 = vpop.f32.mrf.mxu0
    %3154 = vmatmul.bf16.gmra.mxu0 %v2230
    %v3155 = vpop.f32.mrf.mxu0
    %v3156 = vadd.f32 %v2939, %v3155
    %v3157 = vpop.f32.mrf.mxu0
    %v3158 = vadd.f32 %v2941, %v3157
    %3159 = vmatmul.bf16.gmra.mxu0 %v2233
    %v3160 = vpop.f32.mrf.mxu0
    %v3161 = vpop.f32.mrf.mxu0
    %v3162 = vadd.f32 %v2945, %v3161
    %3163 = vmatmul.bf16.gmra.mxu0 %v2236
    %v3164 = vpop.f32.mrf.mxu0
    %v3165 = vadd.f32 %v2948, %v3164
    %v3166 = vpop.f32.mrf.mxu0
    %3167 = vmatmul.bf16.gmra.mxu0 %v2239
    %v3168 = vpop.f32.mrf.mxu0
    %v3169 = vadd.f32 %v2952, %v3168
    %v3170 = vpop.f32.mrf.mxu0
    %v3171 = vadd.f32 %v2954, %v3170
    %3172 = vmatmul.bf16.gmra.mxu0 %v2242
    %v3173 = vpop.f32.mrf.mxu0
    %v3174 = vpop.f32.mrf.mxu0
    %v3175 = vadd.f32 %v2958, %v3174
    %3176 = vmatmul.bf16.gmra.mxu0 %v2245
    %v3177 = vpop.f32.mrf.mxu0
    %v3178 = vadd.f32 %v2961, %v3177
    %v3179 = vpop.f32.mrf.mxu0
    %3180 = vmatmul.bf16.gmra.mxu0 %v2248
    %v3181 = vpop.f32.mrf.mxu0
    %v3182 = vadd.f32 %v2965, %v3181
    %v3183 = vpop.f32.mrf.mxu0
    %v3184 = vadd.f32 %v2967, %v3183
    %3185 = vmatmul.bf16.gmra.mxu0 %v2251
    %v3186 = vpop.f32.mrf.mxu0
    %v3187 = vpop.f32.mrf.mxu0
    %v3188 = vadd.f32 %v2971, %v3187
    %3189 = vmatmul.bf16.gmra.mxu0 %v2254
    %v3190 = vpop.f32.mrf.mxu0
    %v3191 = vadd.f32 %v2974, %v3190
    %v3192 = vpop.f32.mrf.mxu0
    %3193 = vmatmul.bf16.gmra.mxu0 %v2257
    %v3194 = vpop.f32.mrf.mxu0
    %v3195 = vadd.f32 %v2978, %v3194
    %v3196 = vpop.f32.mrf.mxu0
    %v3197 = vadd.f32 %v2980, %v3196
    %3198 = vmatmul.bf16.gmra.mxu0 %v2260
    %v3199 = vpop.f32.mrf.mxu0
    %v3200 = vpop.f32.mrf.mxu0
    %v3201 = vadd.f32 %v2984, %v3200
    %3202 = vmatmul.bf16.gmra.mxu0 %v2263
    %v3203 = vpop.f32.mrf.mxu0
    %v3204 = vadd.f32 %v2987, %v3203
    %v3205 = vpop.f32.mrf.mxu0
    %3206 = vmatmul.bf16.gmra.mxu0 %v2266
    %v3207 = vpop.f32.mrf.mxu0
    %v3208 = vadd.f32 %v2991, %v3207
    %v3209 = vpop.f32.mrf.mxu0
    %v3210 = vadd.f32 %v2993, %v3209
    %3211 = vmatmul.bf16.gmra.mxu0 %v2269
    %v3212 = vpop.f32.mrf.mxu0
    %v3213 = vpop.f32.mrf.mxu0
    %v3214 = vadd.f32 %v2997, %v3213
    %3215 = vmatmul.bf16.gmra.mxu0 %v2272
    %v3216 = vpop.f32.mrf.mxu0
    %v3217 = vadd.f32 %v3000, %v3216
    %v3218 = vpop.f32.mrf.mxu0
    %3219 = vmatmul.bf16.gmra.mxu0 %v2275
    %v3220 = vpop.f32.mrf.mxu0
    %v3221 = vadd.f32 %v3004, %v3220
    %v3222 = vpop.f32.mrf.mxu0
    %v3223 = vadd.f32 %v3006, %v3222
    %3224 = vmatmul.bf16.gmra.mxu0 %v2278
    %v3225 = vpop.f32.mrf.mxu0
    %v3226 = vpop.f32.mrf.mxu0
    %v3227 = vadd.f32 %v3010, %v3226
    %3228 = vmatmul.bf16.gmra.mxu0 %v2281
    %v3229 = vpop.f32.mrf.mxu0
    %v3230 = vadd.f32 %v3013, %v3229
    %v3231 = vpop.f32.mrf.mxu0
    %3232 = vmatmul.bf16.gmra.mxu0 %v2284
    %v3233 = vpop.f32.mrf.mxu0
    %v3234 = vadd.f32 %v3017, %v3233
    %v3235 = vpop.f32.mrf.mxu0
    %v3236 = vadd.f32 %v3019, %v3235
    %3237 = vmatmul.bf16.gmra.mxu0 %v2287
    %v3238 = vpop.f32.mrf.mxu0
    %v3239 = vpop.f32.mrf.mxu0
    %v3240 = vadd.f32 %v3023, %v3239
    %3241 = vmatmul.bf16.gmra.mxu0 %v2290
    %v3242 = vpop.f32.mrf.mxu0
    %v3243 = vadd.f32 %v3026, %v3242
    %v3244 = vpop.f32.mrf.mxu0
    %3245 = vmatmul.bf16.gmra.mxu0 %v2293
    %v3246 = vpop.f32.mrf.mxu0
    %v3247 = vadd.f32 %v3030, %v3246
    %v3248 = vpop.f32.mrf.mxu0
    %v3249 = vadd.f32 %v3032, %v3248
    %3250 = vmatmul.bf16.gmra.mxu0 %v2296
    %v3251 = vpop.f32.mrf.mxu0
    %v3252 = vpop.f32.mrf.mxu0
    %v3253 = vadd.f32 %v3036, %v3252
    %3254 = vmatmul.bf16.gmra.mxu0 %v2299
    %v3255 = vpop.f32.mrf.mxu0
    %v3256 = vadd.f32 %v3039, %v3255
    %v3257 = vpop.f32.mrf.mxu0
    %3258 = vmatmul.bf16.gmra.mxu0 %v2302
    %v3259 = vpop.f32.mrf.mxu0
    %v3260 = vadd.f32 %v3043, %v3259
    %v3261 = vpop.f32.mrf.mxu0
    %v3262 = vadd.f32 %v3045, %v3261
    %3263 = vmatmul.bf16.gmra.mxu0 %v2305
    %v3264 = vpop.f32.mrf.mxu0
    %v3265 = vpop.f32.mrf.mxu0
    %v3266 = vadd.f32 %v3049, %v3265
    %3267 = vmatmul.bf16.gmra.mxu0 %v2308
    %v3268 = vpop.f32.mrf.mxu0
    %v3269 = vadd.f32 %v3052, %v3268
    %v3270 = vpop.f32.mrf.mxu0
    %3271 = vdwg.mxu0
    %3272 = vmatpush.bf16.msra.mxu0 %v2763
    %3273 = vmatpush.bf16.msra.mxu0 %v2760
    %3274 = vmatpush.bf16.msra.mxu0 %v2757
    %3275 = vmatpush.bf16.msra.mxu0 %v2754
    %3276 = vmatpush.bf16.msra.mxu0 %v2751
    %3277 = vmatpush.bf16.msra.mxu0 %v2748
    %3278 = vmatpush.bf16.msra.mxu0 %v2745
    %3279 = vmatpush.bf16.msra.mxu0 %v2742
    %3280 = vmatmul.bf16.gmra.mxu0 %v2168
    %v3281 = vpop.f32.mrf.mxu0
    %v3282 = vadd.f32 %v3065, %v3281
    %v3283 = vpop.f32.mrf.mxu0
    %v3284 = vadd.f32 %v3067, %v3283
    %3285 = vmatmul.bf16.gmra.mxu0 %v2171
    %v3286 = vpop.f32.mrf.mxu0
    %v3287 = vpop.f32.mrf.mxu0
    %v3288 = vadd.f32 %v3071, %v3287
    %3289 = vmatmul.bf16.gmra.mxu0 %v2174
    %v3290 = vpop.f32.mrf.mxu0
    %v3291 = vadd.f32 %v3074, %v3290
    %v3292 = vpop.f32.mrf.mxu0
    %3293 = vmatmul.bf16.gmra.mxu0 %v2177
    %v3294 = vpop.f32.mrf.mxu0
    %v3295 = vadd.f32 %v3078, %v3294
    %v3296 = vpop.f32.mrf.mxu0
    %v3297 = vadd.f32 %v3080, %v3296
    %3298 = vmatmul.bf16.gmra.mxu0 %v2180
    %v3299 = vpop.f32.mrf.mxu0
    %v3300 = vpop.f32.mrf.mxu0
    %v3301 = vadd.f32 %v3084, %v3300
    %3302 = vmatmul.bf16.gmra.mxu0 %v2183
    %v3303 = vpop.f32.mrf.mxu0
    %v3304 = vadd.f32 %v3087, %v3303
    %v3305 = vpop.f32.mrf.mxu0
    %3306 = vmatmul.bf16.gmra.mxu0 %v2186
    %v3307 = vpop.f32.mrf.mxu0
    %v3308 = vadd.f32 %v3091, %v3307
    %v3309 = vpop.f32.mrf.mxu0
    %v3310 = vadd.f32 %v3093, %v3309
    %3311 = vmatmul.bf16.gmra.mxu0 %v2189
    %v3312 = vpop.f32.mrf.mxu0
    %v3313 = vpop.f32.mrf.mxu0
    %v3314 = vadd.f32 %v3097, %v3313
    %3315 = vmatmul.bf16.gmra.mxu0 %v2192
    %v3316 = vpop.f32.mrf.mxu0
    %v3317 = vadd.f32 %v3100, %v3316
    %v3318 = vpop.f32.mrf.mxu0
    %3319 = vmatmul.bf16.gmra.mxu0 %v2195
    %v3320 = vpop.f32.mrf.mxu0
    %v3321 = vadd.f32 %v3104, %v3320
    %v3322 = vpop.f32.mrf.mxu0
    %v3323 = vadd.f32 %v3106, %v3322
    %3324 = vmatmul.bf16.gmra.mxu0 %v2198
    %v3325 = vpop.f32.mrf.mxu0
    %v3326 = vpop.f32.mrf.mxu0
    %v3327 = vadd.f32 %v3110, %v3326
    %3328 = vmatmul.bf16.gmra.mxu0 %v2201
    %v3329 = vpop.f32.mrf.mxu0
    %v3330 = vadd.f32 %v3113, %v3329
    %v3331 = vpop.f32.mrf.mxu0
    %3332 = vmatmul.bf16.gmra.mxu0 %v2204
    %v3333 = vpop.f32.mrf.mxu0
    %v3334 = vadd.f32 %v3117, %v3333
    %v3335 = vpop.f32.mrf.mxu0
    %v3336 = vadd.f32 %v3119, %v3335
    %3337 = vmatmul.bf16.gmra.mxu0 %v2207
    %v3338 = vpop.f32.mrf.mxu0
    %v3339 = vpop.f32.mrf.mxu0
    %v3340 = vadd.f32 %v3123, %v3339
    %3341 = vmatmul.bf16.gmra.mxu0 %v2210
    %v3342 = vpop.f32.mrf.mxu0
    %v3343 = vadd.f32 %v3126, %v3342
    %v3344 = vpop.f32.mrf.mxu0
    %3345 = vmatmul.bf16.gmra.mxu0 %v2213
    %v3346 = vpop.f32.mrf.mxu0
    %v3347 = vadd.f32 %v3130, %v3346
    %v3348 = vpop.f32.mrf.mxu0
    %v3349 = vadd.f32 %v3132, %v3348
    %3350 = vmatmul.bf16.gmra.mxu0 %v2216
    %v3351 = vpop.f32.mrf.mxu0
    %v3352 = vpop.f32.mrf.mxu0
    %v3353 = vadd.f32 %v3136, %v3352
    %3354 = vmatmul.bf16.gmra.mxu0 %v2219
    %v3355 = vpop.f32.mrf.mxu0
    %v3356 = vadd.f32 %v3139, %v3355
    %v3357 = vpop.f32.mrf.mxu0
    %3358 = vmatmul.bf16.gmra.mxu0 %v2222
    %v3359 = vpop.f32.mrf.mxu0
    %v3360 = vadd.f32 %v3143, %v3359
    %v3361 = vpop.f32.mrf.mxu0
    %v3362 = vadd.f32 %v3145, %v3361
    %3363 = vmatmul.bf16.gmra.mxu0 %v2225
    %v3364 = vpop.f32.mrf.mxu0
    %v3365 = vpop.f32.mrf.mxu0
    %v3366 = vadd.f32 %v3149, %v3365
    %3367 = vmatmul.bf16.gmra.mxu0 %v2228
    %v3368 = vpop.f32.mrf.mxu0
    %v3369 = vadd.f32 %v3152, %v3368
    %v3370 = vpop.f32.mrf.mxu0
    %3371 = vmatmul.bf16.gmra.mxu0 %v2231
    %v3372 = vpop.f32.mrf.mxu0
    %v3373 = vadd.f32 %v3156, %v3372
    %v3374 = vpop.f32.mrf.mxu0
    %v3375 = vadd.f32 %v3158, %v3374
    %3376 = vmatmul.bf16.gmra.mxu0 %v2234
    %v3377 = vpop.f32.mrf.mxu0
    %v3378 = vpop.f32.mrf.mxu0
    %v3379 = vadd.f32 %v3162, %v3378
    %3380 = vmatmul.bf16.gmra.mxu0 %v2237
    %v3381 = vpop.f32.mrf.mxu0
    %v3382 = vadd.f32 %v3165, %v3381
    %v3383 = vpop.f32.mrf.mxu0
    %3384 = vmatmul.bf16.gmra.mxu0 %v2240
    %v3385 = vpop.f32.mrf.mxu0
    %v3386 = vadd.f32 %v3169, %v3385
    %v3387 = vpop.f32.mrf.mxu0
    %v3388 = vadd.f32 %v3171, %v3387
    %3389 = vmatmul.bf16.gmra.mxu0 %v2243
    %v3390 = vpop.f32.mrf.mxu0
    %v3391 = vpop.f32.mrf.mxu0
    %v3392 = vadd.f32 %v3175, %v3391
    %3393 = vmatmul.bf16.gmra.mxu0 %v2246
    %v3394 = vpop.f32.mrf.mxu0
    %v3395 = vadd.f32 %v3178, %v3394
    %v3396 = vpop.f32.mrf.mxu0
    %3397 = vmatmul.bf16.gmra.mxu0 %v2249
    %v3398 = vpop.f32.mrf.mxu0
    %v3399 = vadd.f32 %v3182, %v3398
    %v3400 = vpop.f32.mrf.mxu0
    %v3401 = vadd.f32 %v3184, %v3400
    %3402 = vmatmul.bf16.gmra.mxu0 %v2252
    %v3403 = vpop.f32.mrf.mxu0
    %v3404 = vpop.f32.mrf.mxu0
    %v3405 = vadd.f32 %v3188, %v3404
    %3406 = vmatmul.bf16.gmra.mxu0 %v2255
    %v3407 = vpop.f32.mrf.mxu0
    %v3408 = vadd.f32 %v3191, %v3407
    %v3409 = vpop.f32.mrf.mxu0
    %3410 = vmatmul.bf16.gmra.mxu0 %v2258
    %v3411 = vpop.f32.mrf.mxu0
    %v3412 = vadd.f32 %v3195, %v3411
    %v3413 = vpop.f32.mrf.mxu0
    %v3414 = vadd.f32 %v3197, %v3413
    %3415 = vmatmul.bf16.gmra.mxu0 %v2261
    %v3416 = vpop.f32.mrf.mxu0
    %v3417 = vpop.f32.mrf.mxu0
    %v3418 = vadd.f32 %v3201, %v3417
    %3419 = vmatmul.bf16.gmra.mxu0 %v2264
    %v3420 = vpop.f32.mrf.mxu0
    %v3421 = vadd.f32 %v3204, %v3420
    %v3422 = vpop.f32.mrf.mxu0
    %3423 = vmatmul.bf16.gmra.mxu0 %v2267
    %v3424 = vpop.f32.mrf.mxu0
    %v3425 = vadd.f32 %v3208, %v3424
    %v3426 = vpop.f32.mrf.mxu0
    %v3427 = vadd.f32 %v3210, %v3426
    %3428 = vmatmul.bf16.gmra.mxu0 %v2270
    %v3429 = vpop.f32.mrf.mxu0
    %v3430 = vpop.f32.mrf.mxu0
    %v3431 = vadd.f32 %v3214, %v3430
    %3432 = vmatmul.bf16.gmra.mxu0 %v2273
    %v3433 = vpop.f32.mrf.mxu0
    %v3434 = vadd.f32 %v3217, %v3433
    %v3435 = vpop.f32.mrf.mxu0
    %3436 = vmatmul.bf16.gmra.mxu0 %v2276
    %v3437 = vpop.f32.mrf.mxu0
    %v3438 = vadd.f32 %v3221, %v3437
    %v3439 = vpop.f32.mrf.mxu0
    %v3440 = vadd.f32 %v3223, %v3439
    %3441 = vmatmul.bf16.gmra.mxu0 %v2279
    %v3442 = vpop.f32.mrf.mxu0
    %v3443 = vpop.f32.mrf.mxu0
    %v3444 = vadd.f32 %v3227, %v3443
    %3445 = vmatmul.bf16.gmra.mxu0 %v2282
    %v3446 = vpop.f32.mrf.mxu0
    %v3447 = vadd.f32 %v3230, %v3446
    %v3448 = vpop.f32.mrf.mxu0
    %3449 = vmatmul.bf16.gmra.mxu0 %v2285
    %v3450 = vpop.f32.mrf.mxu0
    %v3451 = vadd.f32 %v3234, %v3450
    %v3452 = vpop.f32.mrf.mxu0
    %v3453 = vadd.f32 %v3236, %v3452
    %3454 = vmatmul.bf16.gmra.mxu0 %v2288
    %v3455 = vpop.f32.mrf.mxu0
    %v3456 = vpop.f32.mrf.mxu0
    %v3457 = vadd.f32 %v3240, %v3456
    %3458 = vmatmul.bf16.gmra.mxu0 %v2291
    %v3459 = vpop.f32.mrf.mxu0
    %v3460 = vadd.f32 %v3243, %v3459
    %v3461 = vpop.f32.mrf.mxu0
    %3462 = vmatmul.bf16.gmra.mxu0 %v2294
    %v3463 = vpop.f32.mrf.mxu0
    %v3464 = vadd.f32 %v3247, %v3463
    %v3465 = vpop.f32.mrf.mxu0
    %v3466 = vadd.f32 %v3249, %v3465
    %3467 = vmatmul.bf16.gmra.mxu0 %v2297
    %v3468 = vpop.f32.mrf.mxu0
    %v3469 = vpop.f32.mrf.mxu0
    %v3470 = vadd.f32 %v3253, %v3469
    %3471 = vmatmul.bf16.gmra.mxu0 %v2300
    %v3472 = vpop.f32.mrf.mxu0
    %v3473 = vadd.f32 %v3256, %v3472
    %v3474 = vpop.f32.mrf.mxu0
    %3475 = vmatmul.bf16.gmra.mxu0 %v2303
    %v3476 = vpop.f32.mrf.mxu0
    %v3477 = vadd.f32 %v3260, %v3476
    %v3478 = vpop.f32.mrf.mxu0
    %v3479 = vadd.f32 %v3262, %v3478
    %3480 = vmatmul.bf16.gmra.mxu0 %v2306
    %v3481 = vpop.f32.mrf.mxu0
    %v3482 = vpop.f32.mrf.mxu0
    %v3483 = vadd.f32 %v3266, %v3482
    %3484 = vmatmul.bf16.gmra.mxu0 %v2309
    %v3485 = vpop.f32.mrf.mxu0
    %v3486 = vadd.f32 %v3269, %v3485
    %v3487 = vpop.f32.mrf.mxu0
    %3488 = vdwg.mxu0
    %3489 = vmatpush.bf16.msra.mxu0 %v2716
    %3490 = vmatpush.bf16.msra.mxu0 %v2713
    %3491 = vmatpush.bf16.msra.mxu0 %v2710
    %3492 = vmatpush.bf16.msra.mxu0 %v2707
    %3493 = vmatpush.bf16.msra.mxu0 %v2704
    %3494 = vmatpush.bf16.msra.mxu0 %v2701
    %3495 = vmatpush.bf16.msra.mxu0 %v2698
    %3496 = vmatpush.bf16.msra.mxu0 %v2695
    %3497 = vmatmul.bf16.gmra.mxu0 %v2166
    %v3498 = vpop.f32.mrf.mxu0
    %v3499 = vadd.f32 0.0, %v3498
    %v3500 = vpop.f32.mrf.mxu0
    %v3501 = vadd.f32 0.0, %v3500
    %3502 = vmatmul.bf16.gmra.mxu0 %v2169
    %v3503 = vpop.f32.mrf.mxu0
    %v3504 = vadd.f32 0.0, %v3503
    %v3505 = vpop.f32.mrf.mxu0
    %v3506 = vadd.f32 0.0, %v3505
    %3507 = vmatmul.bf16.gmra.mxu0 %v2172
    %v3508 = vpop.f32.mrf.mxu0
    %v3509 = vadd.f32 0.0, %v3508
    %v3510 = vpop.f32.mrf.mxu0
    %v3511 = vadd.f32 0.0, %v3510
    %3512 = vmatmul.bf16.gmra.mxu0 %v2175
    %v3513 = vpop.f32.mrf.mxu0
    %v3514 = vadd.f32 0.0, %v3513
    %v3515 = vpop.f32.mrf.mxu0
    %v3516 = vadd.f32 0.0, %v3515
    %3517 = vmatmul.bf16.gmra.mxu0 %v2178
    %v3518 = vpop.f32.mrf.mxu0
    %v3519 = vadd.f32 0.0, %v3518
    %v3520 = vpop.f32.mrf.mxu0
    %v3521 = vadd.f32 0.0, %v3520
    %3522 = vmatmul.bf16.gmra.mxu0 %v2181
    %v3523 = vpop.f32.mrf.mxu0
    %v3524 = vadd.f32 0.0, %v3523
    %v3525 = vpop.f32.mrf.mxu0
    %v3526 = vadd.f32 0.0, %v3525
    %3527 = vmatmul.bf16.gmra.mxu0 %v2184
    %v3528 = vpop.f32.mrf.mxu0
    %v3529 = vadd.f32 0.0, %v3528
    %v3530 = vpop.f32.mrf.mxu0
    %v3531 = vadd.f32 0.0, %v3530
    %3532 = vmatmul.bf16.gmra.mxu0 %v2187
    %v3533 = vpop.f32.mrf.mxu0
    %v3534 = vadd.f32 0.0, %v3533
    %v3535 = vpop.f32.mrf.mxu0
    %v3536 = vadd.f32 0.0, %v3535
    %3537 = vmatmul.bf16.gmra.mxu0 %v2190
    %v3538 = vpop.f32.mrf.mxu0
    %v3539 = vadd.f32 0.0, %v3538
    %v3540 = vpop.f32.mrf.mxu0
    %v3541 = vadd.f32 0.0, %v3540
    %3542 = vmatmul.bf16.gmra.mxu0 %v2193
    %v3543 = vpop.f32.mrf.mxu0
    %v3544 = vadd.f32 0.0, %v3543
    %v3545 = vpop.f32.mrf.mxu0
    %v3546 = vadd.f32 0.0, %v3545
    %3547 = vmatmul.bf16.gmra.mxu0 %v2196
    %v3548 = vpop.f32.mrf.mxu0
    %v3549 = vadd.f32 0.0, %v3548
    %v3550 = vpop.f32.mrf.mxu0
    %v3551 = vadd.f32 0.0, %v3550
    %3552 = vmatmul.bf16.gmra.mxu0 %v2199
    %v3553 = vpop.f32.mrf.mxu0
    %v3554 = vadd.f32 0.0, %v3553
    %v3555 = vpop.f32.mrf.mxu0
    %v3556 = vadd.f32 0.0, %v3555
    %3557 = vmatmul.bf16.gmra.mxu0 %v2202
    %v3558 = vpop.f32.mrf.mxu0
    %v3559 = vadd.f32 0.0, %v3558
    %v3560 = vpop.f32.mrf.mxu0
    %v3561 = vadd.f32 0.0, %v3560
    %3562 = vmatmul.bf16.gmra.mxu0 %v2205
    %v3563 = vpop.f32.mrf.mxu0
    %v3564 = vadd.f32 0.0, %v3563
    %v3565 = vpop.f32.mrf.mxu0
    %v3566 = vadd.f32 0.0, %v3565
    %3567 = vmatmul.bf16.gmra.mxu0 %v2208
    %v3568 = vpop.f32.mrf.mxu0
    %v3569 = vadd.f32 0.0, %v3568
    %v3570 = vpop.f32.mrf.mxu0
    %v3571 = vadd.f32 0.0, %v3570
    %3572 = vmatmul.bf16.gmra.mxu0 %v2211
    %v3573 = vpop.f32.mrf.mxu0
    %v3574 = vadd.f32 0.0, %v3573
    %v3575 = vpop.f32.mrf.mxu0
    %v3576 = vadd.f32 0.0, %v3575
    %3577 = vmatmul.bf16.gmra.mxu0 %v2214
    %v3578 = vpop.f32.mrf.mxu0
    %v3579 = vadd.f32 0.0, %v3578
    %v3580 = vpop.f32.mrf.mxu0
    %v3581 = vadd.f32 0.0, %v3580
    %3582 = vmatmul.bf16.gmra.mxu0 %v2217
    %v3583 = vpop.f32.mrf.mxu0
    %v3584 = vadd.f32 0.0, %v3583
    %v3585 = vpop.f32.mrf.mxu0
    %v3586 = vadd.f32 0.0, %v3585
    %3587 = vmatmul.bf16.gmra.mxu0 %v2220
    %v3588 = vpop.f32.mrf.mxu0
    %v3589 = vadd.f32 0.0, %v3588
    %v3590 = vpop.f32.mrf.mxu0
    %v3591 = vadd.f32 0.0, %v3590
    %3592 = vmatmul.bf16.gmra.mxu0 %v2223
    %v3593 = vpop.f32.mrf.mxu0
    %v3594 = vadd.f32 0.0, %v3593
    %v3595 = vpop.f32.mrf.mxu0
    %v3596 = vadd.f32 0.0, %v3595
    %3597 = vmatmul.bf16.gmra.mxu0 %v2226
    %v3598 = vpop.f32.mrf.mxu0
    %v3599 = vadd.f32 0.0, %v3598
    %v3600 = vpop.f32.mrf.mxu0
    %v3601 = vadd.f32 0.0, %v3600
    %3602 = vmatmul.bf16.gmra.mxu0 %v2229
    %v3603 = vpop.f32.mrf.mxu0
    %v3604 = vadd.f32 0.0, %v3603
    %v3605 = vpop.f32.mrf.mxu0
    %v3606 = vadd.f32 0.0, %v3605
    %3607 = vmatmul.bf16.gmra.mxu0 %v2232
    %v3608 = vpop.f32.mrf.mxu0
    %v3609 = vadd.f32 0.0, %v3608
    %v3610 = vpop.f32.mrf.mxu0
    %v3611 = vadd.f32 0.0, %v3610
    %3612 = vmatmul.bf16.gmra.mxu0 %v2235
    %v3613 = vpop.f32.mrf.mxu0
    %v3614 = vadd.f32 0.0, %v3613
    %v3615 = vpop.f32.mrf.mxu0
    %v3616 = vadd.f32 0.0, %v3615
    %3617 = vmatmul.bf16.gmra.mxu0 %v2238
    %v3618 = vpop.f32.mrf.mxu0
    %v3619 = vadd.f32 0.0, %v3618
    %v3620 = vpop.f32.mrf.mxu0
    %v3621 = vadd.f32 0.0, %v3620
    %3622 = vmatmul.bf16.gmra.mxu0 %v2241
    %v3623 = vpop.f32.mrf.mxu0
    %v3624 = vadd.f32 0.0, %v3623
    %v3625 = vpop.f32.mrf.mxu0
    %v3626 = vadd.f32 0.0, %v3625
    %3627 = vmatmul.bf16.gmra.mxu0 %v2244
    %v3628 = vpop.f32.mrf.mxu0
    %v3629 = vadd.f32 0.0, %v3628
    %v3630 = vpop.f32.mrf.mxu0
    %v3631 = vadd.f32 0.0, %v3630
    %3632 = vmatmul.bf16.gmra.mxu0 %v2247
    %v3633 = vpop.f32.mrf.mxu0
    %v3634 = vadd.f32 0.0, %v3633
    %v3635 = vpop.f32.mrf.mxu0
    %v3636 = vadd.f32 0.0, %v3635
    %3637 = vmatmul.bf16.gmra.mxu0 %v2250
    %v3638 = vpop.f32.mrf.mxu0
    %v3639 = vadd.f32 0.0, %v3638
    %v3640 = vpop.f32.mrf.mxu0
    %v3641 = vadd.f32 0.0, %v3640
    %3642 = vmatmul.bf16.gmra.mxu0 %v2253
    %v3643 = vpop.f32.mrf.mxu0
    %v3644 = vadd.f32 0.0, %v3643
    %v3645 = vpop.f32.mrf.mxu0
    %v3646 = vadd.f32 0.0, %v3645
    %3647 = vmatmul.bf16.gmra.mxu0 %v2256
    %v3648 = vpop.f32.mrf.mxu0
    %v3649 = vadd.f32 0.0, %v3648
    %v3650 = vpop.f32.mrf.mxu0
    %v3651 = vadd.f32 0.0, %v3650
    %3652 = vmatmul.bf16.gmra.mxu0 %v2259
    %v3653 = vpop.f32.mrf.mxu0
    %v3654 = vadd.f32 0.0, %v3653
    %v3655 = vpop.f32.mrf.mxu0
    %v3656 = vadd.f32 0.0, %v3655
    %3657 = vmatmul.bf16.gmra.mxu0 %v2262
    %v3658 = vpop.f32.mrf.mxu0
    %v3659 = vadd.f32 0.0, %v3658
    %v3660 = vpop.f32.mrf.mxu0
    %v3661 = vadd.f32 0.0, %v3660
    %3662 = vmatmul.bf16.gmra.mxu0 %v2265
    %v3663 = vpop.f32.mrf.mxu0
    %v3664 = vadd.f32 0.0, %v3663
    %v3665 = vpop.f32.mrf.mxu0
    %v3666 = vadd.f32 0.0, %v3665
    %3667 = vmatmul.bf16.gmra.mxu0 %v2268
    %v3668 = vpop.f32.mrf.mxu0
    %v3669 = vadd.f32 0.0, %v3668
    %v3670 = vpop.f32.mrf.mxu0
    %v3671 = vadd.f32 0.0, %v3670
    %3672 = vmatmul.bf16.gmra.mxu0 %v2271
    %v3673 = vpop.f32.mrf.mxu0
    %v3674 = vadd.f32 0.0, %v3673
    %v3675 = vpop.f32.mrf.mxu0
    %v3676 = vadd.f32 0.0, %v3675
    %3677 = vmatmul.bf16.gmra.mxu0 %v2274
    %v3678 = vpop.f32.mrf.mxu0
    %v3679 = vadd.f32 0.0, %v3678
    %v3680 = vpop.f32.mrf.mxu0
    %v3681 = vadd.f32 0.0, %v3680
    %3682 = vmatmul.bf16.gmra.mxu0 %v2277
    %v3683 = vpop.f32.mrf.mxu0
    %v3684 = vadd.f32 0.0, %v3683
    %v3685 = vpop.f32.mrf.mxu0
    %v3686 = vadd.f32 0.0, %v3685
    %3687 = vmatmul.bf16.gmra.mxu0 %v2280
    %v3688 = vpop.f32.mrf.mxu0
    %v3689 = vadd.f32 0.0, %v3688
    %v3690 = vpop.f32.mrf.mxu0
    %v3691 = vadd.f32 0.0, %v3690
    %3692 = vmatmul.bf16.gmra.mxu0 %v2283
    %v3693 = vpop.f32.mrf.mxu0
    %v3694 = vadd.f32 0.0, %v3693
    %v3695 = vpop.f32.mrf.mxu0
    %v3696 = vadd.f32 0.0, %v3695
    %3697 = vmatmul.bf16.gmra.mxu0 %v2286
    %v3698 = vpop.f32.mrf.mxu0
    %v3699 = vadd.f32 0.0, %v3698
    %v3700 = vpop.f32.mrf.mxu0
    %v3701 = vadd.f32 0.0, %v3700
    %3702 = vmatmul.bf16.gmra.mxu0 %v2289
    %v3703 = vpop.f32.mrf.mxu0
    %v3704 = vadd.f32 0.0, %v3703
    %v3705 = vpop.f32.mrf.mxu0
    %v3706 = vadd.f32 0.0, %v3705
    %3707 = vmatmul.bf16.gmra.mxu0 %v2292
    %v3708 = vpop.f32.mrf.mxu0
    %v3709 = vadd.f32 0.0, %v3708
    %v3710 = vpop.f32.mrf.mxu0
    %v3711 = vadd.f32 0.0, %v3710
    %3712 = vmatmul.bf16.gmra.mxu0 %v2295
    %v3713 = vpop.f32.mrf.mxu0
    %v3714 = vadd.f32 0.0, %v3713
    %v3715 = vpop.f32.mrf.mxu0
    %v3716 = vadd.f32 0.0, %v3715
    %3717 = vmatmul.bf16.gmra.mxu0 %v2298
    %v3718 = vpop.f32.mrf.mxu0
    %v3719 = vadd.f32 0.0, %v3718
    %v3720 = vpop.f32.mrf.mxu0
    %v3721 = vadd.f32 0.0, %v3720
    %3722 = vmatmul.bf16.gmra.mxu0 %v2301
    %v3723 = vpop.f32.mrf.mxu0
    %v3724 = vadd.f32 0.0, %v3723
    %v3725 = vpop.f32.mrf.mxu0
    %v3726 = vadd.f32 0.0, %v3725
    %3727 = vmatmul.bf16.gmra.mxu0 %v2304
    %v3728 = vpop.f32.mrf.mxu0
    %v3729 = vadd.f32 0.0, %v3728
    %v3730 = vpop.f32.mrf.mxu0
    %v3731 = vadd.f32 0.0, %v3730
    %3732 = vmatmul.bf16.gmra.mxu0 %v2307
    %v3733 = vpop.f32.mrf.mxu0
    %v3734 = vadd.f32 0.0, %v3733
    %v3735 = vpop.f32.mrf.mxu0
    %v3736 = vadd.f32 0.0, %v3735
    %3737 = vdwg.mxu0
    %3738 = vmatpush.bf16.msra.mxu0 %v2740
    %3739 = vmatpush.bf16.msra.mxu0 %v2737
    %3740 = vmatpush.bf16.msra.mxu0 %v2734
    %3741 = vmatpush.bf16.msra.mxu0 %v2731
    %3742 = vmatpush.bf16.msra.mxu0 %v2728
    %3743 = vmatpush.bf16.msra.mxu0 %v2725
    %3744 = vmatpush.bf16.msra.mxu0 %v2722
    %3745 = vmatpush.bf16.msra.mxu0 %v2719
    %3746 = vmatmul.bf16.gmra.mxu0 %v2167
    %v3747 = vpop.f32.mrf.mxu0
    %v3748 = vadd.f32 %v3499, %v3747
    %v3749 = vpop.f32.mrf.mxu0
    %v3750 = vadd.f32 %v3501, %v3749
    %3751 = vmatmul.bf16.gmra.mxu0 %v2170
    %v3752 = vpop.f32.mrf.mxu0
    %v3753 = vadd.f32 %v3504, %v3752
    %v3754 = vpop.f32.mrf.mxu0
    %v3755 = vadd.f32 %v3506, %v3754
    %3756 = vmatmul.bf16.gmra.mxu0 %v2173
    %v3757 = vpop.f32.mrf.mxu0
    %v3758 = vadd.f32 %v3509, %v3757
    %v3759 = vpop.f32.mrf.mxu0
    %v3760 = vadd.f32 %v3511, %v3759
    %3761 = vmatmul.bf16.gmra.mxu0 %v2176
    %v3762 = vpop.f32.mrf.mxu0
    %v3763 = vadd.f32 %v3514, %v3762
    %v3764 = vpop.f32.mrf.mxu0
    %v3765 = vadd.f32 %v3516, %v3764
    %3766 = vmatmul.bf16.gmra.mxu0 %v2179
    %v3767 = vpop.f32.mrf.mxu0
    %v3768 = vadd.f32 %v3519, %v3767
    %v3769 = vpop.f32.mrf.mxu0
    %v3770 = vadd.f32 %v3521, %v3769
    %3771 = vmatmul.bf16.gmra.mxu0 %v2182
    %v3772 = vpop.f32.mrf.mxu0
    %v3773 = vadd.f32 %v3524, %v3772
    %v3774 = vpop.f32.mrf.mxu0
    %v3775 = vadd.f32 %v3526, %v3774
    %3776 = vmatmul.bf16.gmra.mxu0 %v2185
    %v3777 = vpop.f32.mrf.mxu0
    %v3778 = vadd.f32 %v3529, %v3777
    %v3779 = vpop.f32.mrf.mxu0
    %v3780 = vadd.f32 %v3531, %v3779
    %3781 = vmatmul.bf16.gmra.mxu0 %v2188
    %v3782 = vpop.f32.mrf.mxu0
    %v3783 = vadd.f32 %v3534, %v3782
    %v3784 = vpop.f32.mrf.mxu0
    %v3785 = vadd.f32 %v3536, %v3784
    %3786 = vmatmul.bf16.gmra.mxu0 %v2191
    %v3787 = vpop.f32.mrf.mxu0
    %v3788 = vadd.f32 %v3539, %v3787
    %v3789 = vpop.f32.mrf.mxu0
    %v3790 = vadd.f32 %v3541, %v3789
    %3791 = vmatmul.bf16.gmra.mxu0 %v2194
    %v3792 = vpop.f32.mrf.mxu0
    %v3793 = vadd.f32 %v3544, %v3792
    %v3794 = vpop.f32.mrf.mxu0
    %v3795 = vadd.f32 %v3546, %v3794
    %3796 = vmatmul.bf16.gmra.mxu0 %v2197
    %v3797 = vpop.f32.mrf.mxu0
    %v3798 = vadd.f32 %v3549, %v3797
    %v3799 = vpop.f32.mrf.mxu0
    %v3800 = vadd.f32 %v3551, %v3799
    %3801 = vmatmul.bf16.gmra.mxu0 %v2200
    %v3802 = vpop.f32.mrf.mxu0
    %v3803 = vadd.f32 %v3554, %v3802
    %v3804 = vpop.f32.mrf.mxu0
    %v3805 = vadd.f32 %v3556, %v3804
    %3806 = vmatmul.bf16.gmra.mxu0 %v2203
    %v3807 = vpop.f32.mrf.mxu0
    %v3808 = vadd.f32 %v3559, %v3807
    %v3809 = vpop.f32.mrf.mxu0
    %v3810 = vadd.f32 %v3561, %v3809
    %3811 = vmatmul.bf16.gmra.mxu0 %v2206
    %v3812 = vpop.f32.mrf.mxu0
    %v3813 = vadd.f32 %v3564, %v3812
    %v3814 = vpop.f32.mrf.mxu0
    %v3815 = vadd.f32 %v3566, %v3814
    %3816 = vmatmul.bf16.gmra.mxu0 %v2209
    %v3817 = vpop.f32.mrf.mxu0
    %v3818 = vadd.f32 %v3569, %v3817
    %v3819 = vpop.f32.mrf.mxu0
    %v3820 = vadd.f32 %v3571, %v3819
    %3821 = vmatmul.bf16.gmra.mxu0 %v2212
    %v3822 = vpop.f32.mrf.mxu0
    %v3823 = vadd.f32 %v3574, %v3822
    %v3824 = vpop.f32.mrf.mxu0
    %v3825 = vadd.f32 %v3576, %v3824
    %3826 = vmatmul.bf16.gmra.mxu0 %v2215
    %v3827 = vpop.f32.mrf.mxu0
    %v3828 = vadd.f32 %v3579, %v3827
    %v3829 = vpop.f32.mrf.mxu0
    %v3830 = vadd.f32 %v3581, %v3829
    %3831 = vmatmul.bf16.gmra.mxu0 %v2218
    %v3832 = vpop.f32.mrf.mxu0
    %v3833 = vadd.f32 %v3584, %v3832
    %v3834 = vpop.f32.mrf.mxu0
    %v3835 = vadd.f32 %v3586, %v3834
    %3836 = vmatmul.bf16.gmra.mxu0 %v2221
    %v3837 = vpop.f32.mrf.mxu0
    %v3838 = vadd.f32 %v3589, %v3837
    %v3839 = vpop.f32.mrf.mxu0
    %v3840 = vadd.f32 %v3591, %v3839
    %3841 = vmatmul.bf16.gmra.mxu0 %v2224
    %v3842 = vpop.f32.mrf.mxu0
    %v3843 = vadd.f32 %v3594, %v3842
    %v3844 = vpop.f32.mrf.mxu0
    %v3845 = vadd.f32 %v3596, %v3844
    %3846 = vmatmul.bf16.gmra.mxu0 %v2227
    %v3847 = vpop.f32.mrf.mxu0
    %v3848 = vadd.f32 %v3599, %v3847
    %v3849 = vpop.f32.mrf.mxu0
    %v3850 = vadd.f32 %v3601, %v3849
    %3851 = vmatmul.bf16.gmra.mxu0 %v2230
    %v3852 = vpop.f32.mrf.mxu0
    %v3853 = vadd.f32 %v3604, %v3852
    %v3854 = vpop.f32.mrf.mxu0
    %v3855 = vadd.f32 %v3606, %v3854
    %3856 = vmatmul.bf16.gmra.mxu0 %v2233
    %v3857 = vpop.f32.mrf.mxu0
    %v3858 = vadd.f32 %v3609, %v3857
    %v3859 = vpop.f32.mrf.mxu0
    %v3860 = vadd.f32 %v3611, %v3859
    %3861 = vmatmul.bf16.gmra.mxu0 %v2236
    %v3862 = vpop.f32.mrf.mxu0
    %v3863 = vadd.f32 %v3614, %v3862
    %v3864 = vpop.f32.mrf.mxu0
    %v3865 = vadd.f32 %v3616, %v3864
    %3866 = vmatmul.bf16.gmra.mxu0 %v2239
    %v3867 = vpop.f32.mrf.mxu0
    %v3868 = vadd.f32 %v3619, %v3867
    %v3869 = vpop.f32.mrf.mxu0
    %v3870 = vadd.f32 %v3621, %v3869
    %3871 = vmatmul.bf16.gmra.mxu0 %v2242
    %v3872 = vpop.f32.mrf.mxu0
    %v3873 = vadd.f32 %v3624, %v3872
    %v3874 = vpop.f32.mrf.mxu0
    %v3875 = vadd.f32 %v3626, %v3874
    %3876 = vmatmul.bf16.gmra.mxu0 %v2245
    %v3877 = vpop.f32.mrf.mxu0
    %v3878 = vadd.f32 %v3629, %v3877
    %v3879 = vpop.f32.mrf.mxu0
    %v3880 = vadd.f32 %v3631, %v3879
    %3881 = vmatmul.bf16.gmra.mxu0 %v2248
    %v3882 = vpop.f32.mrf.mxu0
    %v3883 = vadd.f32 %v3634, %v3882
    %v3884 = vpop.f32.mrf.mxu0
    %v3885 = vadd.f32 %v3636, %v3884
    %3886 = vmatmul.bf16.gmra.mxu0 %v2251
    %v3887 = vpop.f32.mrf.mxu0
    %v3888 = vadd.f32 %v3639, %v3887
    %v3889 = vpop.f32.mrf.mxu0
    %v3890 = vadd.f32 %v3641, %v3889
    %3891 = vmatmul.bf16.gmra.mxu0 %v2254
    %v3892 = vpop.f32.mrf.mxu0
    %v3893 = vadd.f32 %v3644, %v3892
    %v3894 = vpop.f32.mrf.mxu0
    %v3895 = vadd.f32 %v3646, %v3894
    %3896 = vmatmul.bf16.gmra.mxu0 %v2257
    %v3897 = vpop.f32.mrf.mxu0
    %v3898 = vadd.f32 %v3649, %v3897
    %v3899 = vpop.f32.mrf.mxu0
    %v3900 = vadd.f32 %v3651, %v3899
    %3901 = vmatmul.bf16.gmra.mxu0 %v2260
    %v3902 = vpop.f32.mrf.mxu0
    %v3903 = vadd.f32 %v3654, %v3902
    %v3904 = vpop.f32.mrf.mxu0
    %v3905 = vadd.f32 %v3656, %v3904
    %3906 = vmatmul.bf16.gmra.mxu0 %v2263
    %v3907 = vpop.f32.mrf.mxu0
    %v3908 = vadd.f32 %v3659, %v3907
    %v3909 = vpop.f32.mrf.mxu0
    %v3910 = vadd.f32 %v3661, %v3909
    %3911 = vmatmul.bf16.gmra.mxu0 %v2266
    %v3912 = vpop.f32.mrf.mxu0
    %v3913 = vadd.f32 %v3664, %v3912
    %v3914 = vpop.f32.mrf.mxu0
    %v3915 = vadd.f32 %v3666, %v3914
    %3916 = vmatmul.bf16.gmra.mxu0 %v2269
    %v3917 = vpop.f32.mrf.mxu0
    %v3918 = vadd.f32 %v3669, %v3917
    %v3919 = vpop.f32.mrf.mxu0
    %v3920 = vadd.f32 %v3671, %v3919
    %3921 = vmatmul.bf16.gmra.mxu0 %v2272
    %v3922 = vpop.f32.mrf.mxu0
    %v3923 = vadd.f32 %v3674, %v3922
    %v3924 = vpop.f32.mrf.mxu0
    %v3925 = vadd.f32 %v3676, %v3924
    %3926 = vmatmul.bf16.gmra.mxu0 %v2275
    %v3927 = vpop.f32.mrf.mxu0
    %v3928 = vadd.f32 %v3679, %v3927
    %v3929 = vpop.f32.mrf.mxu0
    %v3930 = vadd.f32 %v3681, %v3929
    %3931 = vmatmul.bf16.gmra.mxu0 %v2278
    %v3932 = vpop.f32.mrf.mxu0
    %v3933 = vadd.f32 %v3684, %v3932
    %v3934 = vpop.f32.mrf.mxu0
    %v3935 = vadd.f32 %v3686, %v3934
    %3936 = vmatmul.bf16.gmra.mxu0 %v2281
    %v3937 = vpop.f32.mrf.mxu0
    %v3938 = vadd.f32 %v3689, %v3937
    %v3939 = vpop.f32.mrf.mxu0
    %v3940 = vadd.f32 %v3691, %v3939
    %3941 = vmatmul.bf16.gmra.mxu0 %v2284
    %v3942 = vpop.f32.mrf.mxu0
    %v3943 = vadd.f32 %v3694, %v3942
    %v3944 = vpop.f32.mrf.mxu0
    %v3945 = vadd.f32 %v3696, %v3944
    %3946 = vmatmul.bf16.gmra.mxu0 %v2287
    %v3947 = vpop.f32.mrf.mxu0
    %v3948 = vadd.f32 %v3699, %v3947
    %v3949 = vpop.f32.mrf.mxu0
    %v3950 = vadd.f32 %v3701, %v3949
    %3951 = vmatmul.bf16.gmra.mxu0 %v2290
    %v3952 = vpop.f32.mrf.mxu0
    %v3953 = vadd.f32 %v3704, %v3952
    %v3954 = vpop.f32.mrf.mxu0
    %v3955 = vadd.f32 %v3706, %v3954
    %3956 = vmatmul.bf16.gmra.mxu0 %v2293
    %v3957 = vpop.f32.mrf.mxu0
    %v3958 = vadd.f32 %v3709, %v3957
    %v3959 = vpop.f32.mrf.mxu0
    %v3960 = vadd.f32 %v3711, %v3959
    %3961 = vmatmul.bf16.gmra.mxu0 %v2296
    %v3962 = vpop.f32.mrf.mxu0
    %v3963 = vadd.f32 %v3714, %v3962
    %v3964 = vpop.f32.mrf.mxu0
    %v3965 = vadd.f32 %v3716, %v3964
    %3966 = vmatmul.bf16.gmra.mxu0 %v2299
    %v3967 = vpop.f32.mrf.mxu0
    %v3968 = vadd.f32 %v3719, %v3967
    %v3969 = vpop.f32.mrf.mxu0
    %v3970 = vadd.f32 %v3721, %v3969
    %3971 = vmatmul.bf16.gmra.mxu0 %v2302
    %v3972 = vpop.f32.mrf.mxu0
    %v3973 = vadd.f32 %v3724, %v3972
    %v3974 = vpop.f32.mrf.mxu0
    %v3975 = vadd.f32 %v3726, %v3974
    %3976 = vmatmul.bf16.gmra.mxu0 %v2305
    %v3977 = vpop.f32.mrf.mxu0
    %v3978 = vadd.f32 %v3729, %v3977
    %v3979 = vpop.f32.mrf.mxu0
    %v3980 = vadd.f32 %v3731, %v3979
    %3981 = vmatmul.bf16.gmra.mxu0 %v2308
    %v3982 = vpop.f32.mrf.mxu0
    %v3983 = vadd.f32 %v3734, %v3982
    %v3984 = vpop.f32.mrf.mxu0
    %v3985 = vadd.f32 %v3736, %v3984
    %3986 = vdwg.mxu0
    %3987 = vmatpush.bf16.msra.mxu0 %v2764
    %3988 = vmatpush.bf16.msra.mxu0 %v2761
    %3989 = vmatpush.bf16.msra.mxu0 %v2758
    %3990 = vmatpush.bf16.msra.mxu0 %v2755
    %3991 = vmatpush.bf16.msra.mxu0 %v2752
    %3992 = vmatpush.bf16.msra.mxu0 %v2749
    %3993 = vmatpush.bf16.msra.mxu0 %v2746
    %3994 = vmatpush.bf16.msra.mxu0 %v2743
    %3995 = vmatmul.bf16.gmra.mxu0 %v2168
    %v3996 = vpop.f32.mrf.mxu0
    %v3997 = vadd.f32 %v3748, %v3996
    %v3998 = vpop.f32.mrf.mxu0
    %v3999 = vadd.f32 %v3750, %v3998
    %4000 = vmatmul.bf16.gmra.mxu0 %v2171
    %v4001 = vpop.f32.mrf.mxu0
    %v4002 = vadd.f32 %v3753, %v4001
    %v4003 = vpop.f32.mrf.mxu0
    %v4004 = vadd.f32 %v3755, %v4003
    %4005 = vmatmul.bf16.gmra.mxu0 %v2174
    %v4006 = vpop.f32.mrf.mxu0
    %v4007 = vadd.f32 %v3758, %v4006
    %v4008 = vpop.f32.mrf.mxu0
    %v4009 = vadd.f32 %v3760, %v4008
    %4010 = vmatmul.bf16.gmra.mxu0 %v2177
    %v4011 = vpop.f32.mrf.mxu0
    %v4012 = vadd.f32 %v3763, %v4011
    %v4013 = vpop.f32.mrf.mxu0
    %v4014 = vadd.f32 %v3765, %v4013
    %4015 = vmatmul.bf16.gmra.mxu0 %v2180
    %v4016 = vpop.f32.mrf.mxu0
    %v4017 = vadd.f32 %v3768, %v4016
    %v4018 = vpop.f32.mrf.mxu0
    %v4019 = vadd.f32 %v3770, %v4018
    %4020 = vmatmul.bf16.gmra.mxu0 %v2183
    %v4021 = vpop.f32.mrf.mxu0
    %v4022 = vadd.f32 %v3773, %v4021
    %v4023 = vpop.f32.mrf.mxu0
    %v4024 = vadd.f32 %v3775, %v4023
    %4025 = vmatmul.bf16.gmra.mxu0 %v2186
    %v4026 = vpop.f32.mrf.mxu0
    %v4027 = vadd.f32 %v3778, %v4026
    %v4028 = vpop.f32.mrf.mxu0
    %v4029 = vadd.f32 %v3780, %v4028
    %4030 = vmatmul.bf16.gmra.mxu0 %v2189
    %v4031 = vpop.f32.mrf.mxu0
    %v4032 = vadd.f32 %v3783, %v4031
    %v4033 = vpop.f32.mrf.mxu0
    %v4034 = vadd.f32 %v3785, %v4033
    %4035 = vmatmul.bf16.gmra.mxu0 %v2192
    %v4036 = vpop.f32.mrf.mxu0
    %v4037 = vadd.f32 %v3788, %v4036
    %v4038 = vpop.f32.mrf.mxu0
    %v4039 = vadd.f32 %v3790, %v4038
    %4040 = vmatmul.bf16.gmra.mxu0 %v2195
    %v4041 = vpop.f32.mrf.mxu0
    %v4042 = vadd.f32 %v3793, %v4041
    %v4043 = vpop.f32.mrf.mxu0
    %v4044 = vadd.f32 %v3795, %v4043
    %4045 = vmatmul.bf16.gmra.mxu0 %v2198
    %v4046 = vpop.f32.mrf.mxu0
    %v4047 = vadd.f32 %v3798, %v4046
    %v4048 = vpop.f32.mrf.mxu0
    %v4049 = vadd.f32 %v3800, %v4048
    %4050 = vmatmul.bf16.gmra.mxu0 %v2201
    %v4051 = vpop.f32.mrf.mxu0
    %v4052 = vadd.f32 %v3803, %v4051
    %v4053 = vpop.f32.mrf.mxu0
    %v4054 = vadd.f32 %v3805, %v4053
    %4055 = vmatmul.bf16.gmra.mxu0 %v2204
    %v4056 = vpop.f32.mrf.mxu0
    %v4057 = vadd.f32 %v3808, %v4056
    %v4058 = vpop.f32.mrf.mxu0
    %v4059 = vadd.f32 %v3810, %v4058
    %4060 = vmatmul.bf16.gmra.mxu0 %v2207
    %v4061 = vpop.f32.mrf.mxu0
    %v4062 = vadd.f32 %v3813, %v4061
    %v4063 = vpop.f32.mrf.mxu0
    %v4064 = vadd.f32 %v3815, %v4063
    %4065 = vmatmul.bf16.gmra.mxu0 %v2210
    %v4066 = vpop.f32.mrf.mxu0
    %v4067 = vadd.f32 %v3818, %v4066
    %v4068 = vpop.f32.mrf.mxu0
    %v4069 = vadd.f32 %v3820, %v4068
    %4070 = vmatmul.bf16.gmra.mxu0 %v2213
    %v4071 = vpop.f32.mrf.mxu0
    %v4072 = vadd.f32 %v3823, %v4071
    %v4073 = vpop.f32.mrf.mxu0
    %v4074 = vadd.f32 %v3825, %v4073
    %4075 = vmatmul.bf16.gmra.mxu0 %v2216
    %v4076 = vpop.f32.mrf.mxu0
    %v4077 = vadd.f32 %v3828, %v4076
    %v4078 = vpop.f32.mrf.mxu0
    %v4079 = vadd.f32 %v3830, %v4078
    %4080 = vmatmul.bf16.gmra.mxu0 %v2219
    %v4081 = vpop.f32.mrf.mxu0
    %v4082 = vadd.f32 %v3833, %v4081
    %v4083 = vpop.f32.mrf.mxu0
    %v4084 = vadd.f32 %v3835, %v4083
    %4085 = vmatmul.bf16.gmra.mxu0 %v2222
    %v4086 = vpop.f32.mrf.mxu0
    %v4087 = vadd.f32 %v3838, %v4086
    %v4088 = vpop.f32.mrf.mxu0
    %v4089 = vadd.f32 %v3840, %v4088
    %4090 = vmatmul.bf16.gmra.mxu0 %v2225
    %v4091 = vpop.f32.mrf.mxu0
    %v4092 = vadd.f32 %v3843, %v4091
    %v4093 = vpop.f32.mrf.mxu0
    %v4094 = vadd.f32 %v3845, %v4093
    %4095 = vmatmul.bf16.gmra.mxu0 %v2228
    %v4096 = vpop.f32.mrf.mxu0
    %v4097 = vadd.f32 %v3848, %v4096
    %v4098 = vpop.f32.mrf.mxu0
    %v4099 = vadd.f32 %v3850, %v4098
    %4100 = vmatmul.bf16.gmra.mxu0 %v2231
    %v4101 = vpop.f32.mrf.mxu0
    %v4102 = vadd.f32 %v3853, %v4101
    %v4103 = vpop.f32.mrf.mxu0
    %v4104 = vadd.f32 %v3855, %v4103
    %4105 = vmatmul.bf16.gmra.mxu0 %v2234
    %v4106 = vpop.f32.mrf.mxu0
    %v4107 = vadd.f32 %v3858, %v4106
    %v4108 = vpop.f32.mrf.mxu0
    %v4109 = vadd.f32 %v3860, %v4108
    %4110 = vmatmul.bf16.gmra.mxu0 %v2237
    %v4111 = vpop.f32.mrf.mxu0
    %v4112 = vadd.f32 %v3863, %v4111
    %v4113 = vpop.f32.mrf.mxu0
    %v4114 = vadd.f32 %v3865, %v4113
    %4115 = vmatmul.bf16.gmra.mxu0 %v2240
    %v4116 = vpop.f32.mrf.mxu0
    %v4117 = vadd.f32 %v3868, %v4116
    %v4118 = vpop.f32.mrf.mxu0
    %v4119 = vadd.f32 %v3870, %v4118
    %4120 = vmatmul.bf16.gmra.mxu0 %v2243
    %v4121 = vpop.f32.mrf.mxu0
    %v4122 = vadd.f32 %v3873, %v4121
    %v4123 = vpop.f32.mrf.mxu0
    %v4124 = vadd.f32 %v3875, %v4123
    %4125 = vmatmul.bf16.gmra.mxu0 %v2246
    %v4126 = vpop.f32.mrf.mxu0
    %v4127 = vadd.f32 %v3878, %v4126
    %v4128 = vpop.f32.mrf.mxu0
    %v4129 = vadd.f32 %v3880, %v4128
    %4130 = vmatmul.bf16.gmra.mxu0 %v2249
    %v4131 = vpop.f32.mrf.mxu0
    %v4132 = vadd.f32 %v3883, %v4131
    %v4133 = vpop.f32.mrf.mxu0
    %v4134 = vadd.f32 %v3885, %v4133
    %4135 = vmatmul.bf16.gmra.mxu0 %v2252
    %v4136 = vpop.f32.mrf.mxu0
    %v4137 = vadd.f32 %v3888, %v4136
    %v4138 = vpop.f32.mrf.mxu0
    %v4139 = vadd.f32 %v3890, %v4138
    %4140 = vmatmul.bf16.gmra.mxu0 %v2255
    %v4141 = vpop.f32.mrf.mxu0
    %v4142 = vadd.f32 %v3893, %v4141
    %v4143 = vpop.f32.mrf.mxu0
    %v4144 = vadd.f32 %v3895, %v4143
    %4145 = vmatmul.bf16.gmra.mxu0 %v2258
    %v4146 = vpop.f32.mrf.mxu0
    %v4147 = vadd.f32 %v3898, %v4146
    %v4148 = vpop.f32.mrf.mxu0
    %v4149 = vadd.f32 %v3900, %v4148
    %4150 = vmatmul.bf16.gmra.mxu0 %v2261
    %v4151 = vpop.f32.mrf.mxu0
    %v4152 = vadd.f32 %v3903, %v4151
    %v4153 = vpop.f32.mrf.mxu0
    %v4154 = vadd.f32 %v3905, %v4153
    %4155 = vmatmul.bf16.gmra.mxu0 %v2264
    %v4156 = vpop.f32.mrf.mxu0
    %v4157 = vadd.f32 %v3908, %v4156
    %v4158 = vpop.f32.mrf.mxu0
    %v4159 = vadd.f32 %v3910, %v4158
    %4160 = vmatmul.bf16.gmra.mxu0 %v2267
    %v4161 = vpop.f32.mrf.mxu0
    %v4162 = vadd.f32 %v3913, %v4161
    %v4163 = vpop.f32.mrf.mxu0
    %v4164 = vadd.f32 %v3915, %v4163
    %4165 = vmatmul.bf16.gmra.mxu0 %v2270
    %v4166 = vpop.f32.mrf.mxu0
    %v4167 = vadd.f32 %v3918, %v4166
    %v4168 = vpop.f32.mrf.mxu0
    %v4169 = vadd.f32 %v3920, %v4168
    %4170 = vmatmul.bf16.gmra.mxu0 %v2273
    %v4171 = vpop.f32.mrf.mxu0
    %v4172 = vadd.f32 %v3923, %v4171
    %v4173 = vpop.f32.mrf.mxu0
    %v4174 = vadd.f32 %v3925, %v4173
    %4175 = vmatmul.bf16.gmra.mxu0 %v2276
    %v4176 = vpop.f32.mrf.mxu0
    %v4177 = vadd.f32 %v3928, %v4176
    %v4178 = vpop.f32.mrf.mxu0
    %v4179 = vadd.f32 %v3930, %v4178
    %4180 = vmatmul.bf16.gmra.mxu0 %v2279
    %v4181 = vpop.f32.mrf.mxu0
    %v4182 = vadd.f32 %v3933, %v4181
    %v4183 = vpop.f32.mrf.mxu0
    %v4184 = vadd.f32 %v3935, %v4183
    %4185 = vmatmul.bf16.gmra.mxu0 %v2282
    %v4186 = vpop.f32.mrf.mxu0
    %v4187 = vadd.f32 %v3938, %v4186
    %v4188 = vpop.f32.mrf.mxu0
    %v4189 = vadd.f32 %v3940, %v4188
    %4190 = vmatmul.bf16.gmra.mxu0 %v2285
    %v4191 = vpop.f32.mrf.mxu0
    %v4192 = vadd.f32 %v3943, %v4191
    %v4193 = vpop.f32.mrf.mxu0
    %v4194 = vadd.f32 %v3945, %v4193
    %4195 = vmatmul.bf16.gmra.mxu0 %v2288
    %v4196 = vpop.f32.mrf.mxu0
    %v4197 = vadd.f32 %v3948, %v4196
    %v4198 = vpop.f32.mrf.mxu0
    %v4199 = vadd.f32 %v3950, %v4198
    %4200 = vmatmul.bf16.gmra.mxu0 %v2291
    %v4201 = vpop.f32.mrf.mxu0
    %v4202 = vadd.f32 %v3953, %v4201
    %v4203 = vpop.f32.mrf.mxu0
    %v4204 = vadd.f32 %v3955, %v4203
    %4205 = vmatmul.bf16.gmra.mxu0 %v2294
    %v4206 = vpop.f32.mrf.mxu0
    %v4207 = vadd.f32 %v3958, %v4206
    %v4208 = vpop.f32.mrf.mxu0
    %v4209 = vadd.f32 %v3960, %v4208
    %4210 = vmatmul.bf16.gmra.mxu0 %v2297
    %v4211 = vpop.f32.mrf.mxu0
    %v4212 = vadd.f32 %v3963, %v4211
    %v4213 = vpop.f32.mrf.mxu0
    %v4214 = vadd.f32 %v3965, %v4213
    %4215 = vmatmul.bf16.gmra.mxu0 %v2300
    %v4216 = vpop.f32.mrf.mxu0
    %v4217 = vadd.f32 %v3968, %v4216
    %v4218 = vpop.f32.mrf.mxu0
    %v4219 = vadd.f32 %v3970, %v4218
    %4220 = vmatmul.bf16.gmra.mxu0 %v2303
    %v4221 = vpop.f32.mrf.mxu0
    %v4222 = vadd.f32 %v3973, %v4221
    %v4223 = vpop.f32.mrf.mxu0
    %v4224 = vadd.f32 %v3975, %v4223
    %4225 = vmatmul.bf16.gmra.mxu0 %v2306
    %v4226 = vpop.f32.mrf.mxu0
    %v4227 = vadd.f32 %v3978, %v4226
    %v4228 = vpop.f32.mrf.mxu0
    %v4229 = vadd.f32 %v3980, %v4228
    %4230 = vmatmul.bf16.gmra.mxu0 %v2309
    %v4231 = vpop.f32.mrf.mxu0
    %v4232 = vadd.f32 %v3983, %v4231
    %v4233 = vpop.f32.mrf.mxu0
    %v4234 = vadd.f32 %v3985, %v4233
    %4235 = vdwg.mxu0
    %4236 = vmatpush.bf16.msra.mxu0 %v2717
    %4237 = vmatpush.bf16.msra.mxu0 %v2714
    %4238 = vmatpush.bf16.msra.mxu0 %v2711
    %4239 = vmatpush.bf16.msra.mxu0 %v2708
    %4240 = vmatpush.bf16.msra.mxu0 %v2705
    %4241 = vmatpush.bf16.msra.mxu0 %v2702
    %4242 = vmatpush.bf16.msra.mxu0 %v2699
    %4243 = vmatpush.bf16.msra.mxu0 %v2696
    %4244 = vmatmul.bf16.gmra.mxu0 %v2166
    %v4245 = vpop.f32.mrf.mxu0
    %v4246 = vadd.f32 0.0, %v4245
    %v4247 = vpop.f32.mrf.mxu0
    %v4248 = vadd.f32 0.0, %v4247
    %4249 = vmatmul.bf16.gmra.mxu0 %v2169
    %v4250 = vpop.f32.mrf.mxu0
    %v4251 = vadd.f32 0.0, %v4250
    %v4252 = vpop.f32.mrf.mxu0
    %v4253 = vadd.f32 0.0, %v4252
    %4254 = vmatmul.bf16.gmra.mxu0 %v2172
    %v4255 = vpop.f32.mrf.mxu0
    %v4256 = vadd.f32 0.0, %v4255
    %v4257 = vpop.f32.mrf.mxu0
    %v4258 = vadd.f32 0.0, %v4257
    %4259 = vmatmul.bf16.gmra.mxu0 %v2175
    %v4260 = vpop.f32.mrf.mxu0
    %v4261 = vadd.f32 0.0, %v4260
    %v4262 = vpop.f32.mrf.mxu0
    %v4263 = vadd.f32 0.0, %v4262
    %4264 = vmatmul.bf16.gmra.mxu0 %v2178
    %v4265 = vpop.f32.mrf.mxu0
    %v4266 = vadd.f32 0.0, %v4265
    %v4267 = vpop.f32.mrf.mxu0
    %v4268 = vadd.f32 0.0, %v4267
    %4269 = vmatmul.bf16.gmra.mxu0 %v2181
    %v4270 = vpop.f32.mrf.mxu0
    %v4271 = vadd.f32 0.0, %v4270
    %v4272 = vpop.f32.mrf.mxu0
    %v4273 = vadd.f32 0.0, %v4272
    %4274 = vmatmul.bf16.gmra.mxu0 %v2184
    %v4275 = vpop.f32.mrf.mxu0
    %v4276 = vadd.f32 0.0, %v4275
    %v4277 = vpop.f32.mrf.mxu0
    %v4278 = vadd.f32 0.0, %v4277
    %4279 = vmatmul.bf16.gmra.mxu0 %v2187
    %v4280 = vpop.f32.mrf.mxu0
    %v4281 = vadd.f32 0.0, %v4280
    %v4282 = vpop.f32.mrf.mxu0
    %v4283 = vadd.f32 0.0, %v4282
    %4284 = vmatmul.bf16.gmra.mxu0 %v2190
    %v4285 = vpop.f32.mrf.mxu0
    %v4286 = vadd.f32 0.0, %v4285
    %v4287 = vpop.f32.mrf.mxu0
    %v4288 = vadd.f32 0.0, %v4287
    %4289 = vmatmul.bf16.gmra.mxu0 %v2193
    %v4290 = vpop.f32.mrf.mxu0
    %v4291 = vadd.f32 0.0, %v4290
    %v4292 = vpop.f32.mrf.mxu0
    %v4293 = vadd.f32 0.0, %v4292
    %4294 = vmatmul.bf16.gmra.mxu0 %v2196
    %v4295 = vpop.f32.mrf.mxu0
    %v4296 = vadd.f32 0.0, %v4295
    %v4297 = vpop.f32.mrf.mxu0
    %v4298 = vadd.f32 0.0, %v4297
    %4299 = vmatmul.bf16.gmra.mxu0 %v2199
    %v4300 = vpop.f32.mrf.mxu0
    %v4301 = vadd.f32 0.0, %v4300
    %v4302 = vpop.f32.mrf.mxu0
    %v4303 = vadd.f32 0.0, %v4302
    %4304 = vmatmul.bf16.gmra.mxu0 %v2202
    %v4305 = vpop.f32.mrf.mxu0
    %v4306 = vadd.f32 0.0, %v4305
    %v4307 = vpop.f32.mrf.mxu0
    %v4308 = vadd.f32 0.0, %v4307
    %4309 = vmatmul.bf16.gmra.mxu0 %v2205
    %v4310 = vpop.f32.mrf.mxu0
    %v4311 = vadd.f32 0.0, %v4310
    %v4312 = vpop.f32.mrf.mxu0
    %v4313 = vadd.f32 0.0, %v4312
    %4314 = vmatmul.bf16.gmra.mxu0 %v2208
    %v4315 = vpop.f32.mrf.mxu0
    %v4316 = vadd.f32 0.0, %v4315
    %v4317 = vpop.f32.mrf.mxu0
    %v4318 = vadd.f32 0.0, %v4317
    %4319 = vmatmul.bf16.gmra.mxu0 %v2211
    %v4320 = vpop.f32.mrf.mxu0
    %v4321 = vadd.f32 0.0, %v4320
    %v4322 = vpop.f32.mrf.mxu0
    %v4323 = vadd.f32 0.0, %v4322
    %4324 = vmatmul.bf16.gmra.mxu0 %v2214
    %v4325 = vpop.f32.mrf.mxu0
    %v4326 = vadd.f32 0.0, %v4325
    %v4327 = vpop.f32.mrf.mxu0
    %v4328 = vadd.f32 0.0, %v4327
    %4329 = vmatmul.bf16.gmra.mxu0 %v2217
    %v4330 = vpop.f32.mrf.mxu0
    %v4331 = vadd.f32 0.0, %v4330
    %v4332 = vpop.f32.mrf.mxu0
    %v4333 = vadd.f32 0.0, %v4332
    %4334 = vmatmul.bf16.gmra.mxu0 %v2220
    %v4335 = vpop.f32.mrf.mxu0
    %v4336 = vadd.f32 0.0, %v4335
    %v4337 = vpop.f32.mrf.mxu0
    %v4338 = vadd.f32 0.0, %v4337
    %4339 = vmatmul.bf16.gmra.mxu0 %v2223
    %v4340 = vpop.f32.mrf.mxu0
    %v4341 = vadd.f32 0.0, %v4340
    %v4342 = vpop.f32.mrf.mxu0
    %v4343 = vadd.f32 0.0, %v4342
    %4344 = vmatmul.bf16.gmra.mxu0 %v2226
    %v4345 = vpop.f32.mrf.mxu0
    %v4346 = vadd.f32 0.0, %v4345
    %v4347 = vpop.f32.mrf.mxu0
    %v4348 = vadd.f32 0.0, %v4347
    %4349 = vmatmul.bf16.gmra.mxu0 %v2229
    %v4350 = vpop.f32.mrf.mxu0
    %v4351 = vadd.f32 0.0, %v4350
    %v4352 = vpop.f32.mrf.mxu0
    %v4353 = vadd.f32 0.0, %v4352
    %4354 = vmatmul.bf16.gmra.mxu0 %v2232
    %v4355 = vpop.f32.mrf.mxu0
    %v4356 = vadd.f32 0.0, %v4355
    %v4357 = vpop.f32.mrf.mxu0
    %v4358 = vadd.f32 0.0, %v4357
    %4359 = vmatmul.bf16.gmra.mxu0 %v2235
    %v4360 = vpop.f32.mrf.mxu0
    %v4361 = vadd.f32 0.0, %v4360
    %v4362 = vpop.f32.mrf.mxu0
    %v4363 = vadd.f32 0.0, %v4362
    %4364 = vmatmul.bf16.gmra.mxu0 %v2238
    %v4365 = vpop.f32.mrf.mxu0
    %v4366 = vadd.f32 0.0, %v4365
    %v4367 = vpop.f32.mrf.mxu0
    %v4368 = vadd.f32 0.0, %v4367
    %4369 = vmatmul.bf16.gmra.mxu0 %v2241
    %v4370 = vpop.f32.mrf.mxu0
    %v4371 = vadd.f32 0.0, %v4370
    %v4372 = vpop.f32.mrf.mxu0
    %v4373 = vadd.f32 0.0, %v4372
    %4374 = vmatmul.bf16.gmra.mxu0 %v2244
    %v4375 = vpop.f32.mrf.mxu0
    %v4376 = vadd.f32 0.0, %v4375
    %v4377 = vpop.f32.mrf.mxu0
    %v4378 = vadd.f32 0.0, %v4377
    %4379 = vmatmul.bf16.gmra.mxu0 %v2247
    %v4380 = vpop.f32.mrf.mxu0
    %v4381 = vadd.f32 0.0, %v4380
    %v4382 = vpop.f32.mrf.mxu0
    %v4383 = vadd.f32 0.0, %v4382
    %4384 = vmatmul.bf16.gmra.mxu0 %v2250
    %v4385 = vpop.f32.mrf.mxu0
    %v4386 = vadd.f32 0.0, %v4385
    %v4387 = vpop.f32.mrf.mxu0
    %v4388 = vadd.f32 0.0, %v4387
    %4389 = vmatmul.bf16.gmra.mxu0 %v2253
    %v4390 = vpop.f32.mrf.mxu0
    %v4391 = vadd.f32 0.0, %v4390
    %v4392 = vpop.f32.mrf.mxu0
    %v4393 = vadd.f32 0.0, %v4392
    %4394 = vmatmul.bf16.gmra.mxu0 %v2256
    %v4395 = vpop.f32.mrf.mxu0
    %v4396 = vadd.f32 0.0, %v4395
    %v4397 = vpop.f32.mrf.mxu0
    %v4398 = vadd.f32 0.0, %v4397
    %4399 = vmatmul.bf16.gmra.mxu0 %v2259
    %v4400 = vpop.f32.mrf.mxu0
    %v4401 = vadd.f32 0.0, %v4400
    %v4402 = vpop.f32.mrf.mxu0
    %v4403 = vadd.f32 0.0, %v4402
    %4404 = vmatmul.bf16.gmra.mxu0 %v2262
    %v4405 = vpop.f32.mrf.mxu0
    %v4406 = vadd.f32 0.0, %v4405
    %v4407 = vpop.f32.mrf.mxu0
    %v4408 = vadd.f32 0.0, %v4407
    %4409 = vmatmul.bf16.gmra.mxu0 %v2265
    %v4410 = vpop.f32.mrf.mxu0
    %v4411 = vadd.f32 0.0, %v4410
    %v4412 = vpop.f32.mrf.mxu0
    %v4413 = vadd.f32 0.0, %v4412
    %4414 = vmatmul.bf16.gmra.mxu0 %v2268
    %v4415 = vpop.f32.mrf.mxu0
    %v4416 = vadd.f32 0.0, %v4415
    %v4417 = vpop.f32.mrf.mxu0
    %v4418 = vadd.f32 0.0, %v4417
    %4419 = vmatmul.bf16.gmra.mxu0 %v2271
    %v4420 = vpop.f32.mrf.mxu0
    %v4421 = vadd.f32 0.0, %v4420
    %v4422 = vpop.f32.mrf.mxu0
    %v4423 = vadd.f32 0.0, %v4422
    %4424 = vmatmul.bf16.gmra.mxu0 %v2274
    %v4425 = vpop.f32.mrf.mxu0
    %v4426 = vadd.f32 0.0, %v4425
    %v4427 = vpop.f32.mrf.mxu0
    %v4428 = vadd.f32 0.0, %v4427
    %4429 = vmatmul.bf16.gmra.mxu0 %v2277
    %v4430 = vpop.f32.mrf.mxu0
    %v4431 = vadd.f32 0.0, %v4430
    %v4432 = vpop.f32.mrf.mxu0
    %v4433 = vadd.f32 0.0, %v4432
    %4434 = vmatmul.bf16.gmra.mxu0 %v2280
    %v4435 = vpop.f32.mrf.mxu0
    %v4436 = vadd.f32 0.0, %v4435
    %v4437 = vpop.f32.mrf.mxu0
    %v4438 = vadd.f32 0.0, %v4437
    %4439 = vmatmul.bf16.gmra.mxu0 %v2283
    %v4440 = vpop.f32.mrf.mxu0
    %v4441 = vadd.f32 0.0, %v4440
    %v4442 = vpop.f32.mrf.mxu0
    %v4443 = vadd.f32 0.0, %v4442
    %4444 = vmatmul.bf16.gmra.mxu0 %v2286
    %v4445 = vpop.f32.mrf.mxu0
    %v4446 = vadd.f32 0.0, %v4445
    %v4447 = vpop.f32.mrf.mxu0
    %v4448 = vadd.f32 0.0, %v4447
    %4449 = vmatmul.bf16.gmra.mxu0 %v2289
    %v4450 = vpop.f32.mrf.mxu0
    %v4451 = vadd.f32 0.0, %v4450
    %v4452 = vpop.f32.mrf.mxu0
    %v4453 = vadd.f32 0.0, %v4452
    %4454 = vmatmul.bf16.gmra.mxu0 %v2292
    %v4455 = vpop.f32.mrf.mxu0
    %v4456 = vadd.f32 0.0, %v4455
    %v4457 = vpop.f32.mrf.mxu0
    %v4458 = vadd.f32 0.0, %v4457
    %4459 = vmatmul.bf16.gmra.mxu0 %v2295
    %v4460 = vpop.f32.mrf.mxu0
    %v4461 = vadd.f32 0.0, %v4460
    %v4462 = vpop.f32.mrf.mxu0
    %v4463 = vadd.f32 0.0, %v4462
    %4464 = vmatmul.bf16.gmra.mxu0 %v2298
    %v4465 = vpop.f32.mrf.mxu0
    %v4466 = vadd.f32 0.0, %v4465
    %v4467 = vpop.f32.mrf.mxu0
    %v4468 = vadd.f32 0.0, %v4467
    %4469 = vmatmul.bf16.gmra.mxu0 %v2301
    %v4470 = vpop.f32.mrf.mxu0
    %v4471 = vadd.f32 0.0, %v4470
    %v4472 = vpop.f32.mrf.mxu0
    %v4473 = vadd.f32 0.0, %v4472
    %4474 = vmatmul.bf16.gmra.mxu0 %v2304
    %v4475 = vpop.f32.mrf.mxu0
    %v4476 = vadd.f32 0.0, %v4475
    %v4477 = vpop.f32.mrf.mxu0
    %v4478 = vadd.f32 0.0, %v4477
    %4479 = vmatmul.bf16.gmra.mxu0 %v2307
    %v4480 = vpop.f32.mrf.mxu0
    %v4481 = vadd.f32 0.0, %v4480
    %v4482 = vpop.f32.mrf.mxu0
    %v4483 = vadd.f32 0.0, %v4482
    %4484 = vdwg.mxu0
    %4485 = vmatpush.bf16.msra.mxu0 %v2741
    %4486 = vmatpush.bf16.msra.mxu0 %v2738
    %4487 = vmatpush.bf16.msra.mxu0 %v2735
    %4488 = vmatpush.bf16.msra.mxu0 %v2732
    %4489 = vmatpush.bf16.msra.mxu0 %v2729
    %4490 = vmatpush.bf16.msra.mxu0 %v2726
    %4491 = vmatpush.bf16.msra.mxu0 %v2723
    %4492 = vmatpush.bf16.msra.mxu0 %v2720
    %4493 = vmatmul.bf16.gmra.mxu0 %v2167
    %v4494 = vpop.f32.mrf.mxu0
    %v4495 = vadd.f32 %v4246, %v4494
    %v4496 = vpop.f32.mrf.mxu0
    %v4497 = vadd.f32 %v4248, %v4496
    %4498 = vmatmul.bf16.gmra.mxu0 %v2170
    %v4499 = vpop.f32.mrf.mxu0
    %v4500 = vadd.f32 %v4251, %v4499
    %v4501 = vpop.f32.mrf.mxu0
    %v4502 = vadd.f32 %v4253, %v4501
    %4503 = vmatmul.bf16.gmra.mxu0 %v2173
    %v4504 = vpop.f32.mrf.mxu0
    %v4505 = vadd.f32 %v4256, %v4504
    %v4506 = vpop.f32.mrf.mxu0
    %v4507 = vadd.f32 %v4258, %v4506
    %4508 = vmatmul.bf16.gmra.mxu0 %v2176
    %v4509 = vpop.f32.mrf.mxu0
    %v4510 = vadd.f32 %v4261, %v4509
    %v4511 = vpop.f32.mrf.mxu0
    %v4512 = vadd.f32 %v4263, %v4511
    %4513 = vmatmul.bf16.gmra.mxu0 %v2179
    %v4514 = vpop.f32.mrf.mxu0
    %v4515 = vadd.f32 %v4266, %v4514
    %v4516 = vpop.f32.mrf.mxu0
    %v4517 = vadd.f32 %v4268, %v4516
    %4518 = vmatmul.bf16.gmra.mxu0 %v2182
    %v4519 = vpop.f32.mrf.mxu0
    %v4520 = vadd.f32 %v4271, %v4519
    %v4521 = vpop.f32.mrf.mxu0
    %v4522 = vadd.f32 %v4273, %v4521
    %4523 = vmatmul.bf16.gmra.mxu0 %v2185
    %v4524 = vpop.f32.mrf.mxu0
    %v4525 = vadd.f32 %v4276, %v4524
    %v4526 = vpop.f32.mrf.mxu0
    %v4527 = vadd.f32 %v4278, %v4526
    %4528 = vmatmul.bf16.gmra.mxu0 %v2188
    %v4529 = vpop.f32.mrf.mxu0
    %v4530 = vadd.f32 %v4281, %v4529
    %v4531 = vpop.f32.mrf.mxu0
    %v4532 = vadd.f32 %v4283, %v4531
    %4533 = vmatmul.bf16.gmra.mxu0 %v2191
    %v4534 = vpop.f32.mrf.mxu0
    %v4535 = vadd.f32 %v4286, %v4534
    %v4536 = vpop.f32.mrf.mxu0
    %v4537 = vadd.f32 %v4288, %v4536
    %4538 = vmatmul.bf16.gmra.mxu0 %v2194
    %v4539 = vpop.f32.mrf.mxu0
    %v4540 = vadd.f32 %v4291, %v4539
    %v4541 = vpop.f32.mrf.mxu0
    %v4542 = vadd.f32 %v4293, %v4541
    %4543 = vmatmul.bf16.gmra.mxu0 %v2197
    %v4544 = vpop.f32.mrf.mxu0
    %v4545 = vadd.f32 %v4296, %v4544
    %v4546 = vpop.f32.mrf.mxu0
    %v4547 = vadd.f32 %v4298, %v4546
    %4548 = vmatmul.bf16.gmra.mxu0 %v2200
    %v4549 = vpop.f32.mrf.mxu0
    %v4550 = vadd.f32 %v4301, %v4549
    %v4551 = vpop.f32.mrf.mxu0
    %v4552 = vadd.f32 %v4303, %v4551
    %4553 = vmatmul.bf16.gmra.mxu0 %v2203
    %v4554 = vpop.f32.mrf.mxu0
    %v4555 = vadd.f32 %v4306, %v4554
    %v4556 = vpop.f32.mrf.mxu0
    %v4557 = vadd.f32 %v4308, %v4556
    %4558 = vmatmul.bf16.gmra.mxu0 %v2206
    %v4559 = vpop.f32.mrf.mxu0
    %v4560 = vadd.f32 %v4311, %v4559
    %v4561 = vpop.f32.mrf.mxu0
    %v4562 = vadd.f32 %v4313, %v4561
    %4563 = vmatmul.bf16.gmra.mxu0 %v2209
    %v4564 = vpop.f32.mrf.mxu0
    %v4565 = vadd.f32 %v4316, %v4564
    %v4566 = vpop.f32.mrf.mxu0
    %v4567 = vadd.f32 %v4318, %v4566
    %4568 = vmatmul.bf16.gmra.mxu0 %v2212
    %v4569 = vpop.f32.mrf.mxu0
    %v4570 = vadd.f32 %v4321, %v4569
    %v4571 = vpop.f32.mrf.mxu0
    %v4572 = vadd.f32 %v4323, %v4571
    %4573 = vmatmul.bf16.gmra.mxu0 %v2215
    %v4574 = vpop.f32.mrf.mxu0
    %v4575 = vadd.f32 %v4326, %v4574
    %v4576 = vpop.f32.mrf.mxu0
    %v4577 = vadd.f32 %v4328, %v4576
    %4578 = vmatmul.bf16.gmra.mxu0 %v2218
    %v4579 = vpop.f32.mrf.mxu0
    %v4580 = vadd.f32 %v4331, %v4579
    %v4581 = vpop.f32.mrf.mxu0
    %v4582 = vadd.f32 %v4333, %v4581
    %4583 = vmatmul.bf16.gmra.mxu0 %v2221
    %v4584 = vpop.f32.mrf.mxu0
    %v4585 = vadd.f32 %v4336, %v4584
    %v4586 = vpop.f32.mrf.mxu0
    %v4587 = vadd.f32 %v4338, %v4586
    %4588 = vmatmul.bf16.gmra.mxu0 %v2224
    %v4589 = vpop.f32.mrf.mxu0
    %v4590 = vadd.f32 %v4341, %v4589
    %v4591 = vpop.f32.mrf.mxu0
    %v4592 = vadd.f32 %v4343, %v4591
    %4593 = vmatmul.bf16.gmra.mxu0 %v2227
    %v4594 = vpop.f32.mrf.mxu0
    %v4595 = vadd.f32 %v4346, %v4594
    %v4596 = vpop.f32.mrf.mxu0
    %v4597 = vadd.f32 %v4348, %v4596
    %4598 = vmatmul.bf16.gmra.mxu0 %v2230
    %v4599 = vpop.f32.mrf.mxu0
    %v4600 = vadd.f32 %v4351, %v4599
    %v4601 = vpop.f32.mrf.mxu0
    %v4602 = vadd.f32 %v4353, %v4601
    %4603 = vmatmul.bf16.gmra.mxu0 %v2233
    %v4604 = vpop.f32.mrf.mxu0
    %v4605 = vadd.f32 %v4356, %v4604
    %v4606 = vpop.f32.mrf.mxu0
    %v4607 = vadd.f32 %v4358, %v4606
    %4608 = vmatmul.bf16.gmra.mxu0 %v2236
    %v4609 = vpop.f32.mrf.mxu0
    %v4610 = vadd.f32 %v4361, %v4609
    %v4611 = vpop.f32.mrf.mxu0
    %v4612 = vadd.f32 %v4363, %v4611
    %4613 = vmatmul.bf16.gmra.mxu0 %v2239
    %v4614 = vpop.f32.mrf.mxu0
    %v4615 = vadd.f32 %v4366, %v4614
    %v4616 = vpop.f32.mrf.mxu0
    %v4617 = vadd.f32 %v4368, %v4616
    %4618 = vmatmul.bf16.gmra.mxu0 %v2242
    %v4619 = vpop.f32.mrf.mxu0
    %v4620 = vadd.f32 %v4371, %v4619
    %v4621 = vpop.f32.mrf.mxu0
    %v4622 = vadd.f32 %v4373, %v4621
    %4623 = vmatmul.bf16.gmra.mxu0 %v2245
    %v4624 = vpop.f32.mrf.mxu0
    %v4625 = vadd.f32 %v4376, %v4624
    %v4626 = vpop.f32.mrf.mxu0
    %v4627 = vadd.f32 %v4378, %v4626
    %4628 = vmatmul.bf16.gmra.mxu0 %v2248
    %v4629 = vpop.f32.mrf.mxu0
    %v4630 = vadd.f32 %v4381, %v4629
    %v4631 = vpop.f32.mrf.mxu0
    %v4632 = vadd.f32 %v4383, %v4631
    %4633 = vmatmul.bf16.gmra.mxu0 %v2251
    %v4634 = vpop.f32.mrf.mxu0
    %v4635 = vadd.f32 %v4386, %v4634
    %v4636 = vpop.f32.mrf.mxu0
    %v4637 = vadd.f32 %v4388, %v4636
    %4638 = vmatmul.bf16.gmra.mxu0 %v2254
    %v4639 = vpop.f32.mrf.mxu0
    %v4640 = vadd.f32 %v4391, %v4639
    %v4641 = vpop.f32.mrf.mxu0
    %v4642 = vadd.f32 %v4393, %v4641
    %4643 = vmatmul.bf16.gmra.mxu0 %v2257
    %v4644 = vpop.f32.mrf.mxu0
    %v4645 = vadd.f32 %v4396, %v4644
    %v4646 = vpop.f32.mrf.mxu0
    %v4647 = vadd.f32 %v4398, %v4646
    %4648 = vmatmul.bf16.gmra.mxu0 %v2260
    %v4649 = vpop.f32.mrf.mxu0
    %v4650 = vadd.f32 %v4401, %v4649
    %v4651 = vpop.f32.mrf.mxu0
    %v4652 = vadd.f32 %v4403, %v4651
    %4653 = vmatmul.bf16.gmra.mxu0 %v2263
    %v4654 = vpop.f32.mrf.mxu0
    %v4655 = vadd.f32 %v4406, %v4654
    %v4656 = vpop.f32.mrf.mxu0
    %v4657 = vadd.f32 %v4408, %v4656
    %4658 = vmatmul.bf16.gmra.mxu0 %v2266
    %v4659 = vpop.f32.mrf.mxu0
    %v4660 = vadd.f32 %v4411, %v4659
    %v4661 = vpop.f32.mrf.mxu0
    %v4662 = vadd.f32 %v4413, %v4661
    %4663 = vmatmul.bf16.gmra.mxu0 %v2269
    %v4664 = vpop.f32.mrf.mxu0
    %v4665 = vadd.f32 %v4416, %v4664
    %v4666 = vpop.f32.mrf.mxu0
    %v4667 = vadd.f32 %v4418, %v4666
    %4668 = vmatmul.bf16.gmra.mxu0 %v2272
    %v4669 = vpop.f32.mrf.mxu0
    %v4670 = vadd.f32 %v4421, %v4669
    %v4671 = vpop.f32.mrf.mxu0
    %v4672 = vadd.f32 %v4423, %v4671
    %4673 = vmatmul.bf16.gmra.mxu0 %v2275
    %v4674 = vpop.f32.mrf.mxu0
    %v4675 = vadd.f32 %v4426, %v4674
    %v4676 = vpop.f32.mrf.mxu0
    %v4677 = vadd.f32 %v4428, %v4676
    %4678 = vmatmul.bf16.gmra.mxu0 %v2278
    %v4679 = vpop.f32.mrf.mxu0
    %v4680 = vadd.f32 %v4431, %v4679
    %v4681 = vpop.f32.mrf.mxu0
    %v4682 = vadd.f32 %v4433, %v4681
    %4683 = vmatmul.bf16.gmra.mxu0 %v2281
    %v4684 = vpop.f32.mrf.mxu0
    %v4685 = vadd.f32 %v4436, %v4684
    %v4686 = vpop.f32.mrf.mxu0
    %v4687 = vadd.f32 %v4438, %v4686
    %4688 = vmatmul.bf16.gmra.mxu0 %v2284
    %v4689 = vpop.f32.mrf.mxu0
    %v4690 = vadd.f32 %v4441, %v4689
    %v4691 = vpop.f32.mrf.mxu0
    %v4692 = vadd.f32 %v4443, %v4691
    %4693 = vmatmul.bf16.gmra.mxu0 %v2287
    %v4694 = vpop.f32.mrf.mxu0
    %v4695 = vadd.f32 %v4446, %v4694
    %v4696 = vpop.f32.mrf.mxu0
    %v4697 = vadd.f32 %v4448, %v4696
    %4698 = vmatmul.bf16.gmra.mxu0 %v2290
    %v4699 = vpop.f32.mrf.mxu0
    %v4700 = vadd.f32 %v4451, %v4699
    %v4701 = vpop.f32.mrf.mxu0
    %v4702 = vadd.f32 %v4453, %v4701
    %4703 = vmatmul.bf16.gmra.mxu0 %v2293
    %v4704 = vpop.f32.mrf.mxu0
    %v4705 = vadd.f32 %v4456, %v4704
    %v4706 = vpop.f32.mrf.mxu0
    %v4707 = vadd.f32 %v4458, %v4706
    %4708 = vmatmul.bf16.gmra.mxu0 %v2296
    %v4709 = vpop.f32.mrf.mxu0
    %v4710 = vadd.f32 %v4461, %v4709
    %v4711 = vpop.f32.mrf.mxu0
    %v4712 = vadd.f32 %v4463, %v4711
    %4713 = vmatmul.bf16.gmra.mxu0 %v2299
    %v4714 = vpop.f32.mrf.mxu0
    %v4715 = vadd.f32 %v4466, %v4714
    %v4716 = vpop.f32.mrf.mxu0
    %v4717 = vadd.f32 %v4468, %v4716
    %4718 = vmatmul.bf16.gmra.mxu0 %v2302
    %v4719 = vpop.f32.mrf.mxu0
    %v4720 = vadd.f32 %v4471, %v4719
    %v4721 = vpop.f32.mrf.mxu0
    %v4722 = vadd.f32 %v4473, %v4721
    %4723 = vmatmul.bf16.gmra.mxu0 %v2305
    %v4724 = vpop.f32.mrf.mxu0
    %v4725 = vadd.f32 %v4476, %v4724
    %v4726 = vpop.f32.mrf.mxu0
    %v4727 = vadd.f32 %v4478, %v4726
    %4728 = vmatmul.bf16.gmra.mxu0 %v2308
    %v4729 = vpop.f32.mrf.mxu0
    %v4730 = vadd.f32 %v4481, %v4729
    %v4731 = vpop.f32.mrf.mxu0
    %v4732 = vadd.f32 %v4483, %v4731
    %4733 = vdwg.mxu0
    %4734 = vmatpush.bf16.msra.mxu0 %v2765
    %4735 = vmatpush.bf16.msra.mxu0 %v2762
    %4736 = vmatpush.bf16.msra.mxu0 %v2759
    %4737 = vmatpush.bf16.msra.mxu0 %v2756
    %4738 = vmatpush.bf16.msra.mxu0 %v2753
    %4739 = vmatpush.bf16.msra.mxu0 %v2750
    %4740 = vmatpush.bf16.msra.mxu0 %v2747
    %4741 = vmatpush.bf16.msra.mxu0 %v2744
    %4742 = vmatmul.bf16.gmra.mxu0 %v2168
    %v4743 = vpop.f32.mrf.mxu0
    %v4744 = vadd.f32 %v4495, %v4743
    %v4745 = vpop.f32.mrf.mxu0
    %v4746 = vadd.f32 %v4497, %v4745
    %4747 = vmatmul.bf16.gmra.mxu0 %v2171
    %v4748 = vpop.f32.mrf.mxu0
    %v4749 = vadd.f32 %v4500, %v4748
    %v4750 = vpop.f32.mrf.mxu0
    %v4751 = vadd.f32 %v4502, %v4750
    %4752 = vmatmul.bf16.gmra.mxu0 %v2174
    %v4753 = vpop.f32.mrf.mxu0
    %v4754 = vadd.f32 %v4505, %v4753
    %v4755 = vpop.f32.mrf.mxu0
    %v4756 = vadd.f32 %v4507, %v4755
    %4757 = vmatmul.bf16.gmra.mxu0 %v2177
    %v4758 = vpop.f32.mrf.mxu0
    %v4759 = vadd.f32 %v4510, %v4758
    %v4760 = vpop.f32.mrf.mxu0
    %v4761 = vadd.f32 %v4512, %v4760
    %4762 = vmatmul.bf16.gmra.mxu0 %v2180
    %v4763 = vpop.f32.mrf.mxu0
    %v4764 = vadd.f32 %v4515, %v4763
    %v4765 = vpop.f32.mrf.mxu0
    %v4766 = vadd.f32 %v4517, %v4765
    %4767 = vmatmul.bf16.gmra.mxu0 %v2183
    %v4768 = vpop.f32.mrf.mxu0
    %v4769 = vadd.f32 %v4520, %v4768
    %v4770 = vpop.f32.mrf.mxu0
    %v4771 = vadd.f32 %v4522, %v4770
    %4772 = vmatmul.bf16.gmra.mxu0 %v2186
    %v4773 = vpop.f32.mrf.mxu0
    %v4774 = vadd.f32 %v4525, %v4773
    %v4775 = vpop.f32.mrf.mxu0
    %v4776 = vadd.f32 %v4527, %v4775
    %4777 = vmatmul.bf16.gmra.mxu0 %v2189
    %v4778 = vpop.f32.mrf.mxu0
    %v4779 = vadd.f32 %v4530, %v4778
    %v4780 = vpop.f32.mrf.mxu0
    %v4781 = vadd.f32 %v4532, %v4780
    %4782 = vmatmul.bf16.gmra.mxu0 %v2192
    %v4783 = vpop.f32.mrf.mxu0
    %v4784 = vadd.f32 %v4535, %v4783
    %v4785 = vpop.f32.mrf.mxu0
    %v4786 = vadd.f32 %v4537, %v4785
    %4787 = vmatmul.bf16.gmra.mxu0 %v2195
    %v4788 = vpop.f32.mrf.mxu0
    %v4789 = vadd.f32 %v4540, %v4788
    %v4790 = vpop.f32.mrf.mxu0
    %v4791 = vadd.f32 %v4542, %v4790
    %4792 = vmatmul.bf16.gmra.mxu0 %v2198
    %v4793 = vpop.f32.mrf.mxu0
    %v4794 = vadd.f32 %v4545, %v4793
    %v4795 = vpop.f32.mrf.mxu0
    %v4796 = vadd.f32 %v4547, %v4795
    %4797 = vmatmul.bf16.gmra.mxu0 %v2201
    %v4798 = vpop.f32.mrf.mxu0
    %v4799 = vadd.f32 %v4550, %v4798
    %v4800 = vpop.f32.mrf.mxu0
    %v4801 = vadd.f32 %v4552, %v4800
    %4802 = vmatmul.bf16.gmra.mxu0 %v2204
    %v4803 = vpop.f32.mrf.mxu0
    %v4804 = vadd.f32 %v4555, %v4803
    %v4805 = vpop.f32.mrf.mxu0
    %v4806 = vadd.f32 %v4557, %v4805
    %4807 = vmatmul.bf16.gmra.mxu0 %v2207
    %v4808 = vpop.f32.mrf.mxu0
    %v4809 = vadd.f32 %v4560, %v4808
    %v4810 = vpop.f32.mrf.mxu0
    %v4811 = vadd.f32 %v4562, %v4810
    %4812 = vmatmul.bf16.gmra.mxu0 %v2210
    %v4813 = vpop.f32.mrf.mxu0
    %v4814 = vadd.f32 %v4565, %v4813
    %v4815 = vpop.f32.mrf.mxu0
    %v4816 = vadd.f32 %v4567, %v4815
    %4817 = vmatmul.bf16.gmra.mxu0 %v2213
    %v4818 = vpop.f32.mrf.mxu0
    %v4819 = vadd.f32 %v4570, %v4818
    %v4820 = vpop.f32.mrf.mxu0
    %v4821 = vadd.f32 %v4572, %v4820
    %4822 = vmatmul.bf16.gmra.mxu0 %v2216
    %v4823 = vpop.f32.mrf.mxu0
    %v4824 = vadd.f32 %v4575, %v4823
    %v4825 = vpop.f32.mrf.mxu0
    %v4826 = vadd.f32 %v4577, %v4825
    %4827 = vmatmul.bf16.gmra.mxu0 %v2219
    %v4828 = vpop.f32.mrf.mxu0
    %v4829 = vadd.f32 %v4580, %v4828
    %v4830 = vpop.f32.mrf.mxu0
    %v4831 = vadd.f32 %v4582, %v4830
    %4832 = vmatmul.bf16.gmra.mxu0 %v2222
    %v4833 = vpop.f32.mrf.mxu0
    %v4834 = vadd.f32 %v4585, %v4833
    %v4835 = vpop.f32.mrf.mxu0
    %v4836 = vadd.f32 %v4587, %v4835
    %4837 = vmatmul.bf16.gmra.mxu0 %v2225
    %v4838 = vpop.f32.mrf.mxu0
    %v4839 = vadd.f32 %v4590, %v4838
    %v4840 = vpop.f32.mrf.mxu0
    %v4841 = vadd.f32 %v4592, %v4840
    %4842 = vmatmul.bf16.gmra.mxu0 %v2228
    %v4843 = vpop.f32.mrf.mxu0
    %v4844 = vadd.f32 %v4595, %v4843
    %v4845 = vpop.f32.mrf.mxu0
    %v4846 = vadd.f32 %v4597, %v4845
    %4847 = vmatmul.bf16.gmra.mxu0 %v2231
    %v4848 = vpop.f32.mrf.mxu0
    %v4849 = vadd.f32 %v4600, %v4848
    %v4850 = vpop.f32.mrf.mxu0
    %v4851 = vadd.f32 %v4602, %v4850
    %4852 = vmatmul.bf16.gmra.mxu0 %v2234
    %v4853 = vpop.f32.mrf.mxu0
    %v4854 = vadd.f32 %v4605, %v4853
    %v4855 = vpop.f32.mrf.mxu0
    %v4856 = vadd.f32 %v4607, %v4855
    %4857 = vmatmul.bf16.gmra.mxu0 %v2237
    %v4858 = vpop.f32.mrf.mxu0
    %v4859 = vadd.f32 %v4610, %v4858
    %v4860 = vpop.f32.mrf.mxu0
    %v4861 = vadd.f32 %v4612, %v4860
    %4862 = vmatmul.bf16.gmra.mxu0 %v2240
    %v4863 = vpop.f32.mrf.mxu0
    %v4864 = vadd.f32 %v4615, %v4863
    %v4865 = vpop.f32.mrf.mxu0
    %v4866 = vadd.f32 %v4617, %v4865
    %4867 = vmatmul.bf16.gmra.mxu0 %v2243
    %v4868 = vpop.f32.mrf.mxu0
    %v4869 = vadd.f32 %v4620, %v4868
    %v4870 = vpop.f32.mrf.mxu0
    %v4871 = vadd.f32 %v4622, %v4870
    %4872 = vmatmul.bf16.gmra.mxu0 %v2246
    %v4873 = vpop.f32.mrf.mxu0
    %v4874 = vadd.f32 %v4625, %v4873
    %v4875 = vpop.f32.mrf.mxu0
    %v4876 = vadd.f32 %v4627, %v4875
    %4877 = vmatmul.bf16.gmra.mxu0 %v2249
    %v4878 = vpop.f32.mrf.mxu0
    %v4879 = vadd.f32 %v4630, %v4878
    %v4880 = vpop.f32.mrf.mxu0
    %v4881 = vadd.f32 %v4632, %v4880
    %4882 = vmatmul.bf16.gmra.mxu0 %v2252
    %v4883 = vpop.f32.mrf.mxu0
    %v4884 = vadd.f32 %v4635, %v4883
    %v4885 = vpop.f32.mrf.mxu0
    %v4886 = vadd.f32 %v4637, %v4885
    %4887 = vmatmul.bf16.gmra.mxu0 %v2255
    %v4888 = vpop.f32.mrf.mxu0
    %v4889 = vadd.f32 %v4640, %v4888
    %v4890 = vpop.f32.mrf.mxu0
    %v4891 = vadd.f32 %v4642, %v4890
    %4892 = vmatmul.bf16.gmra.mxu0 %v2258
    %v4893 = vpop.f32.mrf.mxu0
    %v4894 = vadd.f32 %v4645, %v4893
    %v4895 = vpop.f32.mrf.mxu0
    %v4896 = vadd.f32 %v4647, %v4895
    %4897 = vmatmul.bf16.gmra.mxu0 %v2261
    %v4898 = vpop.f32.mrf.mxu0
    %v4899 = vadd.f32 %v4650, %v4898
    %v4900 = vpop.f32.mrf.mxu0
    %v4901 = vadd.f32 %v4652, %v4900
    %4902 = vmatmul.bf16.gmra.mxu0 %v2264
    %v4903 = vpop.f32.mrf.mxu0
    %v4904 = vadd.f32 %v4655, %v4903
    %v4905 = vpop.f32.mrf.mxu0
    %v4906 = vadd.f32 %v4657, %v4905
    %4907 = vmatmul.bf16.gmra.mxu0 %v2267
    %v4908 = vpop.f32.mrf.mxu0
    %v4909 = vadd.f32 %v4660, %v4908
    %v4910 = vpop.f32.mrf.mxu0
    %v4911 = vadd.f32 %v4662, %v4910
    %4912 = vmatmul.bf16.gmra.mxu0 %v2270
    %v4913 = vpop.f32.mrf.mxu0
    %v4914 = vadd.f32 %v4665, %v4913
    %v4915 = vpop.f32.mrf.mxu0
    %v4916 = vadd.f32 %v4667, %v4915
    %4917 = vmatmul.bf16.gmra.mxu0 %v2273
    %v4918 = vpop.f32.mrf.mxu0
    %v4919 = vadd.f32 %v4670, %v4918
    %v4920 = vpop.f32.mrf.mxu0
    %v4921 = vadd.f32 %v4672, %v4920
    %4922 = vmatmul.bf16.gmra.mxu0 %v2276
    %v4923 = vpop.f32.mrf.mxu0
    %v4924 = vadd.f32 %v4675, %v4923
    %v4925 = vpop.f32.mrf.mxu0
    %v4926 = vadd.f32 %v4677, %v4925
    %4927 = vmatmul.bf16.gmra.mxu0 %v2279
    %v4928 = vpop.f32.mrf.mxu0
    %v4929 = vadd.f32 %v4680, %v4928
    %v4930 = vpop.f32.mrf.mxu0
    %v4931 = vadd.f32 %v4682, %v4930
    %4932 = vmatmul.bf16.gmra.mxu0 %v2282
    %v4933 = vpop.f32.mrf.mxu0
    %v4934 = vadd.f32 %v4685, %v4933
    %v4935 = vpop.f32.mrf.mxu0
    %v4936 = vadd.f32 %v4687, %v4935
    %4937 = vmatmul.bf16.gmra.mxu0 %v2285
    %v4938 = vpop.f32.mrf.mxu0
    %v4939 = vadd.f32 %v4690, %v4938
    %v4940 = vpop.f32.mrf.mxu0
    %v4941 = vadd.f32 %v4692, %v4940
    %4942 = vmatmul.bf16.gmra.mxu0 %v2288
    %v4943 = vpop.f32.mrf.mxu0
    %v4944 = vadd.f32 %v4695, %v4943
    %v4945 = vpop.f32.mrf.mxu0
    %v4946 = vadd.f32 %v4697, %v4945
    %4947 = vmatmul.bf16.gmra.mxu0 %v2291
    %v4948 = vpop.f32.mrf.mxu0
    %v4949 = vadd.f32 %v4700, %v4948
    %v4950 = vpop.f32.mrf.mxu0
    %v4951 = vadd.f32 %v4702, %v4950
    %4952 = vmatmul.bf16.gmra.mxu0 %v2294
    %v4953 = vpop.f32.mrf.mxu0
    %v4954 = vadd.f32 %v4705, %v4953
    %v4955 = vpop.f32.mrf.mxu0
    %v4956 = vadd.f32 %v4707, %v4955
    %4957 = vmatmul.bf16.gmra.mxu0 %v2297
    %v4958 = vpop.f32.mrf.mxu0
    %v4959 = vadd.f32 %v4710, %v4958
    %v4960 = vpop.f32.mrf.mxu0
    %v4961 = vadd.f32 %v4712, %v4960
    %4962 = vmatmul.bf16.gmra.mxu0 %v2300
    %v4963 = vpop.f32.mrf.mxu0
    %v4964 = vadd.f32 %v4715, %v4963
    %v4965 = vpop.f32.mrf.mxu0
    %v4966 = vadd.f32 %v4717, %v4965
    %4967 = vmatmul.bf16.gmra.mxu0 %v2303
    %v4968 = vpop.f32.mrf.mxu0
    %v4969 = vadd.f32 %v4720, %v4968
    %v4970 = vpop.f32.mrf.mxu0
    %v4971 = vadd.f32 %v4722, %v4970
    %4972 = vmatmul.bf16.gmra.mxu0 %v2306
    %v4973 = vpop.f32.mrf.mxu0
    %v4974 = vadd.f32 %v4725, %v4973
    %v4975 = vpop.f32.mrf.mxu0
    %v4976 = vadd.f32 %v4727, %v4975
    %4977 = vmatmul.bf16.gmra.mxu0 %v2309
    %v4978 = vpop.f32.mrf.mxu0
    %v4979 = vadd.f32 %v4730, %v4978
    %v4980 = vpop.f32.mrf.mxu0
    %v4981 = vadd.f32 %v4732, %v4980
    %4982 = vdwg.mxu0
    %vm5079 = vcmask 1046528
    %v5080 = vrot.slane %v3997, 1
    %v5081 = vrot.slane %v3999, 1
    %v5082 = vsel %vm5079, %v5080, %v5081
    %v5083 = vrot.slane %v4002, 1
    %v5084 = vsel %vm5079, %v5081, %v5083
    %v5085 = vrot.slane %v4004, 1
    %v5086 = vrot.slane %v4007, 1
    %v5087 = vsel %vm5079, %v5085, %v5086
    %v5088 = vrot.slane %v4009, 1
    %v5089 = vsel %vm5079, %v5086, %v5088
    %v5090 = vrot.slane %v4012, 1
    %v5091 = vrot.slane %v4014, 1
    %v5092 = vsel %vm5079, %v5090, %v5091
    %v5093 = vrot.slane %v4017, 1
    %v5094 = vsel %vm5079, %v5091, %v5093
    %v5095 = vrot.slane %v4019, 1
    %v5096 = vrot.slane %v4022, 1
    %v5097 = vsel %vm5079, %v5095, %v5096
    %v5098 = vrot.slane %v4024, 1
    %v5099 = vsel %vm5079, %v5096, %v5098
    %v5100 = vrot.slane %v4027, 1
    %v5101 = vrot.slane %v4029, 1
    %v5102 = vsel %vm5079, %v5100, %v5101
    %v5103 = vrot.slane %v4032, 1
    %v5104 = vsel %vm5079, %v5101, %v5103
    %v5105 = vrot.slane %v4034, 1
    %v5106 = vrot.slane %v4037, 1
    %v5107 = vsel %vm5079, %v5105, %v5106
    %v5108 = vrot.slane %v4039, 1
    %v5109 = vsel %vm5079, %v5106, %v5108
    %v5110 = vrot.slane %v4042, 1
    %v5111 = vrot.slane %v4044, 1
    %v5112 = vsel %vm5079, %v5110, %v5111
    %v5113 = vrot.slane %v4047, 1
    %v5114 = vsel %vm5079, %v5111, %v5113
    %v5115 = vrot.slane %v4049, 1
    %v5116 = vrot.slane %v4052, 1
    %v5117 = vsel %vm5079, %v5115, %v5116
    %v5118 = vrot.slane %v4054, 1
    %v5119 = vsel %vm5079, %v5116, %v5118
    %v5120 = vrot.slane %v4057, 1
    %v5121 = vrot.slane %v4059, 1
    %v5122 = vsel %vm5079, %v5120, %v5121
    %v5123 = vrot.slane %v4062, 1
    %v5124 = vsel %vm5079, %v5121, %v5123
    %v5125 = vrot.slane %v4064, 1
    %v5126 = vrot.slane %v4067, 1
    %v5127 = vsel %vm5079, %v5125, %v5126
    %v5128 = vrot.slane %v4069, 1
    %v5129 = vsel %vm5079, %v5126, %v5128
    %v5130 = vrot.slane %v4072, 1
    %v5131 = vrot.slane %v4074, 1
    %v5132 = vsel %vm5079, %v5130, %v5131
    %v5133 = vrot.slane %v4077, 1
    %v5134 = vsel %vm5079, %v5131, %v5133
    %v5135 = vrot.slane %v4079, 1
    %v5136 = vrot.slane %v4082, 1
    %v5137 = vsel %vm5079, %v5135, %v5136
    %v5138 = vrot.slane %v4084, 1
    %v5139 = vsel %vm5079, %v5136, %v5138
    %v5140 = vrot.slane %v4087, 1
    %v5141 = vrot.slane %v4089, 1
    %v5142 = vsel %vm5079, %v5140, %v5141
    %v5143 = vrot.slane %v4092, 1
    %v5144 = vsel %vm5079, %v5141, %v5143
    %v5145 = vrot.slane %v4094, 1
    %v5146 = vrot.slane %v4097, 1
    %v5147 = vsel %vm5079, %v5145, %v5146
    %v5148 = vrot.slane %v4099, 1
    %v5149 = vsel %vm5079, %v5146, %v5148
    %v5150 = vrot.slane %v4102, 1
    %v5151 = vrot.slane %v4104, 1
    %v5152 = vsel %vm5079, %v5150, %v5151
    %v5153 = vrot.slane %v4107, 1
    %v5154 = vsel %vm5079, %v5151, %v5153
    %v5155 = vrot.slane %v4109, 1
    %v5156 = vrot.slane %v4112, 1
    %v5157 = vsel %vm5079, %v5155, %v5156
    %v5158 = vrot.slane %v4114, 1
    %v5159 = vsel %vm5079, %v5156, %v5158
    %v5160 = vrot.slane %v4117, 1
    %v5161 = vrot.slane %v4119, 1
    %v5162 = vsel %vm5079, %v5160, %v5161
    %v5163 = vrot.slane %v4122, 1
    %v5164 = vsel %vm5079, %v5161, %v5163
    %v5165 = vrot.slane %v4124, 1
    %v5166 = vrot.slane %v4127, 1
    %v5167 = vsel %vm5079, %v5165, %v5166
    %v5168 = vrot.slane %v4129, 1
    %v5169 = vsel %vm5079, %v5166, %v5168
    %v5170 = vrot.slane %v4132, 1
    %v5171 = vrot.slane %v4134, 1
    %v5172 = vsel %vm5079, %v5170, %v5171
    %v5173 = vrot.slane %v4137, 1
    %v5174 = vsel %vm5079, %v5171, %v5173
    %v5175 = vrot.slane %v4139, 1
    %v5176 = vrot.slane %v4142, 1
    %v5177 = vsel %vm5079, %v5175, %v5176
    %v5178 = vrot.slane %v4144, 1
    %v5179 = vsel %vm5079, %v5176, %v5178
    %v5180 = vrot.slane %v4147, 1
    %v5181 = vrot.slane %v4149, 1
    %v5182 = vsel %vm5079, %v5180, %v5181
    %v5183 = vrot.slane %v4152, 1
    %v5184 = vsel %vm5079, %v5181, %v5183
    %v5185 = vrot.slane %v4154, 1
    %v5186 = vrot.slane %v4157, 1
    %v5187 = vsel %vm5079, %v5185, %v5186
    %v5188 = vrot.slane %v4159, 1
    %v5189 = vsel %vm5079, %v5186, %v5188
    %v5190 = vrot.slane %v4162, 1
    %v5191 = vrot.slane %v4164, 1
    %v5192 = vsel %vm5079, %v5190, %v5191
    %v5193 = vrot.slane %v4167, 1
    %v5194 = vsel %vm5079, %v5191, %v5193
    %v5195 = vrot.slane %v4169, 1
    %v5196 = vrot.slane %v4172, 1
    %v5197 = vsel %vm5079, %v5195, %v5196
    %v5198 = vrot.slane %v4174, 1
    %v5199 = vsel %vm5079, %v5196, %v5198
    %v5200 = vrot.slane %v4177, 1
    %v5201 = vrot.slane %v4179, 1
    %v5202 = vsel %vm5079, %v5200, %v5201
    %v5203 = vrot.slane %v4182, 1
    %v5204 = vsel %vm5079, %v5201, %v5203
    %v5205 = vrot.slane %v4184, 1
    %v5206 = vrot.slane %v4187, 1
    %v5207 = vsel %vm5079, %v5205, %v5206
    %v5208 = vrot.slane %v4189, 1
    %v5209 = vsel %vm5079, %v5206, %v5208
    %v5210 = vrot.slane %v4192, 1
    %v5211 = vrot.slane %v4194, 1
    %v5212 = vsel %vm5079, %v5210, %v5211
    %v5213 = vrot.slane %v4197, 1
    %v5214 = vsel %vm5079, %v5211, %v5213
    %v5215 = vrot.slane %v4199, 1
    %v5216 = vrot.slane %v4202, 1
    %v5217 = vsel %vm5079, %v5215, %v5216
    %v5218 = vrot.slane %v4204, 1
    %v5219 = vsel %vm5079, %v5216, %v5218
    %v5220 = vrot.slane %v4207, 1
    %v5221 = vrot.slane %v4209, 1
    %v5222 = vsel %vm5079, %v5220, %v5221
    %v5223 = vrot.slane %v4212, 1
    %v5224 = vsel %vm5079, %v5221, %v5223
    %v5225 = vrot.slane %v4214, 1
    %v5226 = vrot.slane %v4217, 1
    %v5227 = vsel %vm5079, %v5225, %v5226
    %v5228 = vrot.slane %v4219, 1
    %v5229 = vsel %vm5079, %v5226, %v5228
    %v5230 = vrot.slane %v4222, 1
    %v5231 = vrot.slane %v4224, 1
    %v5232 = vsel %vm5079, %v5230, %v5231
    %v5233 = vrot.slane %v4227, 1
    %v5234 = vsel %vm5079, %v5231, %v5233
    %v5235 = vrot.slane %v4229, 1
    %v5236 = vrot.slane %v4232, 1
    %v5237 = vsel %vm5079, %v5235, %v5236
    %v5238 = vrot.slane %v4234, 1
    %v5239 = vsel %vm5079, %v5236, %v5238
    %v5304 = vadd.f32 %v3282, %v5082
    %v5305 = vadd.f32 %v3284, %v5084
    %v5306 = vadd.f32 %v3288, %v5087
    %v5307 = vadd.f32 %v3291, %v5089
    %v5308 = vadd.f32 %v3295, %v5092
    %v5309 = vadd.f32 %v3297, %v5094
    %v5310 = vadd.f32 %v3301, %v5097
    %v5311 = vadd.f32 %v3304, %v5099
    %v5312 = vadd.f32 %v3308, %v5102
    %v5313 = vadd.f32 %v3310, %v5104
    %v5314 = vadd.f32 %v3314, %v5107
    %v5315 = vadd.f32 %v3317, %v5109
    %v5316 = vadd.f32 %v3321, %v5112
    %v5317 = vadd.f32 %v3323, %v5114
    %v5318 = vadd.f32 %v3327, %v5117
    %v5319 = vadd.f32 %v3330, %v5119
    %v5320 = vadd.f32 %v3334, %v5122
    %v5321 = vadd.f32 %v3336, %v5124
    %v5322 = vadd.f32 %v3340, %v5127
    %v5323 = vadd.f32 %v3343, %v5129
    %v5324 = vadd.f32 %v3347, %v5132
    %v5325 = vadd.f32 %v3349, %v5134
    %v5326 = vadd.f32 %v3353, %v5137
    %v5327 = vadd.f32 %v3356, %v5139
    %v5328 = vadd.f32 %v3360, %v5142
    %v5329 = vadd.f32 %v3362, %v5144
    %v5330 = vadd.f32 %v3366, %v5147
    %v5331 = vadd.f32 %v3369, %v5149
    %v5332 = vadd.f32 %v3373, %v5152
    %v5333 = vadd.f32 %v3375, %v5154
    %v5334 = vadd.f32 %v3379, %v5157
    %v5335 = vadd.f32 %v3382, %v5159
    %v5336 = vadd.f32 %v3386, %v5162
    %v5337 = vadd.f32 %v3388, %v5164
    %v5338 = vadd.f32 %v3392, %v5167
    %v5339 = vadd.f32 %v3395, %v5169
    %v5340 = vadd.f32 %v3399, %v5172
    %v5341 = vadd.f32 %v3401, %v5174
    %v5342 = vadd.f32 %v3405, %v5177
    %v5343 = vadd.f32 %v3408, %v5179
    %v5344 = vadd.f32 %v3412, %v5182
    %v5345 = vadd.f32 %v3414, %v5184
    %v5346 = vadd.f32 %v3418, %v5187
    %v5347 = vadd.f32 %v3421, %v5189
    %v5348 = vadd.f32 %v3425, %v5192
    %v5349 = vadd.f32 %v3427, %v5194
    %v5350 = vadd.f32 %v3431, %v5197
    %v5351 = vadd.f32 %v3434, %v5199
    %v5352 = vadd.f32 %v3438, %v5202
    %v5353 = vadd.f32 %v3440, %v5204
    %v5354 = vadd.f32 %v3444, %v5207
    %v5355 = vadd.f32 %v3447, %v5209
    %v5356 = vadd.f32 %v3451, %v5212
    %v5357 = vadd.f32 %v3453, %v5214
    %v5358 = vadd.f32 %v3457, %v5217
    %v5359 = vadd.f32 %v3460, %v5219
    %v5360 = vadd.f32 %v3464, %v5222
    %v5361 = vadd.f32 %v3466, %v5224
    %v5362 = vadd.f32 %v3470, %v5227
    %v5363 = vadd.f32 %v3473, %v5229
    %v5364 = vadd.f32 %v3477, %v5232
    %v5365 = vadd.f32 %v3479, %v5234
    %v5366 = vadd.f32 %v3483, %v5237
    %v5367 = vadd.f32 %v3486, %v5239
    %vm5464 = vcmask 1045504
    %v5465 = vrot.slane %v4744, 2
    %v5466 = vrot.slane %v4746, 2
    %v5467 = vsel %vm5464, %v5465, %v5466
    %v5468 = vrot.slane %v4749, 2
    %v5469 = vsel %vm5464, %v5466, %v5468
    %v5470 = vrot.slane %v4751, 2
    %v5471 = vrot.slane %v4754, 2
    %v5472 = vsel %vm5464, %v5470, %v5471
    %v5473 = vrot.slane %v4756, 2
    %v5474 = vsel %vm5464, %v5471, %v5473
    %v5475 = vrot.slane %v4759, 2
    %v5476 = vrot.slane %v4761, 2
    %v5477 = vsel %vm5464, %v5475, %v5476
    %v5478 = vrot.slane %v4764, 2
    %v5479 = vsel %vm5464, %v5476, %v5478
    %v5480 = vrot.slane %v4766, 2
    %v5481 = vrot.slane %v4769, 2
    %v5482 = vsel %vm5464, %v5480, %v5481
    %v5483 = vrot.slane %v4771, 2
    %v5484 = vsel %vm5464, %v5481, %v5483
    %v5485 = vrot.slane %v4774, 2
    %v5486 = vrot.slane %v4776, 2
    %v5487 = vsel %vm5464, %v5485, %v5486
    %v5488 = vrot.slane %v4779, 2
    %v5489 = vsel %vm5464, %v5486, %v5488
    %v5490 = vrot.slane %v4781, 2
    %v5491 = vrot.slane %v4784, 2
    %v5492 = vsel %vm5464, %v5490, %v5491
    %v5493 = vrot.slane %v4786, 2
    %v5494 = vsel %vm5464, %v5491, %v5493
    %v5495 = vrot.slane %v4789, 2
    %v5496 = vrot.slane %v4791, 2
    %v5497 = vsel %vm5464, %v5495, %v5496
    %v5498 = vrot.slane %v4794, 2
    %v5499 = vsel %vm5464, %v5496, %v5498
    %v5500 = vrot.slane %v4796, 2
    %v5501 = vrot.slane %v4799, 2
    %v5502 = vsel %vm5464, %v5500, %v5501
    %v5503 = vrot.slane %v4801, 2
    %v5504 = vsel %vm5464, %v5501, %v5503
    %v5505 = vrot.slane %v4804, 2
    %v5506 = vrot.slane %v4806, 2
    %v5507 = vsel %vm5464, %v5505, %v5506
    %v5508 = vrot.slane %v4809, 2
    %v5509 = vsel %vm5464, %v5506, %v5508
    %v5510 = vrot.slane %v4811, 2
    %v5511 = vrot.slane %v4814, 2
    %v5512 = vsel %vm5464, %v5510, %v5511
    %v5513 = vrot.slane %v4816, 2
    %v5514 = vsel %vm5464, %v5511, %v5513
    %v5515 = vrot.slane %v4819, 2
    %v5516 = vrot.slane %v4821, 2
    %v5517 = vsel %vm5464, %v5515, %v5516
    %v5518 = vrot.slane %v4824, 2
    %v5519 = vsel %vm5464, %v5516, %v5518
    %v5520 = vrot.slane %v4826, 2
    %v5521 = vrot.slane %v4829, 2
    %v5522 = vsel %vm5464, %v5520, %v5521
    %v5523 = vrot.slane %v4831, 2
    %v5524 = vsel %vm5464, %v5521, %v5523
    %v5525 = vrot.slane %v4834, 2
    %v5526 = vrot.slane %v4836, 2
    %v5527 = vsel %vm5464, %v5525, %v5526
    %v5528 = vrot.slane %v4839, 2
    %v5529 = vsel %vm5464, %v5526, %v5528
    %v5530 = vrot.slane %v4841, 2
    %v5531 = vrot.slane %v4844, 2
    %v5532 = vsel %vm5464, %v5530, %v5531
    %v5533 = vrot.slane %v4846, 2
    %v5534 = vsel %vm5464, %v5531, %v5533
    %v5535 = vrot.slane %v4849, 2
    %v5536 = vrot.slane %v4851, 2
    %v5537 = vsel %vm5464, %v5535, %v5536
    %v5538 = vrot.slane %v4854, 2
    %v5539 = vsel %vm5464, %v5536, %v5538
    %v5540 = vrot.slane %v4856, 2
    %v5541 = vrot.slane %v4859, 2
    %v5542 = vsel %vm5464, %v5540, %v5541
    %v5543 = vrot.slane %v4861, 2
    %v5544 = vsel %vm5464, %v5541, %v5543
    %v5545 = vrot.slane %v4864, 2
    %v5546 = vrot.slane %v4866, 2
    %v5547 = vsel %vm5464, %v5545, %v5546
    %v5548 = vrot.slane %v4869, 2
    %v5549 = vsel %vm5464, %v5546, %v5548
    %v5550 = vrot.slane %v4871, 2
    %v5551 = vrot.slane %v4874, 2
    %v5552 = vsel %vm5464, %v5550, %v5551
    %v5553 = vrot.slane %v4876, 2
    %v5554 = vsel %vm5464, %v5551, %v5553
    %v5555 = vrot.slane %v4879, 2
    %v5556 = vrot.slane %v4881, 2
    %v5557 = vsel %vm5464, %v5555, %v5556
    %v5558 = vrot.slane %v4884, 2
    %v5559 = vsel %vm5464, %v5556, %v5558
    %v5560 = vrot.slane %v4886, 2
    %v5561 = vrot.slane %v4889, 2
    %v5562 = vsel %vm5464, %v5560, %v5561
    %v5563 = vrot.slane %v4891, 2
    %v5564 = vsel %vm5464, %v5561, %v5563
    %v5565 = vrot.slane %v4894, 2
    %v5566 = vrot.slane %v4896, 2
    %v5567 = vsel %vm5464, %v5565, %v5566
    %v5568 = vrot.slane %v4899, 2
    %v5569 = vsel %vm5464, %v5566, %v5568
    %v5570 = vrot.slane %v4901, 2
    %v5571 = vrot.slane %v4904, 2
    %v5572 = vsel %vm5464, %v5570, %v5571
    %v5573 = vrot.slane %v4906, 2
    %v5574 = vsel %vm5464, %v5571, %v5573
    %v5575 = vrot.slane %v4909, 2
    %v5576 = vrot.slane %v4911, 2
    %v5577 = vsel %vm5464, %v5575, %v5576
    %v5578 = vrot.slane %v4914, 2
    %v5579 = vsel %vm5464, %v5576, %v5578
    %v5580 = vrot.slane %v4916, 2
    %v5581 = vrot.slane %v4919, 2
    %v5582 = vsel %vm5464, %v5580, %v5581
    %v5583 = vrot.slane %v4921, 2
    %v5584 = vsel %vm5464, %v5581, %v5583
    %v5585 = vrot.slane %v4924, 2
    %v5586 = vrot.slane %v4926, 2
    %v5587 = vsel %vm5464, %v5585, %v5586
    %v5588 = vrot.slane %v4929, 2
    %v5589 = vsel %vm5464, %v5586, %v5588
    %v5590 = vrot.slane %v4931, 2
    %v5591 = vrot.slane %v4934, 2
    %v5592 = vsel %vm5464, %v5590, %v5591
    %v5593 = vrot.slane %v4936, 2
    %v5594 = vsel %vm5464, %v5591, %v5593
    %v5595 = vrot.slane %v4939, 2
    %v5596 = vrot.slane %v4941, 2
    %v5597 = vsel %vm5464, %v5595, %v5596
    %v5598 = vrot.slane %v4944, 2
    %v5599 = vsel %vm5464, %v5596, %v5598
    %v5600 = vrot.slane %v4946, 2
    %v5601 = vrot.slane %v4949, 2
    %v5602 = vsel %vm5464, %v5600, %v5601
    %v5603 = vrot.slane %v4951, 2
    %v5604 = vsel %vm5464, %v5601, %v5603
    %v5605 = vrot.slane %v4954, 2
    %v5606 = vrot.slane %v4956, 2
    %v5607 = vsel %vm5464, %v5605, %v5606
    %v5608 = vrot.slane %v4959, 2
    %v5609 = vsel %vm5464, %v5606, %v5608
    %v5610 = vrot.slane %v4961, 2
    %v5611 = vrot.slane %v4964, 2
    %v5612 = vsel %vm5464, %v5610, %v5611
    %v5613 = vrot.slane %v4966, 2
    %v5614 = vsel %vm5464, %v5611, %v5613
    %v5615 = vrot.slane %v4969, 2
    %v5616 = vrot.slane %v4971, 2
    %v5617 = vsel %vm5464, %v5615, %v5616
    %v5618 = vrot.slane %v4974, 2
    %v5619 = vsel %vm5464, %v5616, %v5618
    %v5620 = vrot.slane %v4976, 2
    %v5621 = vrot.slane %v4979, 2
    %v5622 = vsel %vm5464, %v5620, %v5621
    %v5623 = vrot.slane %v4981, 2
    %v5624 = vsel %vm5464, %v5621, %v5623
    %v5689 = vadd.f32 %v5304, %v5467
    %v5690 = vadd.f32 %v5305, %v5469
    %v5691 = vadd.f32 %v5306, %v5472
    %v5692 = vadd.f32 %v5307, %v5474
    %v5693 = vadd.f32 %v5308, %v5477
    %v5694 = vadd.f32 %v5309, %v5479
    %v5695 = vadd.f32 %v5310, %v5482
    %v5696 = vadd.f32 %v5311, %v5484
    %v5697 = vadd.f32 %v5312, %v5487
    %v5698 = vadd.f32 %v5313, %v5489
    %v5699 = vadd.f32 %v5314, %v5492
    %v5700 = vadd.f32 %v5315, %v5494
    %v5701 = vadd.f32 %v5316, %v5497
    %v5702 = vadd.f32 %v5317, %v5499
    %v5703 = vadd.f32 %v5318, %v5502
    %v5704 = vadd.f32 %v5319, %v5504
    %v5705 = vadd.f32 %v5320, %v5507
    %v5706 = vadd.f32 %v5321, %v5509
    %v5707 = vadd.f32 %v5322, %v5512
    %v5708 = vadd.f32 %v5323, %v5514
    %v5709 = vadd.f32 %v5324, %v5517
    %v5710 = vadd.f32 %v5325, %v5519
    %v5711 = vadd.f32 %v5326, %v5522
    %v5712 = vadd.f32 %v5327, %v5524
    %v5713 = vadd.f32 %v5328, %v5527
    %v5714 = vadd.f32 %v5329, %v5529
    %v5715 = vadd.f32 %v5330, %v5532
    %v5716 = vadd.f32 %v5331, %v5534
    %v5717 = vadd.f32 %v5332, %v5537
    %v5718 = vadd.f32 %v5333, %v5539
    %v5719 = vadd.f32 %v5334, %v5542
    %v5720 = vadd.f32 %v5335, %v5544
    %v5721 = vadd.f32 %v5336, %v5547
    %v5722 = vadd.f32 %v5337, %v5549
    %v5723 = vadd.f32 %v5338, %v5552
    %v5724 = vadd.f32 %v5339, %v5554
    %v5725 = vadd.f32 %v5340, %v5557
    %v5726 = vadd.f32 %v5341, %v5559
    %v5727 = vadd.f32 %v5342, %v5562
    %v5728 = vadd.f32 %v5343, %v5564
    %v5729 = vadd.f32 %v5344, %v5567
    %v5730 = vadd.f32 %v5345, %v5569
    %v5731 = vadd.f32 %v5346, %v5572
    %v5732 = vadd.f32 %v5347, %v5574
    %v5733 = vadd.f32 %v5348, %v5577
    %v5734 = vadd.f32 %v5349, %v5579
    %v5735 = vadd.f32 %v5350, %v5582
    %v5736 = vadd.f32 %v5351, %v5584
    %v5737 = vadd.f32 %v5352, %v5587
    %v5738 = vadd.f32 %v5353, %v5589
    %v5739 = vadd.f32 %v5354, %v5592
    %v5740 = vadd.f32 %v5355, %v5594
    %v5741 = vadd.f32 %v5356, %v5597
    %v5742 = vadd.f32 %v5357, %v5599
    %v5743 = vadd.f32 %v5358, %v5602
    %v5744 = vadd.f32 %v5359, %v5604
    %v5745 = vadd.f32 %v5360, %v5607
    %v5746 = vadd.f32 %v5361, %v5609
    %v5747 = vadd.f32 %v5362, %v5612
    %v5748 = vadd.f32 %v5363, %v5614
    %v5749 = vadd.f32 %v5364, %v5617
    %v5750 = vadd.f32 %v5365, %v5619
    %v5751 = vadd.f32 %v5366, %v5622
    %v5752 = vadd.f32 %v5367, %v5624
    %v5753 = vadd.f32 %v5689, %v5690
    %v5754 = vadd.f32 %v5753, %v5691
    %v5755 = vadd.f32 %v5754, %v5692
    %v5756 = vadd.f32 %v5755, %v5693
    %v5757 = vadd.f32 %v5756, %v5694
    %v5758 = vadd.f32 %v5757, %v5695
    %v5759 = vadd.f32 %v5758, %v5696
    %v5760 = vadd.f32 %v5759, %v5697
    %v5761 = vadd.f32 %v5760, %v5698
    %v5762 = vadd.f32 %v5761, %v5699
    %v5763 = vadd.f32 %v5762, %v5700
    %v5764 = vadd.f32 %v5763, %v5701
    %v5765 = vadd.f32 %v5764, %v5702
    %v5766 = vadd.f32 %v5765, %v5703
    %v5767 = vadd.f32 %v5766, %v5704
    %v5768 = vadd.f32 %v5767, %v5705
    %v5769 = vadd.f32 %v5768, %v5706
    %v5770 = vadd.f32 %v5769, %v5707
    %v5771 = vadd.f32 %v5770, %v5708
    %v5772 = vadd.f32 %v5771, %v5709
    %v5773 = vadd.f32 %v5772, %v5710
    %v5774 = vadd.f32 %v5773, %v5711
    %v5775 = vadd.f32 %v5774, %v5712
    %v5776 = vadd.f32 %v5775, %v5713
    %v5777 = vadd.f32 %v5776, %v5714
    %v5778 = vadd.f32 %v5777, %v5715
    %v5779 = vadd.f32 %v5778, %v5716
    %v5780 = vadd.f32 %v5779, %v5717
    %v5781 = vadd.f32 %v5780, %v5718
    %v5782 = vadd.f32 %v5781, %v5719
    %v5783 = vadd.f32 %v5782, %v5720
    %v5784 = vadd.f32 %v5783, %v5721
    %v5785 = vadd.f32 %v5784, %v5722
    %v5786 = vadd.f32 %v5785, %v5723
    %v5787 = vadd.f32 %v5786, %v5724
    %v5788 = vadd.f32 %v5787, %v5725
    %v5789 = vadd.f32 %v5788, %v5726
    %v5790 = vadd.f32 %v5789, %v5727
    %v5791 = vadd.f32 %v5790, %v5728
    %v5792 = vadd.f32 %v5791, %v5729
    %v5793 = vadd.f32 %v5792, %v5730
    %v5794 = vadd.f32 %v5793, %v5731
    %v5795 = vadd.f32 %v5794, %v5732
    %v5796 = vadd.f32 %v5795, %v5733
    %v5797 = vadd.f32 %v5796, %v5734
    %v5798 = vadd.f32 %v5797, %v5735
    %v5799 = vadd.f32 %v5798, %v5736
    %v5800 = vadd.f32 %v5799, %v5737
    %v5801 = vadd.f32 %v5800, %v5738
    %v5802 = vadd.f32 %v5801, %v5739
    %v5803 = vadd.f32 %v5802, %v5740
    %v5804 = vadd.f32 %v5803, %v5741
    %v5805 = vadd.f32 %v5804, %v5742
    %v5806 = vadd.f32 %v5805, %v5743
    %v5807 = vadd.f32 %v5806, %v5744
    %v5808 = vadd.f32 %v5807, %v5745
    %v5809 = vadd.f32 %v5808, %v5746
    %v5810 = vadd.f32 %v5809, %v5747
    %v5811 = vadd.f32 %v5810, %v5748
    %v5812 = vadd.f32 %v5811, %v5749
    %v5813 = vadd.f32 %v5812, %v5750
    %v5814 = vadd.f32 %v5813, %v5751
    %v5815 = vadd.f32 %v5814, %v5752
    %v5816 = vrot.slane %v5815, 4
    %v5817 = vadd.f32 %v5815, %v5816
    %v5818 = vrot.slane %v5817, 2
    %v5819 = vadd.f32 %v5817, %v5818
    %v5820 = vrot.slane %v5819, 1
    %v5821 = vadd.f32 %v5819, %v5820
    %v5822 = vmul.f32 %v5689, %v5689
    %v5823 = vmul.f32 %v5690, %v5690
    %v5824 = vmul.f32 %v5691, %v5691
    %v5825 = vmul.f32 %v5692, %v5692
    %v5826 = vmul.f32 %v5693, %v5693
    %v5827 = vmul.f32 %v5694, %v5694
    %v5828 = vmul.f32 %v5695, %v5695
    %v5829 = vmul.f32 %v5696, %v5696
    %v5830 = vmul.f32 %v5697, %v5697
    %v5831 = vmul.f32 %v5698, %v5698
    %v5832 = vmul.f32 %v5699, %v5699
    %v5833 = vmul.f32 %v5700, %v5700
    %v5834 = vmul.f32 %v5701, %v5701
    %v5835 = vmul.f32 %v5702, %v5702
    %v5836 = vmul.f32 %v5703, %v5703
    %v5837 = vmul.f32 %v5704, %v5704
    %v5838 = vmul.f32 %v5705, %v5705
    %v5839 = vmul.f32 %v5706, %v5706
    %v5840 = vmul.f32 %v5707, %v5707
    %v5841 = vmul.f32 %v5708, %v5708
    %v5842 = vmul.f32 %v5709, %v5709
    %v5843 = vmul.f32 %v5710, %v5710
    %v5844 = vmul.f32 %v5711, %v5711
    %v5845 = vmul.f32 %v5712, %v5712
    %v5846 = vmul.f32 %v5713, %v5713
    %v5847 = vmul.f32 %v5714, %v5714
    %v5848 = vmul.f32 %v5715, %v5715
    %v5849 = vmul.f32 %v5716, %v5716
    %v5850 = vmul.f32 %v5717, %v5717
    %v5851 = vmul.f32 %v5718, %v5718
    %v5852 = vmul.f32 %v5719, %v5719
    %v5853 = vmul.f32 %v5720, %v5720
    %v5854 = vmul.f32 %v5721, %v5721
    %v5855 = vmul.f32 %v5722, %v5722
    %v5856 = vmul.f32 %v5723, %v5723
    %v5857 = vmul.f32 %v5724, %v5724
    %v5858 = vmul.f32 %v5725, %v5725
    %v5859 = vmul.f32 %v5726, %v5726
    %v5860 = vmul.f32 %v5727, %v5727
    %v5861 = vmul.f32 %v5728, %v5728
    %v5862 = vmul.f32 %v5729, %v5729
    %v5863 = vmul.f32 %v5730, %v5730
    %v5864 = vmul.f32 %v5731, %v5731
    %v5865 = vmul.f32 %v5732, %v5732
    %v5866 = vmul.f32 %v5733, %v5733
    %v5867 = vmul.f32 %v5734, %v5734
    %v5868 = vmul.f32 %v5735, %v5735
    %v5869 = vmul.f32 %v5736, %v5736
    %v5870 = vmul.f32 %v5737, %v5737
    %v5871 = vmul.f32 %v5738, %v5738
    %v5872 = vmul.f32 %v5739, %v5739
    %v5873 = vmul.f32 %v5740, %v5740
    %v5874 = vmul.f32 %v5741, %v5741
    %v5875 = vmul.f32 %v5742, %v5742
    %v5876 = vmul.f32 %v5743, %v5743
    %v5877 = vmul.f32 %v5744, %v5744
    %v5878 = vmul.f32 %v5745, %v5745
    %v5879 = vmul.f32 %v5746, %v5746
    %v5880 = vmul.f32 %v5747, %v5747
    %v5881 = vmul.f32 %v5748, %v5748
    %v5882 = vmul.f32 %v5749, %v5749
    %v5883 = vmul.f32 %v5750, %v5750
    %v5884 = vmul.f32 %v5751, %v5751
    %v5885 = vmul.f32 %v5752, %v5752
    %v5886 = vadd.f32 %v5822, %v5823
    %v5887 = vadd.f32 %v5886, %v5824
    %v5888 = vadd.f32 %v5887, %v5825
    %v5889 = vadd.f32 %v5888, %v5826
    %v5890 = vadd.f32 %v5889, %v5827
    %v5891 = vadd.f32 %v5890, %v5828
    %v5892 = vadd.f32 %v5891, %v5829
    %v5893 = vadd.f32 %v5892, %v5830
    %v5894 = vadd.f32 %v5893, %v5831
    %v5895 = vadd.f32 %v5894, %v5832
    %v5896 = vadd.f32 %v5895, %v5833
    %v5897 = vadd.f32 %v5896, %v5834
    %v5898 = vadd.f32 %v5897, %v5835
    %v5899 = vadd.f32 %v5898, %v5836
    %v5900 = vadd.f32 %v5899, %v5837
    %v5901 = vadd.f32 %v5900, %v5838
    %v5902 = vadd.f32 %v5901, %v5839
    %v5903 = vadd.f32 %v5902, %v5840
    %v5904 = vadd.f32 %v5903, %v5841
    %v5905 = vadd.f32 %v5904, %v5842
    %v5906 = vadd.f32 %v5905, %v5843
    %v5907 = vadd.f32 %v5906, %v5844
    %v5908 = vadd.f32 %v5907, %v5845
    %v5909 = vadd.f32 %v5908, %v5846
    %v5910 = vadd.f32 %v5909, %v5847
    %v5911 = vadd.f32 %v5910, %v5848
    %v5912 = vadd.f32 %v5911, %v5849
    %v5913 = vadd.f32 %v5912, %v5850
    %v5914 = vadd.f32 %v5913, %v5851
    %v5915 = vadd.f32 %v5914, %v5852
    %v5916 = vadd.f32 %v5915, %v5853
    %v5917 = vadd.f32 %v5916, %v5854
    %v5918 = vadd.f32 %v5917, %v5855
    %v5919 = vadd.f32 %v5918, %v5856
    %v5920 = vadd.f32 %v5919, %v5857
    %v5921 = vadd.f32 %v5920, %v5858
    %v5922 = vadd.f32 %v5921, %v5859
    %v5923 = vadd.f32 %v5922, %v5860
    %v5924 = vadd.f32 %v5923, %v5861
    %v5925 = vadd.f32 %v5924, %v5862
    %v5926 = vadd.f32 %v5925, %v5863
    %v5927 = vadd.f32 %v5926, %v5864
    %v5928 = vadd.f32 %v5927, %v5865
    %v5929 = vadd.f32 %v5928, %v5866
    %v5930 = vadd.f32 %v5929, %v5867
    %v5931 = vadd.f32 %v5930, %v5868
    %v5932 = vadd.f32 %v5931, %v5869
    %v5933 = vadd.f32 %v5932, %v5870
    %v5934 = vadd.f32 %v5933, %v5871
    %v5935 = vadd.f32 %v5934, %v5872
    %v5936 = vadd.f32 %v5935, %v5873
    %v5937 = vadd.f32 %v5936, %v5874
    %v5938 = vadd.f32 %v5937, %v5875
    %v5939 = vadd.f32 %v5938, %v5876
    %v5940 = vadd.f32 %v5939, %v5877
    %v5941 = vadd.f32 %v5940, %v5878
    %v5942 = vadd.f32 %v5941, %v5879
    %v5943 = vadd.f32 %v5942, %v5880
    %v5944 = vadd.f32 %v5943, %v5881
    %v5945 = vadd.f32 %v5944, %v5882
    %v5946 = vadd.f32 %v5945, %v5883
    %v5947 = vadd.f32 %v5946, %v5884
    %v5948 = vadd.f32 %v5947, %v5885
    %v5949 = vrot.slane %v5948, 4
    %v5950 = vadd.f32 %v5948, %v5949
    %v5951 = vrot.slane %v5950, 2
    %v5952 = vadd.f32 %v5950, %v5951
    %v5953 = vrot.slane %v5952, 1
    %v5954 = vadd.f32 %v5952, %v5953
    %v5955 = vmul.f32 %v5821, 0.001953125
    %v5956 = vmul.f32 %v5954, 0.001953125
    %v5957 = vmul.f32 %v5955, %v5955
    %v5958 = vsub.f32 %v5956, %v5957
    %v5959 = vmax.f32 %v5958, 0.0
    %v5960 = vsub.f32 %v5689, %v5955
    %v5961 = vsub.f32 %v5690, %v5955
    %v5962 = vsub.f32 %v5691, %v5955
    %v5963 = vsub.f32 %v5692, %v5955
    %v5964 = vsub.f32 %v5693, %v5955
    %v5965 = vsub.f32 %v5694, %v5955
    %v5966 = vsub.f32 %v5695, %v5955
    %v5967 = vsub.f32 %v5696, %v5955
    %v5968 = vsub.f32 %v5697, %v5955
    %v5969 = vsub.f32 %v5698, %v5955
    %v5970 = vsub.f32 %v5699, %v5955
    %v5971 = vsub.f32 %v5700, %v5955
    %v5972 = vsub.f32 %v5701, %v5955
    %v5973 = vsub.f32 %v5702, %v5955
    %v5974 = vsub.f32 %v5703, %v5955
    %v5975 = vsub.f32 %v5704, %v5955
    %v5976 = vsub.f32 %v5705, %v5955
    %v5977 = vsub.f32 %v5706, %v5955
    %v5978 = vsub.f32 %v5707, %v5955
    %v5979 = vsub.f32 %v5708, %v5955
    %v5980 = vsub.f32 %v5709, %v5955
    %v5981 = vsub.f32 %v5710, %v5955
    %v5982 = vsub.f32 %v5711, %v5955
    %v5983 = vsub.f32 %v5712, %v5955
    %v5984 = vsub.f32 %v5713, %v5955
    %v5985 = vsub.f32 %v5714, %v5955
    %v5986 = vsub.f32 %v5715, %v5955
    %v5987 = vsub.f32 %v5716, %v5955
    %v5988 = vsub.f32 %v5717, %v5955
    %v5989 = vsub.f32 %v5718, %v5955
    %v5990 = vsub.f32 %v5719, %v5955
    %v5991 = vsub.f32 %v5720, %v5955
    %v5992 = vsub.f32 %v5721, %v5955
    %v5993 = vsub.f32 %v5722, %v5955
    %v5994 = vsub.f32 %v5723, %v5955
    %v5995 = vsub.f32 %v5724, %v5955
    %v5996 = vsub.f32 %v5725, %v5955
    %v5997 = vsub.f32 %v5726, %v5955
    %v5998 = vsub.f32 %v5727, %v5955
    %v5999 = vsub.f32 %v5728, %v5955
    %v6000 = vsub.f32 %v5729, %v5955
    %v6001 = vsub.f32 %v5730, %v5955
    %v6002 = vsub.f32 %v5731, %v5955
    %v6003 = vsub.f32 %v5732, %v5955
    %v6004 = vsub.f32 %v5733, %v5955
    %v6005 = vsub.f32 %v5734, %v5955
    %v6006 = vsub.f32 %v5735, %v5955
    %v6007 = vsub.f32 %v5736, %v5955
    %v6008 = vsub.f32 %v5737, %v5955
    %v6009 = vsub.f32 %v5738, %v5955
    %v6010 = vsub.f32 %v5739, %v5955
    %v6011 = vsub.f32 %v5740, %v5955
    %v6012 = vsub.f32 %v5741, %v5955
    %v6013 = vsub.f32 %v5742, %v5955
    %v6014 = vsub.f32 %v5743, %v5955
    %v6015 = vsub.f32 %v5744, %v5955
    %v6016 = vsub.f32 %v5745, %v5955
    %v6017 = vsub.f32 %v5746, %v5955
    %v6018 = vsub.f32 %v5747, %v5955
    %v6019 = vsub.f32 %v5748, %v5955
    %v6020 = vsub.f32 %v5749, %v5955
    %v6021 = vsub.f32 %v5750, %v5955
    %v6022 = vsub.f32 %v5751, %v5955
    %v6023 = vsub.f32 %v5752, %v5955
    %v6024 = vadd.f32 %v5959, 1e-05
    %v6025 = vrsqrt.pop %v6024
    %v6026 = vmul.f32 %v6025, %v6024
    %v6027 = vmul.f32 %v6026, %v6025
    %v6028 = vmul.f32 0.5, %v6027
    %v6029 = vsub.f32 1.5, %v6028
    %v6030 = vmul.f32 %v6025, %v6029
    %vm6031 = vweird.f32 %v6024
    %vm6032 = vweird.f32 %v6025
    %vm6033 = vmor %vm6031, %vm6032
    %v6034 = vsel %vm6033, %v6025, %v6030
    %v6035 = vmul.f32 %v5960, %v6034
    %v6036 = vmul.f32 %v5961, %v6034
    %v6037 = vmul.f32 %v5962, %v6034
    %v6038 = vmul.f32 %v5963, %v6034
    %v6039 = vmul.f32 %v5964, %v6034
    %v6040 = vmul.f32 %v5965, %v6034
    %v6041 = vmul.f32 %v5966, %v6034
    %v6042 = vmul.f32 %v5967, %v6034
    %v6043 = vmul.f32 %v5968, %v6034
    %v6044 = vmul.f32 %v5969, %v6034
    %v6045 = vmul.f32 %v5970, %v6034
    %v6046 = vmul.f32 %v5971, %v6034
    %v6047 = vmul.f32 %v5972, %v6034
    %v6048 = vmul.f32 %v5973, %v6034
    %v6049 = vmul.f32 %v5974, %v6034
    %v6050 = vmul.f32 %v5975, %v6034
    %v6051 = vmul.f32 %v5976, %v6034
    %v6052 = vmul.f32 %v5977, %v6034
    %v6053 = vmul.f32 %v5978, %v6034
    %v6054 = vmul.f32 %v5979, %v6034
    %v6055 = vmul.f32 %v5980, %v6034
    %v6056 = vmul.f32 %v5981, %v6034
    %v6057 = vmul.f32 %v5982, %v6034
    %v6058 = vmul.f32 %v5983, %v6034
    %v6059 = vmul.f32 %v5984, %v6034
    %v6060 = vmul.f32 %v5985, %v6034
    %v6061 = vmul.f32 %v5986, %v6034
    %v6062 = vmul.f32 %v5987, %v6034
    %v6063 = vmul.f32 %v5988, %v6034
    %v6064 = vmul.f32 %v5989, %v6034
    %v6065 = vmul.f32 %v5990, %v6034
    %v6066 = vmul.f32 %v5991, %v6034
    %v6067 = vmul.f32 %v5992, %v6034
    %v6068 = vmul.f32 %v5993, %v6034
    %v6069 = vmul.f32 %v5994, %v6034
    %v6070 = vmul.f32 %v5995, %v6034
    %v6071 = vmul.f32 %v5996, %v6034
    %v6072 = vmul.f32 %v5997, %v6034
    %v6073 = vmul.f32 %v5998, %v6034
    %v6074 = vmul.f32 %v5999, %v6034
    %v6075 = vmul.f32 %v6000, %v6034
    %v6076 = vmul.f32 %v6001, %v6034
    %v6077 = vmul.f32 %v6002, %v6034
    %v6078 = vmul.f32 %v6003, %v6034
    %v6079 = vmul.f32 %v6004, %v6034
    %v6080 = vmul.f32 %v6005, %v6034
    %v6081 = vmul.f32 %v6006, %v6034
    %v6082 = vmul.f32 %v6007, %v6034
    %v6083 = vmul.f32 %v6008, %v6034
    %v6084 = vmul.f32 %v6009, %v6034
    %v6085 = vmul.f32 %v6010, %v6034
    %v6086 = vmul.f32 %v6011, %v6034
    %v6087 = vmul.f32 %v6012, %v6034
    %v6088 = vmul.f32 %v6013, %v6034
    %v6089 = vmul.f32 %v6014, %v6034
    %v6090 = vmul.f32 %v6015, %v6034
    %v6091 = vmul.f32 %v6016, %v6034
    %v6092 = vmul.f32 %v6017, %v6034
    %v6093 = vmul.f32 %v6018, %v6034
    %v6094 = vmul.f32 %v6019, %v6034
    %v6095 = vmul.f32 %v6020, %v6034
    %v6096 = vmul.f32 %v6021, %v6034
    %v6097 = vmul.f32 %v6022, %v6034
    %v6098 = vmul.f32 %v6023, %v6034
    %v6099 = vmax.f32 %v6035, 0.0
    %v6100 = vmax.f32 %v6036, 0.0
    %v6101 = vmax.f32 %v6037, 0.0
    %v6102 = vmax.f32 %v6038, 0.0
    %v6103 = vmax.f32 %v6039, 0.0
    %v6104 = vmax.f32 %v6040, 0.0
    %v6105 = vmax.f32 %v6041, 0.0
    %v6106 = vmax.f32 %v6042, 0.0
    %v6107 = vmax.f32 %v6043, 0.0
    %v6108 = vmax.f32 %v6044, 0.0
    %v6109 = vmax.f32 %v6045, 0.0
    %v6110 = vmax.f32 %v6046, 0.0
    %v6111 = vmax.f32 %v6047, 0.0
    %v6112 = vmax.f32 %v6048, 0.0
    %v6113 = vmax.f32 %v6049, 0.0
    %v6114 = vmax.f32 %v6050, 0.0
    %v6115 = vmax.f32 %v6051, 0.0
    %v6116 = vmax.f32 %v6052, 0.0
    %v6117 = vmax.f32 %v6053, 0.0
    %v6118 = vmax.f32 %v6054, 0.0
    %v6119 = vmax.f32 %v6055, 0.0
    %v6120 = vmax.f32 %v6056, 0.0
    %v6121 = vmax.f32 %v6057, 0.0
    %v6122 = vmax.f32 %v6058, 0.0
    %v6123 = vmax.f32 %v6059, 0.0
    %v6124 = vmax.f32 %v6060, 0.0
    %v6125 = vmax.f32 %v6061, 0.0
    %v6126 = vmax.f32 %v6062, 0.0
    %v6127 = vmax.f32 %v6063, 0.0
    %v6128 = vmax.f32 %v6064, 0.0
    %v6129 = vmax.f32 %v6065, 0.0
    %v6130 = vmax.f32 %v6066, 0.0
    %v6131 = vmax.f32 %v6067, 0.0
    %v6132 = vmax.f32 %v6068, 0.0
    %v6133 = vmax.f32 %v6069, 0.0
    %v6134 = vmax.f32 %v6070, 0.0
    %v6135 = vmax.f32 %v6071, 0.0
    %v6136 = vmax.f32 %v6072, 0.0
    %v6137 = vmax.f32 %v6073, 0.0
    %v6138 = vmax.f32 %v6074, 0.0
    %v6139 = vmax.f32 %v6075, 0.0
    %v6140 = vmax.f32 %v6076, 0.0
    %v6141 = vmax.f32 %v6077, 0.0
    %v6142 = vmax.f32 %v6078, 0.0
    %v6143 = vmax.f32 %v6079, 0.0
    %v6144 = vmax.f32 %v6080, 0.0
    %v6145 = vmax.f32 %v6081, 0.0
    %v6146 = vmax.f32 %v6082, 0.0
    %v6147 = vmax.f32 %v6083, 0.0
    %v6148 = vmax.f32 %v6084, 0.0
    %v6149 = vmax.f32 %v6085, 0.0
    %v6150 = vmax.f32 %v6086, 0.0
    %v6151 = vmax.f32 %v6087, 0.0
    %v6152 = vmax.f32 %v6088, 0.0
    %v6153 = vmax.f32 %v6089, 0.0
    %v6154 = vmax.f32 %v6090, 0.0
    %v6155 = vmax.f32 %v6091, 0.0
    %v6156 = vmax.f32 %v6092, 0.0
    %v6157 = vmax.f32 %v6093, 0.0
    %v6158 = vmax.f32 %v6094, 0.0
    %v6159 = vmax.f32 %v6095, 0.0
    %v6160 = vmax.f32 %v6096, 0.0
    %v6161 = vmax.f32 %v6097, 0.0
    %v6162 = vmax.f32 %v6098, 0.0
    %6163 = vst [vmem:[#allocation3] sm:$0xf] 0
    %6164 = vst [vmem:[#allocation3 + $0x4] sm:$0xf] 0
    %6165 = vst [vmem:[#allocation3 + $0x8] sm:$0xf] 0
    %6166 = vst [vmem:[#allocation3 + $0xd8] sm:$0xf] 0
    %6167 = vst [vmem:[#allocation3 + $0xdc] sm:$0xf] 0
    %6168 = vst [vmem:[#allocation3 + $0xe0] sm:$0xf] 0
    %s6169 = scalar_lea.vmem [#allocation3], 204
    %6170 = vst [vmem:[%s6169] sm:$0xf] 0
    %6171 = vst [vmem:[%s6169 + $0x4] sm:$0xf] 0
    %6172 = vst [vmem:[%s6169 + $0x8] sm:$0xf] 0
    %6173 = vst [vmem:[%s6169 + $0xd8] sm:$0xf] 0
    %6174 = vst [vmem:[%s6169 + $0xdc] sm:$0xf] 0
    %6175 = vst [vmem:[%s6169 + $0xe0] sm:$0xf] 0
    %s6176 = scalar_lea.vmem [#allocation3], 12
    %v6177 = vld [vmem:[%s6176] sm:$0x1]
    %v6178 = vsel %vm143, 0, %v6177
    %6179 = vst [vmem:[%s6176] sm:$0x1] %v6178
    %v6180 = vld [vmem:[%s6176 + $0xc] sm:$0x1]
    %v6181 = vsel %vm143, 0, %v6180
    %6182 = vst [vmem:[%s6176 + $0xc] sm:$0x1] %v6181
    %v6183 = vld [vmem:[%s6176 + $0x18] sm:$0x1]
    %v6184 = vsel %vm143, 0, %v6183
    %6185 = vst [vmem:[%s6176 + $0x18] sm:$0x1] %v6184
    %v6186 = vld [vmem:[%s6176 + $0x24] sm:$0x1]
    %v6187 = vsel %vm143, 0, %v6186
    %6188 = vst [vmem:[%s6176 + $0x24] sm:$0x1] %v6187
    %v6189 = vld [vmem:[%s6176 + $0x30] sm:$0x1]
    %v6190 = vsel %vm143, 0, %v6189
    %6191 = vst [vmem:[%s6176 + $0x30] sm:$0x1] %v6190
    %v6192 = vld [vmem:[%s6176 + $0x3c] sm:$0x1]
    %v6193 = vsel %vm143, 0, %v6192
    %6194 = vst [vmem:[%s6176 + $0x3c] sm:$0x1] %v6193
    %v6195 = vld [vmem:[%s6176 + $0x48] sm:$0x1]
    %v6196 = vsel %vm143, 0, %v6195
    %6197 = vst [vmem:[%s6176 + $0x48] sm:$0x1] %v6196
    %v6198 = vld [vmem:[%s6176 + $0x54] sm:$0x1]
    %v6199 = vsel %vm143, 0, %v6198
    %6200 = vst [vmem:[%s6176 + $0x54] sm:$0x1] %v6199
    %v6201 = vld [vmem:[%s6176 + $0x60] sm:$0x1]
    %v6202 = vsel %vm143, 0, %v6201
    %6203 = vst [vmem:[%s6176 + $0x60] sm:$0x1] %v6202
    %v6204 = vld [vmem:[%s6176 + $0x6c] sm:$0x1]
    %v6205 = vsel %vm143, 0, %v6204
    %6206 = vst [vmem:[%s6176 + $0x6c] sm:$0x1] %v6205
    %v6207 = vld [vmem:[%s6176 + $0x78] sm:$0x1]
    %v6208 = vsel %vm143, 0, %v6207
    %6209 = vst [vmem:[%s6176 + $0x78] sm:$0x1] %v6208
    %v6210 = vld [vmem:[%s6176 + $0x84] sm:$0x1]
    %v6211 = vsel %vm143, 0, %v6210
    %6212 = vst [vmem:[%s6176 + $0x84] sm:$0x1] %v6211
    %v6213 = vld [vmem:[%s6176 + $0x90] sm:$0x1]
    %v6214 = vsel %vm143, 0, %v6213
    %6215 = vst [vmem:[%s6176 + $0x90] sm:$0x1] %v6214
    %v6216 = vld [vmem:[%s6176 + $0x9c] sm:$0x1]
    %v6217 = vsel %vm143, 0, %v6216
    %6218 = vst [vmem:[%s6176 + $0x9c] sm:$0x1] %v6217
    %v6219 = vld [vmem:[%s6176 + $0xa8] sm:$0x1]
    %v6220 = vsel %vm143, 0, %v6219
    %6221 = vst [vmem:[%s6176 + $0xa8] sm:$0x1] %v6220
    %v6222 = vld [vmem:[%s6176 + $0xb4] sm:$0x1]
    %v6223 = vsel %vm143, 0, %v6222
    %6224 = vst [vmem:[%s6176 + $0xb4] sm:$0x1] %v6223
    %v6225 = vld [vmem:[%s6176 + $0xd8] sm:$0x1]
    %v6226 = vsel %vm143, 0, %v6225
    %6227 = vst [vmem:[%s6176 + $0xd8] sm:$0x1] %v6226
    %v6228 = vld [vmem:[%s6176 + $0xe4] sm:$0x1]
    %v6229 = vsel %vm143, 0, %v6228
    %6230 = vst [vmem:[%s6176 + $0xe4] sm:$0x1] %v6229
    %v6231 = vld [vmem:[%s6176 + $0xf0] sm:$0x1]
    %v6232 = vsel %vm143, 0, %v6231
    %6233 = vst [vmem:[%s6176 + $0xf0] sm:$0x1] %v6232
    %v6234 = vld [vmem:[%s6176 + $0xfc] sm:$0x1]
    %v6235 = vsel %vm143, 0, %v6234
    %6236 = vst [vmem:[%s6176 + $0xfc] sm:$0x1] %v6235
    %v6237 = vld [vmem:[%s6176 + $0x108] sm:$0x1]
    %v6238 = vsel %vm143, 0, %v6237
    %6239 = vst [vmem:[%s6176 + $0x108] sm:$0x1] %v6238
    %v6240 = vld [vmem:[%s6176 + $0x114] sm:$0x1]
    %v6241 = vsel %vm143, 0, %v6240
    %6242 = vst [vmem:[%s6176 + $0x114] sm:$0x1] %v6241
    %v6243 = vld [vmem:[%s6176 + $0x120] sm:$0x1]
    %v6244 = vsel %vm143, 0, %v6243
    %6245 = vst [vmem:[%s6176 + $0x120] sm:$0x1] %v6244
    %v6246 = vld [vmem:[%s6176 + $0x12c] sm:$0x1]
    %v6247 = vsel %vm143, 0, %v6246
    %6248 = vst [vmem:[%s6176 + $0x12c] sm:$0x1] %v6247
    %v6249 = vld [vmem:[%s6176 + $0x138] sm:$0x1]
    %v6250 = vsel %vm143, 0, %v6249
    %6251 = vst [vmem:[%s6176 + $0x138] sm:$0x1] %v6250
    %v6252 = vld [vmem:[%s6176 + $0x144] sm:$0x1]
    %v6253 = vsel %vm143, 0, %v6252
    %6254 = vst [vmem:[%s6176 + $0x144] sm:$0x1] %v6253
    %v6255 = vld [vmem:[%s6176 + $0x150] sm:$0x1]
    %v6256 = vsel %vm143, 0, %v6255
    %6257 = vst [vmem:[%s6176 + $0x150] sm:$0x1] %v6256
    %v6258 = vld [vmem:[%s6176 + $0x15c] sm:$0x1]
    %v6259 = vsel %vm143, 0, %v6258
    %6260 = vst [vmem:[%s6176 + $0x15c] sm:$0x1] %v6259
    %v6261 = vld [vmem:[%s6176 + $0x168] sm:$0x1]
    %v6262 = vsel %vm143, 0, %v6261
    %6263 = vst [vmem:[%s6176 + $0x168] sm:$0x1] %v6262
    %v6264 = vld [vmem:[%s6176 + $0x174] sm:$0x1]
    %v6265 = vsel %vm143, 0, %v6264
    %6266 = vst [vmem:[%s6176 + $0x174] sm:$0x1] %v6265
    %v6267 = vld [vmem:[%s6176 + $0x180] sm:$0x1]
    %v6268 = vsel %vm143, 0, %v6267
    %6269 = vst [vmem:[%s6176 + $0x180] sm:$0x1] %v6268
    %v6270 = vld [vmem:[%s6176 + $0x18c] sm:$0x1]
    %v6271 = vsel %vm143, 0, %v6270
    %6272 = vst [vmem:[%s6176 + $0x18c] sm:$0x1] %v6271
    %v6273 = vld [vmem:[%s6176 + $0x8] sm:$0xf]
    %v6274 = vsel %vm242, 0, %v6273
    %6275 = vst [vmem:[%s6176 + $0x8] sm:$0xf] %v6274
    %v6276 = vld [vmem:[%s6176 + $0x14] sm:$0xf]
    %v6277 = vsel %vm242, 0, %v6276
    %6278 = vst [vmem:[%s6176 + $0x14] sm:$0xf] %v6277
    %v6279 = vld [vmem:[%s6176 + $0x20] sm:$0xf]
    %v6280 = vsel %vm242, 0, %v6279
    %6281 = vst [vmem:[%s6176 + $0x20] sm:$0xf] %v6280
    %v6282 = vld [vmem:[%s6176 + $0x2c] sm:$0xf]
    %v6283 = vsel %vm242, 0, %v6282
    %6284 = vst [vmem:[%s6176 + $0x2c] sm:$0xf] %v6283
    %v6285 = vld [vmem:[%s6176 + $0x38] sm:$0xf]
    %v6286 = vsel %vm242, 0, %v6285
    %6287 = vst [vmem:[%s6176 + $0x38] sm:$0xf] %v6286
    %v6288 = vld [vmem:[%s6176 + $0x44] sm:$0xf]
    %v6289 = vsel %vm242, 0, %v6288
    %6290 = vst [vmem:[%s6176 + $0x44] sm:$0xf] %v6289
    %v6291 = vld [vmem:[%s6176 + $0x50] sm:$0xf]
    %v6292 = vsel %vm242, 0, %v6291
    %6293 = vst [vmem:[%s6176 + $0x50] sm:$0xf] %v6292
    %v6294 = vld [vmem:[%s6176 + $0x5c] sm:$0xf]
    %v6295 = vsel %vm242, 0, %v6294
    %6296 = vst [vmem:[%s6176 + $0x5c] sm:$0xf] %v6295
    %v6297 = vld [vmem:[%s6176 + $0x68] sm:$0xf]
    %v6298 = vsel %vm242, 0, %v6297
    %6299 = vst [vmem:[%s6176 + $0x68] sm:$0xf] %v6298
    %v6300 = vld [vmem:[%s6176 + $0x74] sm:$0xf]
    %v6301 = vsel %vm242, 0, %v6300
    %6302 = vst [vmem:[%s6176 + $0x74] sm:$0xf] %v6301
    %v6303 = vld [vmem:[%s6176 + $0x80] sm:$0xf]
    %v6304 = vsel %vm242, 0, %v6303
    %6305 = vst [vmem:[%s6176 + $0x80] sm:$0xf] %v6304
    %v6306 = vld [vmem:[%s6176 + $0x8c] sm:$0xf]
    %v6307 = vsel %vm242, 0, %v6306
    %6308 = vst [vmem:[%s6176 + $0x8c] sm:$0xf] %v6307
    %v6309 = vld [vmem:[%s6176 + $0x98] sm:$0xf]
    %v6310 = vsel %vm242, 0, %v6309
    %6311 = vst [vmem:[%s6176 + $0x98] sm:$0xf] %v6310
    %v6312 = vld [vmem:[%s6176 + $0xa4] sm:$0xf]
    %v6313 = vsel %vm242, 0, %v6312
    %6314 = vst [vmem:[%s6176 + $0xa4] sm:$0xf] %v6313
    %v6315 = vld [vmem:[%s6176 + $0xb0] sm:$0xf]
    %v6316 = vsel %vm242, 0, %v6315
    %6317 = vst [vmem:[%s6176 + $0xb0] sm:$0xf] %v6316
    %v6318 = vld [vmem:[%s6176 + $0xbc] sm:$0xf]
    %v6319 = vsel %vm242, 0, %v6318
    %6320 = vst [vmem:[%s6176 + $0xbc] sm:$0xf] %v6319
    %v6321 = vld [vmem:[%s6176 + $0xe0] sm:$0xf]
    %v6322 = vsel %vm242, 0, %v6321
    %6323 = vst [vmem:[%s6176 + $0xe0] sm:$0xf] %v6322
    %v6324 = vld [vmem:[%s6176 + $0xec] sm:$0xf]
    %v6325 = vsel %vm242, 0, %v6324
    %6326 = vst [vmem:[%s6176 + $0xec] sm:$0xf] %v6325
    %v6327 = vld [vmem:[%s6176 + $0xf8] sm:$0xf]
    %v6328 = vsel %vm242, 0, %v6327
    %6329 = vst [vmem:[%s6176 + $0xf8] sm:$0xf] %v6328
    %v6330 = vld [vmem:[%s6176 + $0x104] sm:$0xf]
    %v6331 = vsel %vm242, 0, %v6330
    %6332 = vst [vmem:[%s6176 + $0x104] sm:$0xf] %v6331
    %v6333 = vld [vmem:[%s6176 + $0x110] sm:$0xf]
    %v6334 = vsel %vm242, 0, %v6333
    %6335 = vst [vmem:[%s6176 + $0x110] sm:$0xf] %v6334
    %v6336 = vld [vmem:[%s6176 + $0x11c] sm:$0xf]
    %v6337 = vsel %vm242, 0, %v6336
    %6338 = vst [vmem:[%s6176 + $0x11c] sm:$0xf] %v6337
    %v6339 = vld [vmem:[%s6176 + $0x128] sm:$0xf]
    %v6340 = vsel %vm242, 0, %v6339
    %6341 = vst [vmem:[%s6176 + $0x128] sm:$0xf] %v6340
    %v6342 = vld [vmem:[%s6176 + $0x134] sm:$0xf]
    %v6343 = vsel %vm242, 0, %v6342
    %6344 = vst [vmem:[%s6176 + $0x134] sm:$0xf] %v6343
    %v6345 = vld [vmem:[%s6176 + $0x140] sm:$0xf]
    %v6346 = vsel %vm242, 0, %v6345
    %6347 = vst [vmem:[%s6176 + $0x140] sm:$0xf] %v6346
    %v6348 = vld [vmem:[%s6176 + $0x14c] sm:$0xf]
    %v6349 = vsel %vm242, 0, %v6348
    %6350 = vst [vmem:[%s6176 + $0x14c] sm:$0xf] %v6349
    %v6351 = vld [vmem:[%s6176 + $0x158] sm:$0xf]
    %v6352 = vsel %vm242, 0, %v6351
    %6353 = vst [vmem:[%s6176 + $0x158] sm:$0xf] %v6352
    %v6354 = vld [vmem:[%s6176 + $0x164] sm:$0xf]
    %v6355 = vsel %vm242, 0, %v6354
    %6356 = vst [vmem:[%s6176 + $0x164] sm:$0xf] %v6355
    %v6357 = vld [vmem:[%s6176 + $0x170] sm:$0xf]
    %v6358 = vsel %vm242, 0, %v6357
    %6359 = vst [vmem:[%s6176 + $0x170] sm:$0xf] %v6358
    %v6360 = vld [vmem:[%s6176 + $0x17c] sm:$0xf]
    %v6361 = vsel %vm242, 0, %v6360
    %6362 = vst [vmem:[%s6176 + $0x17c] sm:$0xf] %v6361
    %v6363 = vld [vmem:[%s6176 + $0x188] sm:$0xf]
    %v6364 = vsel %vm242, 0, %v6363
    %6365 = vst [vmem:[%s6176 + $0x188] sm:$0xf] %v6364
    %v6366 = vld [vmem:[%s6176 + $0x194] sm:$0xf]
    %v6367 = vsel %vm242, 0, %v6366
    %6368 = vst [vmem:[%s6176 + $0x194] sm:$0xf] %v6367
    %v6369 = vpack.c.bf16 %v6099, %v6099
    %v6370 = vpack.c.bf16 %v6100, %v6100
    %v6371 = vpack.c.bf16 %v6101, %v6101
    %v6372 = vpack.c.bf16 %v6102, %v6102
    %v6373 = vpack.c.bf16 %v6103, %v6103
    %v6374 = vpack.c.bf16 %v6104, %v6104
    %v6375 = vpack.c.bf16 %v6105, %v6105
    %v6376 = vpack.c.bf16 %v6106, %v6106
    %v6377 = vpack.c.bf16 %v6107, %v6107
    %v6378 = vpack.c.bf16 %v6108, %v6108
    %v6379 = vpack.c.bf16 %v6109, %v6109
    %v6380 = vpack.c.bf16 %v6110, %v6110
    %v6381 = vpack.c.bf16 %v6111, %v6111
    %v6382 = vpack.c.bf16 %v6112, %v6112
    %v6383 = vpack.c.bf16 %v6113, %v6113
    %v6384 = vpack.c.bf16 %v6114, %v6114
    %v6385 = vpack.c.bf16 %v6115, %v6115
    %v6386 = vpack.c.bf16 %v6116, %v6116
    %v6387 = vpack.c.bf16 %v6117, %v6117
    %v6388 = vpack.c.bf16 %v6118, %v6118
    %v6389 = vpack.c.bf16 %v6119, %v6119
    %v6390 = vpack.c.bf16 %v6120, %v6120
    %v6391 = vpack.c.bf16 %v6121, %v6121
    %v6392 = vpack.c.bf16 %v6122, %v6122
    %v6393 = vpack.c.bf16 %v6123, %v6123
    %v6394 = vpack.c.bf16 %v6124, %v6124
    %v6395 = vpack.c.bf16 %v6125, %v6125
    %v6396 = vpack.c.bf16 %v6126, %v6126
    %v6397 = vpack.c.bf16 %v6127, %v6127
    %v6398 = vpack.c.bf16 %v6128, %v6128
    %v6399 = vpack.c.bf16 %v6129, %v6129
    %v6400 = vpack.c.bf16 %v6130, %v6130
    %v6401 = vpack.c.bf16 %v6131, %v6131
    %v6402 = vpack.c.bf16 %v6132, %v6132
    %v6403 = vpack.c.bf16 %v6133, %v6133
    %v6404 = vpack.c.bf16 %v6134, %v6134
    %v6405 = vpack.c.bf16 %v6135, %v6135
    %v6406 = vpack.c.bf16 %v6136, %v6136
    %v6407 = vpack.c.bf16 %v6137, %v6137
    %v6408 = vpack.c.bf16 %v6138, %v6138
    %v6409 = vpack.c.bf16 %v6139, %v6139
    %v6410 = vpack.c.bf16 %v6140, %v6140
    %v6411 = vpack.c.bf16 %v6141, %v6141
    %v6412 = vpack.c.bf16 %v6142, %v6142
    %v6413 = vpack.c.bf16 %v6143, %v6143
    %v6414 = vpack.c.bf16 %v6144, %v6144
    %v6415 = vpack.c.bf16 %v6145, %v6145
    %v6416 = vpack.c.bf16 %v6146, %v6146
    %v6417 = vpack.c.bf16 %v6147, %v6147
    %v6418 = vpack.c.bf16 %v6148, %v6148
    %v6419 = vpack.c.bf16 %v6149, %v6149
    %v6420 = vpack.c.bf16 %v6150, %v6150
    %v6421 = vpack.c.bf16 %v6151, %v6151
    %v6422 = vpack.c.bf16 %v6152, %v6152
    %v6423 = vpack.c.bf16 %v6153, %v6153
    %v6424 = vpack.c.bf16 %v6154, %v6154
    %v6425 = vpack.c.bf16 %v6155, %v6155
    %v6426 = vpack.c.bf16 %v6156, %v6156
    %v6427 = vpack.c.bf16 %v6157, %v6157
    %v6428 = vpack.c.bf16 %v6158, %v6158
    %v6429 = vpack.c.bf16 %v6159, %v6159
    %v6430 = vpack.c.bf16 %v6160, %v6160
    %v6431 = vpack.c.bf16 %v6161, %v6161
    %v6432 = vpack.c.bf16 %v6162, %v6162
    %v6434 = vshrl.u32 %v6369, 16
    %v6436 = vrot.slane %v6434, 7
    %v6437 = vshll.u32 %v6369, 16
    %v6439 = vor.u32 %v6436, %v6437
    %v6440 = vrot.slane %v6436, 4
    %v6442 = vshrl.u32 %v6370, 16
    %v6444 = vrot.slane %v6442, 7
    %v6445 = vshll.u32 %v6370, 16
    %v6447 = vor.u32 %v6444, %v6445
    %v6448 = vsel %vm340, %v6440, %v6447
    %v6449 = vrot.slane %v6444, 4
    %v6451 = vshrl.u32 %v6371, 16
    %v6453 = vrot.slane %v6451, 7
    %v6454 = vshll.u32 %v6371, 16
    %v6456 = vor.u32 %v6453, %v6454
    %v6457 = vrot.slane %v6453, 4
    %v6459 = vshrl.u32 %v6372, 16
    %v6461 = vrot.slane %v6459, 7
    %v6462 = vshll.u32 %v6372, 16
    %v6464 = vor.u32 %v6461, %v6462
    %v6465 = vsel %vm340, %v6457, %v6464
    %v6466 = vrot.slane %v6461, 4
    %v6468 = vshrl.u32 %v6373, 16
    %v6470 = vrot.slane %v6468, 7
    %v6471 = vshll.u32 %v6373, 16
    %v6473 = vor.u32 %v6470, %v6471
    %v6474 = vrot.slane %v6470, 4
    %v6476 = vshrl.u32 %v6374, 16
    %v6478 = vrot.slane %v6476, 7
    %v6479 = vshll.u32 %v6374, 16
    %v6481 = vor.u32 %v6478, %v6479
    %v6482 = vsel %vm340, %v6474, %v6481
    %v6483 = vrot.slane %v6478, 4
    %v6485 = vshrl.u32 %v6375, 16
    %v6487 = vrot.slane %v6485, 7
    %v6488 = vshll.u32 %v6375, 16
    %v6490 = vor.u32 %v6487, %v6488
    %v6491 = vrot.slane %v6487, 4
    %v6493 = vshrl.u32 %v6376, 16
    %v6495 = vrot.slane %v6493, 7
    %v6496 = vshll.u32 %v6376, 16
    %v6498 = vor.u32 %v6495, %v6496
    %v6499 = vsel %vm340, %v6491, %v6498
    %v6500 = vrot.slane %v6495, 4
    %v6502 = vshrl.u32 %v6377, 16
    %v6504 = vrot.slane %v6502, 7
    %v6505 = vshll.u32 %v6377, 16
    %v6507 = vor.u32 %v6504, %v6505
    %v6508 = vrot.slane %v6504, 4
    %v6510 = vshrl.u32 %v6378, 16
    %v6512 = vrot.slane %v6510, 7
    %v6513 = vshll.u32 %v6378, 16
    %v6515 = vor.u32 %v6512, %v6513
    %v6516 = vsel %vm340, %v6508, %v6515
    %v6517 = vrot.slane %v6512, 4
    %v6519 = vshrl.u32 %v6379, 16
    %v6521 = vrot.slane %v6519, 7
    %v6522 = vshll.u32 %v6379, 16
    %v6524 = vor.u32 %v6521, %v6522
    %v6525 = vrot.slane %v6521, 4
    %v6527 = vshrl.u32 %v6380, 16
    %v6529 = vrot.slane %v6527, 7
    %v6530 = vshll.u32 %v6380, 16
    %v6532 = vor.u32 %v6529, %v6530
    %v6533 = vsel %vm340, %v6525, %v6532
    %v6534 = vrot.slane %v6529, 4
    %v6536 = vshrl.u32 %v6381, 16
    %v6538 = vrot.slane %v6536, 7
    %v6539 = vshll.u32 %v6381, 16
    %v6541 = vor.u32 %v6538, %v6539
    %v6542 = vrot.slane %v6538, 4
    %v6544 = vshrl.u32 %v6382, 16
    %v6546 = vrot.slane %v6544, 7
    %v6547 = vshll.u32 %v6382, 16
    %v6549 = vor.u32 %v6546, %v6547
    %v6550 = vsel %vm340, %v6542, %v6549
    %v6551 = vrot.slane %v6546, 4
    %v6553 = vshrl.u32 %v6383, 16
    %v6555 = vrot.slane %v6553, 7
    %v6556 = vshll.u32 %v6383, 16
    %v6558 = vor.u32 %v6555, %v6556
    %v6559 = vrot.slane %v6555, 4
    %v6561 = vshrl.u32 %v6384, 16
    %v6563 = vrot.slane %v6561, 7
    %v6564 = vshll.u32 %v6384, 16
    %v6566 = vor.u32 %v6563, %v6564
    %v6567 = vsel %vm340, %v6559, %v6566
    %v6568 = vrot.slane %v6563, 4
    %v6570 = vshrl.u32 %v6385, 16
    %v6572 = vrot.slane %v6570, 7
    %v6573 = vshll.u32 %v6385, 16
    %v6575 = vor.u32 %v6572, %v6573
    %v6576 = vrot.slane %v6572, 4
    %v6578 = vshrl.u32 %v6386, 16
    %v6580 = vrot.slane %v6578, 7
    %v6581 = vshll.u32 %v6386, 16
    %v6583 = vor.u32 %v6580, %v6581
    %v6584 = vsel %vm340, %v6576, %v6583
    %v6585 = vrot.slane %v6580, 4
    %v6587 = vshrl.u32 %v6387, 16
    %v6589 = vrot.slane %v6587, 7
    %v6590 = vshll.u32 %v6387, 16
    %v6592 = vor.u32 %v6589, %v6590
    %v6593 = vrot.slane %v6589, 4
    %v6595 = vshrl.u32 %v6388, 16
    %v6597 = vrot.slane %v6595, 7
    %v6598 = vshll.u32 %v6388, 16
    %v6600 = vor.u32 %v6597, %v6598
    %v6601 = vsel %vm340, %v6593, %v6600
    %v6602 = vrot.slane %v6597, 4
    %v6604 = vshrl.u32 %v6389, 16
    %v6606 = vrot.slane %v6604, 7
    %v6607 = vshll.u32 %v6389, 16
    %v6609 = vor.u32 %v6606, %v6607
    %v6610 = vrot.slane %v6606, 4
    %v6612 = vshrl.u32 %v6390, 16
    %v6614 = vrot.slane %v6612, 7
    %v6615 = vshll.u32 %v6390, 16
    %v6617 = vor.u32 %v6614, %v6615
    %v6618 = vsel %vm340, %v6610, %v6617
    %v6619 = vrot.slane %v6614, 4
    %v6621 = vshrl.u32 %v6391, 16
    %v6623 = vrot.slane %v6621, 7
    %v6624 = vshll.u32 %v6391, 16
    %v6626 = vor.u32 %v6623, %v6624
    %v6627 = vrot.slane %v6623, 4
    %v6629 = vshrl.u32 %v6392, 16
    %v6631 = vrot.slane %v6629, 7
    %v6632 = vshll.u32 %v6392, 16
    %v6634 = vor.u32 %v6631, %v6632
    %v6635 = vsel %vm340, %v6627, %v6634
    %v6636 = vrot.slane %v6631, 4
    %v6638 = vshrl.u32 %v6393, 16
    %v6640 = vrot.slane %v6638, 7
    %v6641 = vshll.u32 %v6393, 16
    %v6643 = vor.u32 %v6640, %v6641
    %v6644 = vrot.slane %v6640, 4
    %v6646 = vshrl.u32 %v6394, 16
    %v6648 = vrot.slane %v6646, 7
    %v6649 = vshll.u32 %v6394, 16
    %v6651 = vor.u32 %v6648, %v6649
    %v6652 = vsel %vm340, %v6644, %v6651
    %v6653 = vrot.slane %v6648, 4
    %v6655 = vshrl.u32 %v6395, 16
    %v6657 = vrot.slane %v6655, 7
    %v6658 = vshll.u32 %v6395, 16
    %v6660 = vor.u32 %v6657, %v6658
    %v6661 = vrot.slane %v6657, 4
    %v6663 = vshrl.u32 %v6396, 16
    %v6665 = vrot.slane %v6663, 7
    %v6666 = vshll.u32 %v6396, 16
    %v6668 = vor.u32 %v6665, %v6666
    %v6669 = vsel %vm340, %v6661, %v6668
    %v6670 = vrot.slane %v6665, 4
    %v6672 = vshrl.u32 %v6397, 16
    %v6674 = vrot.slane %v6672, 7
    %v6675 = vshll.u32 %v6397, 16
    %v6677 = vor.u32 %v6674, %v6675
    %v6678 = vrot.slane %v6674, 4
    %v6680 = vshrl.u32 %v6398, 16
    %v6682 = vrot.slane %v6680, 7
    %v6683 = vshll.u32 %v6398, 16
    %v6685 = vor.u32 %v6682, %v6683
    %v6686 = vsel %vm340, %v6678, %v6685
    %v6687 = vrot.slane %v6682, 4
    %v6689 = vshrl.u32 %v6399, 16
    %v6691 = vrot.slane %v6689, 7
    %v6692 = vshll.u32 %v6399, 16
    %v6694 = vor.u32 %v6691, %v6692
    %v6695 = vrot.slane %v6691, 4
    %v6697 = vshrl.u32 %v6400, 16
    %v6699 = vrot.slane %v6697, 7
    %v6700 = vshll.u32 %v6400, 16
    %v6702 = vor.u32 %v6699, %v6700
    %v6703 = vsel %vm340, %v6695, %v6702
    %v6704 = vrot.slane %v6699, 4
    %v6706 = vshrl.u32 %v6401, 16
    %v6708 = vrot.slane %v6706, 7
    %v6709 = vshll.u32 %v6401, 16
    %v6711 = vor.u32 %v6708, %v6709
    %v6712 = vrot.slane %v6708, 4
    %v6714 = vshrl.u32 %v6402, 16
    %v6716 = vrot.slane %v6714, 7
    %v6717 = vshll.u32 %v6402, 16
    %v6719 = vor.u32 %v6716, %v6717
    %v6720 = vsel %vm340, %v6712, %v6719
    %v6721 = vrot.slane %v6716, 4
    %v6723 = vshrl.u32 %v6403, 16
    %v6725 = vrot.slane %v6723, 7
    %v6726 = vshll.u32 %v6403, 16
    %v6728 = vor.u32 %v6725, %v6726
    %v6729 = vrot.slane %v6725, 4
    %v6731 = vshrl.u32 %v6404, 16
    %v6733 = vrot.slane %v6731, 7
    %v6734 = vshll.u32 %v6404, 16
    %v6736 = vor.u32 %v6733, %v6734
    %v6737 = vsel %vm340, %v6729, %v6736
    %v6738 = vrot.slane %v6733, 4
    %v6740 = vshrl.u32 %v6405, 16
    %v6742 = vrot.slane %v6740, 7
    %v6743 = vshll.u32 %v6405, 16
    %v6745 = vor.u32 %v6742, %v6743
    %v6746 = vrot.slane %v6742, 4
    %v6748 = vshrl.u32 %v6406, 16
    %v6750 = vrot.slane %v6748, 7
    %v6751 = vshll.u32 %v6406, 16
    %v6753 = vor.u32 %v6750, %v6751
    %v6754 = vsel %vm340, %v6746, %v6753
    %v6755 = vrot.slane %v6750, 4
    %v6757 = vshrl.u32 %v6407, 16
    %v6759 = vrot.slane %v6757, 7
    %v6760 = vshll.u32 %v6407, 16
    %v6762 = vor.u32 %v6759, %v6760
    %v6763 = vrot.slane %v6759, 4
    %v6765 = vshrl.u32 %v6408, 16
    %v6767 = vrot.slane %v6765, 7
    %v6768 = vshll.u32 %v6408, 16
    %v6770 = vor.u32 %v6767, %v6768
    %v6771 = vsel %vm340, %v6763, %v6770
    %v6772 = vrot.slane %v6767, 4
    %v6774 = vshrl.u32 %v6409, 16
    %v6776 = vrot.slane %v6774, 7
    %v6777 = vshll.u32 %v6409, 16
    %v6779 = vor.u32 %v6776, %v6777
    %v6780 = vrot.slane %v6776, 4
    %v6782 = vshrl.u32 %v6410, 16
    %v6784 = vrot.slane %v6782, 7
    %v6785 = vshll.u32 %v6410, 16
    %v6787 = vor.u32 %v6784, %v6785
    %v6788 = vsel %vm340, %v6780, %v6787
    %v6789 = vrot.slane %v6784, 4
    %v6791 = vshrl.u32 %v6411, 16
    %v6793 = vrot.slane %v6791, 7
    %v6794 = vshll.u32 %v6411, 16
    %v6796 = vor.u32 %v6793, %v6794
    %v6797 = vrot.slane %v6793, 4
    %v6799 = vshrl.u32 %v6412, 16
    %v6801 = vrot.slane %v6799, 7
    %v6802 = vshll.u32 %v6412, 16
    %v6804 = vor.u32 %v6801, %v6802
    %v6805 = vsel %vm340, %v6797, %v6804
    %v6806 = vrot.slane %v6801, 4
    %v6808 = vshrl.u32 %v6413, 16
    %v6810 = vrot.slane %v6808, 7
    %v6811 = vshll.u32 %v6413, 16
    %v6813 = vor.u32 %v6810, %v6811
    %v6814 = vrot.slane %v6810, 4
    %v6816 = vshrl.u32 %v6414, 16
    %v6818 = vrot.slane %v6816, 7
    %v6819 = vshll.u32 %v6414, 16
    %v6821 = vor.u32 %v6818, %v6819
    %v6822 = vsel %vm340, %v6814, %v6821
    %v6823 = vrot.slane %v6818, 4
    %v6825 = vshrl.u32 %v6415, 16
    %v6827 = vrot.slane %v6825, 7
    %v6828 = vshll.u32 %v6415, 16
    %v6830 = vor.u32 %v6827, %v6828
    %v6831 = vrot.slane %v6827, 4
    %v6833 = vshrl.u32 %v6416, 16
    %v6835 = vrot.slane %v6833, 7
    %v6836 = vshll.u32 %v6416, 16
    %v6838 = vor.u32 %v6835, %v6836
    %v6839 = vsel %vm340, %v6831, %v6838
    %v6840 = vrot.slane %v6835, 4
    %v6842 = vshrl.u32 %v6417, 16
    %v6844 = vrot.slane %v6842, 7
    %v6845 = vshll.u32 %v6417, 16
    %v6847 = vor.u32 %v6844, %v6845
    %v6848 = vrot.slane %v6844, 4
    %v6850 = vshrl.u32 %v6418, 16
    %v6852 = vrot.slane %v6850, 7
    %v6853 = vshll.u32 %v6418, 16
    %v6855 = vor.u32 %v6852, %v6853
    %v6856 = vsel %vm340, %v6848, %v6855
    %v6857 = vrot.slane %v6852, 4
    %v6859 = vshrl.u32 %v6419, 16
    %v6861 = vrot.slane %v6859, 7
    %v6862 = vshll.u32 %v6419, 16
    %v6864 = vor.u32 %v6861, %v6862
    %v6865 = vrot.slane %v6861, 4
    %v6867 = vshrl.u32 %v6420, 16
    %v6869 = vrot.slane %v6867, 7
    %v6870 = vshll.u32 %v6420, 16
    %v6872 = vor.u32 %v6869, %v6870
    %v6873 = vsel %vm340, %v6865, %v6872
    %v6874 = vrot.slane %v6869, 4
    %v6876 = vshrl.u32 %v6421, 16
    %v6878 = vrot.slane %v6876, 7
    %v6879 = vshll.u32 %v6421, 16
    %v6881 = vor.u32 %v6878, %v6879
    %v6882 = vrot.slane %v6878, 4
    %v6884 = vshrl.u32 %v6422, 16
    %v6886 = vrot.slane %v6884, 7
    %v6887 = vshll.u32 %v6422, 16
    %v6889 = vor.u32 %v6886, %v6887
    %v6890 = vsel %vm340, %v6882, %v6889
    %v6891 = vrot.slane %v6886, 4
    %v6893 = vshrl.u32 %v6423, 16
    %v6895 = vrot.slane %v6893, 7
    %v6896 = vshll.u32 %v6423, 16
    %v6898 = vor.u32 %v6895, %v6896
    %v6899 = vrot.slane %v6895, 4
    %v6901 = vshrl.u32 %v6424, 16
    %v6903 = vrot.slane %v6901, 7
    %v6904 = vshll.u32 %v6424, 16
    %v6906 = vor.u32 %v6903, %v6904
    %v6907 = vsel %vm340, %v6899, %v6906
    %v6908 = vrot.slane %v6903, 4
    %v6910 = vshrl.u32 %v6425, 16
    %v6912 = vrot.slane %v6910, 7
    %v6913 = vshll.u32 %v6425, 16
    %v6915 = vor.u32 %v6912, %v6913
    %v6916 = vrot.slane %v6912, 4
    %v6918 = vshrl.u32 %v6426, 16
    %v6920 = vrot.slane %v6918, 7
    %v6921 = vshll.u32 %v6426, 16
    %v6923 = vor.u32 %v6920, %v6921
    %v6924 = vsel %vm340, %v6916, %v6923
    %v6925 = vrot.slane %v6920, 4
    %v6927 = vshrl.u32 %v6427, 16
    %v6929 = vrot.slane %v6927, 7
    %v6930 = vshll.u32 %v6427, 16
    %v6932 = vor.u32 %v6929, %v6930
    %v6933 = vrot.slane %v6929, 4
    %v6935 = vshrl.u32 %v6428, 16
    %v6937 = vrot.slane %v6935, 7
    %v6938 = vshll.u32 %v6428, 16
    %v6940 = vor.u32 %v6937, %v6938
    %v6941 = vsel %vm340, %v6933, %v6940
    %v6942 = vrot.slane %v6937, 4
    %v6944 = vshrl.u32 %v6429, 16
    %v6946 = vrot.slane %v6944, 7
    %v6947 = vshll.u32 %v6429, 16
    %v6949 = vor.u32 %v6946, %v6947
    %v6950 = vrot.slane %v6946, 4
    %v6952 = vshrl.u32 %v6430, 16
    %v6954 = vrot.slane %v6952, 7
    %v6955 = vshll.u32 %v6430, 16
    %v6957 = vor.u32 %v6954, %v6955
    %v6958 = vsel %vm340, %v6950, %v6957
    %v6959 = vrot.slane %v6954, 4
    %v6961 = vshrl.u32 %v6431, 16
    %v6963 = vrot.slane %v6961, 7
    %v6964 = vshll.u32 %v6431, 16
    %v6966 = vor.u32 %v6963, %v6964
    %v6967 = vrot.slane %v6963, 4
    %v6969 = vshrl.u32 %v6432, 16
    %v6971 = vrot.slane %v6969, 7
    %v6972 = vshll.u32 %v6432, 16
    %v6974 = vor.u32 %v6971, %v6972
    %v6975 = vsel %vm340, %v6967, %v6974
    %v6976 = vrot.slane %v6971, 4
    %v7073 = vld [vmem:[%s6176] sm:$0xf]
    %v7074 = vsel %vm242, %v6439, %v7073
    %7075 = vst [vmem:[%s6176] sm:$0xf] %v7074
    %7076 = vst [vmem:[%s6176 + $0x4] sm:$0xf] %v6448
    %v7077 = vld [vmem:[%s6176 + $0x8] sm:$0x1]
    %v7078 = vsel %vm143, %v6449, %v7077
    %7079 = vst [vmem:[%s6176 + $0x8] sm:$0x1] %v7078
    %v7080 = vld [vmem:[%s6176 + $0xc] sm:$0xf]
    %v7081 = vsel %vm242, %v6456, %v7080
    %7082 = vst [vmem:[%s6176 + $0xc] sm:$0xf] %v7081
    %7083 = vst [vmem:[%s6176 + $0x10] sm:$0xf] %v6465
    %v7084 = vld [vmem:[%s6176 + $0x14] sm:$0x1]
    %v7085 = vsel %vm143, %v6466, %v7084
    %7086 = vst [vmem:[%s6176 + $0x14] sm:$0x1] %v7085
    %v7087 = vld [vmem:[%s6176 + $0x18] sm:$0xf]
    %v7088 = vsel %vm242, %v6473, %v7087
    %7089 = vst [vmem:[%s6176 + $0x18] sm:$0xf] %v7088
    %7090 = vst [vmem:[%s6176 + $0x1c] sm:$0xf] %v6482
    %v7091 = vld [vmem:[%s6176 + $0x20] sm:$0x1]
    %v7092 = vsel %vm143, %v6483, %v7091
    %7093 = vst [vmem:[%s6176 + $0x20] sm:$0x1] %v7092
    %v7094 = vld [vmem:[%s6176 + $0x24] sm:$0xf]
    %v7095 = vsel %vm242, %v6490, %v7094
    %7096 = vst [vmem:[%s6176 + $0x24] sm:$0xf] %v7095
    %7097 = vst [vmem:[%s6176 + $0x28] sm:$0xf] %v6499
    %v7098 = vld [vmem:[%s6176 + $0x2c] sm:$0x1]
    %v7099 = vsel %vm143, %v6500, %v7098
    %7100 = vst [vmem:[%s6176 + $0x2c] sm:$0x1] %v7099
    %v7101 = vld [vmem:[%s6176 + $0x30] sm:$0xf]
    %v7102 = vsel %vm242, %v6507, %v7101
    %7103 = vst [vmem:[%s6176 + $0x30] sm:$0xf] %v7102
    %7104 = vst [vmem:[%s6176 + $0x34] sm:$0xf] %v6516
    %v7105 = vld [vmem:[%s6176 + $0x38] sm:$0x1]
    %v7106 = vsel %vm143, %v6517, %v7105
    %7107 = vst [vmem:[%s6176 + $0x38] sm:$0x1] %v7106
    %v7108 = vld [vmem:[%s6176 + $0x3c] sm:$0xf]
    %v7109 = vsel %vm242, %v6524, %v7108
    %7110 = vst [vmem:[%s6176 + $0x3c] sm:$0xf] %v7109
    %7111 = vst [vmem:[%s6176 + $0x40] sm:$0xf] %v6533
    %v7112 = vld [vmem:[%s6176 + $0x44] sm:$0x1]
    %v7113 = vsel %vm143, %v6534, %v7112
    %7114 = vst [vmem:[%s6176 + $0x44] sm:$0x1] %v7113
    %v7115 = vld [vmem:[%s6176 + $0x48] sm:$0xf]
    %v7116 = vsel %vm242, %v6541, %v7115
    %7117 = vst [vmem:[%s6176 + $0x48] sm:$0xf] %v7116
    %7118 = vst [vmem:[%s6176 + $0x4c] sm:$0xf] %v6550
    %v7119 = vld [vmem:[%s6176 + $0x50] sm:$0x1]
    %v7120 = vsel %vm143, %v6551, %v7119
    %7121 = vst [vmem:[%s6176 + $0x50] sm:$0x1] %v7120
    %v7122 = vld [vmem:[%s6176 + $0x54] sm:$0xf]
    %v7123 = vsel %vm242, %v6558, %v7122
    %7124 = vst [vmem:[%s6176 + $0x54] sm:$0xf] %v7123
    %7125 = vst [vmem:[%s6176 + $0x58] sm:$0xf] %v6567
    %v7126 = vld [vmem:[%s6176 + $0x5c] sm:$0x1]
    %v7127 = vsel %vm143, %v6568, %v7126
    %7128 = vst [vmem:[%s6176 + $0x5c] sm:$0x1] %v7127
    %v7129 = vld [vmem:[%s6176 + $0x60] sm:$0xf]
    %v7130 = vsel %vm242, %v6575, %v7129
    %7131 = vst [vmem:[%s6176 + $0x60] sm:$0xf] %v7130
    %7132 = vst [vmem:[%s6176 + $0x64] sm:$0xf] %v6584
    %v7133 = vld [vmem:[%s6176 + $0x68] sm:$0x1]
    %v7134 = vsel %vm143, %v6585, %v7133
    %7135 = vst [vmem:[%s6176 + $0x68] sm:$0x1] %v7134
    %v7136 = vld [vmem:[%s6176 + $0x6c] sm:$0xf]
    %v7137 = vsel %vm242, %v6592, %v7136
    %7138 = vst [vmem:[%s6176 + $0x6c] sm:$0xf] %v7137
    %7139 = vst [vmem:[%s6176 + $0x70] sm:$0xf] %v6601
    %v7140 = vld [vmem:[%s6176 + $0x74] sm:$0x1]
    %v7141 = vsel %vm143, %v6602, %v7140
    %7142 = vst [vmem:[%s6176 + $0x74] sm:$0x1] %v7141
    %v7143 = vld [vmem:[%s6176 + $0x78] sm:$0xf]
    %v7144 = vsel %vm242, %v6609, %v7143
    %7145 = vst [vmem:[%s6176 + $0x78] sm:$0xf] %v7144
    %7146 = vst [vmem:[%s6176 + $0x7c] sm:$0xf] %v6618
    %v7147 = vld [vmem:[%s6176 + $0x80] sm:$0x1]
    %v7148 = vsel %vm143, %v6619, %v7147
    %7149 = vst [vmem:[%s6176 + $0x80] sm:$0x1] %v7148
    %v7150 = vld [vmem:[%s6176 + $0x84] sm:$0xf]
    %v7151 = vsel %vm242, %v6626, %v7150
    %7152 = vst [vmem:[%s6176 + $0x84] sm:$0xf] %v7151
    %7153 = vst [vmem:[%s6176 + $0x88] sm:$0xf] %v6635
    %v7154 = vld [vmem:[%s6176 + $0x8c] sm:$0x1]
    %v7155 = vsel %vm143, %v6636, %v7154
    %7156 = vst [vmem:[%s6176 + $0x8c] sm:$0x1] %v7155
    %v7157 = vld [vmem:[%s6176 + $0x90] sm:$0xf]
    %v7158 = vsel %vm242, %v6643, %v7157
    %7159 = vst [vmem:[%s6176 + $0x90] sm:$0xf] %v7158
    %7160 = vst [vmem:[%s6176 + $0x94] sm:$0xf] %v6652
    %v7161 = vld [vmem:[%s6176 + $0x98] sm:$0x1]
    %v7162 = vsel %vm143, %v6653, %v7161
    %7163 = vst [vmem:[%s6176 + $0x98] sm:$0x1] %v7162
    %v7164 = vld [vmem:[%s6176 + $0x9c] sm:$0xf]
    %v7165 = vsel %vm242, %v6660, %v7164
    %7166 = vst [vmem:[%s6176 + $0x9c] sm:$0xf] %v7165
    %7167 = vst [vmem:[%s6176 + $0xa0] sm:$0xf] %v6669
    %v7168 = vld [vmem:[%s6176 + $0xa4] sm:$0x1]
    %v7169 = vsel %vm143, %v6670, %v7168
    %7170 = vst [vmem:[%s6176 + $0xa4] sm:$0x1] %v7169
    %v7171 = vld [vmem:[%s6176 + $0xa8] sm:$0xf]
    %v7172 = vsel %vm242, %v6677, %v7171
    %7173 = vst [vmem:[%s6176 + $0xa8] sm:$0xf] %v7172
    %7174 = vst [vmem:[%s6176 + $0xac] sm:$0xf] %v6686
    %v7175 = vld [vmem:[%s6176 + $0xb0] sm:$0x1]
    %v7176 = vsel %vm143, %v6687, %v7175
    %7177 = vst [vmem:[%s6176 + $0xb0] sm:$0x1] %v7176
    %v7178 = vld [vmem:[%s6176 + $0xb4] sm:$0xf]
    %v7179 = vsel %vm242, %v6694, %v7178
    %7180 = vst [vmem:[%s6176 + $0xb4] sm:$0xf] %v7179
    %7181 = vst [vmem:[%s6176 + $0xb8] sm:$0xf] %v6703
    %v7182 = vld [vmem:[%s6176 + $0xbc] sm:$0x1]
    %v7183 = vsel %vm143, %v6704, %v7182
    %7184 = vst [vmem:[%s6176 + $0xbc] sm:$0x1] %v7183
    %v7185 = vld [vmem:[%s6176 + $0xd8] sm:$0xf]
    %v7186 = vsel %vm242, %v6711, %v7185
    %7187 = vst [vmem:[%s6176 + $0xd8] sm:$0xf] %v7186
    %7188 = vst [vmem:[%s6176 + $0xdc] sm:$0xf] %v6720
    %v7189 = vld [vmem:[%s6176 + $0xe0] sm:$0x1]
    %v7190 = vsel %vm143, %v6721, %v7189
    %7191 = vst [vmem:[%s6176 + $0xe0] sm:$0x1] %v7190
    %v7192 = vld [vmem:[%s6176 + $0xe4] sm:$0xf]
    %v7193 = vsel %vm242, %v6728, %v7192
    %7194 = vst [vmem:[%s6176 + $0xe4] sm:$0xf] %v7193
    %7195 = vst [vmem:[%s6176 + $0xe8] sm:$0xf] %v6737
    %v7196 = vld [vmem:[%s6176 + $0xec] sm:$0x1]
    %v7197 = vsel %vm143, %v6738, %v7196
    %7198 = vst [vmem:[%s6176 + $0xec] sm:$0x1] %v7197
    %v7199 = vld [vmem:[%s6176 + $0xf0] sm:$0xf]
    %v7200 = vsel %vm242, %v6745, %v7199
    %7201 = vst [vmem:[%s6176 + $0xf0] sm:$0xf] %v7200
    %7202 = vst [vmem:[%s6176 + $0xf4] sm:$0xf] %v6754
    %v7203 = vld [vmem:[%s6176 + $0xf8] sm:$0x1]
    %v7204 = vsel %vm143, %v6755, %v7203
    %7205 = vst [vmem:[%s6176 + $0xf8] sm:$0x1] %v7204
    %v7206 = vld [vmem:[%s6176 + $0xfc] sm:$0xf]
    %v7207 = vsel %vm242, %v6762, %v7206
    %7208 = vst [vmem:[%s6176 + $0xfc] sm:$0xf] %v7207
    %7209 = vst [vmem:[%s6176 + $0x100] sm:$0xf] %v6771
    %v7210 = vld [vmem:[%s6176 + $0x104] sm:$0x1]
    %v7211 = vsel %vm143, %v6772, %v7210
    %7212 = vst [vmem:[%s6176 + $0x104] sm:$0x1] %v7211
    %v7213 = vld [vmem:[%s6176 + $0x108] sm:$0xf]
    %v7214 = vsel %vm242, %v6779, %v7213
    %7215 = vst [vmem:[%s6176 + $0x108] sm:$0xf] %v7214
    %7216 = vst [vmem:[%s6176 + $0x10c] sm:$0xf] %v6788
    %v7217 = vld [vmem:[%s6176 + $0x110] sm:$0x1]
    %v7218 = vsel %vm143, %v6789, %v7217
    %7219 = vst [vmem:[%s6176 + $0x110] sm:$0x1] %v7218
    %v7220 = vld [vmem:[%s6176 + $0x114] sm:$0xf]
    %v7221 = vsel %vm242, %v6796, %v7220
    %7222 = vst [vmem:[%s6176 + $0x114] sm:$0xf] %v7221
    %7223 = vst [vmem:[%s6176 + $0x118] sm:$0xf] %v6805
    %v7224 = vld [vmem:[%s6176 + $0x11c] sm:$0x1]
    %v7225 = vsel %vm143, %v6806, %v7224
    %7226 = vst [vmem:[%s6176 + $0x11c] sm:$0x1] %v7225
    %v7227 = vld [vmem:[%s6176 + $0x120] sm:$0xf]
    %v7228 = vsel %vm242, %v6813, %v7227
    %7229 = vst [vmem:[%s6176 + $0x120] sm:$0xf] %v7228
    %7230 = vst [vmem:[%s6176 + $0x124] sm:$0xf] %v6822
    %v7231 = vld [vmem:[%s6176 + $0x128] sm:$0x1]
    %v7232 = vsel %vm143, %v6823, %v7231
    %7233 = vst [vmem:[%s6176 + $0x128] sm:$0x1] %v7232
    %v7234 = vld [vmem:[%s6176 + $0x12c] sm:$0xf]
    %v7235 = vsel %vm242, %v6830, %v7234
    %7236 = vst [vmem:[%s6176 + $0x12c] sm:$0xf] %v7235
    %7237 = vst [vmem:[%s6176 + $0x130] sm:$0xf] %v6839
    %v7238 = vld [vmem:[%s6176 + $0x134] sm:$0x1]
    %v7239 = vsel %vm143, %v6840, %v7238
    %7240 = vst [vmem:[%s6176 + $0x134] sm:$0x1] %v7239
    %v7241 = vld [vmem:[%s6176 + $0x138] sm:$0xf]
    %v7242 = vsel %vm242, %v6847, %v7241
    %7243 = vst [vmem:[%s6176 + $0x138] sm:$0xf] %v7242
    %7244 = vst [vmem:[%s6176 + $0x13c] sm:$0xf] %v6856
    %v7245 = vld [vmem:[%s6176 + $0x140] sm:$0x1]
    %v7246 = vsel %vm143, %v6857, %v7245
    %7247 = vst [vmem:[%s6176 + $0x140] sm:$0x1] %v7246
    %v7248 = vld [vmem:[%s6176 + $0x144] sm:$0xf]
    %v7249 = vsel %vm242, %v6864, %v7248
    %7250 = vst [vmem:[%s6176 + $0x144] sm:$0xf] %v7249
    %7251 = vst [vmem:[%s6176 + $0x148] sm:$0xf] %v6873
    %v7252 = vld [vmem:[%s6176 + $0x14c] sm:$0x1]
    %v7253 = vsel %vm143, %v6874, %v7252
    %7254 = vst [vmem:[%s6176 + $0x14c] sm:$0x1] %v7253
    %v7255 = vld [vmem:[%s6176 + $0x150] sm:$0xf]
    %v7256 = vsel %vm242, %v6881, %v7255
    %7257 = vst [vmem:[%s6176 + $0x150] sm:$0xf] %v7256
    %7258 = vst [vmem:[%s6176 + $0x154] sm:$0xf] %v6890
    %v7259 = vld [vmem:[%s6176 + $0x158] sm:$0x1]
    %v7260 = vsel %vm143, %v6891, %v7259
    %7261 = vst [vmem:[%s6176 + $0x158] sm:$0x1] %v7260
    %v7262 = vld [vmem:[%s6176 + $0x15c] sm:$0xf]
    %v7263 = vsel %vm242, %v6898, %v7262
    %7264 = vst [vmem:[%s6176 + $0x15c] sm:$0xf] %v7263
    %7265 = vst [vmem:[%s6176 + $0x160] sm:$0xf] %v6907
    %v7266 = vld [vmem:[%s6176 + $0x164] sm:$0x1]
    %v7267 = vsel %vm143, %v6908, %v7266
    %7268 = vst [vmem:[%s6176 + $0x164] sm:$0x1] %v7267
    %v7269 = vld [vmem:[%s6176 + $0x168] sm:$0xf]
    %v7270 = vsel %vm242, %v6915, %v7269
    %7271 = vst [vmem:[%s6176 + $0x168] sm:$0xf] %v7270
    %7272 = vst [vmem:[%s6176 + $0x16c] sm:$0xf] %v6924
    %v7273 = vld [vmem:[%s6176 + $0x170] sm:$0x1]
    %v7274 = vsel %vm143, %v6925, %v7273
    %7275 = vst [vmem:[%s6176 + $0x170] sm:$0x1] %v7274
    %v7276 = vld [vmem:[%s6176 + $0x174] sm:$0xf]
    %v7277 = vsel %vm242, %v6932, %v7276
    %7278 = vst [vmem:[%s6176 + $0x174] sm:$0xf] %v7277
    %7279 = vst [vmem:[%s6176 + $0x178] sm:$0xf] %v6941
    %v7280 = vld [vmem:[%s6176 + $0x17c] sm:$0x1]
    %v7281 = vsel %vm143, %v6942, %v7280
    %7282 = vst [vmem:[%s6176 + $0x17c] sm:$0x1] %v7281
    %v7283 = vld [vmem:[%s6176 + $0x180] sm:$0xf]
    %v7284 = vsel %vm242, %v6949, %v7283
    %7285 = vst [vmem:[%s6176 + $0x180] sm:$0xf] %v7284
    %7286 = vst [vmem:[%s6176 + $0x184] sm:$0xf] %v6958
    %v7287 = vld [vmem:[%s6176 + $0x188] sm:$0x1]
    %v7288 = vsel %vm143, %v6959, %v7287
    %7289 = vst [vmem:[%s6176 + $0x188] sm:$0x1] %v7288
    %v7290 = vld [vmem:[%s6176 + $0x18c] sm:$0xf]
    %v7291 = vsel %vm242, %v6966, %v7290
    %7292 = vst [vmem:[%s6176 + $0x18c] sm:$0xf] %v7291
    %7293 = vst [vmem:[%s6176 + $0x190] sm:$0xf] %v6975
    %v7294 = vld [vmem:[%s6176 + $0x194] sm:$0x1]
    %v7295 = vsel %vm143, %v6976, %v7294
    %7296 = vst [vmem:[%s6176 + $0x194] sm:$0x1] %v7295
    %v7297 = vld [vmem:[#allocation3] sm:$0xf]
    %v7298 = vld [vmem:[#allocation3 + $0x4] sm:$0xf]
    %v7299 = vld [vmem:[#allocation3 + $0x8] sm:$0xf]
    %v7300 = vld [vmem:[#allocation3 + $0xc] sm:$0xf]
    %v7301 = vld [vmem:[#allocation3 + $0x10] sm:$0xf]
    %v7302 = vld [vmem:[#allocation3 + $0x14] sm:$0xf]
    %v7303 = vld [vmem:[#allocation3 + $0x18] sm:$0xf]
    %v7304 = vld [vmem:[#allocation3 + $0x1c] sm:$0xf]
    %v7305 = vld [vmem:[#allocation3 + $0x20] sm:$0xf]
    %v7306 = vld [vmem:[#allocation3 + $0x24] sm:$0xf]
    %v7307 = vld [vmem:[#allocation3 + $0x28] sm:$0xf]
    %v7308 = vld [vmem:[#allocation3 + $0x2c] sm:$0xf]
    %v7309 = vld [vmem:[#allocation3 + $0x30] sm:$0xf]
    %v7310 = vld [vmem:[#allocation3 + $0x34] sm:$0xf]
    %v7311 = vld [vmem:[#allocation3 + $0x38] sm:$0xf]
    %v7312 = vld [vmem:[#allocation3 + $0x3c] sm:$0xf]
    %v7313 = vld [vmem:[#allocation3 + $0x40] sm:$0xf]
    %v7314 = vld [vmem:[#allocation3 + $0x44] sm:$0xf]
    %v7315 = vld [vmem:[#allocation3 + $0x48] sm:$0xf]
    %v7316 = vld [vmem:[#allocation3 + $0x4c] sm:$0xf]
    %v7317 = vld [vmem:[#allocation3 + $0x50] sm:$0xf]
    %v7318 = vld [vmem:[#allocation3 + $0x54] sm:$0xf]
    %v7319 = vld [vmem:[#allocation3 + $0x58] sm:$0xf]
    %v7320 = vld [vmem:[#allocation3 + $0x5c] sm:$0xf]
    %v7321 = vld [vmem:[#allocation3 + $0x60] sm:$0xf]
    %v7322 = vld [vmem:[#allocation3 + $0x64] sm:$0xf]
    %v7323 = vld [vmem:[#allocation3 + $0x68] sm:$0xf]
    %v7324 = vld [vmem:[#allocation3 + $0x6c] sm:$0xf]
    %v7325 = vld [vmem:[#allocation3 + $0x70] sm:$0xf]
    %v7326 = vld [vmem:[#allocation3 + $0x74] sm:$0xf]
    %v7327 = vld [vmem:[#allocation3 + $0x78] sm:$0xf]
    %v7328 = vld [vmem:[#allocation3 + $0x7c] sm:$0xf]
    %v7329 = vld [vmem:[#allocation3 + $0x80] sm:$0xf]
    %v7330 = vld [vmem:[#allocation3 + $0x84] sm:$0xf]
    %v7331 = vld [vmem:[#allocation3 + $0x88] sm:$0xf]
    %v7332 = vld [vmem:[#allocation3 + $0x8c] sm:$0xf]
    %v7333 = vld [vmem:[#allocation3 + $0x90] sm:$0xf]
    %v7334 = vld [vmem:[#allocation3 + $0x94] sm:$0xf]
    %v7335 = vld [vmem:[#allocation3 + $0x98] sm:$0xf]
    %v7336 = vld [vmem:[#allocation3 + $0x9c] sm:$0xf]
    %v7337 = vld [vmem:[#allocation3 + $0xa0] sm:$0xf]
    %v7338 = vld [vmem:[#allocation3 + $0xa4] sm:$0xf]
    %v7339 = vld [vmem:[#allocation3 + $0xa8] sm:$0xf]
    %v7340 = vld [vmem:[#allocation3 + $0xac] sm:$0xf]
    %v7341 = vld [vmem:[#allocation3 + $0xb0] sm:$0xf]
    %v7342 = vld [vmem:[#allocation3 + $0xb4] sm:$0xf]
    %v7343 = vld [vmem:[#allocation3 + $0xb8] sm:$0xf]
    %v7344 = vld [vmem:[#allocation3 + $0xbc] sm:$0xf]
    %v7345 = vld [vmem:[#allocation3 + $0xd8] sm:$0xf]
    %v7346 = vld [vmem:[#allocation3 + $0xdc] sm:$0xf]
    %v7347 = vld [vmem:[#allocation3 + $0xe0] sm:$0xf]
    %v7348 = vld [vmem:[#allocation3 + $0xe4] sm:$0xf]
    %v7349 = vld [vmem:[#allocation3 + $0xe8] sm:$0xf]
    %v7350 = vld [vmem:[#allocation3 + $0xec] sm:$0xf]
    %v7351 = vld [vmem:[#allocation3 + $0xf0] sm:$0xf]
    %v7352 = vld [vmem:[#allocation3 + $0xf4] sm:$0xf]
    %v7353 = vld [vmem:[#allocation3 + $0xf8] sm:$0xf]
    %v7354 = vld [vmem:[#allocation3 + $0xfc] sm:$0xf]
    %v7355 = vld [vmem:[#allocation3 + $0x100] sm:$0xf]
    %v7356 = vld [vmem:[#allocation3 + $0x104] sm:$0xf]
    %v7357 = vld [vmem:[#allocation3 + $0x108] sm:$0xf]
    %v7358 = vld [vmem:[#allocation3 + $0x10c] sm:$0xf]
    %v7359 = vld [vmem:[#allocation3 + $0x110] sm:$0xf]
    %v7360 = vld [vmem:[#allocation3 + $0x114] sm:$0xf]
    %v7361 = vld [vmem:[#allocation3 + $0x118] sm:$0xf]
    %v7362 = vld [vmem:[#allocation3 + $0x11c] sm:$0xf]
    %v7363 = vld [vmem:[#allocation3 + $0x120] sm:$0xf]
    %v7364 = vld [vmem:[#allocation3 + $0x124] sm:$0xf]
    %v7365 = vld [vmem:[#allocation3 + $0x128] sm:$0xf]
    %v7366 = vld [vmem:[#allocation3 + $0x12c] sm:$0xf]
    %v7367 = vld [vmem:[#allocation3 + $0x130] sm:$0xf]
    %v7368 = vld [vmem:[#allocation3 + $0x134] sm:$0xf]
    %v7369 = vld [vmem:[#allocation3 + $0x138] sm:$0xf]
    %v7370 = vld [vmem:[#allocation3 + $0x13c] sm:$0xf]
    %v7371 = vld [vmem:[#allocation3 + $0x140] sm:$0xf]
    %v7372 = vld [vmem:[#allocation3 + $0x144] sm:$0xf]
    %v7373 = vld [vmem:[#allocation3 + $0x148] sm:$0xf]
    %v7374 = vld [vmem:[#allocation3 + $0x14c] sm:$0xf]
    %v7375 = vld [vmem:[#allocation3 + $0x150] sm:$0xf]
    %v7376 = vld [vmem:[#allocation3 + $0x154] sm:$0xf]
    %v7377 = vld [vmem:[#allocation3 + $0x158] sm:$0xf]
    %v7378 = vld [vmem:[#allocation3 + $0x15c] sm:$0xf]
    %v7379 = vld [vmem:[#allocation3 + $0x160] sm:$0xf]
    %v7380 = vld [vmem:[#allocation3 + $0x164] sm:$0xf]
    %v7381 = vld [vmem:[#allocation3 + $0x168] sm:$0xf]
    %v7382 = vld [vmem:[#allocation3 + $0x16c] sm:$0xf]
    %v7383 = vld [vmem:[#allocation3 + $0x170] sm:$0xf]
    %v7384 = vld [vmem:[#allocation3 + $0x174] sm:$0xf]
    %v7385 = vld [vmem:[#allocation3 + $0x178] sm:$0xf]
    %v7386 = vld [vmem:[#allocation3 + $0x17c] sm:$0xf]
    %v7387 = vld [vmem:[#allocation3 + $0x180] sm:$0xf]
    %v7388 = vld [vmem:[#allocation3 + $0x184] sm:$0xf]
    %v7389 = vld [vmem:[#allocation3 + $0x188] sm:$0xf]
    %v7390 = vld [vmem:[#allocation3 + $0x18c] sm:$0xf]
    %v7391 = vld [vmem:[#allocation3 + $0x190] sm:$0xf]
    %v7392 = vld [vmem:[#allocation3 + $0x194] sm:$0xf]
    %v7393 = vld [vmem:[%s6176] sm:$0xf]
    %v7394 = vld [vmem:[%s6176 + $0x4] sm:$0xf]
    %v7395 = vld [vmem:[%s6176 + $0x8] sm:$0xf]
    %v7396 = vld [vmem:[%s6176 + $0xc] sm:$0xf]
    %v7397 = vld [vmem:[%s6176 + $0x10] sm:$0xf]
    %v7398 = vld [vmem:[%s6176 + $0x14] sm:$0xf]
    %v7399 = vld [vmem:[%s6176 + $0x18] sm:$0xf]
    %v7400 = vld [vmem:[%s6176 + $0x1c] sm:$0xf]
    %v7401 = vld [vmem:[%s6176 + $0x20] sm:$0xf]
    %v7402 = vld [vmem:[%s6176 + $0x24] sm:$0xf]
    %v7403 = vld [vmem:[%s6176 + $0x28] sm:$0xf]
    %v7404 = vld [vmem:[%s6176 + $0x2c] sm:$0xf]
    %v7405 = vld [vmem:[%s6176 + $0x30] sm:$0xf]
    %v7406 = vld [vmem:[%s6176 + $0x34] sm:$0xf]
    %v7407 = vld [vmem:[%s6176 + $0x38] sm:$0xf]
    %v7408 = vld [vmem:[%s6176 + $0x3c] sm:$0xf]
    %v7409 = vld [vmem:[%s6176 + $0x40] sm:$0xf]
    %v7410 = vld [vmem:[%s6176 + $0x44] sm:$0xf]
    %v7411 = vld [vmem:[%s6176 + $0x48] sm:$0xf]
    %v7412 = vld [vmem:[%s6176 + $0x4c] sm:$0xf]
    %v7413 = vld [vmem:[%s6176 + $0x50] sm:$0xf]
    %v7414 = vld [vmem:[%s6176 + $0x54] sm:$0xf]
    %v7415 = vld [vmem:[%s6176 + $0x58] sm:$0xf]
    %v7416 = vld [vmem:[%s6176 + $0x5c] sm:$0xf]
    %v7417 = vld [vmem:[%s6176 + $0x60] sm:$0xf]
    %v7418 = vld [vmem:[%s6176 + $0x64] sm:$0xf]
    %v7419 = vld [vmem:[%s6176 + $0x68] sm:$0xf]
    %v7420 = vld [vmem:[%s6176 + $0x6c] sm:$0xf]
    %v7421 = vld [vmem:[%s6176 + $0x70] sm:$0xf]
    %v7422 = vld [vmem:[%s6176 + $0x74] sm:$0xf]
    %v7423 = vld [vmem:[%s6176 + $0x78] sm:$0xf]
    %v7424 = vld [vmem:[%s6176 + $0x7c] sm:$0xf]
    %v7425 = vld [vmem:[%s6176 + $0x80] sm:$0xf]
    %v7426 = vld [vmem:[%s6176 + $0x84] sm:$0xf]
    %v7427 = vld [vmem:[%s6176 + $0x88] sm:$0xf]
    %v7428 = vld [vmem:[%s6176 + $0x8c] sm:$0xf]
    %v7429 = vld [vmem:[%s6176 + $0x90] sm:$0xf]
    %v7430 = vld [vmem:[%s6176 + $0x94] sm:$0xf]
    %v7431 = vld [vmem:[%s6176 + $0x98] sm:$0xf]
    %v7432 = vld [vmem:[%s6176 + $0x9c] sm:$0xf]
    %v7433 = vld [vmem:[%s6176 + $0xa0] sm:$0xf]
    %v7434 = vld [vmem:[%s6176 + $0xa4] sm:$0xf]
    %v7435 = vld [vmem:[%s6176 + $0xa8] sm:$0xf]
    %v7436 = vld [vmem:[%s6176 + $0xac] sm:$0xf]
    %v7437 = vld [vmem:[%s6176 + $0xb0] sm:$0xf]
    %v7438 = vld [vmem:[%s6176 + $0xb4] sm:$0xf]
    %v7439 = vld [vmem:[%s6176 + $0xb8] sm:$0xf]
    %v7440 = vld [vmem:[%s6176 + $0xbc] sm:$0xf]
    %v7441 = vld [vmem:[%s6176 + $0xd8] sm:$0xf]
    %v7442 = vld [vmem:[%s6176 + $0xdc] sm:$0xf]
    %v7443 = vld [vmem:[%s6176 + $0xe0] sm:$0xf]
    %v7444 = vld [vmem:[%s6176 + $0xe4] sm:$0xf]
    %v7445 = vld [vmem:[%s6176 + $0xe8] sm:$0xf]
    %v7446 = vld [vmem:[%s6176 + $0xec] sm:$0xf]
    %v7447 = vld [vmem:[%s6176 + $0xf0] sm:$0xf]
    %v7448 = vld [vmem:[%s6176 + $0xf4] sm:$0xf]
    %v7449 = vld [vmem:[%s6176 + $0xf8] sm:$0xf]
    %v7450 = vld [vmem:[%s6176 + $0xfc] sm:$0xf]
    %v7451 = vld [vmem:[%s6176 + $0x100] sm:$0xf]
    %v7452 = vld [vmem:[%s6176 + $0x104] sm:$0xf]
    %v7453 = vld [vmem:[%s6176 + $0x108] sm:$0xf]
    %v7454 = vld [vmem:[%s6176 + $0x10c] sm:$0xf]
    %v7455 = vld [vmem:[%s6176 + $0x110] sm:$0xf]
    %v7456 = vld [vmem:[%s6176 + $0x114] sm:$0xf]
    %v7457 = vld [vmem:[%s6176 + $0x118] sm:$0xf]
    %v7458 = vld [vmem:[%s6176 + $0x11c] sm:$0xf]
    %v7459 = vld [vmem:[%s6176 + $0x120] sm:$0xf]
    %v7460 = vld [vmem:[%s6176 + $0x124] sm:$0xf]
    %v7461 = vld [vmem:[%s6176 + $0x128] sm:$0xf]
    %v7462 = vld [vmem:[%s6176 + $0x12c] sm:$0xf]
    %v7463 = vld [vmem:[%s6176 + $0x130] sm:$0xf]
    %v7464 = vld [vmem:[%s6176 + $0x134] sm:$0xf]
    %v7465 = vld [vmem:[%s6176 + $0x138] sm:$0xf]
    %v7466 = vld [vmem:[%s6176 + $0x13c] sm:$0xf]
    %v7467 = vld [vmem:[%s6176 + $0x140] sm:$0xf]
    %v7468 = vld [vmem:[%s6176 + $0x144] sm:$0xf]
    %v7469 = vld [vmem:[%s6176 + $0x148] sm:$0xf]
    %v7470 = vld [vmem:[%s6176 + $0x14c] sm:$0xf]
    %v7471 = vld [vmem:[%s6176 + $0x150] sm:$0xf]
    %v7472 = vld [vmem:[%s6176 + $0x154] sm:$0xf]
    %v7473 = vld [vmem:[%s6176 + $0x158] sm:$0xf]
    %v7474 = vld [vmem:[%s6176 + $0x15c] sm:$0xf]
    %v7475 = vld [vmem:[%s6176 + $0x160] sm:$0xf]
    %v7476 = vld [vmem:[%s6176 + $0x164] sm:$0xf]
    %v7477 = vld [vmem:[%s6176 + $0x168] sm:$0xf]
    %v7478 = vld [vmem:[%s6176 + $0x16c] sm:$0xf]
    %v7479 = vld [vmem:[%s6176 + $0x170] sm:$0xf]
    %v7480 = vld [vmem:[%s6176 + $0x174] sm:$0xf]
    %v7481 = vld [vmem:[%s6176 + $0x178] sm:$0xf]
    %v7482 = vld [vmem:[%s6176 + $0x17c] sm:$0xf]
    %v7483 = vld [vmem:[%s6176 + $0x180] sm:$0xf]
    %v7484 = vld [vmem:[%s6176 + $0x184] sm:$0xf]
    %v7485 = vld [vmem:[%s6176 + $0x188] sm:$0xf]
    %v7486 = vld [vmem:[%s6176 + $0x18c] sm:$0xf]
    %v7487 = vld [vmem:[%s6176 + $0x190] sm:$0xf]
    %v7488 = vld [vmem:[%s6176 + $0x194] sm:$0xf]
    %s7489 = scalar_lea.vmem [#allocation3], 24
    %v7490 = vld [vmem:[%s7489] sm:$0xf]
    %v7491 = vld [vmem:[%s7489 + $0x4] sm:$0xf]
    %v7492 = vld [vmem:[%s7489 + $0x8] sm:$0xf]
    %v7493 = vld [vmem:[%s7489 + $0xc] sm:$0xf]
    %v7494 = vld [vmem:[%s7489 + $0x10] sm:$0xf]
    %v7495 = vld [vmem:[%s7489 + $0x14] sm:$0xf]
    %v7496 = vld [vmem:[%s7489 + $0x18] sm:$0xf]
    %v7497 = vld [vmem:[%s7489 + $0x1c] sm:$0xf]
    %v7498 = vld [vmem:[%s7489 + $0x20] sm:$0xf]
    %v7499 = vld [vmem:[%s7489 + $0x24] sm:$0xf]
    %v7500 = vld [vmem:[%s7489 + $0x28] sm:$0xf]
    %v7501 = vld [vmem:[%s7489 + $0x2c] sm:$0xf]
    %v7502 = vld [vmem:[%s7489 + $0x30] sm:$0xf]
    %v7503 = vld [vmem:[%s7489 + $0x34] sm:$0xf]
    %v7504 = vld [vmem:[%s7489 + $0x38] sm:$0xf]
    %v7505 = vld [vmem:[%s7489 + $0x3c] sm:$0xf]
    %v7506 = vld [vmem:[%s7489 + $0x40] sm:$0xf]
    %v7507 = vld [vmem:[%s7489 + $0x44] sm:$0xf]
    %v7508 = vld [vmem:[%s7489 + $0x48] sm:$0xf]
    %v7509 = vld [vmem:[%s7489 + $0x4c] sm:$0xf]
    %v7510 = vld [vmem:[%s7489 + $0x50] sm:$0xf]
    %v7511 = vld [vmem:[%s7489 + $0x54] sm:$0xf]
    %v7512 = vld [vmem:[%s7489 + $0x58] sm:$0xf]
    %v7513 = vld [vmem:[%s7489 + $0x5c] sm:$0xf]
    %v7514 = vld [vmem:[%s7489 + $0x60] sm:$0xf]
    %v7515 = vld [vmem:[%s7489 + $0x64] sm:$0xf]
    %v7516 = vld [vmem:[%s7489 + $0x68] sm:$0xf]
    %v7517 = vld [vmem:[%s7489 + $0x6c] sm:$0xf]
    %v7518 = vld [vmem:[%s7489 + $0x70] sm:$0xf]
    %v7519 = vld [vmem:[%s7489 + $0x74] sm:$0xf]
    %v7520 = vld [vmem:[%s7489 + $0x78] sm:$0xf]
    %v7521 = vld [vmem:[%s7489 + $0x7c] sm:$0xf]
    %v7522 = vld [vmem:[%s7489 + $0x80] sm:$0xf]
    %v7523 = vld [vmem:[%s7489 + $0x84] sm:$0xf]
    %v7524 = vld [vmem:[%s7489 + $0x88] sm:$0xf]
    %v7525 = vld [vmem:[%s7489 + $0x8c] sm:$0xf]
    %v7526 = vld [vmem:[%s7489 + $0x90] sm:$0xf]
    %v7527 = vld [vmem:[%s7489 + $0x94] sm:$0xf]
    %v7528 = vld [vmem:[%s7489 + $0x98] sm:$0xf]
    %v7529 = vld [vmem:[%s7489 + $0x9c] sm:$0xf]
    %v7530 = vld [vmem:[%s7489 + $0xa0] sm:$0xf]
    %v7531 = vld [vmem:[%s7489 + $0xa4] sm:$0xf]
    %v7532 = vld [vmem:[%s7489 + $0xa8] sm:$0xf]
    %v7533 = vld [vmem:[%s7489 + $0xac] sm:$0xf]
    %v7534 = vld [vmem:[%s7489 + $0xb0] sm:$0xf]
    %v7535 = vld [vmem:[%s7489 + $0xb4] sm:$0xf]
    %v7536 = vld [vmem:[%s7489 + $0xb8] sm:$0xf]
    %v7537 = vld [vmem:[%s7489 + $0xbc] sm:$0xf]
    %v7538 = vld [vmem:[%s7489 + $0xd8] sm:$0xf]
    %v7539 = vld [vmem:[%s7489 + $0xdc] sm:$0xf]
    %v7540 = vld [vmem:[%s7489 + $0xe0] sm:$0xf]
    %v7541 = vld [vmem:[%s7489 + $0xe4] sm:$0xf]
    %v7542 = vld [vmem:[%s7489 + $0xe8] sm:$0xf]
    %v7543 = vld [vmem:[%s7489 + $0xec] sm:$0xf]
    %v7544 = vld [vmem:[%s7489 + $0xf0] sm:$0xf]
    %v7545 = vld [vmem:[%s7489 + $0xf4] sm:$0xf]
    %v7546 = vld [vmem:[%s7489 + $0xf8] sm:$0xf]
    %v7547 = vld [vmem:[%s7489 + $0xfc] sm:$0xf]
    %v7548 = vld [vmem:[%s7489 + $0x100] sm:$0xf]
    %v7549 = vld [vmem:[%s7489 + $0x104] sm:$0xf]
    %v7550 = vld [vmem:[%s7489 + $0x108] sm:$0xf]
    %v7551 = vld [vmem:[%s7489 + $0x10c] sm:$0xf]
    %v7552 = vld [vmem:[%s7489 + $0x110] sm:$0xf]
    %v7553 = vld [vmem:[%s7489 + $0x114] sm:$0xf]
    %v7554 = vld [vmem:[%s7489 + $0x118] sm:$0xf]
    %v7555 = vld [vmem:[%s7489 + $0x11c] sm:$0xf]
    %v7556 = vld [vmem:[%s7489 + $0x120] sm:$0xf]
    %v7557 = vld [vmem:[%s7489 + $0x124] sm:$0xf]
    %v7558 = vld [vmem:[%s7489 + $0x128] sm:$0xf]
    %v7559 = vld [vmem:[%s7489 + $0x12c] sm:$0xf]
    %v7560 = vld [vmem:[%s7489 + $0x130] sm:$0xf]
    %v7561 = vld [vmem:[%s7489 + $0x134] sm:$0xf]
    %v7562 = vld [vmem:[%s7489 + $0x138] sm:$0xf]
    %v7563 = vld [vmem:[%s7489 + $0x13c] sm:$0xf]
    %v7564 = vld [vmem:[%s7489 + $0x140] sm:$0xf]
    %v7565 = vld [vmem:[%s7489 + $0x144] sm:$0xf]
    %v7566 = vld [vmem:[%s7489 + $0x148] sm:$0xf]
    %v7567 = vld [vmem:[%s7489 + $0x14c] sm:$0xf]
    %v7568 = vld [vmem:[%s7489 + $0x150] sm:$0xf]
    %v7569 = vld [vmem:[%s7489 + $0x154] sm:$0xf]
    %v7570 = vld [vmem:[%s7489 + $0x158] sm:$0xf]
    %v7571 = vld [vmem:[%s7489 + $0x15c] sm:$0xf]
    %v7572 = vld [vmem:[%s7489 + $0x160] sm:$0xf]
    %v7573 = vld [vmem:[%s7489 + $0x164] sm:$0xf]
    %v7574 = vld [vmem:[%s7489 + $0x168] sm:$0xf]
    %v7575 = vld [vmem:[%s7489 + $0x16c] sm:$0xf]
    %v7576 = vld [vmem:[%s7489 + $0x170] sm:$0xf]
    %v7577 = vld [vmem:[%s7489 + $0x174] sm:$0xf]
    %v7578 = vld [vmem:[%s7489 + $0x178] sm:$0xf]
    %v7579 = vld [vmem:[%s7489 + $0x17c] sm:$0xf]
    %v7580 = vld [vmem:[%s7489 + $0x180] sm:$0xf]
    %v7581 = vld [vmem:[%s7489 + $0x184] sm:$0xf]
    %v7582 = vld [vmem:[%s7489 + $0x188] sm:$0xf]
    %v7583 = vld [vmem:[%s7489 + $0x18c] sm:$0xf]
    %v7584 = vld [vmem:[%s7489 + $0x190] sm:$0xf]
    %v7585 = vld [vmem:[%s7489 + $0x194] sm:$0xf]
    %v7682 = vunpack.c.l.b16 %v7297
    %v7683 = vunpack.c.l.b16 %v7298
    %v7684 = vunpack.c.l.b16 %v7299
    %v7685 = vunpack.c.l.b16 %v7300
    %v7686 = vunpack.c.l.b16 %v7301
    %v7687 = vunpack.c.l.b16 %v7302
    %v7688 = vunpack.c.l.b16 %v7303
    %v7689 = vunpack.c.l.b16 %v7304
    %v7690 = vunpack.c.l.b16 %v7305
    %v7691 = vunpack.c.l.b16 %v7306
    %v7692 = vunpack.c.l.b16 %v7307
    %v7693 = vunpack.c.l.b16 %v7308
    %v7694 = vunpack.c.l.b16 %v7309
    %v7695 = vunpack.c.l.b16 %v7310
    %v7696 = vunpack.c.l.b16 %v7311
    %v7697 = vunpack.c.l.b16 %v7312
    %v7698 = vunpack.c.l.b16 %v7313
    %v7699 = vunpack.c.l.b16 %v7314
    %v7700 = vunpack.c.l.b16 %v7315
    %v7701 = vunpack.c.l.b16 %v7316
    %v7702 = vunpack.c.l.b16 %v7317
    %v7703 = vunpack.c.l.b16 %v7318
    %v7704 = vunpack.c.l.b16 %v7319
    %v7705 = vunpack.c.l.b16 %v7320
    %v7706 = vunpack.c.l.b16 %v7321
    %v7707 = vunpack.c.l.b16 %v7322
    %v7708 = vunpack.c.l.b16 %v7323
    %v7709 = vunpack.c.l.b16 %v7324
    %v7710 = vunpack.c.l.b16 %v7325
    %v7711 = vunpack.c.l.b16 %v7326
    %v7712 = vunpack.c.l.b16 %v7327
    %v7713 = vunpack.c.l.b16 %v7328
    %v7714 = vunpack.c.l.b16 %v7329
    %v7715 = vunpack.c.l.b16 %v7330
    %v7716 = vunpack.c.l.b16 %v7331
    %v7717 = vunpack.c.l.b16 %v7332
    %v7718 = vunpack.c.l.b16 %v7333
    %v7719 = vunpack.c.l.b16 %v7334
    %v7720 = vunpack.c.l.b16 %v7335
    %v7721 = vunpack.c.l.b16 %v7336
    %v7722 = vunpack.c.l.b16 %v7337
    %v7723 = vunpack.c.l.b16 %v7338
    %v7724 = vunpack.c.l.b16 %v7339
    %v7725 = vunpack.c.l.b16 %v7340
    %v7726 = vunpack.c.l.b16 %v7341
    %v7727 = vunpack.c.l.b16 %v7342
    %v7728 = vunpack.c.l.b16 %v7343
    %v7729 = vunpack.c.l.b16 %v7344
    %v7730 = vunpack.c.l.b16 %v7345
    %v7731 = vunpack.c.l.b16 %v7346
    %v7732 = vunpack.c.l.b16 %v7347
    %v7733 = vunpack.c.l.b16 %v7348
    %v7734 = vunpack.c.l.b16 %v7349
    %v7735 = vunpack.c.l.b16 %v7350
    %v7736 = vunpack.c.l.b16 %v7351
    %v7737 = vunpack.c.l.b16 %v7352
    %v7738 = vunpack.c.l.b16 %v7353
    %v7739 = vunpack.c.l.b16 %v7354
    %v7740 = vunpack.c.l.b16 %v7355
    %v7741 = vunpack.c.l.b16 %v7356
    %v7742 = vunpack.c.l.b16 %v7357
    %v7743 = vunpack.c.l.b16 %v7358
    %v7744 = vunpack.c.l.b16 %v7359
    %v7745 = vunpack.c.l.b16 %v7360
    %v7746 = vunpack.c.l.b16 %v7361
    %v7747 = vunpack.c.l.b16 %v7362
    %v7748 = vunpack.c.l.b16 %v7363
    %v7749 = vunpack.c.l.b16 %v7364
    %v7750 = vunpack.c.l.b16 %v7365
    %v7751 = vunpack.c.l.b16 %v7366
    %v7752 = vunpack.c.l.b16 %v7367
    %v7753 = vunpack.c.l.b16 %v7368
    %v7754 = vunpack.c.l.b16 %v7369
    %v7755 = vunpack.c.l.b16 %v7370
    %v7756 = vunpack.c.l.b16 %v7371
    %v7757 = vunpack.c.l.b16 %v7372
    %v7758 = vunpack.c.l.b16 %v7373
    %v7759 = vunpack.c.l.b16 %v7374
    %v7760 = vunpack.c.l.b16 %v7375
    %v7761 = vunpack.c.l.b16 %v7376
    %v7762 = vunpack.c.l.b16 %v7377
    %v7763 = vunpack.c.l.b16 %v7378
    %v7764 = vunpack.c.l.b16 %v7379
    %v7765 = vunpack.c.l.b16 %v7380
    %v7766 = vunpack.c.l.b16 %v7381
    %v7767 = vunpack.c.l.b16 %v7382
    %v7768 = vunpack.c.l.b16 %v7383
    %v7769 = vunpack.c.l.b16 %v7384
    %v7770 = vunpack.c.l.b16 %v7385
    %v7771 = vunpack.c.l.b16 %v7386
    %v7772 = vunpack.c.l.b16 %v7387
    %v7773 = vunpack.c.l.b16 %v7388
    %v7774 = vunpack.c.l.b16 %v7389
    %v7775 = vunpack.c.l.b16 %v7390
    %v7776 = vunpack.c.l.b16 %v7391
    %v7777 = vunpack.c.l.b16 %v7392
    %v7874 = vunpack.c.l.b16 %v7393
    %v7875 = vunpack.c.l.b16 %v7394
    %v7876 = vunpack.c.l.b16 %v7395
    %v7877 = vunpack.c.l.b16 %v7396
    %v7878 = vunpack.c.l.b16 %v7397
    %v7879 = vunpack.c.l.b16 %v7398
    %v7880 = vunpack.c.l.b16 %v7399
    %v7881 = vunpack.c.l.b16 %v7400
    %v7882 = vunpack.c.l.b16 %v7401
    %v7883 = vunpack.c.l.b16 %v7402
    %v7884 = vunpack.c.l.b16 %v7403
    %v7885 = vunpack.c.l.b16 %v7404
    %v7886 = vunpack.c.l.b16 %v7405
    %v7887 = vunpack.c.l.b16 %v7406
    %v7888 = vunpack.c.l.b16 %v7407
    %v7889 = vunpack.c.l.b16 %v7408
    %v7890 = vunpack.c.l.b16 %v7409
    %v7891 = vunpack.c.l.b16 %v7410
    %v7892 = vunpack.c.l.b16 %v7411
    %v7893 = vunpack.c.l.b16 %v7412
    %v7894 = vunpack.c.l.b16 %v7413
    %v7895 = vunpack.c.l.b16 %v7414
    %v7896 = vunpack.c.l.b16 %v7415
    %v7897 = vunpack.c.l.b16 %v7416
    %v7898 = vunpack.c.l.b16 %v7417
    %v7899 = vunpack.c.l.b16 %v7418
    %v7900 = vunpack.c.l.b16 %v7419
    %v7901 = vunpack.c.l.b16 %v7420
    %v7902 = vunpack.c.l.b16 %v7421
    %v7903 = vunpack.c.l.b16 %v7422
    %v7904 = vunpack.c.l.b16 %v7423
    %v7905 = vunpack.c.l.b16 %v7424
    %v7906 = vunpack.c.l.b16 %v7425
    %v7907 = vunpack.c.l.b16 %v7426
    %v7908 = vunpack.c.l.b16 %v7427
    %v7909 = vunpack.c.l.b16 %v7428
    %v7910 = vunpack.c.l.b16 %v7429
    %v7911 = vunpack.c.l.b16 %v7430
    %v7912 = vunpack.c.l.b16 %v7431
    %v7913 = vunpack.c.l.b16 %v7432
    %v7914 = vunpack.c.l.b16 %v7433
    %v7915 = vunpack.c.l.b16 %v7434
    %v7916 = vunpack.c.l.b16 %v7435
    %v7917 = vunpack.c.l.b16 %v7436
    %v7918 = vunpack.c.l.b16 %v7437
    %v7919 = vunpack.c.l.b16 %v7438
    %v7920 = vunpack.c.l.b16 %v7439
    %v7921 = vunpack.c.l.b16 %v7440
    %v7922 = vunpack.c.l.b16 %v7441
    %v7923 = vunpack.c.l.b16 %v7442
    %v7924 = vunpack.c.l.b16 %v7443
    %v7925 = vunpack.c.l.b16 %v7444
    %v7926 = vunpack.c.l.b16 %v7445
    %v7927 = vunpack.c.l.b16 %v7446
    %v7928 = vunpack.c.l.b16 %v7447
    %v7929 = vunpack.c.l.b16 %v7448
    %v7930 = vunpack.c.l.b16 %v7449
    %v7931 = vunpack.c.l.b16 %v7450
    %v7932 = vunpack.c.l.b16 %v7451
    %v7933 = vunpack.c.l.b16 %v7452
    %v7934 = vunpack.c.l.b16 %v7453
    %v7935 = vunpack.c.l.b16 %v7454
    %v7936 = vunpack.c.l.b16 %v7455
    %v7937 = vunpack.c.l.b16 %v7456
    %v7938 = vunpack.c.l.b16 %v7457
    %v7939 = vunpack.c.l.b16 %v7458
    %v7940 = vunpack.c.l.b16 %v7459
    %v7941 = vunpack.c.l.b16 %v7460
    %v7942 = vunpack.c.l.b16 %v7461
    %v7943 = vunpack.c.l.b16 %v7462
    %v7944 = vunpack.c.l.b16 %v7463
    %v7945 = vunpack.c.l.b16 %v7464
    %v7946 = vunpack.c.l.b16 %v7465
    %v7947 = vunpack.c.l.b16 %v7466
    %v7948 = vunpack.c.l.b16 %v7467
    %v7949 = vunpack.c.l.b16 %v7468
    %v7950 = vunpack.c.l.b16 %v7469
    %v7951 = vunpack.c.l.b16 %v7470
    %v7952 = vunpack.c.l.b16 %v7471
    %v7953 = vunpack.c.l.b16 %v7472
    %v7954 = vunpack.c.l.b16 %v7473
    %v7955 = vunpack.c.l.b16 %v7474
    %v7956 = vunpack.c.l.b16 %v7475
    %v7957 = vunpack.c.l.b16 %v7476
    %v7958 = vunpack.c.l.b16 %v7477
    %v7959 = vunpack.c.l.b16 %v7478
    %v7960 = vunpack.c.l.b16 %v7479
    %v7961 = vunpack.c.l.b16 %v7480
    %v7962 = vunpack.c.l.b16 %v7481
    %v7963 = vunpack.c.l.b16 %v7482
    %v7964 = vunpack.c.l.b16 %v7483
    %v7965 = vunpack.c.l.b16 %v7484
    %v7966 = vunpack.c.l.b16 %v7485
    %v7967 = vunpack.c.l.b16 %v7486
    %v7968 = vunpack.c.l.b16 %v7487
    %v7969 = vunpack.c.l.b16 %v7488
    %v8066 = vunpack.c.l.b16 %v7490
    %v8067 = vunpack.c.l.b16 %v7491
    %v8068 = vunpack.c.l.b16 %v7492
    %v8069 = vunpack.c.l.b16 %v7493
    %v8070 = vunpack.c.l.b16 %v7494
    %v8071 = vunpack.c.l.b16 %v7495
    %v8072 = vunpack.c.l.b16 %v7496
    %v8073 = vunpack.c.l.b16 %v7497
    %v8074 = vunpack.c.l.b16 %v7498
    %v8075 = vunpack.c.l.b16 %v7499
    %v8076 = vunpack.c.l.b16 %v7500
    %v8077 = vunpack.c.l.b16 %v7501
    %v8078 = vunpack.c.l.b16 %v7502
    %v8079 = vunpack.c.l.b16 %v7503
    %v8080 = vunpack.c.l.b16 %v7504
    %v8081 = vunpack.c.l.b16 %v7505
    %v8082 = vunpack.c.l.b16 %v7506
    %v8083 = vunpack.c.l.b16 %v7507
    %v8084 = vunpack.c.l.b16 %v7508
    %v8085 = vunpack.c.l.b16 %v7509
    %v8086 = vunpack.c.l.b16 %v7510
    %v8087 = vunpack.c.l.b16 %v7511
    %v8088 = vunpack.c.l.b16 %v7512
    %v8089 = vunpack.c.l.b16 %v7513
    %v8090 = vunpack.c.l.b16 %v7514
    %v8091 = vunpack.c.l.b16 %v7515
    %v8092 = vunpack.c.l.b16 %v7516
    %v8093 = vunpack.c.l.b16 %v7517
    %v8094 = vunpack.c.l.b16 %v7518
    %v8095 = vunpack.c.l.b16 %v7519
    %v8096 = vunpack.c.l.b16 %v7520
    %v8097 = vunpack.c.l.b16 %v7521
    %v8098 = vunpack.c.l.b16 %v7522
    %v8099 = vunpack.c.l.b16 %v7523
    %v8100 = vunpack.c.l.b16 %v7524
    %v8101 = vunpack.c.l.b16 %v7525
    %v8102 = vunpack.c.l.b16 %v7526
    %v8103 = vunpack.c.l.b16 %v7527
    %v8104 = vunpack.c.l.b16 %v7528
    %v8105 = vunpack.c.l.b16 %v7529
    %v8106 = vunpack.c.l.b16 %v7530
    %v8107 = vunpack.c.l.b16 %v7531
    %v8108 = vunpack.c.l.b16 %v7532
    %v8109 = vunpack.c.l.b16 %v7533
    %v8110 = vunpack.c.l.b16 %v7534
    %v8111 = vunpack.c.l.b16 %v7535
    %v8112 = vunpack.c.l.b16 %v7536
    %v8113 = vunpack.c.l.b16 %v7537
    %v8114 = vunpack.c.l.b16 %v7538
    %v8115 = vunpack.c.l.b16 %v7539
    %v8116 = vunpack.c.l.b16 %v7540
    %v8117 = vunpack.c.l.b16 %v7541
    %v8118 = vunpack.c.l.b16 %v7542
    %v8119 = vunpack.c.l.b16 %v7543
    %v8120 = vunpack.c.l.b16 %v7544
    %v8121 = vunpack.c.l.b16 %v7545
    %v8122 = vunpack.c.l.b16 %v7546
    %v8123 = vunpack.c.l.b16 %v7547
    %v8124 = vunpack.c.l.b16 %v7548
    %v8125 = vunpack.c.l.b16 %v7549
    %v8126 = vunpack.c.l.b16 %v7550
    %v8127 = vunpack.c.l.b16 %v7551
    %v8128 = vunpack.c.l.b16 %v7552
    %v8129 = vunpack.c.l.b16 %v7553
    %v8130 = vunpack.c.l.b16 %v7554
    %v8131 = vunpack.c.l.b16 %v7555
    %v8132 = vunpack.c.l.b16 %v7556
    %v8133 = vunpack.c.l.b16 %v7557
    %v8134 = vunpack.c.l.b16 %v7558
    %v8135 = vunpack.c.l.b16 %v7559
    %v8136 = vunpack.c.l.b16 %v7560
    %v8137 = vunpack.c.l.b16 %v7561
    %v8138 = vunpack.c.l.b16 %v7562
    %v8139 = vunpack.c.l.b16 %v7563
    %v8140 = vunpack.c.l.b16 %v7564
    %v8141 = vunpack.c.l.b16 %v7565
    %v8142 = vunpack.c.l.b16 %v7566
    %v8143 = vunpack.c.l.b16 %v7567
    %v8144 = vunpack.c.l.b16 %v7568
    %v8145 = vunpack.c.l.b16 %v7569
    %v8146 = vunpack.c.l.b16 %v7570
    %v8147 = vunpack.c.l.b16 %v7571
    %v8148 = vunpack.c.l.b16 %v7572
    %v8149 = vunpack.c.l.b16 %v7573
    %v8150 = vunpack.c.l.b16 %v7574
    %v8151 = vunpack.c.l.b16 %v7575
    %v8152 = vunpack.c.l.b16 %v7576
    %v8153 = vunpack.c.l.b16 %v7577
    %v8154 = vunpack.c.l.b16 %v7578
    %v8155 = vunpack.c.l.b16 %v7579
    %v8156 = vunpack.c.l.b16 %v7580
    %v8157 = vunpack.c.l.b16 %v7581
    %v8158 = vunpack.c.l.b16 %v7582
    %v8159 = vunpack.c.l.b16 %v7583
    %v8160 = vunpack.c.l.b16 %v7584
    %v8161 = vunpack.c.l.b16 %v7585
    %v8162 = vld [vmem:[#allocation9] sm:$0xff]
    %v8163 = vld [vmem:[#allocation9 + $0x8] sm:$0xf]
    %v8164 = vld [vmem:[#allocation9 + $0xc] sm:$0xff]
    %v8165 = vld [vmem:[#allocation9 + $0x14] sm:$0xf]
    %v8166 = vld [vmem:[#allocation9 + $0x18] sm:$0xff]
    %v8167 = vld [vmem:[#allocation9 + $0x20] sm:$0xf]
    %v8168 = vld [vmem:[#allocation9 + $0x24] sm:$0xff]
    %v8169 = vld [vmem:[#allocation9 + $0x2c] sm:$0xf]
    %v8170 = vld [vmem:[#allocation9 + $0x30] sm:$0xff]
    %v8171 = vld [vmem:[#allocation9 + $0x38] sm:$0xf]
    %v8172 = vld [vmem:[#allocation9 + $0x3c] sm:$0xff]
    %v8173 = vld [vmem:[#allocation9 + $0x44] sm:$0xf]
    %v8174 = vld [vmem:[#allocation9 + $0x48] sm:$0xff]
    %v8175 = vld [vmem:[#allocation9 + $0x50] sm:$0xf]
    %v8176 = vld [vmem:[#allocation9 + $0x54] sm:$0xff]
    %v8177 = vld [vmem:[#allocation9 + $0x5c] sm:$0xf]
    %v8178 = vld [vmem:[#allocation9 + $0x60] sm:$0xff]
    %v8179 = vld [vmem:[#allocation9 + $0x68] sm:$0xf]
    %v8180 = vld [vmem:[#allocation9 + $0x6c] sm:$0xff]
    %v8181 = vld [vmem:[#allocation9 + $0x74] sm:$0xf]
    %v8182 = vld [vmem:[#allocation9 + $0x78] sm:$0xff]
    %v8183 = vld [vmem:[#allocation9 + $0x80] sm:$0xf]
    %v8184 = vld [vmem:[#allocation9 + $0x84] sm:$0xff]
    %v8185 = vld [vmem:[#allocation9 + $0x8c] sm:$0xf]
    %v8186 = vld [vmem:[#allocation9 + $0x90] sm:$0xff]
    %v8187 = vld [vmem:[#allocation9 + $0x98] sm:$0xf]
    %v8188 = vld [vmem:[#allocation9 + $0x9c] sm:$0xff]
    %v8189 = vld [vmem:[#allocation9 + $0xa4] sm:$0xf]
    %v8190 = vld [vmem:[#allocation9 + $0xa8] sm:$0xff]
    %v8191 = vld [vmem:[#allocation9 + $0xb0] sm:$0xf]
    %v8192 = vld [vmem:[#allocation9 + $0xb4] sm:$0xff]
    %v8193 = vld [vmem:[#allocation9 + $0xbc] sm:$0xf]
    %v8194 = vld [vmem:[#allocation9 + $0xc0] sm:$0xff]
    %v8195 = vld [vmem:[#allocation9 + $0xc8] sm:$0xf]
    %v8196 = vld [vmem:[#allocation9 + $0xcc] sm:$0xff]
    %v8197 = vld [vmem:[#allocation9 + $0xd4] sm:$0xf]
    %v8198 = vld [vmem:[#allocation9 + $0xd8] sm:$0xff]
    %v8199 = vld [vmem:[#allocation9 + $0xe0] sm:$0xf]
    %v8200 = vld [vmem:[#allocation9 + $0xe4] sm:$0xff]
    %v8201 = vld [vmem:[#allocation9 + $0xec] sm:$0xf]
    %v8202 = vld [vmem:[#allocation9 + $0xf0] sm:$0xff]
    %v8203 = vld [vmem:[#allocation9 + $0xf8] sm:$0xf]
    %v8204 = vld [vmem:[#allocation9 + $0xfc] sm:$0xff]
    %v8205 = vld [vmem:[#allocation9 + $0x104] sm:$0xf]
    %v8206 = vld [vmem:[#allocation9 + $0x108] sm:$0xff]
    %v8207 = vld [vmem:[#allocation9 + $0x110] sm:$0xf]
    %v8208 = vld [vmem:[#allocation9 + $0x114] sm:$0xff]
    %v8209 = vld [vmem:[#allocation9 + $0x11c] sm:$0xf]
    %v8210 = vld [vmem:[#allocation9 + $0x120] sm:$0xff]
    %v8211 = vld [vmem:[#allocation9 + $0x128] sm:$0xf]
    %v8212 = vld [vmem:[#allocation9 + $0x12c] sm:$0xff]
    %v8213 = vld [vmem:[#allocation9 + $0x134] sm:$0xf]
    %v8214 = vld [vmem:[#allocation9 + $0x138] sm:$0xff]
    %v8215 = vld [vmem:[#allocation9 + $0x140] sm:$0xf]
    %v8216 = vld [vmem:[#allocation9 + $0x144] sm:$0xff]
    %v8217 = vld [vmem:[#allocation9 + $0x14c] sm:$0xf]
    %v8218 = vld [vmem:[#allocation9 + $0x150] sm:$0xff]
    %v8219 = vld [vmem:[#allocation9 + $0x158] sm:$0xf]
    %v8220 = vld [vmem:[#allocation9 + $0x15c] sm:$0xff]
    %v8221 = vld [vmem:[#allocation9 + $0x164] sm:$0xf]
    %v8222 = vld [vmem:[#allocation9 + $0x168] sm:$0xff]
    %v8223 = vld [vmem:[#allocation9 + $0x170] sm:$0xf]
    %v8224 = vld [vmem:[#allocation9 + $0x174] sm:$0xff]
    %v8225 = vld [vmem:[#allocation9 + $0x17c] sm:$0xf]
    %v8226 = vld [vmem:[#allocation9 + $0x180] sm:$0xff]
    %v8227 = vld [vmem:[#allocation9 + $0x188] sm:$0xf]
    %v8228 = vld [vmem:[#allocation9 + $0x18c] sm:$0xff]
    %v8229 = vld [vmem:[#allocation9 + $0x194] sm:$0xf]
    %v8230 = vld [vmem:[#allocation9 + $0x198] sm:$0xff]
    %v8231 = vld [vmem:[#allocation9 + $0x1a0] sm:$0xf]
    %v8232 = vld [vmem:[#allocation9 + $0x1a4] sm:$0xff]
    %v8233 = vld [vmem:[#allocation9 + $0x1ac] sm:$0xf]
    %v8234 = vld [vmem:[#allocation9 + $0x1b0] sm:$0xff]
    %v8235 = vld [vmem:[#allocation9 + $0x1b8] sm:$0xf]
    %v8236 = vld [vmem:[#allocation9 + $0x1bc] sm:$0xff]
    %v8237 = vld [vmem:[#allocation9 + $0x1c4] sm:$0xf]
    %v8238 = vld [vmem:[#allocation9 + $0x1c8] sm:$0xff]
    %v8239 = vld [vmem:[#allocation9 + $0x1d0] sm:$0xf]
    %v8240 = vld [vmem:[#allocation9 + $0x1d4] sm:$0xff]
    %v8241 = vld [vmem:[#allocation9 + $0x1dc] sm:$0xf]
    %v8242 = vld [vmem:[#allocation9 + $0x1e0] sm:$0xff]
    %v8243 = vld [vmem:[#allocation9 + $0x1e8] sm:$0xf]
    %v8244 = vld [vmem:[#allocation9 + $0x1ec] sm:$0xff]
    %v8245 = vld [vmem:[#allocation9 + $0x1f4] sm:$0xf]
    %v8246 = vld [vmem:[#allocation9 + $0x1f8] sm:$0xff]
    %v8247 = vld [vmem:[#allocation9 + $0x200] sm:$0xf]
    %v8248 = vld [vmem:[#allocation9 + $0x204] sm:$0xff]
    %v8249 = vld [vmem:[#allocation9 + $0x20c] sm:$0xf]
    %v8250 = vld [vmem:[#allocation9 + $0x210] sm:$0xff]
    %v8251 = vld [vmem:[#allocation9 + $0x218] sm:$0xf]
    %v8252 = vld [vmem:[#allocation9 + $0x21c] sm:$0xff]
    %v8253 = vld [vmem:[#allocation9 + $0x224] sm:$0xf]
    %v8254 = vld [vmem:[#allocation9 + $0x228] sm:$0xff]
    %v8255 = vld [vmem:[#allocation9 + $0x230] sm:$0xf]
    %v8256 = vld [vmem:[#allocation9 + $0x234] sm:$0xff]
    %v8257 = vld [vmem:[#allocation9 + $0x23c] sm:$0xf]
    %v8258 = vpack.c.b16 %v7683, %v7682
    %v8259 = vpack.c.b16 %v7875, %v7874
    %v8260 = vpack.c.b16 %v8067, %v8066
    %v8261 = vpack.c.b16 %v7685, %v7684
    %v8262 = vpack.c.b16 %v7877, %v7876
    %v8263 = vpack.c.b16 %v8069, %v8068
    %v8264 = vpack.c.b16 %v7687, %v7686
    %v8265 = vpack.c.b16 %v7879, %v7878
    %v8266 = vpack.c.b16 %v8071, %v8070
    %v8267 = vpack.c.b16 %v7689, %v7688
    %v8268 = vpack.c.b16 %v7881, %v7880
    %v8269 = vpack.c.b16 %v8073, %v8072
    %v8270 = vpack.c.b16 %v7691, %v7690
    %v8271 = vpack.c.b16 %v7883, %v7882
    %v8272 = vpack.c.b16 %v8075, %v8074
    %v8273 = vpack.c.b16 %v7693, %v7692
    %v8274 = vpack.c.b16 %v7885, %v7884
    %v8275 = vpack.c.b16 %v8077, %v8076
    %v8276 = vpack.c.b16 %v7695, %v7694
    %v8277 = vpack.c.b16 %v7887, %v7886
    %v8278 = vpack.c.b16 %v8079, %v8078
    %v8279 = vpack.c.b16 %v7697, %v7696
    %v8280 = vpack.c.b16 %v7889, %v7888
    %v8281 = vpack.c.b16 %v8081, %v8080
    %v8282 = vpack.c.b16 %v7699, %v7698
    %v8283 = vpack.c.b16 %v7891, %v7890
    %v8284 = vpack.c.b16 %v8083, %v8082
    %v8285 = vpack.c.b16 %v7701, %v7700
    %v8286 = vpack.c.b16 %v7893, %v7892
    %v8287 = vpack.c.b16 %v8085, %v8084
    %v8288 = vpack.c.b16 %v7703, %v7702
    %v8289 = vpack.c.b16 %v7895, %v7894
    %v8290 = vpack.c.b16 %v8087, %v8086
    %v8291 = vpack.c.b16 %v7705, %v7704
    %v8292 = vpack.c.b16 %v7897, %v7896
    %v8293 = vpack.c.b16 %v8089, %v8088
    %v8294 = vpack.c.b16 %v7707, %v7706
    %v8295 = vpack.c.b16 %v7899, %v7898
    %v8296 = vpack.c.b16 %v8091, %v8090
    %v8297 = vpack.c.b16 %v7709, %v7708
    %v8298 = vpack.c.b16 %v7901, %v7900
    %v8299 = vpack.c.b16 %v8093, %v8092
    %v8300 = vpack.c.b16 %v7711, %v7710
    %v8301 = vpack.c.b16 %v7903, %v7902
    %v8302 = vpack.c.b16 %v8095, %v8094
    %v8303 = vpack.c.b16 %v7713, %v7712
    %v8304 = vpack.c.b16 %v7905, %v7904
    %v8305 = vpack.c.b16 %v8097, %v8096
    %v8306 = vpack.c.b16 %v7715, %v7714
    %v8307 = vpack.c.b16 %v7907, %v7906
    %v8308 = vpack.c.b16 %v8099, %v8098
    %v8309 = vpack.c.b16 %v7717, %v7716
    %v8310 = vpack.c.b16 %v7909, %v7908
    %v8311 = vpack.c.b16 %v8101, %v8100
    %v8312 = vpack.c.b16 %v7719, %v7718
    %v8313 = vpack.c.b16 %v7911, %v7910
    %v8314 = vpack.c.b16 %v8103, %v8102
    %v8315 = vpack.c.b16 %v7721, %v7720
    %v8316 = vpack.c.b16 %v7913, %v7912
    %v8317 = vpack.c.b16 %v8105, %v8104
    %v8318 = vpack.c.b16 %v7723, %v7722
    %v8319 = vpack.c.b16 %v7915, %v7914
    %v8320 = vpack.c.b16 %v8107, %v8106
    %v8321 = vpack.c.b16 %v7725, %v7724
    %v8322 = vpack.c.b16 %v7917, %v7916
    %v8323 = vpack.c.b16 %v8109, %v8108
    %v8324 = vpack.c.b16 %v7727, %v7726
    %v8325 = vpack.c.b16 %v7919, %v7918
    %v8326 = vpack.c.b16 %v8111, %v8110
    %v8327 = vpack.c.b16 %v7729, %v7728
    %v8328 = vpack.c.b16 %v7921, %v7920
    %v8329 = vpack.c.b16 %v8113, %v8112
    %v8330 = vpack.c.b16 %v7731, %v7730
    %v8331 = vpack.c.b16 %v7923, %v7922
    %v8332 = vpack.c.b16 %v8115, %v8114
    %v8333 = vpack.c.b16 %v7733, %v7732
    %v8334 = vpack.c.b16 %v7925, %v7924
    %v8335 = vpack.c.b16 %v8117, %v8116
    %v8336 = vpack.c.b16 %v7735, %v7734
    %v8337 = vpack.c.b16 %v7927, %v7926
    %v8338 = vpack.c.b16 %v8119, %v8118
    %v8339 = vpack.c.b16 %v7737, %v7736
    %v8340 = vpack.c.b16 %v7929, %v7928
    %v8341 = vpack.c.b16 %v8121, %v8120
    %v8342 = vpack.c.b16 %v7739, %v7738
    %v8343 = vpack.c.b16 %v7931, %v7930
    %v8344 = vpack.c.b16 %v8123, %v8122
    %v8345 = vpack.c.b16 %v7741, %v7740
    %v8346 = vpack.c.b16 %v7933, %v7932
    %v8347 = vpack.c.b16 %v8125, %v8124
    %v8348 = vpack.c.b16 %v7743, %v7742
    %v8349 = vpack.c.b16 %v7935, %v7934
    %v8350 = vpack.c.b16 %v8127, %v8126
    %v8351 = vpack.c.b16 %v7745, %v7744
    %v8352 = vpack.c.b16 %v7937, %v7936
    %v8353 = vpack.c.b16 %v8129, %v8128
    %v8354 = vpack.c.b16 %v7747, %v7746
    %v8355 = vpack.c.b16 %v7939, %v7938
    %v8356 = vpack.c.b16 %v8131, %v8130
    %v8357 = vpack.c.b16 %v7749, %v7748
    %v8358 = vpack.c.b16 %v7941, %v7940
    %v8359 = vpack.c.b16 %v8133, %v8132
    %v8360 = vpack.c.b16 %v7751, %v7750
    %v8361 = vpack.c.b16 %v7943, %v7942
    %v8362 = vpack.c.b16 %v8135, %v8134
    %v8363 = vpack.c.b16 %v7753, %v7752
    %v8364 = vpack.c.b16 %v7945, %v7944
    %v8365 = vpack.c.b16 %v8137, %v8136
    %v8366 = vpack.c.b16 %v7755, %v7754
    %v8367 = vpack.c.b16 %v7947, %v7946
    %v8368 = vpack.c.b16 %v8139, %v8138
    %v8369 = vpack.c.b16 %v7757, %v7756
    %v8370 = vpack.c.b16 %v7949, %v7948
    %v8371 = vpack.c.b16 %v8141, %v8140
    %v8372 = vpack.c.b16 %v7759, %v7758
    %v8373 = vpack.c.b16 %v7951, %v7950
    %v8374 = vpack.c.b16 %v8143, %v8142
    %v8375 = vpack.c.b16 %v7761, %v7760
    %v8376 = vpack.c.b16 %v7953, %v7952
    %v8377 = vpack.c.b16 %v8145, %v8144
    %v8378 = vpack.c.b16 %v7763, %v7762
    %v8379 = vpack.c.b16 %v7955, %v7954
    %v8380 = vpack.c.b16 %v8147, %v8146
    %v8381 = vpack.c.b16 %v7765, %v7764
    %v8382 = vpack.c.b16 %v7957, %v7956
    %v8383 = vpack.c.b16 %v8149, %v8148
    %v8384 = vpack.c.b16 %v7767, %v7766
    %v8385 = vpack.c.b16 %v7959, %v7958
    %v8386 = vpack.c.b16 %v8151, %v8150
    %v8387 = vpack.c.b16 %v7769, %v7768
    %v8388 = vpack.c.b16 %v7961, %v7960
    %v8389 = vpack.c.b16 %v8153, %v8152
    %v8390 = vpack.c.b16 %v7771, %v7770
    %v8391 = vpack.c.b16 %v7963, %v7962
    %v8392 = vpack.c.b16 %v8155, %v8154
    %v8393 = vpack.c.b16 %v7773, %v7772
    %v8394 = vpack.c.b16 %v7965, %v7964
    %v8395 = vpack.c.b16 %v8157, %v8156
    %v8396 = vpack.c.b16 %v7775, %v7774
    %v8397 = vpack.c.b16 %v7967, %v7966
    %v8398 = vpack.c.b16 %v8159, %v8158
    %v8399 = vpack.c.b16 %v7777, %v7776
    %v8400 = vpack.c.b16 %v7969, %v7968
    %v8401 = vpack.c.b16 %v8161, %v8160
    %v8642 = vunpack.c.l.b16 %v8162
    %v8643 = vunpack.c.h.b16 %v8162
    %v8644 = vunpack.c.l.b16 %v8163
    %v8645 = vunpack.c.l.b16 %v8164
    %v8646 = vunpack.c.h.b16 %v8164
    %v8647 = vunpack.c.l.b16 %v8165
    %v8648 = vunpack.c.l.b16 %v8166
    %v8649 = vunpack.c.h.b16 %v8166
    %v8650 = vunpack.c.l.b16 %v8167
    %v8651 = vunpack.c.l.b16 %v8168
    %v8652 = vunpack.c.h.b16 %v8168
    %v8653 = vunpack.c.l.b16 %v8169
    %v8654 = vunpack.c.l.b16 %v8170
    %v8655 = vunpack.c.h.b16 %v8170
    %v8656 = vunpack.c.l.b16 %v8171
    %v8657 = vunpack.c.l.b16 %v8172
    %v8658 = vunpack.c.h.b16 %v8172
    %v8659 = vunpack.c.l.b16 %v8173
    %v8660 = vunpack.c.l.b16 %v8174
    %v8661 = vunpack.c.h.b16 %v8174
    %v8662 = vunpack.c.l.b16 %v8175
    %v8663 = vunpack.c.l.b16 %v8176
    %v8664 = vunpack.c.h.b16 %v8176
    %v8665 = vunpack.c.l.b16 %v8177
    %v8666 = vunpack.c.l.b16 %v8178
    %v8667 = vunpack.c.h.b16 %v8178
    %v8668 = vunpack.c.l.b16 %v8179
    %v8669 = vunpack.c.l.b16 %v8180
    %v8670 = vunpack.c.h.b16 %v8180
    %v8671 = vunpack.c.l.b16 %v8181
    %v8672 = vunpack.c.l.b16 %v8182
    %v8673 = vunpack.c.h.b16 %v8182
    %v8674 = vunpack.c.l.b16 %v8183
    %v8675 = vunpack.c.l.b16 %v8184
    %v8676 = vunpack.c.h.b16 %v8184
    %v8677 = vunpack.c.l.b16 %v8185
    %v8678 = vunpack.c.l.b16 %v8186
    %v8679 = vunpack.c.h.b16 %v8186
    %v8680 = vunpack.c.l.b16 %v8187
    %v8681 = vunpack.c.l.b16 %v8188
    %v8682 = vunpack.c.h.b16 %v8188
    %v8683 = vunpack.c.l.b16 %v8189
    %v8684 = vunpack.c.l.b16 %v8190
    %v8685 = vunpack.c.h.b16 %v8190
    %v8686 = vunpack.c.l.b16 %v8191
    %v8687 = vunpack.c.l.b16 %v8192
    %v8688 = vunpack.c.h.b16 %v8192
    %v8689 = vunpack.c.l.b16 %v8193
    %v8690 = vunpack.c.l.b16 %v8194
    %v8691 = vunpack.c.h.b16 %v8194
    %v8692 = vunpack.c.l.b16 %v8195
    %v8693 = vunpack.c.l.b16 %v8196
    %v8694 = vunpack.c.h.b16 %v8196
    %v8695 = vunpack.c.l.b16 %v8197
    %v8696 = vunpack.c.l.b16 %v8198
    %v8697 = vunpack.c.h.b16 %v8198
    %v8698 = vunpack.c.l.b16 %v8199
    %v8699 = vunpack.c.l.b16 %v8200
    %v8700 = vunpack.c.h.b16 %v8200
    %v8701 = vunpack.c.l.b16 %v8201
    %v8702 = vunpack.c.l.b16 %v8202
    %v8703 = vunpack.c.h.b16 %v8202
    %v8704 = vunpack.c.l.b16 %v8203
    %v8705 = vunpack.c.l.b16 %v8204
    %v8706 = vunpack.c.h.b16 %v8204
    %v8707 = vunpack.c.l.b16 %v8205
    %v8708 = vunpack.c.l.b16 %v8206
    %v8709 = vunpack.c.h.b16 %v8206
    %v8710 = vunpack.c.l.b16 %v8207
    %v8711 = vunpack.c.l.b16 %v8208
    %v8712 = vunpack.c.h.b16 %v8208
    %v8713 = vunpack.c.l.b16 %v8209
    %v8714 = vunpack.c.l.b16 %v8210
    %v8715 = vunpack.c.h.b16 %v8210
    %v8716 = vunpack.c.l.b16 %v8211
    %v8717 = vunpack.c.l.b16 %v8212
    %v8718 = vunpack.c.h.b16 %v8212
    %v8719 = vunpack.c.l.b16 %v8213
    %v8720 = vunpack.c.l.b16 %v8214
    %v8721 = vunpack.c.h.b16 %v8214
    %v8722 = vunpack.c.l.b16 %v8215
    %v8723 = vunpack.c.l.b16 %v8216
    %v8724 = vunpack.c.h.b16 %v8216
    %v8725 = vunpack.c.l.b16 %v8217
    %v8726 = vunpack.c.l.b16 %v8218
    %v8727 = vunpack.c.h.b16 %v8218
    %v8728 = vunpack.c.l.b16 %v8219
    %v8729 = vunpack.c.l.b16 %v8220
    %v8730 = vunpack.c.h.b16 %v8220
    %v8731 = vunpack.c.l.b16 %v8221
    %v8732 = vunpack.c.l.b16 %v8222
    %v8733 = vunpack.c.h.b16 %v8222
    %v8734 = vunpack.c.l.b16 %v8223
    %v8735 = vunpack.c.l.b16 %v8224
    %v8736 = vunpack.c.h.b16 %v8224
    %v8737 = vunpack.c.l.b16 %v8225
    %v8738 = vunpack.c.l.b16 %v8226
    %v8739 = vunpack.c.h.b16 %v8226
    %v8740 = vunpack.c.l.b16 %v8227
    %v8741 = vunpack.c.l.b16 %v8228
    %v8742 = vunpack.c.h.b16 %v8228
    %v8743 = vunpack.c.l.b16 %v8229
    %v8744 = vunpack.c.l.b16 %v8230
    %v8745 = vunpack.c.h.b16 %v8230
    %v8746 = vunpack.c.l.b16 %v8231
    %v8747 = vunpack.c.l.b16 %v8232
    %v8748 = vunpack.c.h.b16 %v8232
    %v8749 = vunpack.c.l.b16 %v8233
    %v8750 = vunpack.c.l.b16 %v8234
    %v8751 = vunpack.c.h.b16 %v8234
    %v8752 = vunpack.c.l.b16 %v8235
    %v8753 = vunpack.c.l.b16 %v8236
    %v8754 = vunpack.c.h.b16 %v8236
    %v8755 = vunpack.c.l.b16 %v8237
    %v8756 = vunpack.c.l.b16 %v8238
    %v8757 = vunpack.c.h.b16 %v8238
    %v8758 = vunpack.c.l.b16 %v8239
    %v8759 = vunpack.c.l.b16 %v8240
    %v8760 = vunpack.c.h.b16 %v8240
    %v8761 = vunpack.c.l.b16 %v8241
    %v8762 = vunpack.c.l.b16 %v8242
    %v8763 = vunpack.c.h.b16 %v8242
    %v8764 = vunpack.c.l.b16 %v8243
    %v8765 = vunpack.c.l.b16 %v8244
    %v8766 = vunpack.c.h.b16 %v8244
    %v8767 = vunpack.c.l.b16 %v8245
    %v8768 = vunpack.c.l.b16 %v8246
    %v8769 = vunpack.c.h.b16 %v8246
    %v8770 = vunpack.c.l.b16 %v8247
    %v8771 = vunpack.c.l.b16 %v8248
    %v8772 = vunpack.c.h.b16 %v8248
    %v8773 = vunpack.c.l.b16 %v8249
    %v8774 = vunpack.c.l.b16 %v8250
    %v8775 = vunpack.c.h.b16 %v8250
    %v8776 = vunpack.c.l.b16 %v8251
    %v8777 = vunpack.c.l.b16 %v8252
    %v8778 = vunpack.c.h.b16 %v8252
    %v8779 = vunpack.c.l.b16 %v8253
    %v8780 = vunpack.c.l.b16 %v8254
    %v8781 = vunpack.c.h.b16 %v8254
    %v8782 = vunpack.c.l.b16 %v8255
    %v8783 = vunpack.c.l.b16 %v8256
    %v8784 = vunpack.c.h.b16 %v8256
    %v8785 = vunpack.c.l.b16 %v8257
    %v8786 = vpack.c.b16 %v8645, %v8642
    %v8787 = vpack.c.b16 %v8646, %v8643
    %v8788 = vpack.c.b16 %v8647, %v8644
    %v8789 = vpack.c.b16 %v8651, %v8648
    %v8790 = vpack.c.b16 %v8652, %v8649
    %v8791 = vpack.c.b16 %v8653, %v8650
    %v8792 = vpack.c.b16 %v8657, %v8654
    %v8793 = vpack.c.b16 %v8658, %v8655
    %v8794 = vpack.c.b16 %v8659, %v8656
    %v8795 = vpack.c.b16 %v8663, %v8660
    %v8796 = vpack.c.b16 %v8664, %v8661
    %v8797 = vpack.c.b16 %v8665, %v8662
    %v8798 = vpack.c.b16 %v8669, %v8666
    %v8799 = vpack.c.b16 %v8670, %v8667
    %v8800 = vpack.c.b16 %v8671, %v8668
    %v8801 = vpack.c.b16 %v8675, %v8672
    %v8802 = vpack.c.b16 %v8676, %v8673
    %v8803 = vpack.c.b16 %v8677, %v8674
    %v8804 = vpack.c.b16 %v8681, %v8678
    %v8805 = vpack.c.b16 %v8682, %v8679
    %v8806 = vpack.c.b16 %v8683, %v8680
    %v8807 = vpack.c.b16 %v8687, %v8684
    %v8808 = vpack.c.b16 %v8688, %v8685
    %v8809 = vpack.c.b16 %v8689, %v8686
    %v8810 = vpack.c.b16 %v8693, %v8690
    %v8811 = vpack.c.b16 %v8694, %v8691
    %v8812 = vpack.c.b16 %v8695, %v8692
    %v8813 = vpack.c.b16 %v8699, %v8696
    %v8814 = vpack.c.b16 %v8700, %v8697
    %v8815 = vpack.c.b16 %v8701, %v8698
    %v8816 = vpack.c.b16 %v8705, %v8702
    %v8817 = vpack.c.b16 %v8706, %v8703
    %v8818 = vpack.c.b16 %v8707, %v8704
    %v8819 = vpack.c.b16 %v8711, %v8708
    %v8820 = vpack.c.b16 %v8712, %v8709
    %v8821 = vpack.c.b16 %v8713, %v8710
    %v8822 = vpack.c.b16 %v8717, %v8714
    %v8823 = vpack.c.b16 %v8718, %v8715
    %v8824 = vpack.c.b16 %v8719, %v8716
    %v8825 = vpack.c.b16 %v8723, %v8720
    %v8826 = vpack.c.b16 %v8724, %v8721
    %v8827 = vpack.c.b16 %v8725, %v8722
    %v8828 = vpack.c.b16 %v8729, %v8726
    %v8829 = vpack.c.b16 %v8730, %v8727
    %v8830 = vpack.c.b16 %v8731, %v8728
    %v8831 = vpack.c.b16 %v8735, %v8732
    %v8832 = vpack.c.b16 %v8736, %v8733
    %v8833 = vpack.c.b16 %v8737, %v8734
    %v8834 = vpack.c.b16 %v8741, %v8738
    %v8835 = vpack.c.b16 %v8742, %v8739
    %v8836 = vpack.c.b16 %v8743, %v8740
    %v8837 = vpack.c.b16 %v8747, %v8744
    %v8838 = vpack.c.b16 %v8748, %v8745
    %v8839 = vpack.c.b16 %v8749, %v8746
    %v8840 = vpack.c.b16 %v8753, %v8750
    %v8841 = vpack.c.b16 %v8754, %v8751
    %v8842 = vpack.c.b16 %v8755, %v8752
    %v8843 = vpack.c.b16 %v8759, %v8756
    %v8844 = vpack.c.b16 %v8760, %v8757
    %v8845 = vpack.c.b16 %v8761, %v8758
    %v8846 = vpack.c.b16 %v8765, %v8762
    %v8847 = vpack.c.b16 %v8766, %v8763
    %v8848 = vpack.c.b16 %v8767, %v8764
    %v8849 = vpack.c.b16 %v8771, %v8768
    %v8850 = vpack.c.b16 %v8772, %v8769
    %v8851 = vpack.c.b16 %v8773, %v8770
    %v8852 = vpack.c.b16 %v8777, %v8774
    %v8853 = vpack.c.b16 %v8778, %v8775
    %v8854 = vpack.c.b16 %v8779, %v8776
    %v8855 = vpack.c.b16 %v8783, %v8780
    %v8856 = vpack.c.b16 %v8784, %v8781
    %v8857 = vpack.c.b16 %v8785, %v8782
    %8930 = vmatpush.bf16.msra.mxu0 %v8807
    %8931 = vmatpush.bf16.msra.mxu0 %v8804
    %8932 = vmatpush.bf16.msra.mxu0 %v8801
    %8933 = vmatpush.bf16.msra.mxu0 %v8798
    %8934 = vmatpush.bf16.msra.mxu0 %v8795
    %8935 = vmatpush.bf16.msra.mxu0 %v8792
    %8936 = vmatpush.bf16.msra.mxu0 %v8789
    %8937 = vmatpush.bf16.msra.mxu0 %v8786
    %8938 = vmatmul.bf16.gmra.mxu0 %v8258
    %v8939 = vpop.f32.mrf.mxu0
    %v8940 = vadd.f32 0.0, %v8939
    %v8941 = vpop.f32.mrf.mxu0
    %v8942 = vadd.f32 0.0, %v8941
    %8943 = vmatmul.bf16.gmra.mxu0 %v8261
    %v8944 = vpop.f32.mrf.mxu0
    %v8945 = vpop.f32.mrf.mxu0
    %v8946 = vadd.f32 0.0, %v8945
    %8947 = vmatmul.bf16.gmra.mxu0 %v8264
    %v8948 = vpop.f32.mrf.mxu0
    %v8949 = vadd.f32 0.0, %v8948
    %v8950 = vpop.f32.mrf.mxu0
    %8951 = vmatmul.bf16.gmra.mxu0 %v8267
    %v8952 = vpop.f32.mrf.mxu0
    %v8953 = vadd.f32 0.0, %v8952
    %v8954 = vpop.f32.mrf.mxu0
    %v8955 = vadd.f32 0.0, %v8954
    %8956 = vmatmul.bf16.gmra.mxu0 %v8270
    %v8957 = vpop.f32.mrf.mxu0
    %v8958 = vpop.f32.mrf.mxu0
    %v8959 = vadd.f32 0.0, %v8958
    %8960 = vmatmul.bf16.gmra.mxu0 %v8273
    %v8961 = vpop.f32.mrf.mxu0
    %v8962 = vadd.f32 0.0, %v8961
    %v8963 = vpop.f32.mrf.mxu0
    %8964 = vmatmul.bf16.gmra.mxu0 %v8276
    %v8965 = vpop.f32.mrf.mxu0
    %v8966 = vadd.f32 0.0, %v8965
    %v8967 = vpop.f32.mrf.mxu0
    %v8968 = vadd.f32 0.0, %v8967
    %8969 = vmatmul.bf16.gmra.mxu0 %v8279
    %v8970 = vpop.f32.mrf.mxu0
    %v8971 = vpop.f32.mrf.mxu0
    %v8972 = vadd.f32 0.0, %v8971
    %8973 = vmatmul.bf16.gmra.mxu0 %v8282
    %v8974 = vpop.f32.mrf.mxu0
    %v8975 = vadd.f32 0.0, %v8974
    %v8976 = vpop.f32.mrf.mxu0
    %8977 = vmatmul.bf16.gmra.mxu0 %v8285
    %v8978 = vpop.f32.mrf.mxu0
    %v8979 = vadd.f32 0.0, %v8978
    %v8980 = vpop.f32.mrf.mxu0
    %v8981 = vadd.f32 0.0, %v8980
    %8982 = vmatmul.bf16.gmra.mxu0 %v8288
    %v8983 = vpop.f32.mrf.mxu0
    %v8984 = vpop.f32.mrf.mxu0
    %v8985 = vadd.f32 0.0, %v8984
    %8986 = vmatmul.bf16.gmra.mxu0 %v8291
    %v8987 = vpop.f32.mrf.mxu0
    %v8988 = vadd.f32 0.0, %v8987
    %v8989 = vpop.f32.mrf.mxu0
    %8990 = vmatmul.bf16.gmra.mxu0 %v8294
    %v8991 = vpop.f32.mrf.mxu0
    %v8992 = vadd.f32 0.0, %v8991
    %v8993 = vpop.f32.mrf.mxu0
    %v8994 = vadd.f32 0.0, %v8993
    %8995 = vmatmul.bf16.gmra.mxu0 %v8297
    %v8996 = vpop.f32.mrf.mxu0
    %v8997 = vpop.f32.mrf.mxu0
    %v8998 = vadd.f32 0.0, %v8997
    %8999 = vmatmul.bf16.gmra.mxu0 %v8300
    %v9000 = vpop.f32.mrf.mxu0
    %v9001 = vadd.f32 0.0, %v9000
    %v9002 = vpop.f32.mrf.mxu0
    %9003 = vmatmul.bf16.gmra.mxu0 %v8303
    %v9004 = vpop.f32.mrf.mxu0
    %v9005 = vadd.f32 0.0, %v9004
    %v9006 = vpop.f32.mrf.mxu0
    %v9007 = vadd.f32 0.0, %v9006
    %9008 = vmatmul.bf16.gmra.mxu0 %v8306
    %v9009 = vpop.f32.mrf.mxu0
    %v9010 = vpop.f32.mrf.mxu0
    %v9011 = vadd.f32 0.0, %v9010
    %9012 = vmatmul.bf16.gmra.mxu0 %v8309
    %v9013 = vpop.f32.mrf.mxu0
    %v9014 = vadd.f32 0.0, %v9013
    %v9015 = vpop.f32.mrf.mxu0
    %9016 = vmatmul.bf16.gmra.mxu0 %v8312
    %v9017 = vpop.f32.mrf.mxu0
    %v9018 = vadd.f32 0.0, %v9017
    %v9019 = vpop.f32.mrf.mxu0
    %v9020 = vadd.f32 0.0, %v9019
    %9021 = vmatmul.bf16.gmra.mxu0 %v8315
    %v9022 = vpop.f32.mrf.mxu0
    %v9023 = vpop.f32.mrf.mxu0
    %v9024 = vadd.f32 0.0, %v9023
    %9025 = vmatmul.bf16.gmra.mxu0 %v8318
    %v9026 = vpop.f32.mrf.mxu0
    %v9027 = vadd.f32 0.0, %v9026
    %v9028 = vpop.f32.mrf.mxu0
    %9029 = vmatmul.bf16.gmra.mxu0 %v8321
    %v9030 = vpop.f32.mrf.mxu0
    %v9031 = vadd.f32 0.0, %v9030
    %v9032 = vpop.f32.mrf.mxu0
    %v9033 = vadd.f32 0.0, %v9032
    %9034 = vmatmul.bf16.gmra.mxu0 %v8324
    %v9035 = vpop.f32.mrf.mxu0
    %v9036 = vpop.f32.mrf.mxu0
    %v9037 = vadd.f32 0.0, %v9036
    %9038 = vmatmul.bf16.gmra.mxu0 %v8327
    %v9039 = vpop.f32.mrf.mxu0
    %v9040 = vadd.f32 0.0, %v9039
    %v9041 = vpop.f32.mrf.mxu0
    %9042 = vmatmul.bf16.gmra.mxu0 %v8330
    %v9043 = vpop.f32.mrf.mxu0
    %v9044 = vadd.f32 0.0, %v9043
    %v9045 = vpop.f32.mrf.mxu0
    %v9046 = vadd.f32 0.0, %v9045
    %9047 = vmatmul.bf16.gmra.mxu0 %v8333
    %v9048 = vpop.f32.mrf.mxu0
    %v9049 = vpop.f32.mrf.mxu0
    %v9050 = vadd.f32 0.0, %v9049
    %9051 = vmatmul.bf16.gmra.mxu0 %v8336
    %v9052 = vpop.f32.mrf.mxu0
    %v9053 = vadd.f32 0.0, %v9052
    %v9054 = vpop.f32.mrf.mxu0
    %9055 = vmatmul.bf16.gmra.mxu0 %v8339
    %v9056 = vpop.f32.mrf.mxu0
    %v9057 = vadd.f32 0.0, %v9056
    %v9058 = vpop.f32.mrf.mxu0
    %v9059 = vadd.f32 0.0, %v9058
    %9060 = vmatmul.bf16.gmra.mxu0 %v8342
    %v9061 = vpop.f32.mrf.mxu0
    %v9062 = vpop.f32.mrf.mxu0
    %v9063 = vadd.f32 0.0, %v9062
    %9064 = vmatmul.bf16.gmra.mxu0 %v8345
    %v9065 = vpop.f32.mrf.mxu0
    %v9066 = vadd.f32 0.0, %v9065
    %v9067 = vpop.f32.mrf.mxu0
    %9068 = vmatmul.bf16.gmra.mxu0 %v8348
    %v9069 = vpop.f32.mrf.mxu0
    %v9070 = vadd.f32 0.0, %v9069
    %v9071 = vpop.f32.mrf.mxu0
    %v9072 = vadd.f32 0.0, %v9071
    %9073 = vmatmul.bf16.gmra.mxu0 %v8351
    %v9074 = vpop.f32.mrf.mxu0
    %v9075 = vpop.f32.mrf.mxu0
    %v9076 = vadd.f32 0.0, %v9075
    %9077 = vmatmul.bf16.gmra.mxu0 %v8354
    %v9078 = vpop.f32.mrf.mxu0
    %v9079 = vadd.f32 0.0, %v9078
    %v9080 = vpop.f32.mrf.mxu0
    %9081 = vmatmul.bf16.gmra.mxu0 %v8357
    %v9082 = vpop.f32.mrf.mxu0
    %v9083 = vadd.f32 0.0, %v9082
    %v9084 = vpop.f32.mrf.mxu0
    %v9085 = vadd.f32 0.0, %v9084
    %9086 = vmatmul.bf16.gmra.mxu0 %v8360
    %v9087 = vpop.f32.mrf.mxu0
    %v9088 = vpop.f32.mrf.mxu0
    %v9089 = vadd.f32 0.0, %v9088
    %9090 = vmatmul.bf16.gmra.mxu0 %v8363
    %v9091 = vpop.f32.mrf.mxu0
    %v9092 = vadd.f32 0.0, %v9091
    %v9093 = vpop.f32.mrf.mxu0
    %9094 = vmatmul.bf16.gmra.mxu0 %v8366
    %v9095 = vpop.f32.mrf.mxu0
    %v9096 = vadd.f32 0.0, %v9095
    %v9097 = vpop.f32.mrf.mxu0
    %v9098 = vadd.f32 0.0, %v9097
    %9099 = vmatmul.bf16.gmra.mxu0 %v8369
    %v9100 = vpop.f32.mrf.mxu0
    %v9101 = vpop.f32.mrf.mxu0
    %v9102 = vadd.f32 0.0, %v9101
    %9103 = vmatmul.bf16.gmra.mxu0 %v8372
    %v9104 = vpop.f32.mrf.mxu0
    %v9105 = vadd.f32 0.0, %v9104
    %v9106 = vpop.f32.mrf.mxu0
    %9107 = vmatmul.bf16.gmra.mxu0 %v8375
    %v9108 = vpop.f32.mrf.mxu0
    %v9109 = vadd.f32 0.0, %v9108
    %v9110 = vpop.f32.mrf.mxu0
    %v9111 = vadd.f32 0.0, %v9110
    %9112 = vmatmul.bf16.gmra.mxu0 %v8378
    %v9113 = vpop.f32.mrf.mxu0
    %v9114 = vpop.f32.mrf.mxu0
    %v9115 = vadd.f32 0.0, %v9114
    %9116 = vmatmul.bf16.gmra.mxu0 %v8381
    %v9117 = vpop.f32.mrf.mxu0
    %v9118 = vadd.f32 0.0, %v9117
    %v9119 = vpop.f32.mrf.mxu0
    %9120 = vmatmul.bf16.gmra.mxu0 %v8384
    %v9121 = vpop.f32.mrf.mxu0
    %v9122 = vadd.f32 0.0, %v9121
    %v9123 = vpop.f32.mrf.mxu0
    %v9124 = vadd.f32 0.0, %v9123
    %9125 = vmatmul.bf16.gmra.mxu0 %v8387
    %v9126 = vpop.f32.mrf.mxu0
    %v9127 = vpop.f32.mrf.mxu0
    %v9128 = vadd.f32 0.0, %v9127
    %9129 = vmatmul.bf16.gmra.mxu0 %v8390
    %v9130 = vpop.f32.mrf.mxu0
    %v9131 = vadd.f32 0.0, %v9130
    %v9132 = vpop.f32.mrf.mxu0
    %9133 = vmatmul.bf16.gmra.mxu0 %v8393
    %v9134 = vpop.f32.mrf.mxu0
    %v9135 = vadd.f32 0.0, %v9134
    %v9136 = vpop.f32.mrf.mxu0
    %v9137 = vadd.f32 0.0, %v9136
    %9138 = vmatmul.bf16.gmra.mxu0 %v8396
    %v9139 = vpop.f32.mrf.mxu0
    %v9140 = vpop.f32.mrf.mxu0
    %v9141 = vadd.f32 0.0, %v9140
    %9142 = vmatmul.bf16.gmra.mxu0 %v8399
    %v9143 = vpop.f32.mrf.mxu0
    %v9144 = vadd.f32 0.0, %v9143
    %v9145 = vpop.f32.mrf.mxu0
    %9146 = vdwg.mxu0
    %9147 = vmatpush.bf16.msra.mxu0 %v8831
    %9148 = vmatpush.bf16.msra.mxu0 %v8828
    %9149 = vmatpush.bf16.msra.mxu0 %v8825
    %9150 = vmatpush.bf16.msra.mxu0 %v8822
    %9151 = vmatpush.bf16.msra.mxu0 %v8819
    %9152 = vmatpush.bf16.msra.mxu0 %v8816
    %9153 = vmatpush.bf16.msra.mxu0 %v8813
    %9154 = vmatpush.bf16.msra.mxu0 %v8810
    %9155 = vmatmul.bf16.gmra.mxu0 %v8259
    %v9156 = vpop.f32.mrf.mxu0
    %v9157 = vadd.f32 %v8940, %v9156
    %v9158 = vpop.f32.mrf.mxu0
    %v9159 = vadd.f32 %v8942, %v9158
    %9160 = vmatmul.bf16.gmra.mxu0 %v8262
    %v9161 = vpop.f32.mrf.mxu0
    %v9162 = vpop.f32.mrf.mxu0
    %v9163 = vadd.f32 %v8946, %v9162
    %9164 = vmatmul.bf16.gmra.mxu0 %v8265
    %v9165 = vpop.f32.mrf.mxu0
    %v9166 = vadd.f32 %v8949, %v9165
    %v9167 = vpop.f32.mrf.mxu0
    %9168 = vmatmul.bf16.gmra.mxu0 %v8268
    %v9169 = vpop.f32.mrf.mxu0
    %v9170 = vadd.f32 %v8953, %v9169
    %v9171 = vpop.f32.mrf.mxu0
    %v9172 = vadd.f32 %v8955, %v9171
    %9173 = vmatmul.bf16.gmra.mxu0 %v8271
    %v9174 = vpop.f32.mrf.mxu0
    %v9175 = vpop.f32.mrf.mxu0
    %v9176 = vadd.f32 %v8959, %v9175
    %9177 = vmatmul.bf16.gmra.mxu0 %v8274
    %v9178 = vpop.f32.mrf.mxu0
    %v9179 = vadd.f32 %v8962, %v9178
    %v9180 = vpop.f32.mrf.mxu0
    %9181 = vmatmul.bf16.gmra.mxu0 %v8277
    %v9182 = vpop.f32.mrf.mxu0
    %v9183 = vadd.f32 %v8966, %v9182
    %v9184 = vpop.f32.mrf.mxu0
    %v9185 = vadd.f32 %v8968, %v9184
    %9186 = vmatmul.bf16.gmra.mxu0 %v8280
    %v9187 = vpop.f32.mrf.mxu0
    %v9188 = vpop.f32.mrf.mxu0
    %v9189 = vadd.f32 %v8972, %v9188
    %9190 = vmatmul.bf16.gmra.mxu0 %v8283
    %v9191 = vpop.f32.mrf.mxu0
    %v9192 = vadd.f32 %v8975, %v9191
    %v9193 = vpop.f32.mrf.mxu0
    %9194 = vmatmul.bf16.gmra.mxu0 %v8286
    %v9195 = vpop.f32.mrf.mxu0
    %v9196 = vadd.f32 %v8979, %v9195
    %v9197 = vpop.f32.mrf.mxu0
    %v9198 = vadd.f32 %v8981, %v9197
    %9199 = vmatmul.bf16.gmra.mxu0 %v8289
    %v9200 = vpop.f32.mrf.mxu0
    %v9201 = vpop.f32.mrf.mxu0
    %v9202 = vadd.f32 %v8985, %v9201
    %9203 = vmatmul.bf16.gmra.mxu0 %v8292
    %v9204 = vpop.f32.mrf.mxu0
    %v9205 = vadd.f32 %v8988, %v9204
    %v9206 = vpop.f32.mrf.mxu0
    %9207 = vmatmul.bf16.gmra.mxu0 %v8295
    %v9208 = vpop.f32.mrf.mxu0
    %v9209 = vadd.f32 %v8992, %v9208
    %v9210 = vpop.f32.mrf.mxu0
    %v9211 = vadd.f32 %v8994, %v9210
    %9212 = vmatmul.bf16.gmra.mxu0 %v8298
    %v9213 = vpop.f32.mrf.mxu0
    %v9214 = vpop.f32.mrf.mxu0
    %v9215 = vadd.f32 %v8998, %v9214
    %9216 = vmatmul.bf16.gmra.mxu0 %v8301
    %v9217 = vpop.f32.mrf.mxu0
    %v9218 = vadd.f32 %v9001, %v9217
    %v9219 = vpop.f32.mrf.mxu0
    %9220 = vmatmul.bf16.gmra.mxu0 %v8304
    %v9221 = vpop.f32.mrf.mxu0
    %v9222 = vadd.f32 %v9005, %v9221
    %v9223 = vpop.f32.mrf.mxu0
    %v9224 = vadd.f32 %v9007, %v9223
    %9225 = vmatmul.bf16.gmra.mxu0 %v8307
    %v9226 = vpop.f32.mrf.mxu0
    %v9227 = vpop.f32.mrf.mxu0
    %v9228 = vadd.f32 %v9011, %v9227
    %9229 = vmatmul.bf16.gmra.mxu0 %v8310
    %v9230 = vpop.f32.mrf.mxu0
    %v9231 = vadd.f32 %v9014, %v9230
    %v9232 = vpop.f32.mrf.mxu0
    %9233 = vmatmul.bf16.gmra.mxu0 %v8313
    %v9234 = vpop.f32.mrf.mxu0
    %v9235 = vadd.f32 %v9018, %v9234
    %v9236 = vpop.f32.mrf.mxu0
    %v9237 = vadd.f32 %v9020, %v9236
    %9238 = vmatmul.bf16.gmra.mxu0 %v8316
    %v9239 = vpop.f32.mrf.mxu0
    %v9240 = vpop.f32.mrf.mxu0
    %v9241 = vadd.f32 %v9024, %v9240
    %9242 = vmatmul.bf16.gmra.mxu0 %v8319
    %v9243 = vpop.f32.mrf.mxu0
    %v9244 = vadd.f32 %v9027, %v9243
    %v9245 = vpop.f32.mrf.mxu0
    %9246 = vmatmul.bf16.gmra.mxu0 %v8322
    %v9247 = vpop.f32.mrf.mxu0
    %v9248 = vadd.f32 %v9031, %v9247
    %v9249 = vpop.f32.mrf.mxu0
    %v9250 = vadd.f32 %v9033, %v9249
    %9251 = vmatmul.bf16.gmra.mxu0 %v8325
    %v9252 = vpop.f32.mrf.mxu0
    %v9253 = vpop.f32.mrf.mxu0
    %v9254 = vadd.f32 %v9037, %v9253
    %9255 = vmatmul.bf16.gmra.mxu0 %v8328
    %v9256 = vpop.f32.mrf.mxu0
    %v9257 = vadd.f32 %v9040, %v9256
    %v9258 = vpop.f32.mrf.mxu0
    %9259 = vmatmul.bf16.gmra.mxu0 %v8331
    %v9260 = vpop.f32.mrf.mxu0
    %v9261 = vadd.f32 %v9044, %v9260
    %v9262 = vpop.f32.mrf.mxu0
    %v9263 = vadd.f32 %v9046, %v9262
    %9264 = vmatmul.bf16.gmra.mxu0 %v8334
    %v9265 = vpop.f32.mrf.mxu0
    %v9266 = vpop.f32.mrf.mxu0
    %v9267 = vadd.f32 %v9050, %v9266
    %9268 = vmatmul.bf16.gmra.mxu0 %v8337
    %v9269 = vpop.f32.mrf.mxu0
    %v9270 = vadd.f32 %v9053, %v9269
    %v9271 = vpop.f32.mrf.mxu0
    %9272 = vmatmul.bf16.gmra.mxu0 %v8340
    %v9273 = vpop.f32.mrf.mxu0
    %v9274 = vadd.f32 %v9057, %v9273
    %v9275 = vpop.f32.mrf.mxu0
    %v9276 = vadd.f32 %v9059, %v9275
    %9277 = vmatmul.bf16.gmra.mxu0 %v8343
    %v9278 = vpop.f32.mrf.mxu0
    %v9279 = vpop.f32.mrf.mxu0
    %v9280 = vadd.f32 %v9063, %v9279
    %9281 = vmatmul.bf16.gmra.mxu0 %v8346
    %v9282 = vpop.f32.mrf.mxu0
    %v9283 = vadd.f32 %v9066, %v9282
    %v9284 = vpop.f32.mrf.mxu0
    %9285 = vmatmul.bf16.gmra.mxu0 %v8349
    %v9286 = vpop.f32.mrf.mxu0
    %v9287 = vadd.f32 %v9070, %v9286
    %v9288 = vpop.f32.mrf.mxu0
    %v9289 = vadd.f32 %v9072, %v9288
    %9290 = vmatmul.bf16.gmra.mxu0 %v8352
    %v9291 = vpop.f32.mrf.mxu0
    %v9292 = vpop.f32.mrf.mxu0
    %v9293 = vadd.f32 %v9076, %v9292
    %9294 = vmatmul.bf16.gmra.mxu0 %v8355
    %v9295 = vpop.f32.mrf.mxu0
    %v9296 = vadd.f32 %v9079, %v9295
    %v9297 = vpop.f32.mrf.mxu0
    %9298 = vmatmul.bf16.gmra.mxu0 %v8358
    %v9299 = vpop.f32.mrf.mxu0
    %v9300 = vadd.f32 %v9083, %v9299
    %v9301 = vpop.f32.mrf.mxu0
    %v9302 = vadd.f32 %v9085, %v9301
    %9303 = vmatmul.bf16.gmra.mxu0 %v8361
    %v9304 = vpop.f32.mrf.mxu0
    %v9305 = vpop.f32.mrf.mxu0
    %v9306 = vadd.f32 %v9089, %v9305
    %9307 = vmatmul.bf16.gmra.mxu0 %v8364
    %v9308 = vpop.f32.mrf.mxu0
    %v9309 = vadd.f32 %v9092, %v9308
    %v9310 = vpop.f32.mrf.mxu0
    %9311 = vmatmul.bf16.gmra.mxu0 %v8367
    %v9312 = vpop.f32.mrf.mxu0
    %v9313 = vadd.f32 %v9096, %v9312
    %v9314 = vpop.f32.mrf.mxu0
    %v9315 = vadd.f32 %v9098, %v9314
    %9316 = vmatmul.bf16.gmra.mxu0 %v8370
    %v9317 = vpop.f32.mrf.mxu0
    %v9318 = vpop.f32.mrf.mxu0
    %v9319 = vadd.f32 %v9102, %v9318
    %9320 = vmatmul.bf16.gmra.mxu0 %v8373
    %v9321 = vpop.f32.mrf.mxu0
    %v9322 = vadd.f32 %v9105, %v9321
    %v9323 = vpop.f32.mrf.mxu0
    %9324 = vmatmul.bf16.gmra.mxu0 %v8376
    %v9325 = vpop.f32.mrf.mxu0
    %v9326 = vadd.f32 %v9109, %v9325
    %v9327 = vpop.f32.mrf.mxu0
    %v9328 = vadd.f32 %v9111, %v9327
    %9329 = vmatmul.bf16.gmra.mxu0 %v8379
    %v9330 = vpop.f32.mrf.mxu0
    %v9331 = vpop.f32.mrf.mxu0
    %v9332 = vadd.f32 %v9115, %v9331
    %9333 = vmatmul.bf16.gmra.mxu0 %v8382
    %v9334 = vpop.f32.mrf.mxu0
    %v9335 = vadd.f32 %v9118, %v9334
    %v9336 = vpop.f32.mrf.mxu0
    %9337 = vmatmul.bf16.gmra.mxu0 %v8385
    %v9338 = vpop.f32.mrf.mxu0
    %v9339 = vadd.f32 %v9122, %v9338
    %v9340 = vpop.f32.mrf.mxu0
    %v9341 = vadd.f32 %v9124, %v9340
    %9342 = vmatmul.bf16.gmra.mxu0 %v8388
    %v9343 = vpop.f32.mrf.mxu0
    %v9344 = vpop.f32.mrf.mxu0
    %v9345 = vadd.f32 %v9128, %v9344
    %9346 = vmatmul.bf16.gmra.mxu0 %v8391
    %v9347 = vpop.f32.mrf.mxu0
    %v9348 = vadd.f32 %v9131, %v9347
    %v9349 = vpop.f32.mrf.mxu0
    %9350 = vmatmul.bf16.gmra.mxu0 %v8394
    %v9351 = vpop.f32.mrf.mxu0
    %v9352 = vadd.f32 %v9135, %v9351
    %v9353 = vpop.f32.mrf.mxu0
    %v9354 = vadd.f32 %v9137, %v9353
    %9355 = vmatmul.bf16.gmra.mxu0 %v8397
    %v9356 = vpop.f32.mrf.mxu0
    %v9357 = vpop.f32.mrf.mxu0
    %v9358 = vadd.f32 %v9141, %v9357
    %9359 = vmatmul.bf16.gmra.mxu0 %v8400
    %v9360 = vpop.f32.mrf.mxu0
    %v9361 = vadd.f32 %v9144, %v9360
    %v9362 = vpop.f32.mrf.mxu0
    %9363 = vdwg.mxu0
    %9364 = vmatpush.bf16.msra.mxu0 %v8855
    %9365 = vmatpush.bf16.msra.mxu0 %v8852
    %9366 = vmatpush.bf16.msra.mxu0 %v8849
    %9367 = vmatpush.bf16.msra.mxu0 %v8846
    %9368 = vmatpush.bf16.msra.mxu0 %v8843
    %9369 = vmatpush.bf16.msra.mxu0 %v8840
    %9370 = vmatpush.bf16.msra.mxu0 %v8837
    %9371 = vmatpush.bf16.msra.mxu0 %v8834
    %9372 = vmatmul.bf16.gmra.mxu0 %v8260
    %v9373 = vpop.f32.mrf.mxu0
    %v9374 = vadd.f32 %v9157, %v9373
    %v9375 = vpop.f32.mrf.mxu0
    %v9376 = vadd.f32 %v9159, %v9375
    %9377 = vmatmul.bf16.gmra.mxu0 %v8263
    %v9378 = vpop.f32.mrf.mxu0
    %v9379 = vpop.f32.mrf.mxu0
    %v9380 = vadd.f32 %v9163, %v9379
    %9381 = vmatmul.bf16.gmra.mxu0 %v8266
    %v9382 = vpop.f32.mrf.mxu0
    %v9383 = vadd.f32 %v9166, %v9382
    %v9384 = vpop.f32.mrf.mxu0
    %9385 = vmatmul.bf16.gmra.mxu0 %v8269
    %v9386 = vpop.f32.mrf.mxu0
    %v9387 = vadd.f32 %v9170, %v9386
    %v9388 = vpop.f32.mrf.mxu0
    %v9389 = vadd.f32 %v9172, %v9388
    %9390 = vmatmul.bf16.gmra.mxu0 %v8272
    %v9391 = vpop.f32.mrf.mxu0
    %v9392 = vpop.f32.mrf.mxu0
    %v9393 = vadd.f32 %v9176, %v9392
    %9394 = vmatmul.bf16.gmra.mxu0 %v8275
    %v9395 = vpop.f32.mrf.mxu0
    %v9396 = vadd.f32 %v9179, %v9395
    %v9397 = vpop.f32.mrf.mxu0
    %9398 = vmatmul.bf16.gmra.mxu0 %v8278
    %v9399 = vpop.f32.mrf.mxu0
    %v9400 = vadd.f32 %v9183, %v9399
    %v9401 = vpop.f32.mrf.mxu0
    %v9402 = vadd.f32 %v9185, %v9401
    %9403 = vmatmul.bf16.gmra.mxu0 %v8281
    %v9404 = vpop.f32.mrf.mxu0
    %v9405 = vpop.f32.mrf.mxu0
    %v9406 = vadd.f32 %v9189, %v9405
    %9407 = vmatmul.bf16.gmra.mxu0 %v8284
    %v9408 = vpop.f32.mrf.mxu0
    %v9409 = vadd.f32 %v9192, %v9408
    %v9410 = vpop.f32.mrf.mxu0
    %9411 = vmatmul.bf16.gmra.mxu0 %v8287
    %v9412 = vpop.f32.mrf.mxu0
    %v9413 = vadd.f32 %v9196, %v9412
    %v9414 = vpop.f32.mrf.mxu0
    %v9415 = vadd.f32 %v9198, %v9414
    %9416 = vmatmul.bf16.gmra.mxu0 %v8290
    %v9417 = vpop.f32.mrf.mxu0
    %v9418 = vpop.f32.mrf.mxu0
    %v9419 = vadd.f32 %v9202, %v9418
    %9420 = vmatmul.bf16.gmra.mxu0 %v8293
    %v9421 = vpop.f32.mrf.mxu0
    %v9422 = vadd.f32 %v9205, %v9421
    %v9423 = vpop.f32.mrf.mxu0
    %9424 = vmatmul.bf16.gmra.mxu0 %v8296
    %v9425 = vpop.f32.mrf.mxu0
    %v9426 = vadd.f32 %v9209, %v9425
    %v9427 = vpop.f32.mrf.mxu0
    %v9428 = vadd.f32 %v9211, %v9427
    %9429 = vmatmul.bf16.gmra.mxu0 %v8299
    %v9430 = vpop.f32.mrf.mxu0
    %v9431 = vpop.f32.mrf.mxu0
    %v9432 = vadd.f32 %v9215, %v9431
    %9433 = vmatmul.bf16.gmra.mxu0 %v8302
    %v9434 = vpop.f32.mrf.mxu0
    %v9435 = vadd.f32 %v9218, %v9434
    %v9436 = vpop.f32.mrf.mxu0
    %9437 = vmatmul.bf16.gmra.mxu0 %v8305
    %v9438 = vpop.f32.mrf.mxu0
    %v9439 = vadd.f32 %v9222, %v9438
    %v9440 = vpop.f32.mrf.mxu0
    %v9441 = vadd.f32 %v9224, %v9440
    %9442 = vmatmul.bf16.gmra.mxu0 %v8308
    %v9443 = vpop.f32.mrf.mxu0
    %v9444 = vpop.f32.mrf.mxu0
    %v9445 = vadd.f32 %v9228, %v9444
    %9446 = vmatmul.bf16.gmra.mxu0 %v8311
    %v9447 = vpop.f32.mrf.mxu0
    %v9448 = vadd.f32 %v9231, %v9447
    %v9449 = vpop.f32.mrf.mxu0
    %9450 = vmatmul.bf16.gmra.mxu0 %v8314
    %v9451 = vpop.f32.mrf.mxu0
    %v9452 = vadd.f32 %v9235, %v9451
    %v9453 = vpop.f32.mrf.mxu0
    %v9454 = vadd.f32 %v9237, %v9453
    %9455 = vmatmul.bf16.gmra.mxu0 %v8317
    %v9456 = vpop.f32.mrf.mxu0
    %v9457 = vpop.f32.mrf.mxu0
    %v9458 = vadd.f32 %v9241, %v9457
    %9459 = vmatmul.bf16.gmra.mxu0 %v8320
    %v9460 = vpop.f32.mrf.mxu0
    %v9461 = vadd.f32 %v9244, %v9460
    %v9462 = vpop.f32.mrf.mxu0
    %9463 = vmatmul.bf16.gmra.mxu0 %v8323
    %v9464 = vpop.f32.mrf.mxu0
    %v9465 = vadd.f32 %v9248, %v9464
    %v9466 = vpop.f32.mrf.mxu0
    %v9467 = vadd.f32 %v9250, %v9466
    %9468 = vmatmul.bf16.gmra.mxu0 %v8326
    %v9469 = vpop.f32.mrf.mxu0
    %v9470 = vpop.f32.mrf.mxu0
    %v9471 = vadd.f32 %v9254, %v9470
    %9472 = vmatmul.bf16.gmra.mxu0 %v8329
    %v9473 = vpop.f32.mrf.mxu0
    %v9474 = vadd.f32 %v9257, %v9473
    %v9475 = vpop.f32.mrf.mxu0
    %9476 = vmatmul.bf16.gmra.mxu0 %v8332
    %v9477 = vpop.f32.mrf.mxu0
    %v9478 = vadd.f32 %v9261, %v9477
    %v9479 = vpop.f32.mrf.mxu0
    %v9480 = vadd.f32 %v9263, %v9479
    %9481 = vmatmul.bf16.gmra.mxu0 %v8335
    %v9482 = vpop.f32.mrf.mxu0
    %v9483 = vpop.f32.mrf.mxu0
    %v9484 = vadd.f32 %v9267, %v9483
    %9485 = vmatmul.bf16.gmra.mxu0 %v8338
    %v9486 = vpop.f32.mrf.mxu0
    %v9487 = vadd.f32 %v9270, %v9486
    %v9488 = vpop.f32.mrf.mxu0
    %9489 = vmatmul.bf16.gmra.mxu0 %v8341
    %v9490 = vpop.f32.mrf.mxu0
    %v9491 = vadd.f32 %v9274, %v9490
    %v9492 = vpop.f32.mrf.mxu0
    %v9493 = vadd.f32 %v9276, %v9492
    %9494 = vmatmul.bf16.gmra.mxu0 %v8344
    %v9495 = vpop.f32.mrf.mxu0
    %v9496 = vpop.f32.mrf.mxu0
    %v9497 = vadd.f32 %v9280, %v9496
    %9498 = vmatmul.bf16.gmra.mxu0 %v8347
    %v9499 = vpop.f32.mrf.mxu0
    %v9500 = vadd.f32 %v9283, %v9499
    %v9501 = vpop.f32.mrf.mxu0
    %9502 = vmatmul.bf16.gmra.mxu0 %v8350
    %v9503 = vpop.f32.mrf.mxu0
    %v9504 = vadd.f32 %v9287, %v9503
    %v9505 = vpop.f32.mrf.mxu0
    %v9506 = vadd.f32 %v9289, %v9505
    %9507 = vmatmul.bf16.gmra.mxu0 %v8353
    %v9508 = vpop.f32.mrf.mxu0
    %v9509 = vpop.f32.mrf.mxu0
    %v9510 = vadd.f32 %v9293, %v9509
    %9511 = vmatmul.bf16.gmra.mxu0 %v8356
    %v9512 = vpop.f32.mrf.mxu0
    %v9513 = vadd.f32 %v9296, %v9512
    %v9514 = vpop.f32.mrf.mxu0
    %9515 = vmatmul.bf16.gmra.mxu0 %v8359
    %v9516 = vpop.f32.mrf.mxu0
    %v9517 = vadd.f32 %v9300, %v9516
    %v9518 = vpop.f32.mrf.mxu0
    %v9519 = vadd.f32 %v9302, %v9518
    %9520 = vmatmul.bf16.gmra.mxu0 %v8362
    %v9521 = vpop.f32.mrf.mxu0
    %v9522 = vpop.f32.mrf.mxu0
    %v9523 = vadd.f32 %v9306, %v9522
    %9524 = vmatmul.bf16.gmra.mxu0 %v8365
    %v9525 = vpop.f32.mrf.mxu0
    %v9526 = vadd.f32 %v9309, %v9525
    %v9527 = vpop.f32.mrf.mxu0
    %9528 = vmatmul.bf16.gmra.mxu0 %v8368
    %v9529 = vpop.f32.mrf.mxu0
    %v9530 = vadd.f32 %v9313, %v9529
    %v9531 = vpop.f32.mrf.mxu0
    %v9532 = vadd.f32 %v9315, %v9531
    %9533 = vmatmul.bf16.gmra.mxu0 %v8371
    %v9534 = vpop.f32.mrf.mxu0
    %v9535 = vpop.f32.mrf.mxu0
    %v9536 = vadd.f32 %v9319, %v9535
    %9537 = vmatmul.bf16.gmra.mxu0 %v8374
    %v9538 = vpop.f32.mrf.mxu0
    %v9539 = vadd.f32 %v9322, %v9538
    %v9540 = vpop.f32.mrf.mxu0
    %9541 = vmatmul.bf16.gmra.mxu0 %v8377
    %v9542 = vpop.f32.mrf.mxu0
    %v9543 = vadd.f32 %v9326, %v9542
    %v9544 = vpop.f32.mrf.mxu0
    %v9545 = vadd.f32 %v9328, %v9544
    %9546 = vmatmul.bf16.gmra.mxu0 %v8380
    %v9547 = vpop.f32.mrf.mxu0
    %v9548 = vpop.f32.mrf.mxu0
    %v9549 = vadd.f32 %v9332, %v9548
    %9550 = vmatmul.bf16.gmra.mxu0 %v8383
    %v9551 = vpop.f32.mrf.mxu0
    %v9552 = vadd.f32 %v9335, %v9551
    %v9553 = vpop.f32.mrf.mxu0
    %9554 = vmatmul.bf16.gmra.mxu0 %v8386
    %v9555 = vpop.f32.mrf.mxu0
    %v9556 = vadd.f32 %v9339, %v9555
    %v9557 = vpop.f32.mrf.mxu0
    %v9558 = vadd.f32 %v9341, %v9557
    %9559 = vmatmul.bf16.gmra.mxu0 %v8389
    %v9560 = vpop.f32.mrf.mxu0
    %v9561 = vpop.f32.mrf.mxu0
    %v9562 = vadd.f32 %v9345, %v9561
    %9563 = vmatmul.bf16.gmra.mxu0 %v8392
    %v9564 = vpop.f32.mrf.mxu0
    %v9565 = vadd.f32 %v9348, %v9564
    %v9566 = vpop.f32.mrf.mxu0
    %9567 = vmatmul.bf16.gmra.mxu0 %v8395
    %v9568 = vpop.f32.mrf.mxu0
    %v9569 = vadd.f32 %v9352, %v9568
    %v9570 = vpop.f32.mrf.mxu0
    %v9571 = vadd.f32 %v9354, %v9570
    %9572 = vmatmul.bf16.gmra.mxu0 %v8398
    %v9573 = vpop.f32.mrf.mxu0
    %v9574 = vpop.f32.mrf.mxu0
    %v9575 = vadd.f32 %v9358, %v9574
    %9576 = vmatmul.bf16.gmra.mxu0 %v8401
    %v9577 = vpop.f32.mrf.mxu0
    %v9578 = vadd.f32 %v9361, %v9577
    %v9579 = vpop.f32.mrf.mxu0
    %9580 = vdwg.mxu0
    %9581 = vmatpush.bf16.msra.mxu0 %v8808
    %9582 = vmatpush.bf16.msra.mxu0 %v8805
    %9583 = vmatpush.bf16.msra.mxu0 %v8802
    %9584 = vmatpush.bf16.msra.mxu0 %v8799
    %9585 = vmatpush.bf16.msra.mxu0 %v8796
    %9586 = vmatpush.bf16.msra.mxu0 %v8793
    %9587 = vmatpush.bf16.msra.mxu0 %v8790
    %9588 = vmatpush.bf16.msra.mxu0 %v8787
    %9589 = vmatmul.bf16.gmra.mxu0 %v8258
    %v9590 = vpop.f32.mrf.mxu0
    %v9591 = vadd.f32 0.0, %v9590
    %v9592 = vpop.f32.mrf.mxu0
    %v9593 = vadd.f32 0.0, %v9592
    %9594 = vmatmul.bf16.gmra.mxu0 %v8261
    %v9595 = vpop.f32.mrf.mxu0
    %v9596 = vadd.f32 0.0, %v9595
    %v9597 = vpop.f32.mrf.mxu0
    %v9598 = vadd.f32 0.0, %v9597
    %9599 = vmatmul.bf16.gmra.mxu0 %v8264
    %v9600 = vpop.f32.mrf.mxu0
    %v9601 = vadd.f32 0.0, %v9600
    %v9602 = vpop.f32.mrf.mxu0
    %v9603 = vadd.f32 0.0, %v9602
    %9604 = vmatmul.bf16.gmra.mxu0 %v8267
    %v9605 = vpop.f32.mrf.mxu0
    %v9606 = vadd.f32 0.0, %v9605
    %v9607 = vpop.f32.mrf.mxu0
    %v9608 = vadd.f32 0.0, %v9607
    %9609 = vmatmul.bf16.gmra.mxu0 %v8270
    %v9610 = vpop.f32.mrf.mxu0
    %v9611 = vadd.f32 0.0, %v9610
    %v9612 = vpop.f32.mrf.mxu0
    %v9613 = vadd.f32 0.0, %v9612
    %9614 = vmatmul.bf16.gmra.mxu0 %v8273
    %v9615 = vpop.f32.mrf.mxu0
    %v9616 = vadd.f32 0.0, %v9615
    %v9617 = vpop.f32.mrf.mxu0
    %v9618 = vadd.f32 0.0, %v9617
    %9619 = vmatmul.bf16.gmra.mxu0 %v8276
    %v9620 = vpop.f32.mrf.mxu0
    %v9621 = vadd.f32 0.0, %v9620
    %v9622 = vpop.f32.mrf.mxu0
    %v9623 = vadd.f32 0.0, %v9622
    %9624 = vmatmul.bf16.gmra.mxu0 %v8279
    %v9625 = vpop.f32.mrf.mxu0
    %v9626 = vadd.f32 0.0, %v9625
    %v9627 = vpop.f32.mrf.mxu0
    %v9628 = vadd.f32 0.0, %v9627
    %9629 = vmatmul.bf16.gmra.mxu0 %v8282
    %v9630 = vpop.f32.mrf.mxu0
    %v9631 = vadd.f32 0.0, %v9630
    %v9632 = vpop.f32.mrf.mxu0
    %v9633 = vadd.f32 0.0, %v9632
    %9634 = vmatmul.bf16.gmra.mxu0 %v8285
    %v9635 = vpop.f32.mrf.mxu0
    %v9636 = vadd.f32 0.0, %v9635
    %v9637 = vpop.f32.mrf.mxu0
    %v9638 = vadd.f32 0.0, %v9637
    %9639 = vmatmul.bf16.gmra.mxu0 %v8288
    %v9640 = vpop.f32.mrf.mxu0
    %v9641 = vadd.f32 0.0, %v9640
    %v9642 = vpop.f32.mrf.mxu0
    %v9643 = vadd.f32 0.0, %v9642
    %9644 = vmatmul.bf16.gmra.mxu0 %v8291
    %v9645 = vpop.f32.mrf.mxu0
    %v9646 = vadd.f32 0.0, %v9645
    %v9647 = vpop.f32.mrf.mxu0
    %v9648 = vadd.f32 0.0, %v9647
    %9649 = vmatmul.bf16.gmra.mxu0 %v8294
    %v9650 = vpop.f32.mrf.mxu0
    %v9651 = vadd.f32 0.0, %v9650
    %v9652 = vpop.f32.mrf.mxu0
    %v9653 = vadd.f32 0.0, %v9652
    %9654 = vmatmul.bf16.gmra.mxu0 %v8297
    %v9655 = vpop.f32.mrf.mxu0
    %v9656 = vadd.f32 0.0, %v9655
    %v9657 = vpop.f32.mrf.mxu0
    %v9658 = vadd.f32 0.0, %v9657
    %9659 = vmatmul.bf16.gmra.mxu0 %v8300
    %v9660 = vpop.f32.mrf.mxu0
    %v9661 = vadd.f32 0.0, %v9660
    %v9662 = vpop.f32.mrf.mxu0
    %v9663 = vadd.f32 0.0, %v9662
    %9664 = vmatmul.bf16.gmra.mxu0 %v8303
    %v9665 = vpop.f32.mrf.mxu0
    %v9666 = vadd.f32 0.0, %v9665
    %v9667 = vpop.f32.mrf.mxu0
    %v9668 = vadd.f32 0.0, %v9667
    %9669 = vmatmul.bf16.gmra.mxu0 %v8306
    %v9670 = vpop.f32.mrf.mxu0
    %v9671 = vadd.f32 0.0, %v9670
    %v9672 = vpop.f32.mrf.mxu0
    %v9673 = vadd.f32 0.0, %v9672
    %9674 = vmatmul.bf16.gmra.mxu0 %v8309
    %v9675 = vpop.f32.mrf.mxu0
    %v9676 = vadd.f32 0.0, %v9675
    %v9677 = vpop.f32.mrf.mxu0
    %v9678 = vadd.f32 0.0, %v9677
    %9679 = vmatmul.bf16.gmra.mxu0 %v8312
    %v9680 = vpop.f32.mrf.mxu0
    %v9681 = vadd.f32 0.0, %v9680
    %v9682 = vpop.f32.mrf.mxu0
    %v9683 = vadd.f32 0.0, %v9682
    %9684 = vmatmul.bf16.gmra.mxu0 %v8315
    %v9685 = vpop.f32.mrf.mxu0
    %v9686 = vadd.f32 0.0, %v9685
    %v9687 = vpop.f32.mrf.mxu0
    %v9688 = vadd.f32 0.0, %v9687
    %9689 = vmatmul.bf16.gmra.mxu0 %v8318
    %v9690 = vpop.f32.mrf.mxu0
    %v9691 = vadd.f32 0.0, %v9690
    %v9692 = vpop.f32.mrf.mxu0
    %v9693 = vadd.f32 0.0, %v9692
    %9694 = vmatmul.bf16.gmra.mxu0 %v8321
    %v9695 = vpop.f32.mrf.mxu0
    %v9696 = vadd.f32 0.0, %v9695
    %v9697 = vpop.f32.mrf.mxu0
    %v9698 = vadd.f32 0.0, %v9697
    %9699 = vmatmul.bf16.gmra.mxu0 %v8324
    %v9700 = vpop.f32.mrf.mxu0
    %v9701 = vadd.f32 0.0, %v9700
    %v9702 = vpop.f32.mrf.mxu0
    %v9703 = vadd.f32 0.0, %v9702
    %9704 = vmatmul.bf16.gmra.mxu0 %v8327
    %v9705 = vpop.f32.mrf.mxu0
    %v9706 = vadd.f32 0.0, %v9705
    %v9707 = vpop.f32.mrf.mxu0
    %v9708 = vadd.f32 0.0, %v9707
    %9709 = vmatmul.bf16.gmra.mxu0 %v8330
    %v9710 = vpop.f32.mrf.mxu0
    %v9711 = vadd.f32 0.0, %v9710
    %v9712 = vpop.f32.mrf.mxu0
    %v9713 = vadd.f32 0.0, %v9712
    %9714 = vmatmul.bf16.gmra.mxu0 %v8333
    %v9715 = vpop.f32.mrf.mxu0
    %v9716 = vadd.f32 0.0, %v9715
    %v9717 = vpop.f32.mrf.mxu0
    %v9718 = vadd.f32 0.0, %v9717
    %9719 = vmatmul.bf16.gmra.mxu0 %v8336
    %v9720 = vpop.f32.mrf.mxu0
    %v9721 = vadd.f32 0.0, %v9720
    %v9722 = vpop.f32.mrf.mxu0
    %v9723 = vadd.f32 0.0, %v9722
    %9724 = vmatmul.bf16.gmra.mxu0 %v8339
    %v9725 = vpop.f32.mrf.mxu0
    %v9726 = vadd.f32 0.0, %v9725
    %v9727 = vpop.f32.mrf.mxu0
    %v9728 = vadd.f32 0.0, %v9727
    %9729 = vmatmul.bf16.gmra.mxu0 %v8342
    %v9730 = vpop.f32.mrf.mxu0
    %v9731 = vadd.f32 0.0, %v9730
    %v9732 = vpop.f32.mrf.mxu0
    %v9733 = vadd.f32 0.0, %v9732
    %9734 = vmatmul.bf16.gmra.mxu0 %v8345
    %v9735 = vpop.f32.mrf.mxu0
    %v9736 = vadd.f32 0.0, %v9735
    %v9737 = vpop.f32.mrf.mxu0
    %v9738 = vadd.f32 0.0, %v9737
    %9739 = vmatmul.bf16.gmra.mxu0 %v8348
    %v9740 = vpop.f32.mrf.mxu0
    %v9741 = vadd.f32 0.0, %v9740
    %v9742 = vpop.f32.mrf.mxu0
    %v9743 = vadd.f32 0.0, %v9742
    %9744 = vmatmul.bf16.gmra.mxu0 %v8351
    %v9745 = vpop.f32.mrf.mxu0
    %v9746 = vadd.f32 0.0, %v9745
    %v9747 = vpop.f32.mrf.mxu0
    %v9748 = vadd.f32 0.0, %v9747
    %9749 = vmatmul.bf16.gmra.mxu0 %v8354
    %v9750 = vpop.f32.mrf.mxu0
    %v9751 = vadd.f32 0.0, %v9750
    %v9752 = vpop.f32.mrf.mxu0
    %v9753 = vadd.f32 0.0, %v9752
    %9754 = vmatmul.bf16.gmra.mxu0 %v8357
    %v9755 = vpop.f32.mrf.mxu0
    %v9756 = vadd.f32 0.0, %v9755
    %v9757 = vpop.f32.mrf.mxu0
    %v9758 = vadd.f32 0.0, %v9757
    %9759 = vmatmul.bf16.gmra.mxu0 %v8360
    %v9760 = vpop.f32.mrf.mxu0
    %v9761 = vadd.f32 0.0, %v9760
    %v9762 = vpop.f32.mrf.mxu0
    %v9763 = vadd.f32 0.0, %v9762
    %9764 = vmatmul.bf16.gmra.mxu0 %v8363
    %v9765 = vpop.f32.mrf.mxu0
    %v9766 = vadd.f32 0.0, %v9765
    %v9767 = vpop.f32.mrf.mxu0
    %v9768 = vadd.f32 0.0, %v9767
    %9769 = vmatmul.bf16.gmra.mxu0 %v8366
    %v9770 = vpop.f32.mrf.mxu0
    %v9771 = vadd.f32 0.0, %v9770
    %v9772 = vpop.f32.mrf.mxu0
    %v9773 = vadd.f32 0.0, %v9772
    %9774 = vmatmul.bf16.gmra.mxu0 %v8369
    %v9775 = vpop.f32.mrf.mxu0
    %v9776 = vadd.f32 0.0, %v9775
    %v9777 = vpop.f32.mrf.mxu0
    %v9778 = vadd.f32 0.0, %v9777
    %9779 = vmatmul.bf16.gmra.mxu0 %v8372
    %v9780 = vpop.f32.mrf.mxu0
    %v9781 = vadd.f32 0.0, %v9780
    %v9782 = vpop.f32.mrf.mxu0
    %v9783 = vadd.f32 0.0, %v9782
    %9784 = vmatmul.bf16.gmra.mxu0 %v8375
    %v9785 = vpop.f32.mrf.mxu0
    %v9786 = vadd.f32 0.0, %v9785
    %v9787 = vpop.f32.mrf.mxu0
    %v9788 = vadd.f32 0.0, %v9787
    %9789 = vmatmul.bf16.gmra.mxu0 %v8378
    %v9790 = vpop.f32.mrf.mxu0
    %v9791 = vadd.f32 0.0, %v9790
    %v9792 = vpop.f32.mrf.mxu0
    %v9793 = vadd.f32 0.0, %v9792
    %9794 = vmatmul.bf16.gmra.mxu0 %v8381
    %v9795 = vpop.f32.mrf.mxu0
    %v9796 = vadd.f32 0.0, %v9795
    %v9797 = vpop.f32.mrf.mxu0
    %v9798 = vadd.f32 0.0, %v9797
    %9799 = vmatmul.bf16.gmra.mxu0 %v8384
    %v9800 = vpop.f32.mrf.mxu0
    %v9801 = vadd.f32 0.0, %v9800
    %v9802 = vpop.f32.mrf.mxu0
    %v9803 = vadd.f32 0.0, %v9802
    %9804 = vmatmul.bf16.gmra.mxu0 %v8387
    %v9805 = vpop.f32.mrf.mxu0
    %v9806 = vadd.f32 0.0, %v9805
    %v9807 = vpop.f32.mrf.mxu0
    %v9808 = vadd.f32 0.0, %v9807
    %9809 = vmatmul.bf16.gmra.mxu0 %v8390
    %v9810 = vpop.f32.mrf.mxu0
    %v9811 = vadd.f32 0.0, %v9810
    %v9812 = vpop.f32.mrf.mxu0
    %v9813 = vadd.f32 0.0, %v9812
    %9814 = vmatmul.bf16.gmra.mxu0 %v8393
    %v9815 = vpop.f32.mrf.mxu0
    %v9816 = vadd.f32 0.0, %v9815
    %v9817 = vpop.f32.mrf.mxu0
    %v9818 = vadd.f32 0.0, %v9817
    %9819 = vmatmul.bf16.gmra.mxu0 %v8396
    %v9820 = vpop.f32.mrf.mxu0
    %v9821 = vadd.f32 0.0, %v9820
    %v9822 = vpop.f32.mrf.mxu0
    %v9823 = vadd.f32 0.0, %v9822
    %9824 = vmatmul.bf16.gmra.mxu0 %v8399
    %v9825 = vpop.f32.mrf.mxu0
    %v9826 = vadd.f32 0.0, %v9825
    %v9827 = vpop.f32.mrf.mxu0
    %v9828 = vadd.f32 0.0, %v9827
    %9829 = vdwg.mxu0
    %9830 = vmatpush.bf16.msra.mxu0 %v8832
    %9831 = vmatpush.bf16.msra.mxu0 %v8829
    %9832 = vmatpush.bf16.msra.mxu0 %v8826
    %9833 = vmatpush.bf16.msra.mxu0 %v8823
    %9834 = vmatpush.bf16.msra.mxu0 %v8820
    %9835 = vmatpush.bf16.msra.mxu0 %v8817
    %9836 = vmatpush.bf16.msra.mxu0 %v8814
    %9837 = vmatpush.bf16.msra.mxu0 %v8811
    %9838 = vmatmul.bf16.gmra.mxu0 %v8259
    %v9839 = vpop.f32.mrf.mxu0
    %v9840 = vadd.f32 %v9591, %v9839
    %v9841 = vpop.f32.mrf.mxu0
    %v9842 = vadd.f32 %v9593, %v9841
    %9843 = vmatmul.bf16.gmra.mxu0 %v8262
    %v9844 = vpop.f32.mrf.mxu0
    %v9845 = vadd.f32 %v9596, %v9844
    %v9846 = vpop.f32.mrf.mxu0
    %v9847 = vadd.f32 %v9598, %v9846
    %9848 = vmatmul.bf16.gmra.mxu0 %v8265
    %v9849 = vpop.f32.mrf.mxu0
    %v9850 = vadd.f32 %v9601, %v9849
    %v9851 = vpop.f32.mrf.mxu0
    %v9852 = vadd.f32 %v9603, %v9851
    %9853 = vmatmul.bf16.gmra.mxu0 %v8268
    %v9854 = vpop.f32.mrf.mxu0
    %v9855 = vadd.f32 %v9606, %v9854
    %v9856 = vpop.f32.mrf.mxu0
    %v9857 = vadd.f32 %v9608, %v9856
    %9858 = vmatmul.bf16.gmra.mxu0 %v8271
    %v9859 = vpop.f32.mrf.mxu0
    %v9860 = vadd.f32 %v9611, %v9859
    %v9861 = vpop.f32.mrf.mxu0
    %v9862 = vadd.f32 %v9613, %v9861
    %9863 = vmatmul.bf16.gmra.mxu0 %v8274
    %v9864 = vpop.f32.mrf.mxu0
    %v9865 = vadd.f32 %v9616, %v9864
    %v9866 = vpop.f32.mrf.mxu0
    %v9867 = vadd.f32 %v9618, %v9866
    %9868 = vmatmul.bf16.gmra.mxu0 %v8277
    %v9869 = vpop.f32.mrf.mxu0
    %v9870 = vadd.f32 %v9621, %v9869
    %v9871 = vpop.f32.mrf.mxu0
    %v9872 = vadd.f32 %v9623, %v9871
    %9873 = vmatmul.bf16.gmra.mxu0 %v8280
    %v9874 = vpop.f32.mrf.mxu0
    %v9875 = vadd.f32 %v9626, %v9874
    %v9876 = vpop.f32.mrf.mxu0
    %v9877 = vadd.f32 %v9628, %v9876
    %9878 = vmatmul.bf16.gmra.mxu0 %v8283
    %v9879 = vpop.f32.mrf.mxu0
    %v9880 = vadd.f32 %v9631, %v9879
    %v9881 = vpop.f32.mrf.mxu0
    %v9882 = vadd.f32 %v9633, %v9881
    %9883 = vmatmul.bf16.gmra.mxu0 %v8286
    %v9884 = vpop.f32.mrf.mxu0
    %v9885 = vadd.f32 %v9636, %v9884
    %v9886 = vpop.f32.mrf.mxu0
    %v9887 = vadd.f32 %v9638, %v9886
    %9888 = vmatmul.bf16.gmra.mxu0 %v8289
    %v9889 = vpop.f32.mrf.mxu0
    %v9890 = vadd.f32 %v9641, %v9889
    %v9891 = vpop.f32.mrf.mxu0
    %v9892 = vadd.f32 %v9643, %v9891
    %9893 = vmatmul.bf16.gmra.mxu0 %v8292
    %v9894 = vpop.f32.mrf.mxu0
    %v9895 = vadd.f32 %v9646, %v9894
    %v9896 = vpop.f32.mrf.mxu0
    %v9897 = vadd.f32 %v9648, %v9896
    %9898 = vmatmul.bf16.gmra.mxu0 %v8295
    %v9899 = vpop.f32.mrf.mxu0
    %v9900 = vadd.f32 %v9651, %v9899
    %v9901 = vpop.f32.mrf.mxu0
    %v9902 = vadd.f32 %v9653, %v9901
    %9903 = vmatmul.bf16.gmra.mxu0 %v8298
    %v9904 = vpop.f32.mrf.mxu0
    %v9905 = vadd.f32 %v9656, %v9904
    %v9906 = vpop.f32.mrf.mxu0
    %v9907 = vadd.f32 %v9658, %v9906
    %9908 = vmatmul.bf16.gmra.mxu0 %v8301
    %v9909 = vpop.f32.mrf.mxu0
    %v9910 = vadd.f32 %v9661, %v9909
    %v9911 = vpop.f32.mrf.mxu0
    %v9912 = vadd.f32 %v9663, %v9911
    %9913 = vmatmul.bf16.gmra.mxu0 %v8304
    %v9914 = vpop.f32.mrf.mxu0
    %v9915 = vadd.f32 %v9666, %v9914
    %v9916 = vpop.f32.mrf.mxu0
    %v9917 = vadd.f32 %v9668, %v9916
    %9918 = vmatmul.bf16.gmra.mxu0 %v8307
    %v9919 = vpop.f32.mrf.mxu0
    %v9920 = vadd.f32 %v9671, %v9919
    %v9921 = vpop.f32.mrf.mxu0
    %v9922 = vadd.f32 %v9673, %v9921
    %9923 = vmatmul.bf16.gmra.mxu0 %v8310
    %v9924 = vpop.f32.mrf.mxu0
    %v9925 = vadd.f32 %v9676, %v9924
    %v9926 = vpop.f32.mrf.mxu0
    %v9927 = vadd.f32 %v9678, %v9926
    %9928 = vmatmul.bf16.gmra.mxu0 %v8313
    %v9929 = vpop.f32.mrf.mxu0
    %v9930 = vadd.f32 %v9681, %v9929
    %v9931 = vpop.f32.mrf.mxu0
    %v9932 = vadd.f32 %v9683, %v9931
    %9933 = vmatmul.bf16.gmra.mxu0 %v8316
    %v9934 = vpop.f32.mrf.mxu0
    %v9935 = vadd.f32 %v9686, %v9934
    %v9936 = vpop.f32.mrf.mxu0
    %v9937 = vadd.f32 %v9688, %v9936
    %9938 = vmatmul.bf16.gmra.mxu0 %v8319
    %v9939 = vpop.f32.mrf.mxu0
    %v9940 = vadd.f32 %v9691, %v9939
    %v9941 = vpop.f32.mrf.mxu0
    %v9942 = vadd.f32 %v9693, %v9941
    %9943 = vmatmul.bf16.gmra.mxu0 %v8322
    %v9944 = vpop.f32.mrf.mxu0
    %v9945 = vadd.f32 %v9696, %v9944
    %v9946 = vpop.f32.mrf.mxu0
    %v9947 = vadd.f32 %v9698, %v9946
    %9948 = vmatmul.bf16.gmra.mxu0 %v8325
    %v9949 = vpop.f32.mrf.mxu0
    %v9950 = vadd.f32 %v9701, %v9949
    %v9951 = vpop.f32.mrf.mxu0
    %v9952 = vadd.f32 %v9703, %v9951
    %9953 = vmatmul.bf16.gmra.mxu0 %v8328
    %v9954 = vpop.f32.mrf.mxu0
    %v9955 = vadd.f32 %v9706, %v9954
    %v9956 = vpop.f32.mrf.mxu0
    %v9957 = vadd.f32 %v9708, %v9956
    %9958 = vmatmul.bf16.gmra.mxu0 %v8331
    %v9959 = vpop.f32.mrf.mxu0
    %v9960 = vadd.f32 %v9711, %v9959
    %v9961 = vpop.f32.mrf.mxu0
    %v9962 = vadd.f32 %v9713, %v9961
    %9963 = vmatmul.bf16.gmra.mxu0 %v8334
    %v9964 = vpop.f32.mrf.mxu0
    %v9965 = vadd.f32 %v9716, %v9964
    %v9966 = vpop.f32.mrf.mxu0
    %v9967 = vadd.f32 %v9718, %v9966
    %9968 = vmatmul.bf16.gmra.mxu0 %v8337
    %v9969 = vpop.f32.mrf.mxu0
    %v9970 = vadd.f32 %v9721, %v9969
    %v9971 = vpop.f32.mrf.mxu0
    %v9972 = vadd.f32 %v9723, %v9971
    %9973 = vmatmul.bf16.gmra.mxu0 %v8340
    %v9974 = vpop.f32.mrf.mxu0
    %v9975 = vadd.f32 %v9726, %v9974
    %v9976 = vpop.f32.mrf.mxu0
    %v9977 = vadd.f32 %v9728, %v9976
    %9978 = vmatmul.bf16.gmra.mxu0 %v8343
    %v9979 = vpop.f32.mrf.mxu0
    %v9980 = vadd.f32 %v9731, %v9979
    %v9981 = vpop.f32.mrf.mxu0
    %v9982 = vadd.f32 %v9733, %v9981
    %9983 = vmatmul.bf16.gmra.mxu0 %v8346
    %v9984 = vpop.f32.mrf.mxu0
    %v9985 = vadd.f32 %v9736, %v9984
    %v9986 = vpop.f32.mrf.mxu0
    %v9987 = vadd.f32 %v9738, %v9986
    %9988 = vmatmul.bf16.gmra.mxu0 %v8349
    %v9989 = vpop.f32.mrf.mxu0
    %v9990 = vadd.f32 %v9741, %v9989
    %v9991 = vpop.f32.mrf.mxu0
    %v9992 = vadd.f32 %v9743, %v9991
    %9993 = vmatmul.bf16.gmra.mxu0 %v8352
    %v9994 = vpop.f32.mrf.mxu0
    %v9995 = vadd.f32 %v9746, %v9994
    %v9996 = vpop.f32.mrf.mxu0
    %v9997 = vadd.f32 %v9748, %v9996
    %9998 = vmatmul.bf16.gmra.mxu0 %v8355
    %v9999 = vpop.f32.mrf.mxu0
    %v10000 = vadd.f32 %v9751, %v9999
    %v10001 = vpop.f32.mrf.mxu0
    %v10002 = vadd.f32 %v9753, %v10001
    %10003 = vmatmul.bf16.gmra.mxu0 %v8358
    %v10004 = vpop.f32.mrf.mxu0
    %v10005 = vadd.f32 %v9756, %v10004
    %v10006 = vpop.f32.mrf.mxu0
    %v10007 = vadd.f32 %v9758, %v10006
    %10008 = vmatmul.bf16.gmra.mxu0 %v8361
    %v10009 = vpop.f32.mrf.mxu0
    %v10010 = vadd.f32 %v9761, %v10009
    %v10011 = vpop.f32.mrf.mxu0
    %v10012 = vadd.f32 %v9763, %v10011
    %10013 = vmatmul.bf16.gmra.mxu0 %v8364
    %v10014 = vpop.f32.mrf.mxu0
    %v10015 = vadd.f32 %v9766, %v10014
    %v10016 = vpop.f32.mrf.mxu0
    %v10017 = vadd.f32 %v9768, %v10016
    %10018 = vmatmul.bf16.gmra.mxu0 %v8367
    %v10019 = vpop.f32.mrf.mxu0
    %v10020 = vadd.f32 %v9771, %v10019
    %v10021 = vpop.f32.mrf.mxu0
    %v10022 = vadd.f32 %v9773, %v10021
    %10023 = vmatmul.bf16.gmra.mxu0 %v8370
    %v10024 = vpop.f32.mrf.mxu0
    %v10025 = vadd.f32 %v9776, %v10024
    %v10026 = vpop.f32.mrf.mxu0
    %v10027 = vadd.f32 %v9778, %v10026
    %10028 = vmatmul.bf16.gmra.mxu0 %v8373
    %v10029 = vpop.f32.mrf.mxu0
    %v10030 = vadd.f32 %v9781, %v10029
    %v10031 = vpop.f32.mrf.mxu0
    %v10032 = vadd.f32 %v9783, %v10031
    %10033 = vmatmul.bf16.gmra.mxu0 %v8376
    %v10034 = vpop.f32.mrf.mxu0
    %v10035 = vadd.f32 %v9786, %v10034
    %v10036 = vpop.f32.mrf.mxu0
    %v10037 = vadd.f32 %v9788, %v10036
    %10038 = vmatmul.bf16.gmra.mxu0 %v8379
    %v10039 = vpop.f32.mrf.mxu0
    %v10040 = vadd.f32 %v9791, %v10039
    %v10041 = vpop.f32.mrf.mxu0
    %v10042 = vadd.f32 %v9793, %v10041
    %10043 = vmatmul.bf16.gmra.mxu0 %v8382
    %v10044 = vpop.f32.mrf.mxu0
    %v10045 = vadd.f32 %v9796, %v10044
    %v10046 = vpop.f32.mrf.mxu0
    %v10047 = vadd.f32 %v9798, %v10046
    %10048 = vmatmul.bf16.gmra.mxu0 %v8385
    %v10049 = vpop.f32.mrf.mxu0
    %v10050 = vadd.f32 %v9801, %v10049
    %v10051 = vpop.f32.mrf.mxu0
    %v10052 = vadd.f32 %v9803, %v10051
    %10053 = vmatmul.bf16.gmra.mxu0 %v8388
    %v10054 = vpop.f32.mrf.mxu0
    %v10055 = vadd.f32 %v9806, %v10054
    %v10056 = vpop.f32.mrf.mxu0
    %v10057 = vadd.f32 %v9808, %v10056
    %10058 = vmatmul.bf16.gmra.mxu0 %v8391
    %v10059 = vpop.f32.mrf.mxu0
    %v10060 = vadd.f32 %v9811, %v10059
    %v10061 = vpop.f32.mrf.mxu0
    %v10062 = vadd.f32 %v9813, %v10061
    %10063 = vmatmul.bf16.gmra.mxu0 %v8394
    %v10064 = vpop.f32.mrf.mxu0
    %v10065 = vadd.f32 %v9816, %v10064
    %v10066 = vpop.f32.mrf.mxu0
    %v10067 = vadd.f32 %v9818, %v10066
    %10068 = vmatmul.bf16.gmra.mxu0 %v8397
    %v10069 = vpop.f32.mrf.mxu0
    %v10070 = vadd.f32 %v9821, %v10069
    %v10071 = vpop.f32.mrf.mxu0
    %v10072 = vadd.f32 %v9823, %v10071
    %10073 = vmatmul.bf16.gmra.mxu0 %v8400
    %v10074 = vpop.f32.mrf.mxu0
    %v10075 = vadd.f32 %v9826, %v10074
    %v10076 = vpop.f32.mrf.mxu0
    %v10077 = vadd.f32 %v9828, %v10076
    %10078 = vdwg.mxu0
    %10079 = vmatpush.bf16.msra.mxu0 %v8856
    %10080 = vmatpush.bf16.msra.mxu0 %v8853
    %10081 = vmatpush.bf16.msra.mxu0 %v8850
    %10082 = vmatpush.bf16.msra.mxu0 %v8847
    %10083 = vmatpush.bf16.msra.mxu0 %v8844
    %10084 = vmatpush.bf16.msra.mxu0 %v8841
    %10085 = vmatpush.bf16.msra.mxu0 %v8838
    %10086 = vmatpush.bf16.msra.mxu0 %v8835
    %10087 = vmatmul.bf16.gmra.mxu0 %v8260
    %v10088 = vpop.f32.mrf.mxu0
    %v10089 = vadd.f32 %v9840, %v10088
    %v10090 = vpop.f32.mrf.mxu0
    %v10091 = vadd.f32 %v9842, %v10090
    %10092 = vmatmul.bf16.gmra.mxu0 %v8263
    %v10093 = vpop.f32.mrf.mxu0
    %v10094 = vadd.f32 %v9845, %v10093
    %v10095 = vpop.f32.mrf.mxu0
    %v10096 = vadd.f32 %v9847, %v10095
    %10097 = vmatmul.bf16.gmra.mxu0 %v8266
    %v10098 = vpop.f32.mrf.mxu0
    %v10099 = vadd.f32 %v9850, %v10098
    %v10100 = vpop.f32.mrf.mxu0
    %v10101 = vadd.f32 %v9852, %v10100
    %10102 = vmatmul.bf16.gmra.mxu0 %v8269
    %v10103 = vpop.f32.mrf.mxu0
    %v10104 = vadd.f32 %v9855, %v10103
    %v10105 = vpop.f32.mrf.mxu0
    %v10106 = vadd.f32 %v9857, %v10105
    %10107 = vmatmul.bf16.gmra.mxu0 %v8272
    %v10108 = vpop.f32.mrf.mxu0
    %v10109 = vadd.f32 %v9860, %v10108
    %v10110 = vpop.f32.mrf.mxu0
    %v10111 = vadd.f32 %v9862, %v10110
    %10112 = vmatmul.bf16.gmra.mxu0 %v8275
    %v10113 = vpop.f32.mrf.mxu0
    %v10114 = vadd.f32 %v9865, %v10113
    %v10115 = vpop.f32.mrf.mxu0
    %v10116 = vadd.f32 %v9867, %v10115
    %10117 = vmatmul.bf16.gmra.mxu0 %v8278
    %v10118 = vpop.f32.mrf.mxu0
    %v10119 = vadd.f32 %v9870, %v10118
    %v10120 = vpop.f32.mrf.mxu0
    %v10121 = vadd.f32 %v9872, %v10120
    %10122 = vmatmul.bf16.gmra.mxu0 %v8281
    %v10123 = vpop.f32.mrf.mxu0
    %v10124 = vadd.f32 %v9875, %v10123
    %v10125 = vpop.f32.mrf.mxu0
    %v10126 = vadd.f32 %v9877, %v10125
    %10127 = vmatmul.bf16.gmra.mxu0 %v8284
    %v10128 = vpop.f32.mrf.mxu0
    %v10129 = vadd.f32 %v9880, %v10128
    %v10130 = vpop.f32.mrf.mxu0
    %v10131 = vadd.f32 %v9882, %v10130
    %10132 = vmatmul.bf16.gmra.mxu0 %v8287
    %v10133 = vpop.f32.mrf.mxu0
    %v10134 = vadd.f32 %v9885, %v10133
    %v10135 = vpop.f32.mrf.mxu0
    %v10136 = vadd.f32 %v9887, %v10135
    %10137 = vmatmul.bf16.gmra.mxu0 %v8290
    %v10138 = vpop.f32.mrf.mxu0
    %v10139 = vadd.f32 %v9890, %v10138
    %v10140 = vpop.f32.mrf.mxu0
    %v10141 = vadd.f32 %v9892, %v10140
    %10142 = vmatmul.bf16.gmra.mxu0 %v8293
    %v10143 = vpop.f32.mrf.mxu0
    %v10144 = vadd.f32 %v9895, %v10143
    %v10145 = vpop.f32.mrf.mxu0
    %v10146 = vadd.f32 %v9897, %v10145
    %10147 = vmatmul.bf16.gmra.mxu0 %v8296
    %v10148 = vpop.f32.mrf.mxu0
    %v10149 = vadd.f32 %v9900, %v10148
    %v10150 = vpop.f32.mrf.mxu0
    %v10151 = vadd.f32 %v9902, %v10150
    %10152 = vmatmul.bf16.gmra.mxu0 %v8299
    %v10153 = vpop.f32.mrf.mxu0
    %v10154 = vadd.f32 %v9905, %v10153
    %v10155 = vpop.f32.mrf.mxu0
    %v10156 = vadd.f32 %v9907, %v10155
    %10157 = vmatmul.bf16.gmra.mxu0 %v8302
    %v10158 = vpop.f32.mrf.mxu0
    %v10159 = vadd.f32 %v9910, %v10158
    %v10160 = vpop.f32.mrf.mxu0
    %v10161 = vadd.f32 %v9912, %v10160
    %10162 = vmatmul.bf16.gmra.mxu0 %v8305
    %v10163 = vpop.f32.mrf.mxu0
    %v10164 = vadd.f32 %v9915, %v10163
    %v10165 = vpop.f32.mrf.mxu0
    %v10166 = vadd.f32 %v9917, %v10165
    %10167 = vmatmul.bf16.gmra.mxu0 %v8308
    %v10168 = vpop.f32.mrf.mxu0
    %v10169 = vadd.f32 %v9920, %v10168
    %v10170 = vpop.f32.mrf.mxu0
    %v10171 = vadd.f32 %v9922, %v10170
    %10172 = vmatmul.bf16.gmra.mxu0 %v8311
    %v10173 = vpop.f32.mrf.mxu0
    %v10174 = vadd.f32 %v9925, %v10173
    %v10175 = vpop.f32.mrf.mxu0
    %v10176 = vadd.f32 %v9927, %v10175
    %10177 = vmatmul.bf16.gmra.mxu0 %v8314
    %v10178 = vpop.f32.mrf.mxu0
    %v10179 = vadd.f32 %v9930, %v10178
    %v10180 = vpop.f32.mrf.mxu0
    %v10181 = vadd.f32 %v9932, %v10180
    %10182 = vmatmul.bf16.gmra.mxu0 %v8317
    %v10183 = vpop.f32.mrf.mxu0
    %v10184 = vadd.f32 %v9935, %v10183
    %v10185 = vpop.f32.mrf.mxu0
    %v10186 = vadd.f32 %v9937, %v10185
    %10187 = vmatmul.bf16.gmra.mxu0 %v8320
    %v10188 = vpop.f32.mrf.mxu0
    %v10189 = vadd.f32 %v9940, %v10188
    %v10190 = vpop.f32.mrf.mxu0
    %v10191 = vadd.f32 %v9942, %v10190
    %10192 = vmatmul.bf16.gmra.mxu0 %v8323
    %v10193 = vpop.f32.mrf.mxu0
    %v10194 = vadd.f32 %v9945, %v10193
    %v10195 = vpop.f32.mrf.mxu0
    %v10196 = vadd.f32 %v9947, %v10195
    %10197 = vmatmul.bf16.gmra.mxu0 %v8326
    %v10198 = vpop.f32.mrf.mxu0
    %v10199 = vadd.f32 %v9950, %v10198
    %v10200 = vpop.f32.mrf.mxu0
    %v10201 = vadd.f32 %v9952, %v10200
    %10202 = vmatmul.bf16.gmra.mxu0 %v8329
    %v10203 = vpop.f32.mrf.mxu0
    %v10204 = vadd.f32 %v9955, %v10203
    %v10205 = vpop.f32.mrf.mxu0
    %v10206 = vadd.f32 %v9957, %v10205
    %10207 = vmatmul.bf16.gmra.mxu0 %v8332
    %v10208 = vpop.f32.mrf.mxu0
    %v10209 = vadd.f32 %v9960, %v10208
    %v10210 = vpop.f32.mrf.mxu0
    %v10211 = vadd.f32 %v9962, %v10210
    %10212 = vmatmul.bf16.gmra.mxu0 %v8335
    %v10213 = vpop.f32.mrf.mxu0
    %v10214 = vadd.f32 %v9965, %v10213
    %v10215 = vpop.f32.mrf.mxu0
    %v10216 = vadd.f32 %v9967, %v10215
    %10217 = vmatmul.bf16.gmra.mxu0 %v8338
    %v10218 = vpop.f32.mrf.mxu0
    %v10219 = vadd.f32 %v9970, %v10218
    %v10220 = vpop.f32.mrf.mxu0
    %v10221 = vadd.f32 %v9972, %v10220
    %10222 = vmatmul.bf16.gmra.mxu0 %v8341
    %v10223 = vpop.f32.mrf.mxu0
    %v10224 = vadd.f32 %v9975, %v10223
    %v10225 = vpop.f32.mrf.mxu0
    %v10226 = vadd.f32 %v9977, %v10225
    %10227 = vmatmul.bf16.gmra.mxu0 %v8344
    %v10228 = vpop.f32.mrf.mxu0
    %v10229 = vadd.f32 %v9980, %v10228
    %v10230 = vpop.f32.mrf.mxu0
    %v10231 = vadd.f32 %v9982, %v10230
    %10232 = vmatmul.bf16.gmra.mxu0 %v8347
    %v10233 = vpop.f32.mrf.mxu0
    %v10234 = vadd.f32 %v9985, %v10233
    %v10235 = vpop.f32.mrf.mxu0
    %v10236 = vadd.f32 %v9987, %v10235
    %10237 = vmatmul.bf16.gmra.mxu0 %v8350
    %v10238 = vpop.f32.mrf.mxu0
    %v10239 = vadd.f32 %v9990, %v10238
    %v10240 = vpop.f32.mrf.mxu0
    %v10241 = vadd.f32 %v9992, %v10240
    %10242 = vmatmul.bf16.gmra.mxu0 %v8353
    %v10243 = vpop.f32.mrf.mxu0
    %v10244 = vadd.f32 %v9995, %v10243
    %v10245 = vpop.f32.mrf.mxu0
    %v10246 = vadd.f32 %v9997, %v10245
    %10247 = vmatmul.bf16.gmra.mxu0 %v8356
    %v10248 = vpop.f32.mrf.mxu0
    %v10249 = vadd.f32 %v10000, %v10248
    %v10250 = vpop.f32.mrf.mxu0
    %v10251 = vadd.f32 %v10002, %v10250
    %10252 = vmatmul.bf16.gmra.mxu0 %v8359
    %v10253 = vpop.f32.mrf.mxu0
    %v10254 = vadd.f32 %v10005, %v10253
    %v10255 = vpop.f32.mrf.mxu0
    %v10256 = vadd.f32 %v10007, %v10255
    %10257 = vmatmul.bf16.gmra.mxu0 %v8362
    %v10258 = vpop.f32.mrf.mxu0
    %v10259 = vadd.f32 %v10010, %v10258
    %v10260 = vpop.f32.mrf.mxu0
    %v10261 = vadd.f32 %v10012, %v10260
    %10262 = vmatmul.bf16.gmra.mxu0 %v8365
    %v10263 = vpop.f32.mrf.mxu0
    %v10264 = vadd.f32 %v10015, %v10263
    %v10265 = vpop.f32.mrf.mxu0
    %v10266 = vadd.f32 %v10017, %v10265
    %10267 = vmatmul.bf16.gmra.mxu0 %v8368
    %v10268 = vpop.f32.mrf.mxu0
    %v10269 = vadd.f32 %v10020, %v10268
    %v10270 = vpop.f32.mrf.mxu0
    %v10271 = vadd.f32 %v10022, %v10270
    %10272 = vmatmul.bf16.gmra.mxu0 %v8371
    %v10273 = vpop.f32.mrf.mxu0
    %v10274 = vadd.f32 %v10025, %v10273
    %v10275 = vpop.f32.mrf.mxu0
    %v10276 = vadd.f32 %v10027, %v10275
    %10277 = vmatmul.bf16.gmra.mxu0 %v8374
    %v10278 = vpop.f32.mrf.mxu0
    %v10279 = vadd.f32 %v10030, %v10278
    %v10280 = vpop.f32.mrf.mxu0
    %v10281 = vadd.f32 %v10032, %v10280
    %10282 = vmatmul.bf16.gmra.mxu0 %v8377
    %v10283 = vpop.f32.mrf.mxu0
    %v10284 = vadd.f32 %v10035, %v10283
    %v10285 = vpop.f32.mrf.mxu0
    %v10286 = vadd.f32 %v10037, %v10285
    %10287 = vmatmul.bf16.gmra.mxu0 %v8380
    %v10288 = vpop.f32.mrf.mxu0
    %v10289 = vadd.f32 %v10040, %v10288
    %v10290 = vpop.f32.mrf.mxu0
    %v10291 = vadd.f32 %v10042, %v10290
    %10292 = vmatmul.bf16.gmra.mxu0 %v8383
    %v10293 = vpop.f32.mrf.mxu0
    %v10294 = vadd.f32 %v10045, %v10293
    %v10295 = vpop.f32.mrf.mxu0
    %v10296 = vadd.f32 %v10047, %v10295
    %10297 = vmatmul.bf16.gmra.mxu0 %v8386
    %v10298 = vpop.f32.mrf.mxu0
    %v10299 = vadd.f32 %v10050, %v10298
    %v10300 = vpop.f32.mrf.mxu0
    %v10301 = vadd.f32 %v10052, %v10300
    %10302 = vmatmul.bf16.gmra.mxu0 %v8389
    %v10303 = vpop.f32.mrf.mxu0
    %v10304 = vadd.f32 %v10055, %v10303
    %v10305 = vpop.f32.mrf.mxu0
    %v10306 = vadd.f32 %v10057, %v10305
    %10307 = vmatmul.bf16.gmra.mxu0 %v8392
    %v10308 = vpop.f32.mrf.mxu0
    %v10309 = vadd.f32 %v10060, %v10308
    %v10310 = vpop.f32.mrf.mxu0
    %v10311 = vadd.f32 %v10062, %v10310
    %10312 = vmatmul.bf16.gmra.mxu0 %v8395
    %v10313 = vpop.f32.mrf.mxu0
    %v10314 = vadd.f32 %v10065, %v10313
    %v10315 = vpop.f32.mrf.mxu0
    %v10316 = vadd.f32 %v10067, %v10315
    %10317 = vmatmul.bf16.gmra.mxu0 %v8398
    %v10318 = vpop.f32.mrf.mxu0
    %v10319 = vadd.f32 %v10070, %v10318
    %v10320 = vpop.f32.mrf.mxu0
    %v10321 = vadd.f32 %v10072, %v10320
    %10322 = vmatmul.bf16.gmra.mxu0 %v8401
    %v10323 = vpop.f32.mrf.mxu0
    %v10324 = vadd.f32 %v10075, %v10323
    %v10325 = vpop.f32.mrf.mxu0
    %v10326 = vadd.f32 %v10077, %v10325
    %10327 = vdwg.mxu0
    %10328 = vmatpush.bf16.msra.mxu0 %v8809
    %10329 = vmatpush.bf16.msra.mxu0 %v8806
    %10330 = vmatpush.bf16.msra.mxu0 %v8803
    %10331 = vmatpush.bf16.msra.mxu0 %v8800
    %10332 = vmatpush.bf16.msra.mxu0 %v8797
    %10333 = vmatpush.bf16.msra.mxu0 %v8794
    %10334 = vmatpush.bf16.msra.mxu0 %v8791
    %10335 = vmatpush.bf16.msra.mxu0 %v8788
    %10336 = vmatmul.bf16.gmra.mxu0 %v8258
    %v10337 = vpop.f32.mrf.mxu0
    %v10338 = vadd.f32 0.0, %v10337
    %v10339 = vpop.f32.mrf.mxu0
    %v10340 = vadd.f32 0.0, %v10339
    %10341 = vmatmul.bf16.gmra.mxu0 %v8261
    %v10342 = vpop.f32.mrf.mxu0
    %v10343 = vadd.f32 0.0, %v10342
    %v10344 = vpop.f32.mrf.mxu0
    %v10345 = vadd.f32 0.0, %v10344
    %10346 = vmatmul.bf16.gmra.mxu0 %v8264
    %v10347 = vpop.f32.mrf.mxu0
    %v10348 = vadd.f32 0.0, %v10347
    %v10349 = vpop.f32.mrf.mxu0
    %v10350 = vadd.f32 0.0, %v10349
    %10351 = vmatmul.bf16.gmra.mxu0 %v8267
    %v10352 = vpop.f32.mrf.mxu0
    %v10353 = vadd.f32 0.0, %v10352
    %v10354 = vpop.f32.mrf.mxu0
    %v10355 = vadd.f32 0.0, %v10354
    %10356 = vmatmul.bf16.gmra.mxu0 %v8270
    %v10357 = vpop.f32.mrf.mxu0
    %v10358 = vadd.f32 0.0, %v10357
    %v10359 = vpop.f32.mrf.mxu0
    %v10360 = vadd.f32 0.0, %v10359
    %10361 = vmatmul.bf16.gmra.mxu0 %v8273
    %v10362 = vpop.f32.mrf.mxu0
    %v10363 = vadd.f32 0.0, %v10362
    %v10364 = vpop.f32.mrf.mxu0
    %v10365 = vadd.f32 0.0, %v10364
    %10366 = vmatmul.bf16.gmra.mxu0 %v8276
    %v10367 = vpop.f32.mrf.mxu0
    %v10368 = vadd.f32 0.0, %v10367
    %v10369 = vpop.f32.mrf.mxu0
    %v10370 = vadd.f32 0.0, %v10369
    %10371 = vmatmul.bf16.gmra.mxu0 %v8279
    %v10372 = vpop.f32.mrf.mxu0
    %v10373 = vadd.f32 0.0, %v10372
    %v10374 = vpop.f32.mrf.mxu0
    %v10375 = vadd.f32 0.0, %v10374
    %10376 = vmatmul.bf16.gmra.mxu0 %v8282
    %v10377 = vpop.f32.mrf.mxu0
    %v10378 = vadd.f32 0.0, %v10377
    %v10379 = vpop.f32.mrf.mxu0
    %v10380 = vadd.f32 0.0, %v10379
    %10381 = vmatmul.bf16.gmra.mxu0 %v8285
    %v10382 = vpop.f32.mrf.mxu0
    %v10383 = vadd.f32 0.0, %v10382
    %v10384 = vpop.f32.mrf.mxu0
    %v10385 = vadd.f32 0.0, %v10384
    %10386 = vmatmul.bf16.gmra.mxu0 %v8288
    %v10387 = vpop.f32.mrf.mxu0
    %v10388 = vadd.f32 0.0, %v10387
    %v10389 = vpop.f32.mrf.mxu0
    %v10390 = vadd.f32 0.0, %v10389
    %10391 = vmatmul.bf16.gmra.mxu0 %v8291
    %v10392 = vpop.f32.mrf.mxu0
    %v10393 = vadd.f32 0.0, %v10392
    %v10394 = vpop.f32.mrf.mxu0
    %v10395 = vadd.f32 0.0, %v10394
    %10396 = vmatmul.bf16.gmra.mxu0 %v8294
    %v10397 = vpop.f32.mrf.mxu0
    %v10398 = vadd.f32 0.0, %v10397
    %v10399 = vpop.f32.mrf.mxu0
    %v10400 = vadd.f32 0.0, %v10399
    %10401 = vmatmul.bf16.gmra.mxu0 %v8297
    %v10402 = vpop.f32.mrf.mxu0
    %v10403 = vadd.f32 0.0, %v10402
    %v10404 = vpop.f32.mrf.mxu0
    %v10405 = vadd.f32 0.0, %v10404
    %10406 = vmatmul.bf16.gmra.mxu0 %v8300
    %v10407 = vpop.f32.mrf.mxu0
    %v10408 = vadd.f32 0.0, %v10407
    %v10409 = vpop.f32.mrf.mxu0
    %v10410 = vadd.f32 0.0, %v10409
    %10411 = vmatmul.bf16.gmra.mxu0 %v8303
    %v10412 = vpop.f32.mrf.mxu0
    %v10413 = vadd.f32 0.0, %v10412
    %v10414 = vpop.f32.mrf.mxu0
    %v10415 = vadd.f32 0.0, %v10414
    %10416 = vmatmul.bf16.gmra.mxu0 %v8306
    %v10417 = vpop.f32.mrf.mxu0
    %v10418 = vadd.f32 0.0, %v10417
    %v10419 = vpop.f32.mrf.mxu0
    %v10420 = vadd.f32 0.0, %v10419
    %10421 = vmatmul.bf16.gmra.mxu0 %v8309
    %v10422 = vpop.f32.mrf.mxu0
    %v10423 = vadd.f32 0.0, %v10422
    %v10424 = vpop.f32.mrf.mxu0
    %v10425 = vadd.f32 0.0, %v10424
    %10426 = vmatmul.bf16.gmra.mxu0 %v8312
    %v10427 = vpop.f32.mrf.mxu0
    %v10428 = vadd.f32 0.0, %v10427
    %v10429 = vpop.f32.mrf.mxu0
    %v10430 = vadd.f32 0.0, %v10429
    %10431 = vmatmul.bf16.gmra.mxu0 %v8315
    %v10432 = vpop.f32.mrf.mxu0
    %v10433 = vadd.f32 0.0, %v10432
    %v10434 = vpop.f32.mrf.mxu0
    %v10435 = vadd.f32 0.0, %v10434
    %10436 = vmatmul.bf16.gmra.mxu0 %v8318
    %v10437 = vpop.f32.mrf.mxu0
    %v10438 = vadd.f32 0.0, %v10437
    %v10439 = vpop.f32.mrf.mxu0
    %v10440 = vadd.f32 0.0, %v10439
    %10441 = vmatmul.bf16.gmra.mxu0 %v8321
    %v10442 = vpop.f32.mrf.mxu0
    %v10443 = vadd.f32 0.0, %v10442
    %v10444 = vpop.f32.mrf.mxu0
    %v10445 = vadd.f32 0.0, %v10444
    %10446 = vmatmul.bf16.gmra.mxu0 %v8324
    %v10447 = vpop.f32.mrf.mxu0
    %v10448 = vadd.f32 0.0, %v10447
    %v10449 = vpop.f32.mrf.mxu0
    %v10450 = vadd.f32 0.0, %v10449
    %10451 = vmatmul.bf16.gmra.mxu0 %v8327
    %v10452 = vpop.f32.mrf.mxu0
    %v10453 = vadd.f32 0.0, %v10452
    %v10454 = vpop.f32.mrf.mxu0
    %v10455 = vadd.f32 0.0, %v10454
    %10456 = vmatmul.bf16.gmra.mxu0 %v8330
    %v10457 = vpop.f32.mrf.mxu0
    %v10458 = vadd.f32 0.0, %v10457
    %v10459 = vpop.f32.mrf.mxu0
    %v10460 = vadd.f32 0.0, %v10459
    %10461 = vmatmul.bf16.gmra.mxu0 %v8333
    %v10462 = vpop.f32.mrf.mxu0
    %v10463 = vadd.f32 0.0, %v10462
    %v10464 = vpop.f32.mrf.mxu0
    %v10465 = vadd.f32 0.0, %v10464
    %10466 = vmatmul.bf16.gmra.mxu0 %v8336
    %v10467 = vpop.f32.mrf.mxu0
    %v10468 = vadd.f32 0.0, %v10467
    %v10469 = vpop.f32.mrf.mxu0
    %v10470 = vadd.f32 0.0, %v10469
    %10471 = vmatmul.bf16.gmra.mxu0 %v8339
    %v10472 = vpop.f32.mrf.mxu0
    %v10473 = vadd.f32 0.0, %v10472
    %v10474 = vpop.f32.mrf.mxu0
    %v10475 = vadd.f32 0.0, %v10474
    %10476 = vmatmul.bf16.gmra.mxu0 %v8342
    %v10477 = vpop.f32.mrf.mxu0
    %v10478 = vadd.f32 0.0, %v10477
    %v10479 = vpop.f32.mrf.mxu0
    %v10480 = vadd.f32 0.0, %v10479
    %10481 = vmatmul.bf16.gmra.mxu0 %v8345
    %v10482 = vpop.f32.mrf.mxu0
    %v10483 = vadd.f32 0.0, %v10482
    %v10484 = vpop.f32.mrf.mxu0
    %v10485 = vadd.f32 0.0, %v10484
    %10486 = vmatmul.bf16.gmra.mxu0 %v8348
    %v10487 = vpop.f32.mrf.mxu0
    %v10488 = vadd.f32 0.0, %v10487
    %v10489 = vpop.f32.mrf.mxu0
    %v10490 = vadd.f32 0.0, %v10489
    %10491 = vmatmul.bf16.gmra.mxu0 %v8351
    %v10492 = vpop.f32.mrf.mxu0
    %v10493 = vadd.f32 0.0, %v10492
    %v10494 = vpop.f32.mrf.mxu0
    %v10495 = vadd.f32 0.0, %v10494
    %10496 = vmatmul.bf16.gmra.mxu0 %v8354
    %v10497 = vpop.f32.mrf.mxu0
    %v10498 = vadd.f32 0.0, %v10497
    %v10499 = vpop.f32.mrf.mxu0
    %v10500 = vadd.f32 0.0, %v10499
    %10501 = vmatmul.bf16.gmra.mxu0 %v8357
    %v10502 = vpop.f32.mrf.mxu0
    %v10503 = vadd.f32 0.0, %v10502
    %v10504 = vpop.f32.mrf.mxu0
    %v10505 = vadd.f32 0.0, %v10504
    %10506 = vmatmul.bf16.gmra.mxu0 %v8360
    %v10507 = vpop.f32.mrf.mxu0
    %v10508 = vadd.f32 0.0, %v10507
    %v10509 = vpop.f32.mrf.mxu0
    %v10510 = vadd.f32 0.0, %v10509
    %10511 = vmatmul.bf16.gmra.mxu0 %v8363
    %v10512 = vpop.f32.mrf.mxu0
    %v10513 = vadd.f32 0.0, %v10512
    %v10514 = vpop.f32.mrf.mxu0
    %v10515 = vadd.f32 0.0, %v10514
    %10516 = vmatmul.bf16.gmra.mxu0 %v8366
    %v10517 = vpop.f32.mrf.mxu0
    %v10518 = vadd.f32 0.0, %v10517
    %v10519 = vpop.f32.mrf.mxu0
    %v10520 = vadd.f32 0.0, %v10519
    %10521 = vmatmul.bf16.gmra.mxu0 %v8369
    %v10522 = vpop.f32.mrf.mxu0
    %v10523 = vadd.f32 0.0, %v10522
    %v10524 = vpop.f32.mrf.mxu0
    %v10525 = vadd.f32 0.0, %v10524
    %10526 = vmatmul.bf16.gmra.mxu0 %v8372
    %v10527 = vpop.f32.mrf.mxu0
    %v10528 = vadd.f32 0.0, %v10527
    %v10529 = vpop.f32.mrf.mxu0
    %v10530 = vadd.f32 0.0, %v10529
    %10531 = vmatmul.bf16.gmra.mxu0 %v8375
    %v10532 = vpop.f32.mrf.mxu0
    %v10533 = vadd.f32 0.0, %v10532
    %v10534 = vpop.f32.mrf.mxu0
    %v10535 = vadd.f32 0.0, %v10534
    %10536 = vmatmul.bf16.gmra.mxu0 %v8378
    %v10537 = vpop.f32.mrf.mxu0
    %v10538 = vadd.f32 0.0, %v10537
    %v10539 = vpop.f32.mrf.mxu0
    %v10540 = vadd.f32 0.0, %v10539
    %10541 = vmatmul.bf16.gmra.mxu0 %v8381
    %v10542 = vpop.f32.mrf.mxu0
    %v10543 = vadd.f32 0.0, %v10542
    %v10544 = vpop.f32.mrf.mxu0
    %v10545 = vadd.f32 0.0, %v10544
    %10546 = vmatmul.bf16.gmra.mxu0 %v8384
    %v10547 = vpop.f32.mrf.mxu0
    %v10548 = vadd.f32 0.0, %v10547
    %v10549 = vpop.f32.mrf.mxu0
    %v10550 = vadd.f32 0.0, %v10549
    %10551 = vmatmul.bf16.gmra.mxu0 %v8387
    %v10552 = vpop.f32.mrf.mxu0
    %v10553 = vadd.f32 0.0, %v10552
    %v10554 = vpop.f32.mrf.mxu0
    %v10555 = vadd.f32 0.0, %v10554
    %10556 = vmatmul.bf16.gmra.mxu0 %v8390
    %v10557 = vpop.f32.mrf.mxu0
    %v10558 = vadd.f32 0.0, %v10557
    %v10559 = vpop.f32.mrf.mxu0
    %v10560 = vadd.f32 0.0, %v10559
    %10561 = vmatmul.bf16.gmra.mxu0 %v8393
    %v10562 = vpop.f32.mrf.mxu0
    %v10563 = vadd.f32 0.0, %v10562
    %v10564 = vpop.f32.mrf.mxu0
    %v10565 = vadd.f32 0.0, %v10564
    %10566 = vmatmul.bf16.gmra.mxu0 %v8396
    %v10567 = vpop.f32.mrf.mxu0
    %v10568 = vadd.f32 0.0, %v10567
    %v10569 = vpop.f32.mrf.mxu0
    %v10570 = vadd.f32 0.0, %v10569
    %10571 = vmatmul.bf16.gmra.mxu0 %v8399
    %v10572 = vpop.f32.mrf.mxu0
    %v10573 = vadd.f32 0.0, %v10572
    %v10574 = vpop.f32.mrf.mxu0
    %v10575 = vadd.f32 0.0, %v10574
    %10576 = vdwg.mxu0
    %10577 = vmatpush.bf16.msra.mxu0 %v8833
    %10578 = vmatpush.bf16.msra.mxu0 %v8830
    %10579 = vmatpush.bf16.msra.mxu0 %v8827
    %10580 = vmatpush.bf16.msra.mxu0 %v8824
    %10581 = vmatpush.bf16.msra.mxu0 %v8821
    %10582 = vmatpush.bf16.msra.mxu0 %v8818
    %10583 = vmatpush.bf16.msra.mxu0 %v8815
    %10584 = vmatpush.bf16.msra.mxu0 %v8812
    %10585 = vmatmul.bf16.gmra.mxu0 %v8259
    %v10586 = vpop.f32.mrf.mxu0
    %v10587 = vadd.f32 %v10338, %v10586
    %v10588 = vpop.f32.mrf.mxu0
    %v10589 = vadd.f32 %v10340, %v10588
    %10590 = vmatmul.bf16.gmra.mxu0 %v8262
    %v10591 = vpop.f32.mrf.mxu0
    %v10592 = vadd.f32 %v10343, %v10591
    %v10593 = vpop.f32.mrf.mxu0
    %v10594 = vadd.f32 %v10345, %v10593
    %10595 = vmatmul.bf16.gmra.mxu0 %v8265
    %v10596 = vpop.f32.mrf.mxu0
    %v10597 = vadd.f32 %v10348, %v10596
    %v10598 = vpop.f32.mrf.mxu0
    %v10599 = vadd.f32 %v10350, %v10598
    %10600 = vmatmul.bf16.gmra.mxu0 %v8268
    %v10601 = vpop.f32.mrf.mxu0
    %v10602 = vadd.f32 %v10353, %v10601
    %v10603 = vpop.f32.mrf.mxu0
    %v10604 = vadd.f32 %v10355, %v10603
    %10605 = vmatmul.bf16.gmra.mxu0 %v8271
    %v10606 = vpop.f32.mrf.mxu0
    %v10607 = vadd.f32 %v10358, %v10606
    %v10608 = vpop.f32.mrf.mxu0
    %v10609 = vadd.f32 %v10360, %v10608
    %10610 = vmatmul.bf16.gmra.mxu0 %v8274
    %v10611 = vpop.f32.mrf.mxu0
    %v10612 = vadd.f32 %v10363, %v10611
    %v10613 = vpop.f32.mrf.mxu0
    %v10614 = vadd.f32 %v10365, %v10613
    %10615 = vmatmul.bf16.gmra.mxu0 %v8277
    %v10616 = vpop.f32.mrf.mxu0
    %v10617 = vadd.f32 %v10368, %v10616
    %v10618 = vpop.f32.mrf.mxu0
    %v10619 = vadd.f32 %v10370, %v10618
    %10620 = vmatmul.bf16.gmra.mxu0 %v8280
    %v10621 = vpop.f32.mrf.mxu0
    %v10622 = vadd.f32 %v10373, %v10621
    %v10623 = vpop.f32.mrf.mxu0
    %v10624 = vadd.f32 %v10375, %v10623
    %10625 = vmatmul.bf16.gmra.mxu0 %v8283
    %v10626 = vpop.f32.mrf.mxu0
    %v10627 = vadd.f32 %v10378, %v10626
    %v10628 = vpop.f32.mrf.mxu0
    %v10629 = vadd.f32 %v10380, %v10628
    %10630 = vmatmul.bf16.gmra.mxu0 %v8286
    %v10631 = vpop.f32.mrf.mxu0
    %v10632 = vadd.f32 %v10383, %v10631
    %v10633 = vpop.f32.mrf.mxu0
    %v10634 = vadd.f32 %v10385, %v10633
    %10635 = vmatmul.bf16.gmra.mxu0 %v8289
    %v10636 = vpop.f32.mrf.mxu0
    %v10637 = vadd.f32 %v10388, %v10636
    %v10638 = vpop.f32.mrf.mxu0
    %v10639 = vadd.f32 %v10390, %v10638
    %10640 = vmatmul.bf16.gmra.mxu0 %v8292
    %v10641 = vpop.f32.mrf.mxu0
    %v10642 = vadd.f32 %v10393, %v10641
    %v10643 = vpop.f32.mrf.mxu0
    %v10644 = vadd.f32 %v10395, %v10643
    %10645 = vmatmul.bf16.gmra.mxu0 %v8295
    %v10646 = vpop.f32.mrf.mxu0
    %v10647 = vadd.f32 %v10398, %v10646
    %v10648 = vpop.f32.mrf.mxu0
    %v10649 = vadd.f32 %v10400, %v10648
    %10650 = vmatmul.bf16.gmra.mxu0 %v8298
    %v10651 = vpop.f32.mrf.mxu0
    %v10652 = vadd.f32 %v10403, %v10651
    %v10653 = vpop.f32.mrf.mxu0
    %v10654 = vadd.f32 %v10405, %v10653
    %10655 = vmatmul.bf16.gmra.mxu0 %v8301
    %v10656 = vpop.f32.mrf.mxu0
    %v10657 = vadd.f32 %v10408, %v10656
    %v10658 = vpop.f32.mrf.mxu0
    %v10659 = vadd.f32 %v10410, %v10658
    %10660 = vmatmul.bf16.gmra.mxu0 %v8304
    %v10661 = vpop.f32.mrf.mxu0
    %v10662 = vadd.f32 %v10413, %v10661
    %v10663 = vpop.f32.mrf.mxu0
    %v10664 = vadd.f32 %v10415, %v10663
    %10665 = vmatmul.bf16.gmra.mxu0 %v8307
    %v10666 = vpop.f32.mrf.mxu0
    %v10667 = vadd.f32 %v10418, %v10666
    %v10668 = vpop.f32.mrf.mxu0
    %v10669 = vadd.f32 %v10420, %v10668
    %10670 = vmatmul.bf16.gmra.mxu0 %v8310
    %v10671 = vpop.f32.mrf.mxu0
    %v10672 = vadd.f32 %v10423, %v10671
    %v10673 = vpop.f32.mrf.mxu0
    %v10674 = vadd.f32 %v10425, %v10673
    %10675 = vmatmul.bf16.gmra.mxu0 %v8313
    %v10676 = vpop.f32.mrf.mxu0
    %v10677 = vadd.f32 %v10428, %v10676
    %v10678 = vpop.f32.mrf.mxu0
    %v10679 = vadd.f32 %v10430, %v10678
    %10680 = vmatmul.bf16.gmra.mxu0 %v8316
    %v10681 = vpop.f32.mrf.mxu0
    %v10682 = vadd.f32 %v10433, %v10681
    %v10683 = vpop.f32.mrf.mxu0
    %v10684 = vadd.f32 %v10435, %v10683
    %10685 = vmatmul.bf16.gmra.mxu0 %v8319
    %v10686 = vpop.f32.mrf.mxu0
    %v10687 = vadd.f32 %v10438, %v10686
    %v10688 = vpop.f32.mrf.mxu0
    %v10689 = vadd.f32 %v10440, %v10688
    %10690 = vmatmul.bf16.gmra.mxu0 %v8322
    %v10691 = vpop.f32.mrf.mxu0
    %v10692 = vadd.f32 %v10443, %v10691
    %v10693 = vpop.f32.mrf.mxu0
    %v10694 = vadd.f32 %v10445, %v10693
    %10695 = vmatmul.bf16.gmra.mxu0 %v8325
    %v10696 = vpop.f32.mrf.mxu0
    %v10697 = vadd.f32 %v10448, %v10696
    %v10698 = vpop.f32.mrf.mxu0
    %v10699 = vadd.f32 %v10450, %v10698
    %10700 = vmatmul.bf16.gmra.mxu0 %v8328
    %v10701 = vpop.f32.mrf.mxu0
    %v10702 = vadd.f32 %v10453, %v10701
    %v10703 = vpop.f32.mrf.mxu0
    %v10704 = vadd.f32 %v10455, %v10703
    %10705 = vmatmul.bf16.gmra.mxu0 %v8331
    %v10706 = vpop.f32.mrf.mxu0
    %v10707 = vadd.f32 %v10458, %v10706
    %v10708 = vpop.f32.mrf.mxu0
    %v10709 = vadd.f32 %v10460, %v10708
    %10710 = vmatmul.bf16.gmra.mxu0 %v8334
    %v10711 = vpop.f32.mrf.mxu0
    %v10712 = vadd.f32 %v10463, %v10711
    %v10713 = vpop.f32.mrf.mxu0
    %v10714 = vadd.f32 %v10465, %v10713
    %10715 = vmatmul.bf16.gmra.mxu0 %v8337
    %v10716 = vpop.f32.mrf.mxu0
    %v10717 = vadd.f32 %v10468, %v10716
    %v10718 = vpop.f32.mrf.mxu0
    %v10719 = vadd.f32 %v10470, %v10718
    %10720 = vmatmul.bf16.gmra.mxu0 %v8340
    %v10721 = vpop.f32.mrf.mxu0
    %v10722 = vadd.f32 %v10473, %v10721
    %v10723 = vpop.f32.mrf.mxu0
    %v10724 = vadd.f32 %v10475, %v10723
    %10725 = vmatmul.bf16.gmra.mxu0 %v8343
    %v10726 = vpop.f32.mrf.mxu0
    %v10727 = vadd.f32 %v10478, %v10726
    %v10728 = vpop.f32.mrf.mxu0
    %v10729 = vadd.f32 %v10480, %v10728
    %10730 = vmatmul.bf16.gmra.mxu0 %v8346
    %v10731 = vpop.f32.mrf.mxu0
    %v10732 = vadd.f32 %v10483, %v10731
    %v10733 = vpop.f32.mrf.mxu0
    %v10734 = vadd.f32 %v10485, %v10733
    %10735 = vmatmul.bf16.gmra.mxu0 %v8349
    %v10736 = vpop.f32.mrf.mxu0
    %v10737 = vadd.f32 %v10488, %v10736
    %v10738 = vpop.f32.mrf.mxu0
    %v10739 = vadd.f32 %v10490, %v10738
    %10740 = vmatmul.bf16.gmra.mxu0 %v8352
    %v10741 = vpop.f32.mrf.mxu0
    %v10742 = vadd.f32 %v10493, %v10741
    %v10743 = vpop.f32.mrf.mxu0
    %v10744 = vadd.f32 %v10495, %v10743
    %10745 = vmatmul.bf16.gmra.mxu0 %v8355
    %v10746 = vpop.f32.mrf.mxu0
    %v10747 = vadd.f32 %v10498, %v10746
    %v10748 = vpop.f32.mrf.mxu0
    %v10749 = vadd.f32 %v10500, %v10748
    %10750 = vmatmul.bf16.gmra.mxu0 %v8358
    %v10751 = vpop.f32.mrf.mxu0
    %v10752 = vadd.f32 %v10503, %v10751
    %v10753 = vpop.f32.mrf.mxu0
    %v10754 = vadd.f32 %v10505, %v10753
    %10755 = vmatmul.bf16.gmra.mxu0 %v8361
    %v10756 = vpop.f32.mrf.mxu0
    %v10757 = vadd.f32 %v10508, %v10756
    %v10758 = vpop.f32.mrf.mxu0
    %v10759 = vadd.f32 %v10510, %v10758
    %10760 = vmatmul.bf16.gmra.mxu0 %v8364
    %v10761 = vpop.f32.mrf.mxu0
    %v10762 = vadd.f32 %v10513, %v10761
    %v10763 = vpop.f32.mrf.mxu0
    %v10764 = vadd.f32 %v10515, %v10763
    %10765 = vmatmul.bf16.gmra.mxu0 %v8367
    %v10766 = vpop.f32.mrf.mxu0
    %v10767 = vadd.f32 %v10518, %v10766
    %v10768 = vpop.f32.mrf.mxu0
    %v10769 = vadd.f32 %v10520, %v10768
    %10770 = vmatmul.bf16.gmra.mxu0 %v8370
    %v10771 = vpop.f32.mrf.mxu0
    %v10772 = vadd.f32 %v10523, %v10771
    %v10773 = vpop.f32.mrf.mxu0
    %v10774 = vadd.f32 %v10525, %v10773
    %10775 = vmatmul.bf16.gmra.mxu0 %v8373
    %v10776 = vpop.f32.mrf.mxu0
    %v10777 = vadd.f32 %v10528, %v10776
    %v10778 = vpop.f32.mrf.mxu0
    %v10779 = vadd.f32 %v10530, %v10778
    %10780 = vmatmul.bf16.gmra.mxu0 %v8376
    %v10781 = vpop.f32.mrf.mxu0
    %v10782 = vadd.f32 %v10533, %v10781
    %v10783 = vpop.f32.mrf.mxu0
    %v10784 = vadd.f32 %v10535, %v10783
    %10785 = vmatmul.bf16.gmra.mxu0 %v8379
    %v10786 = vpop.f32.mrf.mxu0
    %v10787 = vadd.f32 %v10538, %v10786
    %v10788 = vpop.f32.mrf.mxu0
    %v10789 = vadd.f32 %v10540, %v10788
    %10790 = vmatmul.bf16.gmra.mxu0 %v8382
    %v10791 = vpop.f32.mrf.mxu0
    %v10792 = vadd.f32 %v10543, %v10791
    %v10793 = vpop.f32.mrf.mxu0
    %v10794 = vadd.f32 %v10545, %v10793
    %10795 = vmatmul.bf16.gmra.mxu0 %v8385
    %v10796 = vpop.f32.mrf.mxu0
    %v10797 = vadd.f32 %v10548, %v10796
    %v10798 = vpop.f32.mrf.mxu0
    %v10799 = vadd.f32 %v10550, %v10798
    %10800 = vmatmul.bf16.gmra.mxu0 %v8388
    %v10801 = vpop.f32.mrf.mxu0
    %v10802 = vadd.f32 %v10553, %v10801
    %v10803 = vpop.f32.mrf.mxu0
    %v10804 = vadd.f32 %v10555, %v10803
    %10805 = vmatmul.bf16.gmra.mxu0 %v8391
    %v10806 = vpop.f32.mrf.mxu0
    %v10807 = vadd.f32 %v10558, %v10806
    %v10808 = vpop.f32.mrf.mxu0
    %v10809 = vadd.f32 %v10560, %v10808
    %10810 = vmatmul.bf16.gmra.mxu0 %v8394
    %v10811 = vpop.f32.mrf.mxu0
    %v10812 = vadd.f32 %v10563, %v10811
    %v10813 = vpop.f32.mrf.mxu0
    %v10814 = vadd.f32 %v10565, %v10813
    %10815 = vmatmul.bf16.gmra.mxu0 %v8397
    %v10816 = vpop.f32.mrf.mxu0
    %v10817 = vadd.f32 %v10568, %v10816
    %v10818 = vpop.f32.mrf.mxu0
    %v10819 = vadd.f32 %v10570, %v10818
    %10820 = vmatmul.bf16.gmra.mxu0 %v8400
    %v10821 = vpop.f32.mrf.mxu0
    %v10822 = vadd.f32 %v10573, %v10821
    %v10823 = vpop.f32.mrf.mxu0
    %v10824 = vadd.f32 %v10575, %v10823
    %10825 = vdwg.mxu0
    %10826 = vmatpush.bf16.msra.mxu0 %v8857
    %10827 = vmatpush.bf16.msra.mxu0 %v8854
    %10828 = vmatpush.bf16.msra.mxu0 %v8851
    %10829 = vmatpush.bf16.msra.mxu0 %v8848
    %10830 = vmatpush.bf16.msra.mxu0 %v8845
    %10831 = vmatpush.bf16.msra.mxu0 %v8842
    %10832 = vmatpush.bf16.msra.mxu0 %v8839
    %10833 = vmatpush.bf16.msra.mxu0 %v8836
    %10834 = vmatmul.bf16.gmra.mxu0 %v8260
    %v10835 = vpop.f32.mrf.mxu0
    %v10836 = vadd.f32 %v10587, %v10835
    %v10837 = vpop.f32.mrf.mxu0
    %v10838 = vadd.f32 %v10589, %v10837
    %10839 = vmatmul.bf16.gmra.mxu0 %v8263
    %v10840 = vpop.f32.mrf.mxu0
    %v10841 = vadd.f32 %v10592, %v10840
    %v10842 = vpop.f32.mrf.mxu0
    %v10843 = vadd.f32 %v10594, %v10842
    %10844 = vmatmul.bf16.gmra.mxu0 %v8266
    %v10845 = vpop.f32.mrf.mxu0
    %v10846 = vadd.f32 %v10597, %v10845
    %v10847 = vpop.f32.mrf.mxu0
    %v10848 = vadd.f32 %v10599, %v10847
    %10849 = vmatmul.bf16.gmra.mxu0 %v8269
    %v10850 = vpop.f32.mrf.mxu0
    %v10851 = vadd.f32 %v10602, %v10850
    %v10852 = vpop.f32.mrf.mxu0
    %v10853 = vadd.f32 %v10604, %v10852
    %10854 = vmatmul.bf16.gmra.mxu0 %v8272
    %v10855 = vpop.f32.mrf.mxu0
    %v10856 = vadd.f32 %v10607, %v10855
    %v10857 = vpop.f32.mrf.mxu0
    %v10858 = vadd.f32 %v10609, %v10857
    %10859 = vmatmul.bf16.gmra.mxu0 %v8275
    %v10860 = vpop.f32.mrf.mxu0
    %v10861 = vadd.f32 %v10612, %v10860
    %v10862 = vpop.f32.mrf.mxu0
    %v10863 = vadd.f32 %v10614, %v10862
    %10864 = vmatmul.bf16.gmra.mxu0 %v8278
    %v10865 = vpop.f32.mrf.mxu0
    %v10866 = vadd.f32 %v10617, %v10865
    %v10867 = vpop.f32.mrf.mxu0
    %v10868 = vadd.f32 %v10619, %v10867
    %10869 = vmatmul.bf16.gmra.mxu0 %v8281
    %v10870 = vpop.f32.mrf.mxu0
    %v10871 = vadd.f32 %v10622, %v10870
    %v10872 = vpop.f32.mrf.mxu0
    %v10873 = vadd.f32 %v10624, %v10872
    %10874 = vmatmul.bf16.gmra.mxu0 %v8284
    %v10875 = vpop.f32.mrf.mxu0
    %v10876 = vadd.f32 %v10627, %v10875
    %v10877 = vpop.f32.mrf.mxu0
    %v10878 = vadd.f32 %v10629, %v10877
    %10879 = vmatmul.bf16.gmra.mxu0 %v8287
    %v10880 = vpop.f32.mrf.mxu0
    %v10881 = vadd.f32 %v10632, %v10880
    %v10882 = vpop.f32.mrf.mxu0
    %v10883 = vadd.f32 %v10634, %v10882
    %10884 = vmatmul.bf16.gmra.mxu0 %v8290
    %v10885 = vpop.f32.mrf.mxu0
    %v10886 = vadd.f32 %v10637, %v10885
    %v10887 = vpop.f32.mrf.mxu0
    %v10888 = vadd.f32 %v10639, %v10887
    %10889 = vmatmul.bf16.gmra.mxu0 %v8293
    %v10890 = vpop.f32.mrf.mxu0
    %v10891 = vadd.f32 %v10642, %v10890
    %v10892 = vpop.f32.mrf.mxu0
    %v10893 = vadd.f32 %v10644, %v10892
    %10894 = vmatmul.bf16.gmra.mxu0 %v8296
    %v10895 = vpop.f32.mrf.mxu0
    %v10896 = vadd.f32 %v10647, %v10895
    %v10897 = vpop.f32.mrf.mxu0
    %v10898 = vadd.f32 %v10649, %v10897
    %10899 = vmatmul.bf16.gmra.mxu0 %v8299
    %v10900 = vpop.f32.mrf.mxu0
    %v10901 = vadd.f32 %v10652, %v10900
    %v10902 = vpop.f32.mrf.mxu0
    %v10903 = vadd.f32 %v10654, %v10902
    %10904 = vmatmul.bf16.gmra.mxu0 %v8302
    %v10905 = vpop.f32.mrf.mxu0
    %v10906 = vadd.f32 %v10657, %v10905
    %v10907 = vpop.f32.mrf.mxu0
    %v10908 = vadd.f32 %v10659, %v10907
    %10909 = vmatmul.bf16.gmra.mxu0 %v8305
    %v10910 = vpop.f32.mrf.mxu0
    %v10911 = vadd.f32 %v10662, %v10910
    %v10912 = vpop.f32.mrf.mxu0
    %v10913 = vadd.f32 %v10664, %v10912
    %10914 = vmatmul.bf16.gmra.mxu0 %v8308
    %v10915 = vpop.f32.mrf.mxu0
    %v10916 = vadd.f32 %v10667, %v10915
    %v10917 = vpop.f32.mrf.mxu0
    %v10918 = vadd.f32 %v10669, %v10917
    %10919 = vmatmul.bf16.gmra.mxu0 %v8311
    %v10920 = vpop.f32.mrf.mxu0
    %v10921 = vadd.f32 %v10672, %v10920
    %v10922 = vpop.f32.mrf.mxu0
    %v10923 = vadd.f32 %v10674, %v10922
    %10924 = vmatmul.bf16.gmra.mxu0 %v8314
    %v10925 = vpop.f32.mrf.mxu0
    %v10926 = vadd.f32 %v10677, %v10925
    %v10927 = vpop.f32.mrf.mxu0
    %v10928 = vadd.f32 %v10679, %v10927
    %10929 = vmatmul.bf16.gmra.mxu0 %v8317
    %v10930 = vpop.f32.mrf.mxu0
    %v10931 = vadd.f32 %v10682, %v10930
    %v10932 = vpop.f32.mrf.mxu0
    %v10933 = vadd.f32 %v10684, %v10932
    %10934 = vmatmul.bf16.gmra.mxu0 %v8320
    %v10935 = vpop.f32.mrf.mxu0
    %v10936 = vadd.f32 %v10687, %v10935
    %v10937 = vpop.f32.mrf.mxu0
    %v10938 = vadd.f32 %v10689, %v10937
    %10939 = vmatmul.bf16.gmra.mxu0 %v8323
    %v10940 = vpop.f32.mrf.mxu0
    %v10941 = vadd.f32 %v10692, %v10940
    %v10942 = vpop.f32.mrf.mxu0
    %v10943 = vadd.f32 %v10694, %v10942
    %10944 = vmatmul.bf16.gmra.mxu0 %v8326
    %v10945 = vpop.f32.mrf.mxu0
    %v10946 = vadd.f32 %v10697, %v10945
    %v10947 = vpop.f32.mrf.mxu0
    %v10948 = vadd.f32 %v10699, %v10947
    %10949 = vmatmul.bf16.gmra.mxu0 %v8329
    %v10950 = vpop.f32.mrf.mxu0
    %v10951 = vadd.f32 %v10702, %v10950
    %v10952 = vpop.f32.mrf.mxu0
    %v10953 = vadd.f32 %v10704, %v10952
    %10954 = vmatmul.bf16.gmra.mxu0 %v8332
    %v10955 = vpop.f32.mrf.mxu0
    %v10956 = vadd.f32 %v10707, %v10955
    %v10957 = vpop.f32.mrf.mxu0
    %v10958 = vadd.f32 %v10709, %v10957
    %10959 = vmatmul.bf16.gmra.mxu0 %v8335
    %v10960 = vpop.f32.mrf.mxu0
    %v10961 = vadd.f32 %v10712, %v10960
    %v10962 = vpop.f32.mrf.mxu0
    %v10963 = vadd.f32 %v10714, %v10962
    %10964 = vmatmul.bf16.gmra.mxu0 %v8338
    %v10965 = vpop.f32.mrf.mxu0
    %v10966 = vadd.f32 %v10717, %v10965
    %v10967 = vpop.f32.mrf.mxu0
    %v10968 = vadd.f32 %v10719, %v10967
    %10969 = vmatmul.bf16.gmra.mxu0 %v8341
    %v10970 = vpop.f32.mrf.mxu0
    %v10971 = vadd.f32 %v10722, %v10970
    %v10972 = vpop.f32.mrf.mxu0
    %v10973 = vadd.f32 %v10724, %v10972
    %10974 = vmatmul.bf16.gmra.mxu0 %v8344
    %v10975 = vpop.f32.mrf.mxu0
    %v10976 = vadd.f32 %v10727, %v10975
    %v10977 = vpop.f32.mrf.mxu0
    %v10978 = vadd.f32 %v10729, %v10977
    %10979 = vmatmul.bf16.gmra.mxu0 %v8347
    %v10980 = vpop.f32.mrf.mxu0
    %v10981 = vadd.f32 %v10732, %v10980
    %v10982 = vpop.f32.mrf.mxu0
    %v10983 = vadd.f32 %v10734, %v10982
    %10984 = vmatmul.bf16.gmra.mxu0 %v8350
    %v10985 = vpop.f32.mrf.mxu0
    %v10986 = vadd.f32 %v10737, %v10985
    %v10987 = vpop.f32.mrf.mxu0
    %v10988 = vadd.f32 %v10739, %v10987
    %10989 = vmatmul.bf16.gmra.mxu0 %v8353
    %v10990 = vpop.f32.mrf.mxu0
    %v10991 = vadd.f32 %v10742, %v10990
    %v10992 = vpop.f32.mrf.mxu0
    %v10993 = vadd.f32 %v10744, %v10992
    %10994 = vmatmul.bf16.gmra.mxu0 %v8356
    %v10995 = vpop.f32.mrf.mxu0
    %v10996 = vadd.f32 %v10747, %v10995
    %v10997 = vpop.f32.mrf.mxu0
    %v10998 = vadd.f32 %v10749, %v10997
    %10999 = vmatmul.bf16.gmra.mxu0 %v8359
    %v11000 = vpop.f32.mrf.mxu0
    %v11001 = vadd.f32 %v10752, %v11000
    %v11002 = vpop.f32.mrf.mxu0
    %v11003 = vadd.f32 %v10754, %v11002
    %11004 = vmatmul.bf16.gmra.mxu0 %v8362
    %v11005 = vpop.f32.mrf.mxu0
    %v11006 = vadd.f32 %v10757, %v11005
    %v11007 = vpop.f32.mrf.mxu0
    %v11008 = vadd.f32 %v10759, %v11007
    %11009 = vmatmul.bf16.gmra.mxu0 %v8365
    %v11010 = vpop.f32.mrf.mxu0
    %v11011 = vadd.f32 %v10762, %v11010
    %v11012 = vpop.f32.mrf.mxu0
    %v11013 = vadd.f32 %v10764, %v11012
    %11014 = vmatmul.bf16.gmra.mxu0 %v8368
    %v11015 = vpop.f32.mrf.mxu0
    %v11016 = vadd.f32 %v10767, %v11015
    %v11017 = vpop.f32.mrf.mxu0
    %v11018 = vadd.f32 %v10769, %v11017
    %11019 = vmatmul.bf16.gmra.mxu0 %v8371
    %v11020 = vpop.f32.mrf.mxu0
    %v11021 = vadd.f32 %v10772, %v11020
    %v11022 = vpop.f32.mrf.mxu0
    %v11023 = vadd.f32 %v10774, %v11022
    %11024 = vmatmul.bf16.gmra.mxu0 %v8374
    %v11025 = vpop.f32.mrf.mxu0
    %v11026 = vadd.f32 %v10777, %v11025
    %v11027 = vpop.f32.mrf.mxu0
    %v11028 = vadd.f32 %v10779, %v11027
    %11029 = vmatmul.bf16.gmra.mxu0 %v8377
    %v11030 = vpop.f32.mrf.mxu0
    %v11031 = vadd.f32 %v10782, %v11030
    %v11032 = vpop.f32.mrf.mxu0
    %v11033 = vadd.f32 %v10784, %v11032
    %11034 = vmatmul.bf16.gmra.mxu0 %v8380
    %v11035 = vpop.f32.mrf.mxu0
    %v11036 = vadd.f32 %v10787, %v11035
    %v11037 = vpop.f32.mrf.mxu0
    %v11038 = vadd.f32 %v10789, %v11037
    %11039 = vmatmul.bf16.gmra.mxu0 %v8383
    %v11040 = vpop.f32.mrf.mxu0
    %v11041 = vadd.f32 %v10792, %v11040
    %v11042 = vpop.f32.mrf.mxu0
    %v11043 = vadd.f32 %v10794, %v11042
    %11044 = vmatmul.bf16.gmra.mxu0 %v8386
    %v11045 = vpop.f32.mrf.mxu0
    %v11046 = vadd.f32 %v10797, %v11045
    %v11047 = vpop.f32.mrf.mxu0
    %v11048 = vadd.f32 %v10799, %v11047
    %11049 = vmatmul.bf16.gmra.mxu0 %v8389
    %v11050 = vpop.f32.mrf.mxu0
    %v11051 = vadd.f32 %v10802, %v11050
    %v11052 = vpop.f32.mrf.mxu0
    %v11053 = vadd.f32 %v10804, %v11052
    %11054 = vmatmul.bf16.gmra.mxu0 %v8392
    %v11055 = vpop.f32.mrf.mxu0
    %v11056 = vadd.f32 %v10807, %v11055
    %v11057 = vpop.f32.mrf.mxu0
    %v11058 = vadd.f32 %v10809, %v11057
    %11059 = vmatmul.bf16.gmra.mxu0 %v8395
    %v11060 = vpop.f32.mrf.mxu0
    %v11061 = vadd.f32 %v10812, %v11060
    %v11062 = vpop.f32.mrf.mxu0
    %v11063 = vadd.f32 %v10814, %v11062
    %11064 = vmatmul.bf16.gmra.mxu0 %v8398
    %v11065 = vpop.f32.mrf.mxu0
    %v11066 = vadd.f32 %v10817, %v11065
    %v11067 = vpop.f32.mrf.mxu0
    %v11068 = vadd.f32 %v10819, %v11067
    %11069 = vmatmul.bf16.gmra.mxu0 %v8401
    %v11070 = vpop.f32.mrf.mxu0
    %v11071 = vadd.f32 %v10822, %v11070
    %v11072 = vpop.f32.mrf.mxu0
    %v11073 = vadd.f32 %v10824, %v11072
    %11074 = vdwg.mxu0
    %v11171 = vrot.slane %v10089, 1
    %v11172 = vrot.slane %v10091, 1
    %v11173 = vsel %vm5079, %v11171, %v11172
    %v11174 = vrot.slane %v10094, 1
    %v11175 = vsel %vm5079, %v11172, %v11174
    %v11176 = vrot.slane %v10096, 1
    %v11177 = vrot.slane %v10099, 1
    %v11178 = vsel %vm5079, %v11176, %v11177
    %v11179 = vrot.slane %v10101, 1
    %v11180 = vsel %vm5079, %v11177, %v11179
    %v11181 = vrot.slane %v10104, 1
    %v11182 = vrot.slane %v10106, 1
    %v11183 = vsel %vm5079, %v11181, %v11182
    %v11184 = vrot.slane %v10109, 1
    %v11185 = vsel %vm5079, %v11182, %v11184
    %v11186 = vrot.slane %v10111, 1
    %v11187 = vrot.slane %v10114, 1
    %v11188 = vsel %vm5079, %v11186, %v11187
    %v11189 = vrot.slane %v10116, 1
    %v11190 = vsel %vm5079, %v11187, %v11189
    %v11191 = vrot.slane %v10119, 1
    %v11192 = vrot.slane %v10121, 1
    %v11193 = vsel %vm5079, %v11191, %v11192
    %v11194 = vrot.slane %v10124, 1
    %v11195 = vsel %vm5079, %v11192, %v11194
    %v11196 = vrot.slane %v10126, 1
    %v11197 = vrot.slane %v10129, 1
    %v11198 = vsel %vm5079, %v11196, %v11197
    %v11199 = vrot.slane %v10131, 1
    %v11200 = vsel %vm5079, %v11197, %v11199
    %v11201 = vrot.slane %v10134, 1
    %v11202 = vrot.slane %v10136, 1
    %v11203 = vsel %vm5079, %v11201, %v11202
    %v11204 = vrot.slane %v10139, 1
    %v11205 = vsel %vm5079, %v11202, %v11204
    %v11206 = vrot.slane %v10141, 1
    %v11207 = vrot.slane %v10144, 1
    %v11208 = vsel %vm5079, %v11206, %v11207
    %v11209 = vrot.slane %v10146, 1
    %v11210 = vsel %vm5079, %v11207, %v11209
    %v11211 = vrot.slane %v10149, 1
    %v11212 = vrot.slane %v10151, 1
    %v11213 = vsel %vm5079, %v11211, %v11212
    %v11214 = vrot.slane %v10154, 1
    %v11215 = vsel %vm5079, %v11212, %v11214
    %v11216 = vrot.slane %v10156, 1
    %v11217 = vrot.slane %v10159, 1
    %v11218 = vsel %vm5079, %v11216, %v11217
    %v11219 = vrot.slane %v10161, 1
    %v11220 = vsel %vm5079, %v11217, %v11219
    %v11221 = vrot.slane %v10164, 1
    %v11222 = vrot.slane %v10166, 1
    %v11223 = vsel %vm5079, %v11221, %v11222
    %v11224 = vrot.slane %v10169, 1
    %v11225 = vsel %vm5079, %v11222, %v11224
    %v11226 = vrot.slane %v10171, 1
    %v11227 = vrot.slane %v10174, 1
    %v11228 = vsel %vm5079, %v11226, %v11227
    %v11229 = vrot.slane %v10176, 1
    %v11230 = vsel %vm5079, %v11227, %v11229
    %v11231 = vrot.slane %v10179, 1
    %v11232 = vrot.slane %v10181, 1
    %v11233 = vsel %vm5079, %v11231, %v11232
    %v11234 = vrot.slane %v10184, 1
    %v11235 = vsel %vm5079, %v11232, %v11234
    %v11236 = vrot.slane %v10186, 1
    %v11237 = vrot.slane %v10189, 1
    %v11238 = vsel %vm5079, %v11236, %v11237
    %v11239 = vrot.slane %v10191, 1
    %v11240 = vsel %vm5079, %v11237, %v11239
    %v11241 = vrot.slane %v10194, 1
    %v11242 = vrot.slane %v10196, 1
    %v11243 = vsel %vm5079, %v11241, %v11242
    %v11244 = vrot.slane %v10199, 1
    %v11245 = vsel %vm5079, %v11242, %v11244
    %v11246 = vrot.slane %v10201, 1
    %v11247 = vrot.slane %v10204, 1
    %v11248 = vsel %vm5079, %v11246, %v11247
    %v11249 = vrot.slane %v10206, 1
    %v11250 = vsel %vm5079, %v11247, %v11249
    %v11251 = vrot.slane %v10209, 1
    %v11252 = vrot.slane %v10211, 1
    %v11253 = vsel %vm5079, %v11251, %v11252
    %v11254 = vrot.slane %v10214, 1
    %v11255 = vsel %vm5079, %v11252, %v11254
    %v11256 = vrot.slane %v10216, 1
    %v11257 = vrot.slane %v10219, 1
    %v11258 = vsel %vm5079, %v11256, %v11257
    %v11259 = vrot.slane %v10221, 1
    %v11260 = vsel %vm5079, %v11257, %v11259
    %v11261 = vrot.slane %v10224, 1
    %v11262 = vrot.slane %v10226, 1
    %v11263 = vsel %vm5079, %v11261, %v11262
    %v11264 = vrot.slane %v10229, 1
    %v11265 = vsel %vm5079, %v11262, %v11264
    %v11266 = vrot.slane %v10231, 1
    %v11267 = vrot.slane %v10234, 1
    %v11268 = vsel %vm5079, %v11266, %v11267
    %v11269 = vrot.slane %v10236, 1
    %v11270 = vsel %vm5079, %v11267, %v11269
    %v11271 = vrot.slane %v10239, 1
    %v11272 = vrot.slane %v10241, 1
    %v11273 = vsel %vm5079, %v11271, %v11272
    %v11274 = vrot.slane %v10244, 1
    %v11275 = vsel %vm5079, %v11272, %v11274
    %v11276 = vrot.slane %v10246, 1
    %v11277 = vrot.slane %v10249, 1
    %v11278 = vsel %vm5079, %v11276, %v11277
    %v11279 = vrot.slane %v10251, 1
    %v11280 = vsel %vm5079, %v11277, %v11279
    %v11281 = vrot.slane %v10254, 1
    %v11282 = vrot.slane %v10256, 1
    %v11283 = vsel %vm5079, %v11281, %v11282
    %v11284 = vrot.slane %v10259, 1
    %v11285 = vsel %vm5079, %v11282, %v11284
    %v11286 = vrot.slane %v10261, 1
    %v11287 = vrot.slane %v10264, 1
    %v11288 = vsel %vm5079, %v11286, %v11287
    %v11289 = vrot.slane %v10266, 1
    %v11290 = vsel %vm5079, %v11287, %v11289
    %v11291 = vrot.slane %v10269, 1
    %v11292 = vrot.slane %v10271, 1
    %v11293 = vsel %vm5079, %v11291, %v11292
    %v11294 = vrot.slane %v10274, 1
    %v11295 = vsel %vm5079, %v11292, %v11294
    %v11296 = vrot.slane %v10276, 1
    %v11297 = vrot.slane %v10279, 1
    %v11298 = vsel %vm5079, %v11296, %v11297
    %v11299 = vrot.slane %v10281, 1
    %v11300 = vsel %vm5079, %v11297, %v11299
    %v11301 = vrot.slane %v10284, 1
    %v11302 = vrot.slane %v10286, 1
    %v11303 = vsel %vm5079, %v11301, %v11302
    %v11304 = vrot.slane %v10289, 1
    %v11305 = vsel %vm5079, %v11302, %v11304
    %v11306 = vrot.slane %v10291, 1
    %v11307 = vrot.slane %v10294, 1
    %v11308 = vsel %vm5079, %v11306, %v11307
    %v11309 = vrot.slane %v10296, 1
    %v11310 = vsel %vm5079, %v11307, %v11309
    %v11311 = vrot.slane %v10299, 1
    %v11312 = vrot.slane %v10301, 1
    %v11313 = vsel %vm5079, %v11311, %v11312
    %v11314 = vrot.slane %v10304, 1
    %v11315 = vsel %vm5079, %v11312, %v11314
    %v11316 = vrot.slane %v10306, 1
    %v11317 = vrot.slane %v10309, 1
    %v11318 = vsel %vm5079, %v11316, %v11317
    %v11319 = vrot.slane %v10311, 1
    %v11320 = vsel %vm5079, %v11317, %v11319
    %v11321 = vrot.slane %v10314, 1
    %v11322 = vrot.slane %v10316, 1
    %v11323 = vsel %vm5079, %v11321, %v11322
    %v11324 = vrot.slane %v10319, 1
    %v11325 = vsel %vm5079, %v11322, %v11324
    %v11326 = vrot.slane %v10321, 1
    %v11327 = vrot.slane %v10324, 1
    %v11328 = vsel %vm5079, %v11326, %v11327
    %v11329 = vrot.slane %v10326, 1
    %v11330 = vsel %vm5079, %v11327, %v11329
    %v11395 = vadd.f32 %v9374, %v11173
    %v11396 = vadd.f32 %v9376, %v11175
    %v11397 = vadd.f32 %v9380, %v11178
    %v11398 = vadd.f32 %v9383, %v11180
    %v11399 = vadd.f32 %v9387, %v11183
    %v11400 = vadd.f32 %v9389, %v11185
    %v11401 = vadd.f32 %v9393, %v11188
    %v11402 = vadd.f32 %v9396, %v11190
    %v11403 = vadd.f32 %v9400, %v11193
    %v11404 = vadd.f32 %v9402, %v11195
    %v11405 = vadd.f32 %v9406, %v11198
    %v11406 = vadd.f32 %v9409, %v11200
    %v11407 = vadd.f32 %v9413, %v11203
    %v11408 = vadd.f32 %v9415, %v11205
    %v11409 = vadd.f32 %v9419, %v11208
    %v11410 = vadd.f32 %v9422, %v11210
    %v11411 = vadd.f32 %v9426, %v11213
    %v11412 = vadd.f32 %v9428, %v11215
    %v11413 = vadd.f32 %v9432, %v11218
    %v11414 = vadd.f32 %v9435, %v11220
    %v11415 = vadd.f32 %v9439, %v11223
    %v11416 = vadd.f32 %v9441, %v11225
    %v11417 = vadd.f32 %v9445, %v11228
    %v11418 = vadd.f32 %v9448, %v11230
    %v11419 = vadd.f32 %v9452, %v11233
    %v11420 = vadd.f32 %v9454, %v11235
    %v11421 = vadd.f32 %v9458, %v11238
    %v11422 = vadd.f32 %v9461, %v11240
    %v11423 = vadd.f32 %v9465, %v11243
    %v11424 = vadd.f32 %v9467, %v11245
    %v11425 = vadd.f32 %v9471, %v11248
    %v11426 = vadd.f32 %v9474, %v11250
    %v11427 = vadd.f32 %v9478, %v11253
    %v11428 = vadd.f32 %v9480, %v11255
    %v11429 = vadd.f32 %v9484, %v11258
    %v11430 = vadd.f32 %v9487, %v11260
    %v11431 = vadd.f32 %v9491, %v11263
    %v11432 = vadd.f32 %v9493, %v11265
    %v11433 = vadd.f32 %v9497, %v11268
    %v11434 = vadd.f32 %v9500, %v11270
    %v11435 = vadd.f32 %v9504, %v11273
    %v11436 = vadd.f32 %v9506, %v11275
    %v11437 = vadd.f32 %v9510, %v11278
    %v11438 = vadd.f32 %v9513, %v11280
    %v11439 = vadd.f32 %v9517, %v11283
    %v11440 = vadd.f32 %v9519, %v11285
    %v11441 = vadd.f32 %v9523, %v11288
    %v11442 = vadd.f32 %v9526, %v11290
    %v11443 = vadd.f32 %v9530, %v11293
    %v11444 = vadd.f32 %v9532, %v11295
    %v11445 = vadd.f32 %v9536, %v11298
    %v11446 = vadd.f32 %v9539, %v11300
    %v11447 = vadd.f32 %v9543, %v11303
    %v11448 = vadd.f32 %v9545, %v11305
    %v11449 = vadd.f32 %v9549, %v11308
    %v11450 = vadd.f32 %v9552, %v11310
    %v11451 = vadd.f32 %v9556, %v11313
    %v11452 = vadd.f32 %v9558, %v11315
    %v11453 = vadd.f32 %v9562, %v11318
    %v11454 = vadd.f32 %v9565, %v11320
    %v11455 = vadd.f32 %v9569, %v11323
    %v11456 = vadd.f32 %v9571, %v11325
    %v11457 = vadd.f32 %v9575, %v11328
    %v11458 = vadd.f32 %v9578, %v11330
    %v11555 = vrot.slane %v10836, 2
    %v11556 = vrot.slane %v10838, 2
    %v11557 = vsel %vm5464, %v11555, %v11556
    %v11558 = vrot.slane %v10841, 2
    %v11559 = vsel %vm5464, %v11556, %v11558
    %v11560 = vrot.slane %v10843, 2
    %v11561 = vrot.slane %v10846, 2
    %v11562 = vsel %vm5464, %v11560, %v11561
    %v11563 = vrot.slane %v10848, 2
    %v11564 = vsel %vm5464, %v11561, %v11563
    %v11565 = vrot.slane %v10851, 2
    %v11566 = vrot.slane %v10853, 2
    %v11567 = vsel %vm5464, %v11565, %v11566
    %v11568 = vrot.slane %v10856, 2
    %v11569 = vsel %vm5464, %v11566, %v11568
    %v11570 = vrot.slane %v10858, 2
    %v11571 = vrot.slane %v10861, 2
    %v11572 = vsel %vm5464, %v11570, %v11571
    %v11573 = vrot.slane %v10863, 2
    %v11574 = vsel %vm5464, %v11571, %v11573
    %v11575 = vrot.slane %v10866, 2
    %v11576 = vrot.slane %v10868, 2
    %v11577 = vsel %vm5464, %v11575, %v11576
    %v11578 = vrot.slane %v10871, 2
    %v11579 = vsel %vm5464, %v11576, %v11578
    %v11580 = vrot.slane %v10873, 2
    %v11581 = vrot.slane %v10876, 2
    %v11582 = vsel %vm5464, %v11580, %v11581
    %v11583 = vrot.slane %v10878, 2
    %v11584 = vsel %vm5464, %v11581, %v11583
    %v11585 = vrot.slane %v10881, 2
    %v11586 = vrot.slane %v10883, 2
    %v11587 = vsel %vm5464, %v11585, %v11586
    %v11588 = vrot.slane %v10886, 2
    %v11589 = vsel %vm5464, %v11586, %v11588
    %v11590 = vrot.slane %v10888, 2
    %v11591 = vrot.slane %v10891, 2
    %v11592 = vsel %vm5464, %v11590, %v11591
    %v11593 = vrot.slane %v10893, 2
    %v11594 = vsel %vm5464, %v11591, %v11593
    %v11595 = vrot.slane %v10896, 2
    %v11596 = vrot.slane %v10898, 2
    %v11597 = vsel %vm5464, %v11595, %v11596
    %v11598 = vrot.slane %v10901, 2
    %v11599 = vsel %vm5464, %v11596, %v11598
    %v11600 = vrot.slane %v10903, 2
    %v11601 = vrot.slane %v10906, 2
    %v11602 = vsel %vm5464, %v11600, %v11601
    %v11603 = vrot.slane %v10908, 2
    %v11604 = vsel %vm5464, %v11601, %v11603
    %v11605 = vrot.slane %v10911, 2
    %v11606 = vrot.slane %v10913, 2
    %v11607 = vsel %vm5464, %v11605, %v11606
    %v11608 = vrot.slane %v10916, 2
    %v11609 = vsel %vm5464, %v11606, %v11608
    %v11610 = vrot.slane %v10918, 2
    %v11611 = vrot.slane %v10921, 2
    %v11612 = vsel %vm5464, %v11610, %v11611
    %v11613 = vrot.slane %v10923, 2
    %v11614 = vsel %vm5464, %v11611, %v11613
    %v11615 = vrot.slane %v10926, 2
    %v11616 = vrot.slane %v10928, 2
    %v11617 = vsel %vm5464, %v11615, %v11616
    %v11618 = vrot.slane %v10931, 2
    %v11619 = vsel %vm5464, %v11616, %v11618
    %v11620 = vrot.slane %v10933, 2
    %v11621 = vrot.slane %v10936, 2
    %v11622 = vsel %vm5464, %v11620, %v11621
    %v11623 = vrot.slane %v10938, 2
    %v11624 = vsel %vm5464, %v11621, %v11623
    %v11625 = vrot.slane %v10941, 2
    %v11626 = vrot.slane %v10943, 2
    %v11627 = vsel %vm5464, %v11625, %v11626
    %v11628 = vrot.slane %v10946, 2
    %v11629 = vsel %vm5464, %v11626, %v11628
    %v11630 = vrot.slane %v10948, 2
    %v11631 = vrot.slane %v10951, 2
    %v11632 = vsel %vm5464, %v11630, %v11631
    %v11633 = vrot.slane %v10953, 2
    %v11634 = vsel %vm5464, %v11631, %v11633
    %v11635 = vrot.slane %v10956, 2
    %v11636 = vrot.slane %v10958, 2
    %v11637 = vsel %vm5464, %v11635, %v11636
    %v11638 = vrot.slane %v10961, 2
    %v11639 = vsel %vm5464, %v11636, %v11638
    %v11640 = vrot.slane %v10963, 2
    %v11641 = vrot.slane %v10966, 2
    %v11642 = vsel %vm5464, %v11640, %v11641
    %v11643 = vrot.slane %v10968, 2
    %v11644 = vsel %vm5464, %v11641, %v11643
    %v11645 = vrot.slane %v10971, 2
    %v11646 = vrot.slane %v10973, 2
    %v11647 = vsel %vm5464, %v11645, %v11646
    %v11648 = vrot.slane %v10976, 2
    %v11649 = vsel %vm5464, %v11646, %v11648
    %v11650 = vrot.slane %v10978, 2
    %v11651 = vrot.slane %v10981, 2
    %v11652 = vsel %vm5464, %v11650, %v11651
    %v11653 = vrot.slane %v10983, 2
    %v11654 = vsel %vm5464, %v11651, %v11653
    %v11655 = vrot.slane %v10986, 2
    %v11656 = vrot.slane %v10988, 2
    %v11657 = vsel %vm5464, %v11655, %v11656
    %v11658 = vrot.slane %v10991, 2
    %v11659 = vsel %vm5464, %v11656, %v11658
    %v11660 = vrot.slane %v10993, 2
    %v11661 = vrot.slane %v10996, 2
    %v11662 = vsel %vm5464, %v11660, %v11661
    %v11663 = vrot.slane %v10998, 2
    %v11664 = vsel %vm5464, %v11661, %v11663
    %v11665 = vrot.slane %v11001, 2
    %v11666 = vrot.slane %v11003, 2
    %v11667 = vsel %vm5464, %v11665, %v11666
    %v11668 = vrot.slane %v11006, 2
    %v11669 = vsel %vm5464, %v11666, %v11668
    %v11670 = vrot.slane %v11008, 2
    %v11671 = vrot.slane %v11011, 2
    %v11672 = vsel %vm5464, %v11670, %v11671
    %v11673 = vrot.slane %v11013, 2
    %v11674 = vsel %vm5464, %v11671, %v11673
    %v11675 = vrot.slane %v11016, 2
    %v11676 = vrot.slane %v11018, 2
    %v11677 = vsel %vm5464, %v11675, %v11676
    %v11678 = vrot.slane %v11021, 2
    %v11679 = vsel %vm5464, %v11676, %v11678
    %v11680 = vrot.slane %v11023, 2
    %v11681 = vrot.slane %v11026, 2
    %v11682 = vsel %vm5464, %v11680, %v11681
    %v11683 = vrot.slane %v11028, 2
    %v11684 = vsel %vm5464, %v11681, %v11683
    %v11685 = vrot.slane %v11031, 2
    %v11686 = vrot.slane %v11033, 2
    %v11687 = vsel %vm5464, %v11685, %v11686
    %v11688 = vrot.slane %v11036, 2
    %v11689 = vsel %vm5464, %v11686, %v11688
    %v11690 = vrot.slane %v11038, 2
    %v11691 = vrot.slane %v11041, 2
    %v11692 = vsel %vm5464, %v11690, %v11691
    %v11693 = vrot.slane %v11043, 2
    %v11694 = vsel %vm5464, %v11691, %v11693
    %v11695 = vrot.slane %v11046, 2
    %v11696 = vrot.slane %v11048, 2
    %v11697 = vsel %vm5464, %v11695, %v11696
    %v11698 = vrot.slane %v11051, 2
    %v11699 = vsel %vm5464, %v11696, %v11698
    %v11700 = vrot.slane %v11053, 2
    %v11701 = vrot.slane %v11056, 2
    %v11702 = vsel %vm5464, %v11700, %v11701
    %v11703 = vrot.slane %v11058, 2
    %v11704 = vsel %vm5464, %v11701, %v11703
    %v11705 = vrot.slane %v11061, 2
    %v11706 = vrot.slane %v11063, 2
    %v11707 = vsel %vm5464, %v11705, %v11706
    %v11708 = vrot.slane %v11066, 2
    %v11709 = vsel %vm5464, %v11706, %v11708
    %v11710 = vrot.slane %v11068, 2
    %v11711 = vrot.slane %v11071, 2
    %v11712 = vsel %vm5464, %v11710, %v11711
    %v11713 = vrot.slane %v11073, 2
    %v11714 = vsel %vm5464, %v11711, %v11713
    %v11779 = vadd.f32 %v11395, %v11557
    %v11780 = vadd.f32 %v11396, %v11559
    %v11781 = vadd.f32 %v11397, %v11562
    %v11782 = vadd.f32 %v11398, %v11564
    %v11783 = vadd.f32 %v11399, %v11567
    %v11784 = vadd.f32 %v11400, %v11569
    %v11785 = vadd.f32 %v11401, %v11572
    %v11786 = vadd.f32 %v11402, %v11574
    %v11787 = vadd.f32 %v11403, %v11577
    %v11788 = vadd.f32 %v11404, %v11579
    %v11789 = vadd.f32 %v11405, %v11582
    %v11790 = vadd.f32 %v11406, %v11584
    %v11791 = vadd.f32 %v11407, %v11587
    %v11792 = vadd.f32 %v11408, %v11589
    %v11793 = vadd.f32 %v11409, %v11592
    %v11794 = vadd.f32 %v11410, %v11594
    %v11795 = vadd.f32 %v11411, %v11597
    %v11796 = vadd.f32 %v11412, %v11599
    %v11797 = vadd.f32 %v11413, %v11602
    %v11798 = vadd.f32 %v11414, %v11604
    %v11799 = vadd.f32 %v11415, %v11607
    %v11800 = vadd.f32 %v11416, %v11609
    %v11801 = vadd.f32 %v11417, %v11612
    %v11802 = vadd.f32 %v11418, %v11614
    %v11803 = vadd.f32 %v11419, %v11617
    %v11804 = vadd.f32 %v11420, %v11619
    %v11805 = vadd.f32 %v11421, %v11622
    %v11806 = vadd.f32 %v11422, %v11624
    %v11807 = vadd.f32 %v11423, %v11627
    %v11808 = vadd.f32 %v11424, %v11629
    %v11809 = vadd.f32 %v11425, %v11632
    %v11810 = vadd.f32 %v11426, %v11634
    %v11811 = vadd.f32 %v11427, %v11637
    %v11812 = vadd.f32 %v11428, %v11639
    %v11813 = vadd.f32 %v11429, %v11642
    %v11814 = vadd.f32 %v11430, %v11644
    %v11815 = vadd.f32 %v11431, %v11647
    %v11816 = vadd.f32 %v11432, %v11649
    %v11817 = vadd.f32 %v11433, %v11652
    %v11818 = vadd.f32 %v11434, %v11654
    %v11819 = vadd.f32 %v11435, %v11657
    %v11820 = vadd.f32 %v11436, %v11659
    %v11821 = vadd.f32 %v11437, %v11662
    %v11822 = vadd.f32 %v11438, %v11664
    %v11823 = vadd.f32 %v11439, %v11667
    %v11824 = vadd.f32 %v11440, %v11669
    %v11825 = vadd.f32 %v11441, %v11672
    %v11826 = vadd.f32 %v11442, %v11674
    %v11827 = vadd.f32 %v11443, %v11677
    %v11828 = vadd.f32 %v11444, %v11679
    %v11829 = vadd.f32 %v11445, %v11682
    %v11830 = vadd.f32 %v11446, %v11684
    %v11831 = vadd.f32 %v11447, %v11687
    %v11832 = vadd.f32 %v11448, %v11689
    %v11833 = vadd.f32 %v11449, %v11692
    %v11834 = vadd.f32 %v11450, %v11694
    %v11835 = vadd.f32 %v11451, %v11697
    %v11836 = vadd.f32 %v11452, %v11699
    %v11837 = vadd.f32 %v11453, %v11702
    %v11838 = vadd.f32 %v11454, %v11704
    %v11839 = vadd.f32 %v11455, %v11707
    %v11840 = vadd.f32 %v11456, %v11709
    %v11841 = vadd.f32 %v11457, %v11712
    %v11842 = vadd.f32 %v11458, %v11714
    %v11843 = vadd.f32 %v11779, %v11780
    %v11844 = vadd.f32 %v11843, %v11781
    %v11845 = vadd.f32 %v11844, %v11782
    %v11846 = vadd.f32 %v11845, %v11783
    %v11847 = vadd.f32 %v11846, %v11784
    %v11848 = vadd.f32 %v11847, %v11785
    %v11849 = vadd.f32 %v11848, %v11786
    %v11850 = vadd.f32 %v11849, %v11787
    %v11851 = vadd.f32 %v11850, %v11788
    %v11852 = vadd.f32 %v11851, %v11789
    %v11853 = vadd.f32 %v11852, %v11790
    %v11854 = vadd.f32 %v11853, %v11791
    %v11855 = vadd.f32 %v11854, %v11792
    %v11856 = vadd.f32 %v11855, %v11793
    %v11857 = vadd.f32 %v11856, %v11794
    %v11858 = vadd.f32 %v11857, %v11795
    %v11859 = vadd.f32 %v11858, %v11796
    %v11860 = vadd.f32 %v11859, %v11797
    %v11861 = vadd.f32 %v11860, %v11798
    %v11862 = vadd.f32 %v11861, %v11799
    %v11863 = vadd.f32 %v11862, %v11800
    %v11864 = vadd.f32 %v11863, %v11801
    %v11865 = vadd.f32 %v11864, %v11802
    %v11866 = vadd.f32 %v11865, %v11803
    %v11867 = vadd.f32 %v11866, %v11804
    %v11868 = vadd.f32 %v11867, %v11805
    %v11869 = vadd.f32 %v11868, %v11806
    %v11870 = vadd.f32 %v11869, %v11807
    %v11871 = vadd.f32 %v11870, %v11808
    %v11872 = vadd.f32 %v11871, %v11809
    %v11873 = vadd.f32 %v11872, %v11810
    %v11874 = vadd.f32 %v11873, %v11811
    %v11875 = vadd.f32 %v11874, %v11812
    %v11876 = vadd.f32 %v11875, %v11813
    %v11877 = vadd.f32 %v11876, %v11814
    %v11878 = vadd.f32 %v11877, %v11815
    %v11879 = vadd.f32 %v11878, %v11816
    %v11880 = vadd.f32 %v11879, %v11817
    %v11881 = vadd.f32 %v11880, %v11818
    %v11882 = vadd.f32 %v11881, %v11819
    %v11883 = vadd.f32 %v11882, %v11820
    %v11884 = vadd.f32 %v11883, %v11821
    %v11885 = vadd.f32 %v11884, %v11822
    %v11886 = vadd.f32 %v11885, %v11823
    %v11887 = vadd.f32 %v11886, %v11824
    %v11888 = vadd.f32 %v11887, %v11825
    %v11889 = vadd.f32 %v11888, %v11826
    %v11890 = vadd.f32 %v11889, %v11827
    %v11891 = vadd.f32 %v11890, %v11828
    %v11892 = vadd.f32 %v11891, %v11829
    %v11893 = vadd.f32 %v11892, %v11830
    %v11894 = vadd.f32 %v11893, %v11831
    %v11895 = vadd.f32 %v11894, %v11832
    %v11896 = vadd.f32 %v11895, %v11833
    %v11897 = vadd.f32 %v11896, %v11834
    %v11898 = vadd.f32 %v11897, %v11835
    %v11899 = vadd.f32 %v11898, %v11836
    %v11900 = vadd.f32 %v11899, %v11837
    %v11901 = vadd.f32 %v11900, %v11838
    %v11902 = vadd.f32 %v11901, %v11839
    %v11903 = vadd.f32 %v11902, %v11840
    %v11904 = vadd.f32 %v11903, %v11841
    %v11905 = vadd.f32 %v11904, %v11842
    %v11906 = vrot.slane %v11905, 4
    %v11907 = vadd.f32 %v11905, %v11906
    %v11908 = vrot.slane %v11907, 2
    %v11909 = vadd.f32 %v11907, %v11908
    %v11910 = vrot.slane %v11909, 1
    %v11911 = vadd.f32 %v11909, %v11910
    %v11912 = vmul.f32 %v11779, %v11779
    %v11913 = vmul.f32 %v11780, %v11780
    %v11914 = vmul.f32 %v11781, %v11781
    %v11915 = vmul.f32 %v11782, %v11782
    %v11916 = vmul.f32 %v11783, %v11783
    %v11917 = vmul.f32 %v11784, %v11784
    %v11918 = vmul.f32 %v11785, %v11785
    %v11919 = vmul.f32 %v11786, %v11786
    %v11920 = vmul.f32 %v11787, %v11787
    %v11921 = vmul.f32 %v11788, %v11788
    %v11922 = vmul.f32 %v11789, %v11789
    %v11923 = vmul.f32 %v11790, %v11790
    %v11924 = vmul.f32 %v11791, %v11791
    %v11925 = vmul.f32 %v11792, %v11792
    %v11926 = vmul.f32 %v11793, %v11793
    %v11927 = vmul.f32 %v11794, %v11794
    %v11928 = vmul.f32 %v11795, %v11795
    %v11929 = vmul.f32 %v11796, %v11796
    %v11930 = vmul.f32 %v11797, %v11797
    %v11931 = vmul.f32 %v11798, %v11798
    %v11932 = vmul.f32 %v11799, %v11799
    %v11933 = vmul.f32 %v11800, %v11800
    %v11934 = vmul.f32 %v11801, %v11801
    %v11935 = vmul.f32 %v11802, %v11802
    %v11936 = vmul.f32 %v11803, %v11803
    %v11937 = vmul.f32 %v11804, %v11804
    %v11938 = vmul.f32 %v11805, %v11805
    %v11939 = vmul.f32 %v11806, %v11806
    %v11940 = vmul.f32 %v11807, %v11807
    %v11941 = vmul.f32 %v11808, %v11808
    %v11942 = vmul.f32 %v11809, %v11809
    %v11943 = vmul.f32 %v11810, %v11810
    %v11944 = vmul.f32 %v11811, %v11811
    %v11945 = vmul.f32 %v11812, %v11812
    %v11946 = vmul.f32 %v11813, %v11813
    %v11947 = vmul.f32 %v11814, %v11814
    %v11948 = vmul.f32 %v11815, %v11815
    %v11949 = vmul.f32 %v11816, %v11816
    %v11950 = vmul.f32 %v11817, %v11817
    %v11951 = vmul.f32 %v11818, %v11818
    %v11952 = vmul.f32 %v11819, %v11819
    %v11953 = vmul.f32 %v11820, %v11820
    %v11954 = vmul.f32 %v11821, %v11821
    %v11955 = vmul.f32 %v11822, %v11822
    %v11956 = vmul.f32 %v11823, %v11823
    %v11957 = vmul.f32 %v11824, %v11824
    %v11958 = vmul.f32 %v11825, %v11825
    %v11959 = vmul.f32 %v11826, %v11826
    %v11960 = vmul.f32 %v11827, %v11827
    %v11961 = vmul.f32 %v11828, %v11828
    %v11962 = vmul.f32 %v11829, %v11829
    %v11963 = vmul.f32 %v11830, %v11830
    %v11964 = vmul.f32 %v11831, %v11831
    %v11965 = vmul.f32 %v11832, %v11832
    %v11966 = vmul.f32 %v11833, %v11833
    %v11967 = vmul.f32 %v11834, %v11834
    %v11968 = vmul.f32 %v11835, %v11835
    %v11969 = vmul.f32 %v11836, %v11836
    %v11970 = vmul.f32 %v11837, %v11837
    %v11971 = vmul.f32 %v11838, %v11838
    %v11972 = vmul.f32 %v11839, %v11839
    %v11973 = vmul.f32 %v11840, %v11840
    %v11974 = vmul.f32 %v11841, %v11841
    %v11975 = vmul.f32 %v11842, %v11842
    %v11976 = vadd.f32 %v11912, %v11913
    %v11977 = vadd.f32 %v11976, %v11914
    %v11978 = vadd.f32 %v11977, %v11915
    %v11979 = vadd.f32 %v11978, %v11916
    %v11980 = vadd.f32 %v11979, %v11917
    %v11981 = vadd.f32 %v11980, %v11918
    %v11982 = vadd.f32 %v11981, %v11919
    %v11983 = vadd.f32 %v11982, %v11920
    %v11984 = vadd.f32 %v11983, %v11921
    %v11985 = vadd.f32 %v11984, %v11922
    %v11986 = vadd.f32 %v11985, %v11923
    %v11987 = vadd.f32 %v11986, %v11924
    %v11988 = vadd.f32 %v11987, %v11925
    %v11989 = vadd.f32 %v11988, %v11926
    %v11990 = vadd.f32 %v11989, %v11927
    %v11991 = vadd.f32 %v11990, %v11928
    %v11992 = vadd.f32 %v11991, %v11929
    %v11993 = vadd.f32 %v11992, %v11930
    %v11994 = vadd.f32 %v11993, %v11931
    %v11995 = vadd.f32 %v11994, %v11932
    %v11996 = vadd.f32 %v11995, %v11933
    %v11997 = vadd.f32 %v11996, %v11934
    %v11998 = vadd.f32 %v11997, %v11935
    %v11999 = vadd.f32 %v11998, %v11936
    %v12000 = vadd.f32 %v11999, %v11937
    %v12001 = vadd.f32 %v12000, %v11938
    %v12002 = vadd.f32 %v12001, %v11939
    %v12003 = vadd.f32 %v12002, %v11940
    %v12004 = vadd.f32 %v12003, %v11941
    %v12005 = vadd.f32 %v12004, %v11942
    %v12006 = vadd.f32 %v12005, %v11943
    %v12007 = vadd.f32 %v12006, %v11944
    %v12008 = vadd.f32 %v12007, %v11945
    %v12009 = vadd.f32 %v12008, %v11946
    %v12010 = vadd.f32 %v12009, %v11947
    %v12011 = vadd.f32 %v12010, %v11948
    %v12012 = vadd.f32 %v12011, %v11949
    %v12013 = vadd.f32 %v12012, %v11950
    %v12014 = vadd.f32 %v12013, %v11951
    %v12015 = vadd.f32 %v12014, %v11952
    %v12016 = vadd.f32 %v12015, %v11953
    %v12017 = vadd.f32 %v12016, %v11954
    %v12018 = vadd.f32 %v12017, %v11955
    %v12019 = vadd.f32 %v12018, %v11956
    %v12020 = vadd.f32 %v12019, %v11957
    %v12021 = vadd.f32 %v12020, %v11958
    %v12022 = vadd.f32 %v12021, %v11959
    %v12023 = vadd.f32 %v12022, %v11960
    %v12024 = vadd.f32 %v12023, %v11961
    %v12025 = vadd.f32 %v12024, %v11962
    %v12026 = vadd.f32 %v12025, %v11963
    %v12027 = vadd.f32 %v12026, %v11964
    %v12028 = vadd.f32 %v12027, %v11965
    %v12029 = vadd.f32 %v12028, %v11966
    %v12030 = vadd.f32 %v12029, %v11967
    %v12031 = vadd.f32 %v12030, %v11968
    %v12032 = vadd.f32 %v12031, %v11969
    %v12033 = vadd.f32 %v12032, %v11970
    %v12034 = vadd.f32 %v12033, %v11971
    %v12035 = vadd.f32 %v12034, %v11972
    %v12036 = vadd.f32 %v12035, %v11973
    %v12037 = vadd.f32 %v12036, %v11974
    %v12038 = vadd.f32 %v12037, %v11975
    %v12039 = vrot.slane %v12038, 4
    %v12040 = vadd.f32 %v12038, %v12039
    %v12041 = vrot.slane %v12040, 2
    %v12042 = vadd.f32 %v12040, %v12041
    %v12043 = vrot.slane %v12042, 1
    %v12044 = vadd.f32 %v12042, %v12043
    %v12045 = vmul.f32 %v11911, 0.001953125
    %v12046 = vmul.f32 %v12044, 0.001953125
    %v12047 = vmul.f32 %v12045, %v12045
    %v12048 = vsub.f32 %v12046, %v12047
    %v12049 = vmax.f32 %v12048, 0.0
    %v12050 = vsub.f32 %v11779, %v12045
    %v12051 = vsub.f32 %v11780, %v12045
    %v12052 = vsub.f32 %v11781, %v12045
    %v12053 = vsub.f32 %v11782, %v12045
    %v12054 = vsub.f32 %v11783, %v12045
    %v12055 = vsub.f32 %v11784, %v12045
    %v12056 = vsub.f32 %v11785, %v12045
    %v12057 = vsub.f32 %v11786, %v12045
    %v12058 = vsub.f32 %v11787, %v12045
    %v12059 = vsub.f32 %v11788, %v12045
    %v12060 = vsub.f32 %v11789, %v12045
    %v12061 = vsub.f32 %v11790, %v12045
    %v12062 = vsub.f32 %v11791, %v12045
    %v12063 = vsub.f32 %v11792, %v12045
    %v12064 = vsub.f32 %v11793, %v12045
    %v12065 = vsub.f32 %v11794, %v12045
    %v12066 = vsub.f32 %v11795, %v12045
    %v12067 = vsub.f32 %v11796, %v12045
    %v12068 = vsub.f32 %v11797, %v12045
    %v12069 = vsub.f32 %v11798, %v12045
    %v12070 = vsub.f32 %v11799, %v12045
    %v12071 = vsub.f32 %v11800, %v12045
    %v12072 = vsub.f32 %v11801, %v12045
    %v12073 = vsub.f32 %v11802, %v12045
    %v12074 = vsub.f32 %v11803, %v12045
    %v12075 = vsub.f32 %v11804, %v12045
    %v12076 = vsub.f32 %v11805, %v12045
    %v12077 = vsub.f32 %v11806, %v12045
    %v12078 = vsub.f32 %v11807, %v12045
    %v12079 = vsub.f32 %v11808, %v12045
    %v12080 = vsub.f32 %v11809, %v12045
    %v12081 = vsub.f32 %v11810, %v12045
    %v12082 = vsub.f32 %v11811, %v12045
    %v12083 = vsub.f32 %v11812, %v12045
    %v12084 = vsub.f32 %v11813, %v12045
    %v12085 = vsub.f32 %v11814, %v12045
    %v12086 = vsub.f32 %v11815, %v12045
    %v12087 = vsub.f32 %v11816, %v12045
    %v12088 = vsub.f32 %v11817, %v12045
    %v12089 = vsub.f32 %v11818, %v12045
    %v12090 = vsub.f32 %v11819, %v12045
    %v12091 = vsub.f32 %v11820, %v12045
    %v12092 = vsub.f32 %v11821, %v12045
    %v12093 = vsub.f32 %v11822, %v12045
    %v12094 = vsub.f32 %v11823, %v12045
    %v12095 = vsub.f32 %v11824, %v12045
    %v12096 = vsub.f32 %v11825, %v12045
    %v12097 = vsub.f32 %v11826, %v12045
    %v12098 = vsub.f32 %v11827, %v12045
    %v12099 = vsub.f32 %v11828, %v12045
    %v12100 = vsub.f32 %v11829, %v12045
    %v12101 = vsub.f32 %v11830, %v12045
    %v12102 = vsub.f32 %v11831, %v12045
    %v12103 = vsub.f32 %v11832, %v12045
    %v12104 = vsub.f32 %v11833, %v12045
    %v12105 = vsub.f32 %v11834, %v12045
    %v12106 = vsub.f32 %v11835, %v12045
    %v12107 = vsub.f32 %v11836, %v12045
    %v12108 = vsub.f32 %v11837, %v12045
    %v12109 = vsub.f32 %v11838, %v12045
    %v12110 = vsub.f32 %v11839, %v12045
    %v12111 = vsub.f32 %v11840, %v12045
    %v12112 = vsub.f32 %v11841, %v12045
    %v12113 = vsub.f32 %v11842, %v12045
    %v12114 = vadd.f32 %v12049, 1e-05
    %v12115 = vrsqrt.pop %v12114
    %v12116 = vmul.f32 %v12115, %v12114
    %v12117 = vmul.f32 %v12116, %v12115
    %v12118 = vmul.f32 0.5, %v12117
    %v12119 = vsub.f32 1.5, %v12118
    %v12120 = vmul.f32 %v12115, %v12119
    %vm12121 = vweird.f32 %v12114
    %vm12122 = vweird.f32 %v12115
    %vm12123 = vmor %vm12121, %vm12122
    %v12124 = vsel %vm12123, %v12115, %v12120
    %v12125 = vmul.f32 %v12050, %v12124
    %v12126 = vmul.f32 %v12051, %v12124
    %v12127 = vmul.f32 %v12052, %v12124
    %v12128 = vmul.f32 %v12053, %v12124
    %v12129 = vmul.f32 %v12054, %v12124
    %v12130 = vmul.f32 %v12055, %v12124
    %v12131 = vmul.f32 %v12056, %v12124
    %v12132 = vmul.f32 %v12057, %v12124
    %v12133 = vmul.f32 %v12058, %v12124
    %v12134 = vmul.f32 %v12059, %v12124
    %v12135 = vmul.f32 %v12060, %v12124
    %v12136 = vmul.f32 %v12061, %v12124
    %v12137 = vmul.f32 %v12062, %v12124
    %v12138 = vmul.f32 %v12063, %v12124
    %v12139 = vmul.f32 %v12064, %v12124
    %v12140 = vmul.f32 %v12065, %v12124
    %v12141 = vmul.f32 %v12066, %v12124
    %v12142 = vmul.f32 %v12067, %v12124
    %v12143 = vmul.f32 %v12068, %v12124
    %v12144 = vmul.f32 %v12069, %v12124
    %v12145 = vmul.f32 %v12070, %v12124
    %v12146 = vmul.f32 %v12071, %v12124
    %v12147 = vmul.f32 %v12072, %v12124
    %v12148 = vmul.f32 %v12073, %v12124
    %v12149 = vmul.f32 %v12074, %v12124
    %v12150 = vmul.f32 %v12075, %v12124
    %v12151 = vmul.f32 %v12076, %v12124
    %v12152 = vmul.f32 %v12077, %v12124
    %v12153 = vmul.f32 %v12078, %v12124
    %v12154 = vmul.f32 %v12079, %v12124
    %v12155 = vmul.f32 %v12080, %v12124
    %v12156 = vmul.f32 %v12081, %v12124
    %v12157 = vmul.f32 %v12082, %v12124
    %v12158 = vmul.f32 %v12083, %v12124
    %v12159 = vmul.f32 %v12084, %v12124
    %v12160 = vmul.f32 %v12085, %v12124
    %v12161 = vmul.f32 %v12086, %v12124
    %v12162 = vmul.f32 %v12087, %v12124
    %v12163 = vmul.f32 %v12088, %v12124
    %v12164 = vmul.f32 %v12089, %v12124
    %v12165 = vmul.f32 %v12090, %v12124
    %v12166 = vmul.f32 %v12091, %v12124
    %v12167 = vmul.f32 %v12092, %v12124
    %v12168 = vmul.f32 %v12093, %v12124
    %v12169 = vmul.f32 %v12094, %v12124
    %v12170 = vmul.f32 %v12095, %v12124
    %v12171 = vmul.f32 %v12096, %v12124
    %v12172 = vmul.f32 %v12097, %v12124
    %v12173 = vmul.f32 %v12098, %v12124
    %v12174 = vmul.f32 %v12099, %v12124
    %v12175 = vmul.f32 %v12100, %v12124
    %v12176 = vmul.f32 %v12101, %v12124
    %v12177 = vmul.f32 %v12102, %v12124
    %v12178 = vmul.f32 %v12103, %v12124
    %v12179 = vmul.f32 %v12104, %v12124
    %v12180 = vmul.f32 %v12105, %v12124
    %v12181 = vmul.f32 %v12106, %v12124
    %v12182 = vmul.f32 %v12107, %v12124
    %v12183 = vmul.f32 %v12108, %v12124
    %v12184 = vmul.f32 %v12109, %v12124
    %v12185 = vmul.f32 %v12110, %v12124
    %v12186 = vmul.f32 %v12111, %v12124
    %v12187 = vmul.f32 %v12112, %v12124
    %v12188 = vmul.f32 %v12113, %v12124
    %v12189 = vmax.f32 %v12125, 0.0
    %v12190 = vmax.f32 %v12126, 0.0
    %v12191 = vmax.f32 %v12127, 0.0
    %v12192 = vmax.f32 %v12128, 0.0
    %v12193 = vmax.f32 %v12129, 0.0
    %v12194 = vmax.f32 %v12130, 0.0
    %v12195 = vmax.f32 %v12131, 0.0
    %v12196 = vmax.f32 %v12132, 0.0
    %v12197 = vmax.f32 %v12133, 0.0
    %v12198 = vmax.f32 %v12134, 0.0
    %v12199 = vmax.f32 %v12135, 0.0
    %v12200 = vmax.f32 %v12136, 0.0
    %v12201 = vmax.f32 %v12137, 0.0
    %v12202 = vmax.f32 %v12138, 0.0
    %v12203 = vmax.f32 %v12139, 0.0
    %v12204 = vmax.f32 %v12140, 0.0
    %v12205 = vmax.f32 %v12141, 0.0
    %v12206 = vmax.f32 %v12142, 0.0
    %v12207 = vmax.f32 %v12143, 0.0
    %v12208 = vmax.f32 %v12144, 0.0
    %v12209 = vmax.f32 %v12145, 0.0
    %v12210 = vmax.f32 %v12146, 0.0
    %v12211 = vmax.f32 %v12147, 0.0
    %v12212 = vmax.f32 %v12148, 0.0
    %v12213 = vmax.f32 %v12149, 0.0
    %v12214 = vmax.f32 %v12150, 0.0
    %v12215 = vmax.f32 %v12151, 0.0
    %v12216 = vmax.f32 %v12152, 0.0
    %v12217 = vmax.f32 %v12153, 0.0
    %v12218 = vmax.f32 %v12154, 0.0
    %v12219 = vmax.f32 %v12155, 0.0
    %v12220 = vmax.f32 %v12156, 0.0
    %v12221 = vmax.f32 %v12157, 0.0
    %v12222 = vmax.f32 %v12158, 0.0
    %v12223 = vmax.f32 %v12159, 0.0
    %v12224 = vmax.f32 %v12160, 0.0
    %v12225 = vmax.f32 %v12161, 0.0
    %v12226 = vmax.f32 %v12162, 0.0
    %v12227 = vmax.f32 %v12163, 0.0
    %v12228 = vmax.f32 %v12164, 0.0
    %v12229 = vmax.f32 %v12165, 0.0
    %v12230 = vmax.f32 %v12166, 0.0
    %v12231 = vmax.f32 %v12167, 0.0
    %v12232 = vmax.f32 %v12168, 0.0
    %v12233 = vmax.f32 %v12169, 0.0
    %v12234 = vmax.f32 %v12170, 0.0
    %v12235 = vmax.f32 %v12171, 0.0
    %v12236 = vmax.f32 %v12172, 0.0
    %v12237 = vmax.f32 %v12173, 0.0
    %v12238 = vmax.f32 %v12174, 0.0
    %v12239 = vmax.f32 %v12175, 0.0
    %v12240 = vmax.f32 %v12176, 0.0
    %v12241 = vmax.f32 %v12177, 0.0
    %v12242 = vmax.f32 %v12178, 0.0
    %v12243 = vmax.f32 %v12179, 0.0
    %v12244 = vmax.f32 %v12180, 0.0
    %v12245 = vmax.f32 %v12181, 0.0
    %v12246 = vmax.f32 %v12182, 0.0
    %v12247 = vmax.f32 %v12183, 0.0
    %v12248 = vmax.f32 %v12184, 0.0
    %v12249 = vmax.f32 %v12185, 0.0
    %v12250 = vmax.f32 %v12186, 0.0
    %v12251 = vmax.f32 %v12187, 0.0
    %v12252 = vmax.f32 %v12188, 0.0
    %12253 = vst [vmem:[#allocation10] sm:$0xff] %v12189
    %12254 = vst [vmem:[#allocation10 + $0x8] sm:$0xff] %v12190
    %12255 = vst [vmem:[#allocation10 + $0x10] sm:$0xff] %v12191
    %12256 = vst [vmem:[#allocation10 + $0x18] sm:$0xff] %v12192
    %12257 = vst [vmem:[#allocation10 + $0x20] sm:$0xff] %v12193
    %12258 = vst [vmem:[#allocation10 + $0x28] sm:$0xff] %v12194
    %12259 = vst [vmem:[#allocation10 + $0x30] sm:$0xff] %v12195
    %12260 = vst [vmem:[#allocation10 + $0x38] sm:$0xff] %v12196
    %12261 = vst [vmem:[#allocation10 + $0x40] sm:$0xff] %v12197
    %12262 = vst [vmem:[#allocation10 + $0x48] sm:$0xff] %v12198
    %12263 = vst [vmem:[#allocation10 + $0x50] sm:$0xff] %v12199
    %12264 = vst [vmem:[#allocation10 + $0x58] sm:$0xff] %v12200
    %12265 = vst [vmem:[#allocation10 + $0x60] sm:$0xff] %v12201
    %12266 = vst [vmem:[#allocation10 + $0x68] sm:$0xff] %v12202
    %12267 = vst [vmem:[#allocation10 + $0x70] sm:$0xff] %v12203
    %12268 = vst [vmem:[#allocation10 + $0x78] sm:$0xff] %v12204
    %12269 = vst [vmem:[#allocation10 + $0x80] sm:$0xff] %v12205
    %12270 = vst [vmem:[#allocation10 + $0x88] sm:$0xff] %v12206
    %12271 = vst [vmem:[#allocation10 + $0x90] sm:$0xff] %v12207
    %12272 = vst [vmem:[#allocation10 + $0x98] sm:$0xff] %v12208
    %12273 = vst [vmem:[#allocation10 + $0xa0] sm:$0xff] %v12209
    %12274 = vst [vmem:[#allocation10 + $0xa8] sm:$0xff] %v12210
    %12275 = vst [vmem:[#allocation10 + $0xb0] sm:$0xff] %v12211
    %12276 = vst [vmem:[#allocation10 + $0xb8] sm:$0xff] %v12212
    %12277 = vst [vmem:[#allocation10 + $0xc0] sm:$0xff] %v12213
    %12278 = vst [vmem:[#allocation10 + $0xc8] sm:$0xff] %v12214
    %12279 = vst [vmem:[#allocation10 + $0xd0] sm:$0xff] %v12215
    %12280 = vst [vmem:[#allocation10 + $0xd8] sm:$0xff] %v12216
    %12281 = vst [vmem:[#allocation10 + $0xe0] sm:$0xff] %v12217
    %12282 = vst [vmem:[#allocation10 + $0xe8] sm:$0xff] %v12218
    %12283 = vst [vmem:[#allocation10 + $0xf0] sm:$0xff] %v12219
    %12284 = vst [vmem:[#allocation10 + $0xf8] sm:$0xff] %v12220
    %12285 = vst [vmem:[#allocation10 + $0x100] sm:$0xff] %v12221
    %12286 = vst [vmem:[#allocation10 + $0x108] sm:$0xff] %v12222
    %12287 = vst [vmem:[#allocation10 + $0x110] sm:$0xff] %v12223
    %12288 = vst [vmem:[#allocation10 + $0x118] sm:$0xff] %v12224
    %12289 = vst [vmem:[#allocation10 + $0x120] sm:$0xff] %v12225
    %12290 = vst [vmem:[#allocation10 + $0x128] sm:$0xff] %v12226
    %12291 = vst [vmem:[#allocation10 + $0x130] sm:$0xff] %v12227
    %12292 = vst [vmem:[#allocation10 + $0x138] sm:$0xff] %v12228
    %12293 = vst [vmem:[#allocation10 + $0x140] sm:$0xff] %v12229
    %12294 = vst [vmem:[#allocation10 + $0x148] sm:$0xff] %v12230
    %12295 = vst [vmem:[#allocation10 + $0x150] sm:$0xff] %v12231
    %12296 = vst [vmem:[#allocation10 + $0x158] sm:$0xff] %v12232
    %12297 = vst [vmem:[#allocation10 + $0x160] sm:$0xff] %v12233
    %12298 = vst [vmem:[#allocation10 + $0x168] sm:$0xff] %v12234
    %12299 = vst [vmem:[#allocation10 + $0x170] sm:$0xff] %v12235
    %12300 = vst [vmem:[#allocation10 + $0x178] sm:$0xff] %v12236
    %12301 = vst [vmem:[#allocation10 + $0x180] sm:$0xff] %v12237
    %12302 = vst [vmem:[#allocation10 + $0x188] sm:$0xff] %v12238
    %12303 = vst [vmem:[#allocation10 + $0x190] sm:$0xff] %v12239
    %12304 = vst [vmem:[#allocation10 + $0x198] sm:$0xff] %v12240
    %12305 = vst [vmem:[#allocation10 + $0x1a0] sm:$0xff] %v12241
    %12306 = vst [vmem:[#allocation10 + $0x1a8] sm:$0xff] %v12242
    %12307 = vst [vmem:[#allocation10 + $0x1b0] sm:$0xff] %v12243
    %12308 = vst [vmem:[#allocation10 + $0x1b8] sm:$0xff] %v12244
    %12309 = vst [vmem:[#allocation10 + $0x1c0] sm:$0xff] %v12245
    %12310 = vst [vmem:[#allocation10 + $0x1c8] sm:$0xff] %v12246
    %12311 = vst [vmem:[#allocation10 + $0x1d0] sm:$0xff] %v12247
    %12312 = vst [vmem:[#allocation10 + $0x1d8] sm:$0xff] %v12248
    %12313 = vst [vmem:[#allocation10 + $0x1e0] sm:$0xff] %v12249
    %12314 = vst [vmem:[#allocation10 + $0x1e8] sm:$0xff] %v12250
    %12315 = vst [vmem:[#allocation10 + $0x1f0] sm:$0xff] %v12251
    %12316 = vst [vmem:[#allocation10 + $0x1f8] sm:$0xff] %v12252
    // Predicated region
    $region26: #{tpu_custom_call.1} parent=1 // pred_check
      _
    $region27: #{tpu_custom_call.1} parent=1 // pred_check_branch
      %12318 = sbr.rel (0) target = $region29
    $region28: #{tpu_custom_call.1} parent=1 // pred_region
      %12320 = vsyncadd [#allocation6], 0
      %s12321 = sshll.u32 [#allocation10], 4
      %s12322 = int_to_ptr.vmem [resolvable:$true] %s12321
      %s12323 = sshll.u32 %s3, 4
      %s12324 = int_to_ptr.hbm [resolvable:$true] %s12323
      %12329 = dma.vmem_to_hbm [thread:$0]  %s12322, 8192, %s12324, [#allocation6], 128, 128, 8
    $region29: #{tpu_custom_call.1} parent=1 // pred_fallthru
      _
    // Predicated region
    $region30: #{tpu_custom_call.1} parent=1 // pred_check
      _
    $region31: #{tpu_custom_call.1} parent=1 // pred_check_branch
      %12331 = sbr.rel (0) target = $region33
    $region32: #{tpu_custom_call.1} parent=1 // pred_region
      %12333 = dma.done [#allocation6], 8192
    $region33: #{tpu_custom_call.1} parent=1 // pred_fallthru
      _
    %12334 = vsyncpa [#allocation5], 1
    %12335 = vsyncpa [#allocation8], 1
    %12336 = vsyncpa [#allocation6], 1

</llo_original>
